<compile_context>
chip_gen: v7x
topology: tpu7x:2x2x1
jax: 0.10.0
libtpu: 0.0.40
codegen_flags: <defaults>
</compile_context>

<pallas_src>
import functools

import jax
import jax.numpy as jnp
from jax.experimental import pallas as pl
from jax.experimental.pallas import tpu as pltpu  # noqa: F401  (TPU backend)

# ----------------------------- config (small, lane-dense) -------------------
CFG = dict(
    image_size=32, patch=16,            # 2x2 = 4 patches -> vision seq = 5 (CLS + 4)
    vision_width=128, vision_layers=2, vision_heads=4,
    text_ctx=8, vocab=64,
    text_width=128, text_layers=2, text_heads=4,
    embed_dim=128, mlp_ratio=4,
)

_BLOCK_KEYS = ("ln1_g", "ln1_b", "w_qkv", "b_qkv", "w_out", "b_out",
               "ln2_g", "ln2_b", "w_fc", "b_fc", "w_proj", "b_proj")


# ----------------------------- in-kernel helpers -----------------------------

def _ln(x, g, b, eps=1e-5):
    """Row-wise layernorm on a (rows, D) f32 slab; g/b are (1, D)."""
    mean = jnp.mean(x, axis=-1, keepdims=True)
    xc = x - mean
    var = jnp.mean(xc * xc, axis=-1, keepdims=True)
    return xc * jax.lax.rsqrt(var + eps) * g + b


def _mm(x, w, b=None):
    """Matmul with bf16 MXU operands and f32 accumulation; optional bias."""
    acc = jnp.dot(x.astype(jnp.bfloat16), w.astype(jnp.bfloat16),
                  preferred_element_type=jnp.float32)
    if b is not None:
        acc = acc + b
    return acc


def _block_diag_mask(batch, seq, causal):
    """Additive (B*S, B*S) mask: 0 within a sample (and <= diag if causal), -1e9 elsewhere.

    Lets all samples share one attention matmul per head with no reshapes.
    """
    rows = batch * seq
    ri = jax.lax.broadcasted_iota(jnp.int32, (rows, rows), 0)
    ci = jax.lax.broadcasted_iota(jnp.int32, (rows, rows), 1)
    allowed = None
    for b in range(batch):                      # static, tiny B -> unrolled
        rin = (ri >= b * seq) & (ri < (b + 1) * seq)
        cin = (ci >= b * seq) & (ci < (b + 1) * seq)
        term = rin & cin
        allowed = term if allowed is None else (allowed | term)
    if causal:
        allowed = allowed & (ci <= ri)
    return jnp.where(allowed, 0.0, -1e9).astype(jnp.float32)


def _attn_mlp_block(x, mask, heads, p):
    """One pre-LN transformer block on a (rows, D) slab (fully in-kernel)."""
    rows, D = x.shape
    Dh = D // heads
    scale = Dh ** -0.5

    # ---- multi-head self-attention ----
    h = _ln(x, p["ln1_g"], p["ln1_b"])
    qkv = _mm(h, p["w_qkv"], p["b_qkv"])                       # (rows, 3D), fused QKV
    w_out = p["w_out"]
    attn_out = None
    for hh in range(heads):                                    # static head loop
        q = qkv[:, hh * Dh:(hh + 1) * Dh] * scale              # scale folded into q
        k = qkv[:, D + hh * Dh:D + (hh + 1) * Dh]
        v = qkv[:, 2 * D + hh * Dh:2 * D + (hh + 1) * Dh]
        s = jax.lax.dot_general(                               # q @ k.T (bf16 MXU)
            q.astype(jnp.bfloat16), k.astype(jnp.bfloat16),
            (((1,), (1,)), ((), ())), preferred_element_type=jnp.float32)
        s = s + mask
        s = s - jnp.max(s, axis=-1, keepdims=True)
        e = jnp.exp(s)
        pr = e * pl.reciprocal(jnp.sum(e, axis=-1, keepdims=True), approx=True)
        o = _mm(pr, v)                                         # (rows, Dh)
        # head merge folded into out-proj: concat_h(o_h) @ W == sum_h o_h @ W[h]
        contrib = _mm(o, w_out[hh * Dh:(hh + 1) * Dh, :])
        attn_out = contrib if attn_out is None else attn_out + contrib
    x = x + attn_out + p["b_out"]                              # residual add in-kernel

    # ---- MLP ----
    h = _ln(x, p["ln2_g"], p["ln2_b"])
    h = _mm(h, p["w_fc"], p["b_fc"])
    # TODO(synk): open_clip ViT-H uses exact-erf GELU; tanh approximation kept
    # here (erf lowering is not guaranteed in Mosaic).
    h = jax.nn.gelu(h, approximate=True)
    x = x + _mm(h, p["w_proj"], p["b_proj"])                   # residual add in-kernel
    return x


def _run_blocks(x, blk_refs, *, batch, seq, heads, layers, causal):
    mask = _block_diag_mask(batch, seq, causal)                # built once, in VMEM/vregs
    for l in range(layers):                                    # static, unrolled (L=2)
        p = {k: r[l] for k, r in zip(_BLOCK_KEYS, blk_refs)}   # static leading-axis load
        x = _attn_mlp_block(x, mask, heads, p)
    return x


# ----------------------------- fused tower kernels ---------------------------

def _vision_tower_kernel(
        patches_ref, patch_w_ref, addend_ref, ln_pre_g_ref, ln_pre_b_ref,
        ln1_g_ref, ln1_b_ref, w_qkv_ref, b_qkv_ref, w_out_ref, b_out_ref,
        ln2_g_ref, ln2_b_ref, w_fc_ref, b_fc_ref, w_proj_ref, b_proj_ref,
        ln_post_g_ref, ln_post_b_ref, proj_ref, out_ref,
        *, batch, seq, heads, layers):
    blk_refs = (ln1_g_ref, ln1_b_ref, w_qkv_ref, b_qkv_ref, w_out_ref, b_out_ref,
                ln2_g_ref, ln2_b_ref, w_fc_ref, b_fc_ref, w_proj_ref, b_proj_ref)
    rows = batch * seq
    # patch-embed conv (kernel=stride=P, no bias) as a matmul; CLS rows of
    # `patches` are zero so the class+positional embeddings come from `addend`.
    x = _mm(patches_ref[...], patch_w_ref[...]) + addend_ref[...]
    x = _ln(x, ln_pre_g_ref[...], ln_pre_b_ref[...])
    x = _run_blocks(x, blk_refs, batch=batch, seq=seq, heads=heads,
                    layers=layers, causal=False)
    x = _ln(x, ln_post_g_ref[...], ln_post_b_ref[...])
    # CLS pooling (row b*seq per sample) via an iota-built selection matrix.
    ri = jax.lax.broadcasted_iota(jnp.int32, (batch, rows), 0)
    ci = jax.lax.broadcasted_iota(jnp.int32, (batch, rows), 1)
    sel = jnp.where(ci == ri * seq, 1.0, 0.0).astype(jnp.float32)
    pooled = jnp.dot(sel, x, preferred_element_type=jnp.float32)   # (B, D)
    out_ref[...] = _mm(pooled, proj_ref[...]).astype(out_ref.dtype)


def _text_tower_kernel(
        x0_ref,
        ln1_g_ref, ln1_b_ref, w_qkv_ref, b_qkv_ref, w_out_ref, b_out_ref,
        ln2_g_ref, ln2_b_ref, w_fc_ref, b_fc_ref, w_proj_ref, b_proj_ref,
        ln_f_g_ref, ln_f_b_ref, sel_ref, proj_ref, out_ref,
        *, batch, seq, heads, layers):
    blk_refs = (ln1_g_ref, ln1_b_ref, w_qkv_ref, b_qkv_ref, w_out_ref, b_out_ref,
                ln2_g_ref, ln2_b_ref, w_fc_ref, b_fc_ref, w_proj_ref, b_proj_ref)
    x = x0_ref[...]
    x = _run_blocks(x, blk_refs, batch=batch, seq=seq, heads=heads,
                    layers=layers, causal=True)
    x = _ln(x, ln_f_g_ref[...], ln_f_b_ref[...])
    # EOT pooling: one-hot selection matrix (data-dependent, built JAX-side).
    pooled = jnp.dot(sel_ref[...], x, preferred_element_type=jnp.float32)  # (B, D)
    out_ref[...] = _mm(pooled, proj_ref[...]).astype(out_ref.dtype)


def _clip_logits_kernel(i_ref, t_ref, o_ref):
    im = i_ref[...]
    tx = t_ref[...]
    im = im * jax.lax.rsqrt(jnp.sum(im * im, axis=-1, keepdims=True) + 1e-12)
    tx = tx * jax.lax.rsqrt(jnp.sum(tx * tx, axis=-1, keepdims=True) + 1e-12)
    # final (B,E)x(B,E) dot is negligible -> keep f32 for output accuracy
    o_ref[...] = jax.lax.dot_general(im, tx, (((1,), (1,)), ((), ())),
                                     preferred_element_type=jnp.float32)


# ----------------------------- params -----------------------------------------

def _normal(key, shape, std=0.02):
    return std * jax.random.normal(key, shape, dtype=jnp.float32)


def init_block(key, width, mlp_ratio):
    ks = jax.random.split(key, 4)
    hidden = width * mlp_ratio
    return dict(
        ln1_g=jnp.ones((1, width), jnp.float32), ln1_b=jnp.zeros((1, width), jnp.float32),
        w_qkv=_normal(ks[0], (width, 3 * width)), b_qkv=jnp.zeros((1, 3 * width), jnp.float32),
        w_out=_normal(ks[1], (width, width)), b_out=jnp.zeros((1, width), jnp.float32),
        ln2_g=jnp.ones((1, width), jnp.float32), ln2_b=jnp.zeros((1, width), jnp.float32),
        w_fc=_normal(ks[2], (width, hidden)), b_fc=jnp.zeros((1, hidden), jnp.float32),
        w_proj=_normal(ks[3], (hidden, width)), b_proj=jnp.zeros((1, width), jnp.float32),
    )


def _stack_blocks(blocks):
    return {k: jnp.stack([b[k] for b in blocks], axis=0) for k in _BLOCK_KEYS}


def init_params(key):
    c = CFG
    keys = jax.random.split(key, 9)
    n_side = c["image_size"] // c["patch"]
    num_patches = n_side * n_side
    vis_blocks = _stack_blocks([init_block(k, c["vision_width"], c["mlp_ratio"])
                                for k in jax.random.split(keys[0], c["vision_layers"])])
    txt_blocks = _stack_blocks([init_block(k, c["text_width"], c["mlp_ratio"])
                                for k in jax.random.split(keys[1], c["text_layers"])])
    return dict(
        # vision tower
        patch_w=_normal(keys[2], (3 * c["patch"] * c["patch"], c["vision_width"])),
        cls=_normal(keys[3], (c["vision_width"],)),
        vis_pos=_normal(keys[4], (num_patches + 1, c["vision_width"])),
        vis_ln_pre_g=jnp.ones((1, c["vision_width"]), jnp.float32),
        vis_ln_pre_b=jnp.zeros((1, c["vision_width"]), jnp.float32),
        vis_blocks=vis_blocks,
        vis_ln_post_g=jnp.ones((1, c["vision_width"]), jnp.float32),
        vis_ln_post_b=jnp.zeros((1, c["vision_width"]), jnp.float32),
        vis_proj=_normal(keys[5], (c["vision_width"], c["embed_dim"])),
        # text tower
        tok_emb=_normal(keys[6], (c["vocab"], c["text_width"])),
        txt_pos=_normal(keys[7], (c["text_ctx"], c["text_width"])),
        txt_blocks=txt_blocks,
        txt_ln_g=jnp.ones((1, c["text_width"]), jnp.float32),
        txt_ln_b=jnp.zeros((1, c["text_width"]), jnp.float32),
        txt_proj=_normal(keys[8], (c["text_width"], c["embed_dim"])),
    )


# ----------------------------- tower wrappers (1 pallas_call each) ------------

def encode_image(params, pixels):
    c = CFG
    B, C, H, W = pixels.shape
    P = c["patch"]
    nh, nw = H // P, W // P
    npatch = nh * nw
    S = npatch + 1
    D = c["vision_width"]
    E = c["embed_dim"]

    # glue: extract per-patch pixel vectors (pure layout); CLS rows are zeroed
    # so the in-kernel patch matmul leaves them 0 (class emb comes via `addend`).
    patches = pixels.reshape(B, C, nh, P, nw, P).transpose(0, 2, 4, 1, 3, 5)
    patches = patches.reshape(B, npatch, C * P * P)
    patches_all = jnp.concatenate(
        [jnp.zeros((B, 1, C * P * P), patches.dtype), patches], axis=1
    ).reshape(B * S, C * P * P)
    # additive term per row: positional embedding (+ class embedding on CLS rows)
    pos_with_cls = params["vis_pos"].at[0].add(params["cls"])          # (S, D)
    addend = jnp.tile(pos_with_cls, (B, 1))                            # (B*S, D)

    blk = params["vis_blocks"]
    kernel = functools.partial(_vision_tower_kernel, batch=B, seq=S,
                               heads=c["vision_heads"], layers=c["vision_layers"])
    args = [patches_all, params["patch_w"], addend,
            params["vis_ln_pre_g"], params["vis_ln_pre_b"],
            *[blk[k] for k in _BLOCK_KEYS],
            params["vis_ln_post_g"], params["vis_ln_post_b"], params["vis_proj"]]
    return pl.pallas_call(
        kernel, out_shape=jax.ShapeDtypeStruct((B, E), jnp.float32))(*args)


def encode_text(params, tokens):
    c = CFG
    B, S = tokens.shape
    D = c["text_width"]
    E = c["embed_dim"]
    # glue: token-embedding gather + positional add (data-dependent gather)
    x0 = (jnp.take(params["tok_emb"], tokens, axis=0) +
          params["txt_pos"][None]).reshape(B * S, D)
    # open_clip pools features at the EOT token (argmax of token ids)
    eot = jnp.argmax(tokens, axis=-1)
    sel = jax.nn.one_hot(jnp.arange(B) * S + eot, B * S, dtype=jnp.float32)  # (B, B*S)

    blk = params["txt_blocks"]
    kernel = functools.partial(_text_tower_kernel, batch=B, seq=S,
                               heads=c["text_heads"], layers=c["text_layers"])
    args = [x0, *[blk[k] for k in _BLOCK_KEYS],
            params["txt_ln_g"], params["txt_ln_b"], sel, params["txt_proj"]]
    return pl.pallas_call(
        kernel, out_shape=jax.ShapeDtypeStruct((B, E), jnp.float32))(*args)


def clip_logits(img_feat, txt_feat):
    B, _ = img_feat.shape
    Bt = txt_feat.shape[0]
    return pl.pallas_call(
        _clip_logits_kernel,
        out_shape=jax.ShapeDtypeStruct((B, Bt), jnp.float32))(img_feat, txt_feat)


def hpsv2_forward(params, pixels, captions):
    """HPSv2.forward(pixels, captions) -> logits = norm(img_feat) @ norm(txt_feat).T

    NOTE: HPSv2.forward recomputes logits directly from the (normalized) CLIP
    features and does NOT apply logit_scale, so none is applied here either.
    """
    img_feat = encode_image(params, pixels)
    txt_feat = encode_text(params, captions)
    return clip_logits(img_feat, txt_feat)


# --------------------------------- main ---------------------------------------
if __name__ == "__main__":
    key = jax.random.PRNGKey(0)
    kp, kx, kt = jax.random.split(key, 3)
    params = init_params(kp)

    B = 2
    pixels = jax.random.normal(kx, (B, 3, CFG["image_size"], CFG["image_size"]),
                               dtype=jnp.float32)
    # token ids: BOS-ish(1), random body, EOT = vocab-1 at the final position
    body = jax.random.randint(kt, (B, CFG["text_ctx"] - 2), 1,
                              CFG["vocab"] - 1).astype(jnp.int32)
    captions = jnp.concatenate(
        [jnp.full((B, 1), 1, jnp.int32), body,
         jnp.full((B, 1), CFG["vocab"] - 1, jnp.int32)], axis=1)

    fwd = jax.jit(hpsv2_forward)
    logits = fwd(params, pixels, captions)
    jax.block_until_ready(logits)
    assert logits.shape == (B, B)
    assert bool(jnp.all(jnp.isfinite(logits)))
    print("KERNEL_OK")
</pallas_src>

<mosaic_0001>
module attributes {stable_mosaic.version = 11 : i64} {
  func.func @_text_tower_kernel(%arg0: memref<16x128xf32, #tpu.memory_space<vmem>>, %arg1: memref<2x1x128xf32, #tpu.memory_space<vmem>>, %arg2: memref<2x1x128xf32, #tpu.memory_space<vmem>>, %arg3: memref<2x128x384xf32, #tpu.memory_space<vmem>>, %arg4: memref<2x1x384xf32, #tpu.memory_space<vmem>>, %arg5: memref<2x128x128xf32, #tpu.memory_space<vmem>>, %arg6: memref<2x1x128xf32, #tpu.memory_space<vmem>>, %arg7: memref<2x1x128xf32, #tpu.memory_space<vmem>>, %arg8: memref<2x1x128xf32, #tpu.memory_space<vmem>>, %arg9: memref<2x128x512xf32, #tpu.memory_space<vmem>>, %arg10: memref<2x1x512xf32, #tpu.memory_space<vmem>>, %arg11: memref<2x512x128xf32, #tpu.memory_space<vmem>>, %arg12: memref<2x1x128xf32, #tpu.memory_space<vmem>>, %arg13: memref<1x128xf32, #tpu.memory_space<vmem>>, %arg14: memref<1x128xf32, #tpu.memory_space<vmem>>, %arg15: memref<2x16xf32, #tpu.memory_space<vmem>>, %arg16: memref<128x128xf32, #tpu.memory_space<vmem>>, %arg17: memref<2x128xf32, #tpu.memory_space<vmem>>) attributes {dimension_semantics = [], scalar_prefetch = 0 : i64, scratch_operands = 0 : i64, tpu.core_type = #tpu.core_type<tc>} {
    %c0 = arith.constant 0 : index
    %c0_0 = arith.constant 0 : index
    %0 = vector.load %arg0[%c0, %c0_0] : memref<16x128xf32, #tpu.memory_space<vmem>>, vector<16x128xf32>
    %1 = tpu.iota {dimensions = array<i32: 0>} : vector<16x16xi32>
    %2 = tpu.iota {dimensions = array<i32: 1>} : vector<16x16xi32>
    %c0_i32 = arith.constant 0 : i32
    %3 = vector.broadcast %c0_i32 : i32 to vector<16x16xi32>
    %4 = arith.cmpi sge, %1, %3 : vector<16x16xi32>
    %c8_i32 = arith.constant 8 : i32
    %5 = vector.broadcast %c8_i32 : i32 to vector<16x16xi32>
    %6 = arith.cmpi slt, %1, %5 : vector<16x16xi32>
    %7 = arith.andi %4, %6 : vector<16x16xi1>
    %c0_i32_1 = arith.constant 0 : i32
    %8 = vector.broadcast %c0_i32_1 : i32 to vector<16x16xi32>
    %9 = arith.cmpi sge, %2, %8 : vector<16x16xi32>
    %c8_i32_2 = arith.constant 8 : i32
    %10 = vector.broadcast %c8_i32_2 : i32 to vector<16x16xi32>
    %11 = arith.cmpi slt, %2, %10 : vector<16x16xi32>
    %12 = arith.andi %9, %11 : vector<16x16xi1>
    %13 = arith.andi %7, %12 : vector<16x16xi1>
    %c8_i32_3 = arith.constant 8 : i32
    %14 = vector.broadcast %c8_i32_3 : i32 to vector<16x16xi32>
    %15 = arith.cmpi sge, %1, %14 : vector<16x16xi32>
    %c16_i32 = arith.constant 16 : i32
    %16 = vector.broadcast %c16_i32 : i32 to vector<16x16xi32>
    %17 = arith.cmpi slt, %1, %16 : vector<16x16xi32>
    %18 = arith.andi %15, %17 : vector<16x16xi1>
    %c8_i32_4 = arith.constant 8 : i32
    %19 = vector.broadcast %c8_i32_4 : i32 to vector<16x16xi32>
    %20 = arith.cmpi sge, %2, %19 : vector<16x16xi32>
    %c16_i32_5 = arith.constant 16 : i32
    %21 = vector.broadcast %c16_i32_5 : i32 to vector<16x16xi32>
    %22 = arith.cmpi slt, %2, %21 : vector<16x16xi32>
    %23 = arith.andi %20, %22 : vector<16x16xi1>
    %24 = arith.andi %18, %23 : vector<16x16xi1>
    %25 = arith.ori %13, %24 : vector<16x16xi1>
    %26 = arith.cmpi sle, %2, %1 : vector<16x16xi32>
    %27 = arith.andi %25, %26 : vector<16x16xi1>
    %cst = arith.constant 0.000000e+00 : f32
    %cst_6 = arith.constant -1.000000e+09 : f32
    %28 = vector.broadcast %cst : f32 to vector<16x16xf32>
    %29 = vector.broadcast %cst_6 : f32 to vector<16x16xf32>
    %30 = arith.select %27, %28, %29 : vector<16x16xi1>, vector<16x16xf32>
    %c0_7 = arith.constant 0 : index
    %c0_8 = arith.constant 0 : index
    %c0_9 = arith.constant 0 : index
    %31 = vector.load %arg1[%c0_7, %c0_8, %c0_9] : memref<2x1x128xf32, #tpu.memory_space<vmem>>, vector<1x1x128xf32>
    %32 = vector.shape_cast %31 : vector<1x1x128xf32> to vector<1x128xf32>
    %c0_10 = arith.constant 0 : index
    %c0_11 = arith.constant 0 : index
    %c0_12 = arith.constant 0 : index
    %33 = vector.load %arg2[%c0_10, %c0_11, %c0_12] : memref<2x1x128xf32, #tpu.memory_space<vmem>>, vector<1x1x128xf32>
    %34 = vector.shape_cast %33 : vector<1x1x128xf32> to vector<1x128xf32>
    %c0_13 = arith.constant 0 : index
    %c0_14 = arith.constant 0 : index
    %c0_15 = arith.constant 0 : index
    %35 = vector.load %arg3[%c0_13, %c0_14, %c0_15] : memref<2x128x384xf32, #tpu.memory_space<vmem>>, vector<1x128x384xf32>
    %36 = vector.shape_cast %35 : vector<1x128x384xf32> to vector<128x384xf32>
    %c0_16 = arith.constant 0 : index
    %c0_17 = arith.constant 0 : index
    %c0_18 = arith.constant 0 : index
    %37 = vector.load %arg4[%c0_16, %c0_17, %c0_18] : memref<2x1x384xf32, #tpu.memory_space<vmem>>, vector<1x1x384xf32>
    %38 = vector.shape_cast %37 : vector<1x1x384xf32> to vector<1x384xf32>
    %c0_19 = arith.constant 0 : index
    %c0_20 = arith.constant 0 : index
    %c0_21 = arith.constant 0 : index
    %39 = vector.load %arg5[%c0_19, %c0_20, %c0_21] : memref<2x128x128xf32, #tpu.memory_space<vmem>>, vector<1x128x128xf32>
    %40 = vector.shape_cast %39 : vector<1x128x128xf32> to vector<128x128xf32>
    %c0_22 = arith.constant 0 : index
    %c0_23 = arith.constant 0 : index
    %c0_24 = arith.constant 0 : index
    %41 = vector.load %arg6[%c0_22, %c0_23, %c0_24] : memref<2x1x128xf32, #tpu.memory_space<vmem>>, vector<1x1x128xf32>
    %42 = vector.shape_cast %41 : vector<1x1x128xf32> to vector<1x128xf32>
    %c0_25 = arith.constant 0 : index
    %c0_26 = arith.constant 0 : index
    %c0_27 = arith.constant 0 : index
    %43 = vector.load %arg7[%c0_25, %c0_26, %c0_27] : memref<2x1x128xf32, #tpu.memory_space<vmem>>, vector<1x1x128xf32>
    %44 = vector.shape_cast %43 : vector<1x1x128xf32> to vector<1x128xf32>
    %c0_28 = arith.constant 0 : index
    %c0_29 = arith.constant 0 : index
    %c0_30 = arith.constant 0 : index
    %45 = vector.load %arg8[%c0_28, %c0_29, %c0_30] : memref<2x1x128xf32, #tpu.memory_space<vmem>>, vector<1x1x128xf32>
    %46 = vector.shape_cast %45 : vector<1x1x128xf32> to vector<1x128xf32>
    %c0_31 = arith.constant 0 : index
    %c0_32 = arith.constant 0 : index
    %c0_33 = arith.constant 0 : index
    %47 = vector.load %arg9[%c0_31, %c0_32, %c0_33] : memref<2x128x512xf32, #tpu.memory_space<vmem>>, vector<1x128x512xf32>
    %48 = vector.shape_cast %47 : vector<1x128x512xf32> to vector<128x512xf32>
    %c0_34 = arith.constant 0 : index
    %c0_35 = arith.constant 0 : index
    %c0_36 = arith.constant 0 : index
    %49 = vector.load %arg10[%c0_34, %c0_35, %c0_36] : memref<2x1x512xf32, #tpu.memory_space<vmem>>, vector<1x1x512xf32>
    %50 = vector.shape_cast %49 : vector<1x1x512xf32> to vector<1x512xf32>
    %c0_37 = arith.constant 0 : index
    %c0_38 = arith.constant 0 : index
    %c0_39 = arith.constant 0 : index
    %51 = vector.load %arg11[%c0_37, %c0_38, %c0_39] : memref<2x512x128xf32, #tpu.memory_space<vmem>>, vector<1x512x128xf32>
    %52 = vector.shape_cast %51 : vector<1x512x128xf32> to vector<512x128xf32>
    %c0_40 = arith.constant 0 : index
    %c0_41 = arith.constant 0 : index
    %c0_42 = arith.constant 0 : index
    %53 = vector.load %arg12[%c0_40, %c0_41, %c0_42] : memref<2x1x128xf32, #tpu.memory_space<vmem>>, vector<1x1x128xf32>
    %54 = vector.shape_cast %53 : vector<1x1x128xf32> to vector<1x128xf32>
    %cst_43 = arith.constant dense<0.000000e+00> : vector<16xf32>
    %55 = vector.multi_reduction <add>, %0, %cst_43 [1] : vector<16x128xf32> to vector<16xf32>
    %56 = vector.shape_cast %55 : vector<16xf32> to vector<16x1xf32>
    %cst_44 = arith.constant 1.280000e+02 : f32
    %57 = vector.broadcast %cst_44 : f32 to vector<16x1xf32>
    %58 = arith.divf %56, %57 : vector<16x1xf32>
    %59 = vector.broadcast %58 : vector<16x1xf32> to vector<16x128xf32>
    %60 = arith.subf %0, %59 : vector<16x128xf32>
    %61 = arith.mulf %60, %60 : vector<16x128xf32>
    %cst_45 = arith.constant dense<0.000000e+00> : vector<16xf32>
    %62 = vector.multi_reduction <add>, %61, %cst_45 [1] : vector<16x128xf32> to vector<16xf32>
    %63 = vector.shape_cast %62 : vector<16xf32> to vector<16x1xf32>
    %cst_46 = arith.constant 1.280000e+02 : f32
    %64 = vector.broadcast %cst_46 : f32 to vector<16x1xf32>
    %65 = arith.divf %63, %64 : vector<16x1xf32>
    %cst_47 = arith.constant 9.99999974E-6 : f32
    %66 = vector.broadcast %cst_47 : f32 to vector<16x1xf32>
    %67 = arith.addf %65, %66 : vector<16x1xf32>
    %68 = math.rsqrt %67 : vector<16x1xf32>
    %69 = vector.broadcast %68 : vector<16x1xf32> to vector<16x128xf32>
    %70 = arith.mulf %60, %69 : vector<16x128xf32>
    %71 = vector.broadcast %32 : vector<1x128xf32> to vector<16x128xf32>
    %72 = arith.mulf %70, %71 : vector<16x128xf32>
    %73 = vector.broadcast %34 : vector<1x128xf32> to vector<16x128xf32>
    %74 = arith.addf %72, %73 : vector<16x128xf32>
    %75 = arith.truncf %74 : vector<16x128xf32> to vector<16x128xbf16>
    %76 = arith.truncf %36 : vector<128x384xf32> to vector<128x384xbf16>
    %cst_48 = arith.constant dense<0.000000e+00> : vector<16x384xf32>
    %77 = tpu.matmul %75, %76, %cst_48 {dimension_numbers = #tpu.dot_dimension_numbers<[1], [0], [0], [1], [0, 0, 1, 1], [], []>} : vector<16x128xbf16>, vector<128x384xbf16>, vector<16x384xf32> -> vector<16x384xf32>
    %78 = vector.broadcast %38 : vector<1x384xf32> to vector<16x384xf32>
    %79 = arith.addf %77, %78 : vector<16x384xf32>
    %80 = vector.extract_strided_slice %79 {offsets = [0, 0], sizes = [16, 32], strides = [1, 1]} : vector<16x384xf32> to vector<16x32xf32>
    %cst_49 = arith.constant 0.176776692 : f32
    %81 = vector.broadcast %cst_49 : f32 to vector<16x32xf32>
    %82 = arith.mulf %80, %81 : vector<16x32xf32>
    %83 = vector.extract_strided_slice %79 {offsets = [0, 128], sizes = [16, 32], strides = [1, 1]} : vector<16x384xf32> to vector<16x32xf32>
    %84 = vector.extract_strided_slice %79 {offsets = [0, 256], sizes = [16, 32], strides = [1, 1]} : vector<16x384xf32> to vector<16x32xf32>
    %85 = arith.truncf %82 : vector<16x32xf32> to vector<16x32xbf16>
    %86 = arith.truncf %83 : vector<16x32xf32> to vector<16x32xbf16>
    %cst_50 = arith.constant dense<0.000000e+00> : vector<16x16xf32>
    %87 = tpu.matmul %85, %86, %cst_50 {dimension_numbers = #tpu.dot_dimension_numbers<[1], [1], [0], [0], [0, 0, 1, 0], [], []>} : vector<16x32xbf16>, vector<16x32xbf16>, vector<16x16xf32> -> vector<16x16xf32>
    %88 = arith.addf %87, %30 : vector<16x16xf32>
    %cst_51 = arith.constant dense<0xFF800000> : vector<16xf32>
    %89 = vector.multi_reduction <maximumf>, %88, %cst_51 [1] : vector<16x16xf32> to vector<16xf32>
    %90 = vector.shape_cast %89 : vector<16xf32> to vector<16x1xf32>
    %91 = vector.broadcast %90 : vector<16x1xf32> to vector<16x16xf32>
    %92 = arith.subf %88, %91 : vector<16x16xf32>
    %93 = math.exp %92 : vector<16x16xf32>
    %cst_52 = arith.constant dense<0.000000e+00> : vector<16xf32>
    %94 = vector.multi_reduction <add>, %93, %cst_52 [1] : vector<16x16xf32> to vector<16xf32>
    %95 = vector.shape_cast %94 : vector<16xf32> to vector<16x1xf32>
    %96 = tpu.reciprocal %95 {approx = true} : vector<16x1xf32> -> vector<16x1xf32>
    %97 = vector.broadcast %96 : vector<16x1xf32> to vector<16x16xf32>
    %98 = arith.mulf %93, %97 : vector<16x16xf32>
    %99 = arith.truncf %98 : vector<16x16xf32> to vector<16x16xbf16>
    %100 = arith.truncf %84 : vector<16x32xf32> to vector<16x32xbf16>
    %cst_53 = arith.constant dense<0.000000e+00> : vector<16x32xf32>
    %101 = tpu.matmul %99, %100, %cst_53 {dimension_numbers = #tpu.dot_dimension_numbers<[1], [0], [0], [1], [0, 0, 1, 1], [], []>} : vector<16x16xbf16>, vector<16x32xbf16>, vector<16x32xf32> -> vector<16x32xf32>
    %102 = vector.extract_strided_slice %40 {offsets = [0, 0], sizes = [32, 128], strides = [1, 1]} : vector<128x128xf32> to vector<32x128xf32>
    %103 = arith.truncf %101 : vector<16x32xf32> to vector<16x32xbf16>
    %104 = arith.truncf %102 : vector<32x128xf32> to vector<32x128xbf16>
    %cst_54 = arith.constant dense<0.000000e+00> : vector<16x128xf32>
    %105 = tpu.matmul %103, %104, %cst_54 {dimension_numbers = #tpu.dot_dimension_numbers<[1], [0], [0], [1], [0, 0, 1, 1], [], []>} : vector<16x32xbf16>, vector<32x128xbf16>, vector<16x128xf32> -> vector<16x128xf32>
    %106 = vector.extract_strided_slice %79 {offsets = [0, 32], sizes = [16, 32], strides = [1, 1]} : vector<16x384xf32> to vector<16x32xf32>
    %cst_55 = arith.constant 0.176776692 : f32
    %107 = vector.broadcast %cst_55 : f32 to vector<16x32xf32>
    %108 = arith.mulf %106, %107 : vector<16x32xf32>
    %109 = vector.extract_strided_slice %79 {offsets = [0, 160], sizes = [16, 32], strides = [1, 1]} : vector<16x384xf32> to vector<16x32xf32>
    %110 = vector.extract_strided_slice %79 {offsets = [0, 288], sizes = [16, 32], strides = [1, 1]} : vector<16x384xf32> to vector<16x32xf32>
    %111 = arith.truncf %108 : vector<16x32xf32> to vector<16x32xbf16>
    %112 = arith.truncf %109 : vector<16x32xf32> to vector<16x32xbf16>
    %cst_56 = arith.constant dense<0.000000e+00> : vector<16x16xf32>
    %113 = tpu.matmul %111, %112, %cst_56 {dimension_numbers = #tpu.dot_dimension_numbers<[1], [1], [0], [0], [0, 0, 1, 0], [], []>} : vector<16x32xbf16>, vector<16x32xbf16>, vector<16x16xf32> -> vector<16x16xf32>
    %114 = arith.addf %113, %30 : vector<16x16xf32>
    %cst_57 = arith.constant dense<0xFF800000> : vector<16xf32>
    %115 = vector.multi_reduction <maximumf>, %114, %cst_57 [1] : vector<16x16xf32> to vector<16xf32>
    %116 = vector.shape_cast %115 : vector<16xf32> to vector<16x1xf32>
    %117 = vector.broadcast %116 : vector<16x1xf32> to vector<16x16xf32>
    %118 = arith.subf %114, %117 : vector<16x16xf32>
    %119 = math.exp %118 : vector<16x16xf32>
    %cst_58 = arith.constant dense<0.000000e+00> : vector<16xf32>
    %120 = vector.multi_reduction <add>, %119, %cst_58 [1] : vector<16x16xf32> to vector<16xf32>
    %121 = vector.shape_cast %120 : vector<16xf32> to vector<16x1xf32>
    %122 = tpu.reciprocal %121 {approx = true} : vector<16x1xf32> -> vector<16x1xf32>
    %123 = vector.broadcast %122 : vector<16x1xf32> to vector<16x16xf32>
    %124 = arith.mulf %119, %123 : vector<16x16xf32>
    %125 = arith.truncf %124 : vector<16x16xf32> to vector<16x16xbf16>
    %126 = arith.truncf %110 : vector<16x32xf32> to vector<16x32xbf16>
    %cst_59 = arith.constant dense<0.000000e+00> : vector<16x32xf32>
    %127 = tpu.matmul %125, %126, %cst_59 {dimension_numbers = #tpu.dot_dimension_numbers<[1], [0], [0], [1], [0, 0, 1, 1], [], []>} : vector<16x16xbf16>, vector<16x32xbf16>, vector<16x32xf32> -> vector<16x32xf32>
    %128 = vector.extract_strided_slice %40 {offsets = [32, 0], sizes = [32, 128], strides = [1, 1]} : vector<128x128xf32> to vector<32x128xf32>
    %129 = arith.truncf %127 : vector<16x32xf32> to vector<16x32xbf16>
    %130 = arith.truncf %128 : vector<32x128xf32> to vector<32x128xbf16>
    %cst_60 = arith.constant dense<0.000000e+00> : vector<16x128xf32>
    %131 = tpu.matmul %129, %130, %cst_60 {dimension_numbers = #tpu.dot_dimension_numbers<[1], [0], [0], [1], [0, 0, 1, 1], [], []>} : vector<16x32xbf16>, vector<32x128xbf16>, vector<16x128xf32> -> vector<16x128xf32>
    %132 = arith.addf %105, %131 : vector<16x128xf32>
    %133 = vector.extract_strided_slice %79 {offsets = [0, 64], sizes = [16, 32], strides = [1, 1]} : vector<16x384xf32> to vector<16x32xf32>
    %cst_61 = arith.constant 0.176776692 : f32
    %134 = vector.broadcast %cst_61 : f32 to vector<16x32xf32>
    %135 = arith.mulf %133, %134 : vector<16x32xf32>
    %136 = vector.extract_strided_slice %79 {offsets = [0, 192], sizes = [16, 32], strides = [1, 1]} : vector<16x384xf32> to vector<16x32xf32>
    %137 = vector.extract_strided_slice %79 {offsets = [0, 320], sizes = [16, 32], strides = [1, 1]} : vector<16x384xf32> to vector<16x32xf32>
    %138 = arith.truncf %135 : vector<16x32xf32> to vector<16x32xbf16>
    %139 = arith.truncf %136 : vector<16x32xf32> to vector<16x32xbf16>
    %cst_62 = arith.constant dense<0.000000e+00> : vector<16x16xf32>
    %140 = tpu.matmul %138, %139, %cst_62 {dimension_numbers = #tpu.dot_dimension_numbers<[1], [1], [0], [0], [0, 0, 1, 0], [], []>} : vector<16x32xbf16>, vector<16x32xbf16>, vector<16x16xf32> -> vector<16x16xf32>
    %141 = arith.addf %140, %30 : vector<16x16xf32>
    %cst_63 = arith.constant dense<0xFF800000> : vector<16xf32>
    %142 = vector.multi_reduction <maximumf>, %141, %cst_63 [1] : vector<16x16xf32> to vector<16xf32>
    %143 = vector.shape_cast %142 : vector<16xf32> to vector<16x1xf32>
    %144 = vector.broadcast %143 : vector<16x1xf32> to vector<16x16xf32>
    %145 = arith.subf %141, %144 : vector<16x16xf32>
    %146 = math.exp %145 : vector<16x16xf32>
    %cst_64 = arith.constant dense<0.000000e+00> : vector<16xf32>
    %147 = vector.multi_reduction <add>, %146, %cst_64 [1] : vector<16x16xf32> to vector<16xf32>
    %148 = vector.shape_cast %147 : vector<16xf32> to vector<16x1xf32>
    %149 = tpu.reciprocal %148 {approx = true} : vector<16x1xf32> -> vector<16x1xf32>
    %150 = vector.broadcast %149 : vector<16x1xf32> to vector<16x16xf32>
    %151 = arith.mulf %146, %150 : vector<16x16xf32>
    %152 = arith.truncf %151 : vector<16x16xf32> to vector<16x16xbf16>
    %153 = arith.truncf %137 : vector<16x32xf32> to vector<16x32xbf16>
    %cst_65 = arith.constant dense<0.000000e+00> : vector<16x32xf32>
    %154 = tpu.matmul %152, %153, %cst_65 {dimension_numbers = #tpu.dot_dimension_numbers<[1], [0], [0], [1], [0, 0, 1, 1], [], []>} : vector<16x16xbf16>, vector<16x32xbf16>, vector<16x32xf32> -> vector<16x32xf32>
    %155 = vector.extract_strided_slice %40 {offsets = [64, 0], sizes = [32, 128], strides = [1, 1]} : vector<128x128xf32> to vector<32x128xf32>
    %156 = arith.truncf %154 : vector<16x32xf32> to vector<16x32xbf16>
    %157 = arith.truncf %155 : vector<32x128xf32> to vector<32x128xbf16>
    %cst_66 = arith.constant dense<0.000000e+00> : vector<16x128xf32>
    %158 = tpu.matmul %156, %157, %cst_66 {dimension_numbers = #tpu.dot_dimension_numbers<[1], [0], [0], [1], [0, 0, 1, 1], [], []>} : vector<16x32xbf16>, vector<32x128xbf16>, vector<16x128xf32> -> vector<16x128xf32>
    %159 = arith.addf %132, %158 : vector<16x128xf32>
    %160 = vector.extract_strided_slice %79 {offsets = [0, 96], sizes = [16, 32], strides = [1, 1]} : vector<16x384xf32> to vector<16x32xf32>
    %cst_67 = arith.constant 0.176776692 : f32
    %161 = vector.broadcast %cst_67 : f32 to vector<16x32xf32>
    %162 = arith.mulf %160, %161 : vector<16x32xf32>
    %163 = vector.extract_strided_slice %79 {offsets = [0, 224], sizes = [16, 32], strides = [1, 1]} : vector<16x384xf32> to vector<16x32xf32>
    %164 = vector.extract_strided_slice %79 {offsets = [0, 352], sizes = [16, 32], strides = [1, 1]} : vector<16x384xf32> to vector<16x32xf32>
    %165 = arith.truncf %162 : vector<16x32xf32> to vector<16x32xbf16>
    %166 = arith.truncf %163 : vector<16x32xf32> to vector<16x32xbf16>
    %cst_68 = arith.constant dense<0.000000e+00> : vector<16x16xf32>
    %167 = tpu.matmul %165, %166, %cst_68 {dimension_numbers = #tpu.dot_dimension_numbers<[1], [1], [0], [0], [0, 0, 1, 0], [], []>} : vector<16x32xbf16>, vector<16x32xbf16>, vector<16x16xf32> -> vector<16x16xf32>
    %168 = arith.addf %167, %30 : vector<16x16xf32>
    %cst_69 = arith.constant dense<0xFF800000> : vector<16xf32>
    %169 = vector.multi_reduction <maximumf>, %168, %cst_69 [1] : vector<16x16xf32> to vector<16xf32>
    %170 = vector.shape_cast %169 : vector<16xf32> to vector<16x1xf32>
    %171 = vector.broadcast %170 : vector<16x1xf32> to vector<16x16xf32>
    %172 = arith.subf %168, %171 : vector<16x16xf32>
    %173 = math.exp %172 : vector<16x16xf32>
    %cst_70 = arith.constant dense<0.000000e+00> : vector<16xf32>
    %174 = vector.multi_reduction <add>, %173, %cst_70 [1] : vector<16x16xf32> to vector<16xf32>
    %175 = vector.shape_cast %174 : vector<16xf32> to vector<16x1xf32>
    %176 = tpu.reciprocal %175 {approx = true} : vector<16x1xf32> -> vector<16x1xf32>
    %177 = vector.broadcast %176 : vector<16x1xf32> to vector<16x16xf32>
    %178 = arith.mulf %173, %177 : vector<16x16xf32>
    %179 = arith.truncf %178 : vector<16x16xf32> to vector<16x16xbf16>
    %180 = arith.truncf %164 : vector<16x32xf32> to vector<16x32xbf16>
    %cst_71 = arith.constant dense<0.000000e+00> : vector<16x32xf32>
    %181 = tpu.matmul %179, %180, %cst_71 {dimension_numbers = #tpu.dot_dimension_numbers<[1], [0], [0], [1], [0, 0, 1, 1], [], []>} : vector<16x16xbf16>, vector<16x32xbf16>, vector<16x32xf32> -> vector<16x32xf32>
    %182 = vector.extract_strided_slice %40 {offsets = [96, 0], sizes = [32, 128], strides = [1, 1]} : vector<128x128xf32> to vector<32x128xf32>
    %183 = arith.truncf %181 : vector<16x32xf32> to vector<16x32xbf16>
    %184 = arith.truncf %182 : vector<32x128xf32> to vector<32x128xbf16>
    %cst_72 = arith.constant dense<0.000000e+00> : vector<16x128xf32>
    %185 = tpu.matmul %183, %184, %cst_72 {dimension_numbers = #tpu.dot_dimension_numbers<[1], [0], [0], [1], [0, 0, 1, 1], [], []>} : vector<16x32xbf16>, vector<32x128xbf16>, vector<16x128xf32> -> vector<16x128xf32>
    %186 = arith.addf %159, %185 : vector<16x128xf32>
    %187 = arith.addf %0, %186 : vector<16x128xf32>
    %188 = vector.broadcast %42 : vector<1x128xf32> to vector<16x128xf32>
    %189 = arith.addf %187, %188 : vector<16x128xf32>
    %cst_73 = arith.constant dense<0.000000e+00> : vector<16xf32>
    %190 = vector.multi_reduction <add>, %189, %cst_73 [1] : vector<16x128xf32> to vector<16xf32>
    %191 = vector.shape_cast %190 : vector<16xf32> to vector<16x1xf32>
    %cst_74 = arith.constant 1.280000e+02 : f32
    %192 = vector.broadcast %cst_74 : f32 to vector<16x1xf32>
    %193 = arith.divf %191, %192 : vector<16x1xf32>
    %194 = vector.broadcast %193 : vector<16x1xf32> to vector<16x128xf32>
    %195 = arith.subf %189, %194 : vector<16x128xf32>
    %196 = arith.mulf %195, %195 : vector<16x128xf32>
    %cst_75 = arith.constant dense<0.000000e+00> : vector<16xf32>
    %197 = vector.multi_reduction <add>, %196, %cst_75 [1] : vector<16x128xf32> to vector<16xf32>
    %198 = vector.shape_cast %197 : vector<16xf32> to vector<16x1xf32>
    %cst_76 = arith.constant 1.280000e+02 : f32
    %199 = vector.broadcast %cst_76 : f32 to vector<16x1xf32>
    %200 = arith.divf %198, %199 : vector<16x1xf32>
    %cst_77 = arith.constant 9.99999974E-6 : f32
    %201 = vector.broadcast %cst_77 : f32 to vector<16x1xf32>
    %202 = arith.addf %200, %201 : vector<16x1xf32>
    %203 = math.rsqrt %202 : vector<16x1xf32>
    %204 = vector.broadcast %203 : vector<16x1xf32> to vector<16x128xf32>
    %205 = arith.mulf %195, %204 : vector<16x128xf32>
    %206 = vector.broadcast %44 : vector<1x128xf32> to vector<16x128xf32>
    %207 = arith.mulf %205, %206 : vector<16x128xf32>
    %208 = vector.broadcast %46 : vector<1x128xf32> to vector<16x128xf32>
    %209 = arith.addf %207, %208 : vector<16x128xf32>
    %210 = arith.truncf %209 : vector<16x128xf32> to vector<16x128xbf16>
    %211 = arith.truncf %48 : vector<128x512xf32> to vector<128x512xbf16>
    %cst_78 = arith.constant dense<0.000000e+00> : vector<16x512xf32>
    %212 = tpu.matmul %210, %211, %cst_78 {dimension_numbers = #tpu.dot_dimension_numbers<[1], [0], [0], [1], [0, 0, 1, 1], [], []>} : vector<16x128xbf16>, vector<128x512xbf16>, vector<16x512xf32> -> vector<16x512xf32>
    %213 = vector.broadcast %50 : vector<1x512xf32> to vector<16x512xf32>
    %214 = arith.addf %212, %213 : vector<16x512xf32>
    %215 = arith.mulf %214, %214 : vector<16x512xf32>
    %216 = arith.mulf %214, %215 : vector<16x512xf32>
    %cst_79 = arith.constant 4.471500e-02 : f32
    %217 = vector.broadcast %cst_79 : f32 to vector<16x512xf32>
    %218 = arith.mulf %217, %216 : vector<16x512xf32>
    %219 = arith.addf %214, %218 : vector<16x512xf32>
    %cst_80 = arith.constant 0.797884583 : f32
    %220 = vector.broadcast %cst_80 : f32 to vector<16x512xf32>
    %221 = arith.mulf %220, %219 : vector<16x512xf32>
    %222 = math.tanh %221 : vector<16x512xf32>
    %cst_81 = arith.constant 1.000000e+00 : f32
    %223 = vector.broadcast %cst_81 : f32 to vector<16x512xf32>
    %224 = arith.addf %223, %222 : vector<16x512xf32>
    %cst_82 = arith.constant 5.000000e-01 : f32
    %225 = vector.broadcast %cst_82 : f32 to vector<16x512xf32>
    %226 = arith.mulf %225, %224 : vector<16x512xf32>
    %227 = arith.mulf %214, %226 : vector<16x512xf32>
    %228 = arith.truncf %227 : vector<16x512xf32> to vector<16x512xbf16>
    %229 = arith.truncf %52 : vector<512x128xf32> to vector<512x128xbf16>
    %cst_83 = arith.constant dense<0.000000e+00> : vector<16x128xf32>
    %230 = tpu.matmul %228, %229, %cst_83 {dimension_numbers = #tpu.dot_dimension_numbers<[1], [0], [0], [1], [0, 0, 1, 1], [], []>} : vector<16x512xbf16>, vector<512x128xbf16>, vector<16x128xf32> -> vector<16x128xf32>
    %231 = vector.broadcast %54 : vector<1x128xf32> to vector<16x128xf32>
    %232 = arith.addf %230, %231 : vector<16x128xf32>
    %233 = arith.addf %189, %232 : vector<16x128xf32>
    %c1 = arith.constant 1 : index
    %c0_84 = arith.constant 0 : index
    %c0_85 = arith.constant 0 : index
    %234 = vector.load %arg1[%c1, %c0_84, %c0_85] : memref<2x1x128xf32, #tpu.memory_space<vmem>>, vector<1x1x128xf32>
    %235 = vector.shape_cast %234 : vector<1x1x128xf32> to vector<1x128xf32>
    %c1_86 = arith.constant 1 : index
    %c0_87 = arith.constant 0 : index
    %c0_88 = arith.constant 0 : index
    %236 = vector.load %arg2[%c1_86, %c0_87, %c0_88] : memref<2x1x128xf32, #tpu.memory_space<vmem>>, vector<1x1x128xf32>
    %237 = vector.shape_cast %236 : vector<1x1x128xf32> to vector<1x128xf32>
    %c1_89 = arith.constant 1 : index
    %c0_90 = arith.constant 0 : index
    %c0_91 = arith.constant 0 : index
    %238 = vector.load %arg3[%c1_89, %c0_90, %c0_91] : memref<2x128x384xf32, #tpu.memory_space<vmem>>, vector<1x128x384xf32>
    %239 = vector.shape_cast %238 : vector<1x128x384xf32> to vector<128x384xf32>
    %c1_92 = arith.constant 1 : index
    %c0_93 = arith.constant 0 : index
    %c0_94 = arith.constant 0 : index
    %240 = vector.load %arg4[%c1_92, %c0_93, %c0_94] : memref<2x1x384xf32, #tpu.memory_space<vmem>>, vector<1x1x384xf32>
    %241 = vector.shape_cast %240 : vector<1x1x384xf32> to vector<1x384xf32>
    %c1_95 = arith.constant 1 : index
    %c0_96 = arith.constant 0 : index
    %c0_97 = arith.constant 0 : index
    %242 = vector.load %arg5[%c1_95, %c0_96, %c0_97] : memref<2x128x128xf32, #tpu.memory_space<vmem>>, vector<1x128x128xf32>
    %243 = vector.shape_cast %242 : vector<1x128x128xf32> to vector<128x128xf32>
    %c1_98 = arith.constant 1 : index
    %c0_99 = arith.constant 0 : index
    %c0_100 = arith.constant 0 : index
    %244 = vector.load %arg6[%c1_98, %c0_99, %c0_100] : memref<2x1x128xf32, #tpu.memory_space<vmem>>, vector<1x1x128xf32>
    %245 = vector.shape_cast %244 : vector<1x1x128xf32> to vector<1x128xf32>
    %c1_101 = arith.constant 1 : index
    %c0_102 = arith.constant 0 : index
    %c0_103 = arith.constant 0 : index
    %246 = vector.load %arg7[%c1_101, %c0_102, %c0_103] : memref<2x1x128xf32, #tpu.memory_space<vmem>>, vector<1x1x128xf32>
    %247 = vector.shape_cast %246 : vector<1x1x128xf32> to vector<1x128xf32>
    %c1_104 = arith.constant 1 : index
    %c0_105 = arith.constant 0 : index
    %c0_106 = arith.constant 0 : index
    %248 = vector.load %arg8[%c1_104, %c0_105, %c0_106] : memref<2x1x128xf32, #tpu.memory_space<vmem>>, vector<1x1x128xf32>
    %249 = vector.shape_cast %248 : vector<1x1x128xf32> to vector<1x128xf32>
    %c1_107 = arith.constant 1 : index
    %c0_108 = arith.constant 0 : index
    %c0_109 = arith.constant 0 : index
    %250 = vector.load %arg9[%c1_107, %c0_108, %c0_109] : memref<2x128x512xf32, #tpu.memory_space<vmem>>, vector<1x128x512xf32>
    %251 = vector.shape_cast %250 : vector<1x128x512xf32> to vector<128x512xf32>
    %c1_110 = arith.constant 1 : index
    %c0_111 = arith.constant 0 : index
    %c0_112 = arith.constant 0 : index
    %252 = vector.load %arg10[%c1_110, %c0_111, %c0_112] : memref<2x1x512xf32, #tpu.memory_space<vmem>>, vector<1x1x512xf32>
    %253 = vector.shape_cast %252 : vector<1x1x512xf32> to vector<1x512xf32>
    %c1_113 = arith.constant 1 : index
    %c0_114 = arith.constant 0 : index
    %c0_115 = arith.constant 0 : index
    %254 = vector.load %arg11[%c1_113, %c0_114, %c0_115] : memref<2x512x128xf32, #tpu.memory_space<vmem>>, vector<1x512x128xf32>
    %255 = vector.shape_cast %254 : vector<1x512x128xf32> to vector<512x128xf32>
    %c1_116 = arith.constant 1 : index
    %c0_117 = arith.constant 0 : index
    %c0_118 = arith.constant 0 : index
    %256 = vector.load %arg12[%c1_116, %c0_117, %c0_118] : memref<2x1x128xf32, #tpu.memory_space<vmem>>, vector<1x1x128xf32>
    %257 = vector.shape_cast %256 : vector<1x1x128xf32> to vector<1x128xf32>
    %cst_119 = arith.constant dense<0.000000e+00> : vector<16xf32>
    %258 = vector.multi_reduction <add>, %233, %cst_119 [1] : vector<16x128xf32> to vector<16xf32>
    %259 = vector.shape_cast %258 : vector<16xf32> to vector<16x1xf32>
    %cst_120 = arith.constant 1.280000e+02 : f32
    %260 = vector.broadcast %cst_120 : f32 to vector<16x1xf32>
    %261 = arith.divf %259, %260 : vector<16x1xf32>
    %262 = vector.broadcast %261 : vector<16x1xf32> to vector<16x128xf32>
    %263 = arith.subf %233, %262 : vector<16x128xf32>
    %264 = arith.mulf %263, %263 : vector<16x128xf32>
    %cst_121 = arith.constant dense<0.000000e+00> : vector<16xf32>
    %265 = vector.multi_reduction <add>, %264, %cst_121 [1] : vector<16x128xf32> to vector<16xf32>
    %266 = vector.shape_cast %265 : vector<16xf32> to vector<16x1xf32>
    %cst_122 = arith.constant 1.280000e+02 : f32
    %267 = vector.broadcast %cst_122 : f32 to vector<16x1xf32>
    %268 = arith.divf %266, %267 : vector<16x1xf32>
    %cst_123 = arith.constant 9.99999974E-6 : f32
    %269 = vector.broadcast %cst_123 : f32 to vector<16x1xf32>
    %270 = arith.addf %268, %269 : vector<16x1xf32>
    %271 = math.rsqrt %270 : vector<16x1xf32>
    %272 = vector.broadcast %271 : vector<16x1xf32> to vector<16x128xf32>
    %273 = arith.mulf %263, %272 : vector<16x128xf32>
    %274 = vector.broadcast %235 : vector<1x128xf32> to vector<16x128xf32>
    %275 = arith.mulf %273, %274 : vector<16x128xf32>
    %276 = vector.broadcast %237 : vector<1x128xf32> to vector<16x128xf32>
    %277 = arith.addf %275, %276 : vector<16x128xf32>
    %278 = arith.truncf %277 : vector<16x128xf32> to vector<16x128xbf16>
    %279 = arith.truncf %239 : vector<128x384xf32> to vector<128x384xbf16>
    %cst_124 = arith.constant dense<0.000000e+00> : vector<16x384xf32>
    %280 = tpu.matmul %278, %279, %cst_124 {dimension_numbers = #tpu.dot_dimension_numbers<[1], [0], [0], [1], [0, 0, 1, 1], [], []>} : vector<16x128xbf16>, vector<128x384xbf16>, vector<16x384xf32> -> vector<16x384xf32>
    %281 = vector.broadcast %241 : vector<1x384xf32> to vector<16x384xf32>
    %282 = arith.addf %280, %281 : vector<16x384xf32>
    %283 = vector.extract_strided_slice %282 {offsets = [0, 0], sizes = [16, 32], strides = [1, 1]} : vector<16x384xf32> to vector<16x32xf32>
    %cst_125 = arith.constant 0.176776692 : f32
    %284 = vector.broadcast %cst_125 : f32 to vector<16x32xf32>
    %285 = arith.mulf %283, %284 : vector<16x32xf32>
    %286 = vector.extract_strided_slice %282 {offsets = [0, 128], sizes = [16, 32], strides = [1, 1]} : vector<16x384xf32> to vector<16x32xf32>
    %287 = vector.extract_strided_slice %282 {offsets = [0, 256], sizes = [16, 32], strides = [1, 1]} : vector<16x384xf32> to vector<16x32xf32>
    %288 = arith.truncf %285 : vector<16x32xf32> to vector<16x32xbf16>
    %289 = arith.truncf %286 : vector<16x32xf32> to vector<16x32xbf16>
    %cst_126 = arith.constant dense<0.000000e+00> : vector<16x16xf32>
    %290 = tpu.matmul %288, %289, %cst_126 {dimension_numbers = #tpu.dot_dimension_numbers<[1], [1], [0], [0], [0, 0, 1, 0], [], []>} : vector<16x32xbf16>, vector<16x32xbf16>, vector<16x16xf32> -> vector<16x16xf32>
    %291 = arith.addf %290, %30 : vector<16x16xf32>
    %cst_127 = arith.constant dense<0xFF800000> : vector<16xf32>
    %292 = vector.multi_reduction <maximumf>, %291, %cst_127 [1] : vector<16x16xf32> to vector<16xf32>
    %293 = vector.shape_cast %292 : vector<16xf32> to vector<16x1xf32>
    %294 = vector.broadcast %293 : vector<16x1xf32> to vector<16x16xf32>
    %295 = arith.subf %291, %294 : vector<16x16xf32>
    %296 = math.exp %295 : vector<16x16xf32>
    %cst_128 = arith.constant dense<0.000000e+00> : vector<16xf32>
    %297 = vector.multi_reduction <add>, %296, %cst_128 [1] : vector<16x16xf32> to vector<16xf32>
    %298 = vector.shape_cast %297 : vector<16xf32> to vector<16x1xf32>
    %299 = tpu.reciprocal %298 {approx = true} : vector<16x1xf32> -> vector<16x1xf32>
    %300 = vector.broadcast %299 : vector<16x1xf32> to vector<16x16xf32>
    %301 = arith.mulf %296, %300 : vector<16x16xf32>
    %302 = arith.truncf %301 : vector<16x16xf32> to vector<16x16xbf16>
    %303 = arith.truncf %287 : vector<16x32xf32> to vector<16x32xbf16>
    %cst_129 = arith.constant dense<0.000000e+00> : vector<16x32xf32>
    %304 = tpu.matmul %302, %303, %cst_129 {dimension_numbers = #tpu.dot_dimension_numbers<[1], [0], [0], [1], [0, 0, 1, 1], [], []>} : vector<16x16xbf16>, vector<16x32xbf16>, vector<16x32xf32> -> vector<16x32xf32>
    %305 = vector.extract_strided_slice %243 {offsets = [0, 0], sizes = [32, 128], strides = [1, 1]} : vector<128x128xf32> to vector<32x128xf32>
    %306 = arith.truncf %304 : vector<16x32xf32> to vector<16x32xbf16>
    %307 = arith.truncf %305 : vector<32x128xf32> to vector<32x128xbf16>
    %cst_130 = arith.constant dense<0.000000e+00> : vector<16x128xf32>
    %308 = tpu.matmul %306, %307, %cst_130 {dimension_numbers = #tpu.dot_dimension_numbers<[1], [0], [0], [1], [0, 0, 1, 1], [], []>} : vector<16x32xbf16>, vector<32x128xbf16>, vector<16x128xf32> -> vector<16x128xf32>
    %309 = vector.extract_strided_slice %282 {offsets = [0, 32], sizes = [16, 32], strides = [1, 1]} : vector<16x384xf32> to vector<16x32xf32>
    %cst_131 = arith.constant 0.176776692 : f32
    %310 = vector.broadcast %cst_131 : f32 to vector<16x32xf32>
    %311 = arith.mulf %309, %310 : vector<16x32xf32>
    %312 = vector.extract_strided_slice %282 {offsets = [0, 160], sizes = [16, 32], strides = [1, 1]} : vector<16x384xf32> to vector<16x32xf32>
    %313 = vector.extract_strided_slice %282 {offsets = [0, 288], sizes = [16, 32], strides = [1, 1]} : vector<16x384xf32> to vector<16x32xf32>
    %314 = arith.truncf %311 : vector<16x32xf32> to vector<16x32xbf16>
    %315 = arith.truncf %312 : vector<16x32xf32> to vector<16x32xbf16>
    %cst_132 = arith.constant dense<0.000000e+00> : vector<16x16xf32>
    %316 = tpu.matmul %314, %315, %cst_132 {dimension_numbers = #tpu.dot_dimension_numbers<[1], [1], [0], [0], [0, 0, 1, 0], [], []>} : vector<16x32xbf16>, vector<16x32xbf16>, vector<16x16xf32> -> vector<16x16xf32>
    %317 = arith.addf %316, %30 : vector<16x16xf32>
    %cst_133 = arith.constant dense<0xFF800000> : vector<16xf32>
    %318 = vector.multi_reduction <maximumf>, %317, %cst_133 [1] : vector<16x16xf32> to vector<16xf32>
    %319 = vector.shape_cast %318 : vector<16xf32> to vector<16x1xf32>
    %320 = vector.broadcast %319 : vector<16x1xf32> to vector<16x16xf32>
    %321 = arith.subf %317, %320 : vector<16x16xf32>
    %322 = math.exp %321 : vector<16x16xf32>
    %cst_134 = arith.constant dense<0.000000e+00> : vector<16xf32>
    %323 = vector.multi_reduction <add>, %322, %cst_134 [1] : vector<16x16xf32> to vector<16xf32>
    %324 = vector.shape_cast %323 : vector<16xf32> to vector<16x1xf32>
    %325 = tpu.reciprocal %324 {approx = true} : vector<16x1xf32> -> vector<16x1xf32>
    %326 = vector.broadcast %325 : vector<16x1xf32> to vector<16x16xf32>
    %327 = arith.mulf %322, %326 : vector<16x16xf32>
    %328 = arith.truncf %327 : vector<16x16xf32> to vector<16x16xbf16>
    %329 = arith.truncf %313 : vector<16x32xf32> to vector<16x32xbf16>
    %cst_135 = arith.constant dense<0.000000e+00> : vector<16x32xf32>
    %330 = tpu.matmul %328, %329, %cst_135 {dimension_numbers = #tpu.dot_dimension_numbers<[1], [0], [0], [1], [0, 0, 1, 1], [], []>} : vector<16x16xbf16>, vector<16x32xbf16>, vector<16x32xf32> -> vector<16x32xf32>
    %331 = vector.extract_strided_slice %243 {offsets = [32, 0], sizes = [32, 128], strides = [1, 1]} : vector<128x128xf32> to vector<32x128xf32>
    %332 = arith.truncf %330 : vector<16x32xf32> to vector<16x32xbf16>
    %333 = arith.truncf %331 : vector<32x128xf32> to vector<32x128xbf16>
    %cst_136 = arith.constant dense<0.000000e+00> : vector<16x128xf32>
    %334 = tpu.matmul %332, %333, %cst_136 {dimension_numbers = #tpu.dot_dimension_numbers<[1], [0], [0], [1], [0, 0, 1, 1], [], []>} : vector<16x32xbf16>, vector<32x128xbf16>, vector<16x128xf32> -> vector<16x128xf32>
    %335 = arith.addf %308, %334 : vector<16x128xf32>
    %336 = vector.extract_strided_slice %282 {offsets = [0, 64], sizes = [16, 32], strides = [1, 1]} : vector<16x384xf32> to vector<16x32xf32>
    %cst_137 = arith.constant 0.176776692 : f32
    %337 = vector.broadcast %cst_137 : f32 to vector<16x32xf32>
    %338 = arith.mulf %336, %337 : vector<16x32xf32>
    %339 = vector.extract_strided_slice %282 {offsets = [0, 192], sizes = [16, 32], strides = [1, 1]} : vector<16x384xf32> to vector<16x32xf32>
    %340 = vector.extract_strided_slice %282 {offsets = [0, 320], sizes = [16, 32], strides = [1, 1]} : vector<16x384xf32> to vector<16x32xf32>
    %341 = arith.truncf %338 : vector<16x32xf32> to vector<16x32xbf16>
    %342 = arith.truncf %339 : vector<16x32xf32> to vector<16x32xbf16>
    %cst_138 = arith.constant dense<0.000000e+00> : vector<16x16xf32>
    %343 = tpu.matmul %341, %342, %cst_138 {dimension_numbers = #tpu.dot_dimension_numbers<[1], [1], [0], [0], [0, 0, 1, 0], [], []>} : vector<16x32xbf16>, vector<16x32xbf16>, vector<16x16xf32> -> vector<16x16xf32>
    %344 = arith.addf %343, %30 : vector<16x16xf32>
    %cst_139 = arith.constant dense<0xFF800000> : vector<16xf32>
    %345 = vector.multi_reduction <maximumf>, %344, %cst_139 [1] : vector<16x16xf32> to vector<16xf32>
    %346 = vector.shape_cast %345 : vector<16xf32> to vector<16x1xf32>
    %347 = vector.broadcast %346 : vector<16x1xf32> to vector<16x16xf32>
    %348 = arith.subf %344, %347 : vector<16x16xf32>
    %349 = math.exp %348 : vector<16x16xf32>
    %cst_140 = arith.constant dense<0.000000e+00> : vector<16xf32>
    %350 = vector.multi_reduction <add>, %349, %cst_140 [1] : vector<16x16xf32> to vector<16xf32>
    %351 = vector.shape_cast %350 : vector<16xf32> to vector<16x1xf32>
    %352 = tpu.reciprocal %351 {approx = true} : vector<16x1xf32> -> vector<16x1xf32>
    %353 = vector.broadcast %352 : vector<16x1xf32> to vector<16x16xf32>
    %354 = arith.mulf %349, %353 : vector<16x16xf32>
    %355 = arith.truncf %354 : vector<16x16xf32> to vector<16x16xbf16>
    %356 = arith.truncf %340 : vector<16x32xf32> to vector<16x32xbf16>
    %cst_141 = arith.constant dense<0.000000e+00> : vector<16x32xf32>
    %357 = tpu.matmul %355, %356, %cst_141 {dimension_numbers = #tpu.dot_dimension_numbers<[1], [0], [0], [1], [0, 0, 1, 1], [], []>} : vector<16x16xbf16>, vector<16x32xbf16>, vector<16x32xf32> -> vector<16x32xf32>
    %358 = vector.extract_strided_slice %243 {offsets = [64, 0], sizes = [32, 128], strides = [1, 1]} : vector<128x128xf32> to vector<32x128xf32>
    %359 = arith.truncf %357 : vector<16x32xf32> to vector<16x32xbf16>
    %360 = arith.truncf %358 : vector<32x128xf32> to vector<32x128xbf16>
    %cst_142 = arith.constant dense<0.000000e+00> : vector<16x128xf32>
    %361 = tpu.matmul %359, %360, %cst_142 {dimension_numbers = #tpu.dot_dimension_numbers<[1], [0], [0], [1], [0, 0, 1, 1], [], []>} : vector<16x32xbf16>, vector<32x128xbf16>, vector<16x128xf32> -> vector<16x128xf32>
    %362 = arith.addf %335, %361 : vector<16x128xf32>
    %363 = vector.extract_strided_slice %282 {offsets = [0, 96], sizes = [16, 32], strides = [1, 1]} : vector<16x384xf32> to vector<16x32xf32>
    %cst_143 = arith.constant 0.176776692 : f32
    %364 = vector.broadcast %cst_143 : f32 to vector<16x32xf32>
    %365 = arith.mulf %363, %364 : vector<16x32xf32>
    %366 = vector.extract_strided_slice %282 {offsets = [0, 224], sizes = [16, 32], strides = [1, 1]} : vector<16x384xf32> to vector<16x32xf32>
    %367 = vector.extract_strided_slice %282 {offsets = [0, 352], sizes = [16, 32], strides = [1, 1]} : vector<16x384xf32> to vector<16x32xf32>
    %368 = arith.truncf %365 : vector<16x32xf32> to vector<16x32xbf16>
    %369 = arith.truncf %366 : vector<16x32xf32> to vector<16x32xbf16>
    %cst_144 = arith.constant dense<0.000000e+00> : vector<16x16xf32>
    %370 = tpu.matmul %368, %369, %cst_144 {dimension_numbers = #tpu.dot_dimension_numbers<[1], [1], [0], [0], [0, 0, 1, 0], [], []>} : vector<16x32xbf16>, vector<16x32xbf16>, vector<16x16xf32> -> vector<16x16xf32>
    %371 = arith.addf %370, %30 : vector<16x16xf32>
    %cst_145 = arith.constant dense<0xFF800000> : vector<16xf32>
    %372 = vector.multi_reduction <maximumf>, %371, %cst_145 [1] : vector<16x16xf32> to vector<16xf32>
    %373 = vector.shape_cast %372 : vector<16xf32> to vector<16x1xf32>
    %374 = vector.broadcast %373 : vector<16x1xf32> to vector<16x16xf32>
    %375 = arith.subf %371, %374 : vector<16x16xf32>
    %376 = math.exp %375 : vector<16x16xf32>
    %cst_146 = arith.constant dense<0.000000e+00> : vector<16xf32>
    %377 = vector.multi_reduction <add>, %376, %cst_146 [1] : vector<16x16xf32> to vector<16xf32>
    %378 = vector.shape_cast %377 : vector<16xf32> to vector<16x1xf32>
    %379 = tpu.reciprocal %378 {approx = true} : vector<16x1xf32> -> vector<16x1xf32>
    %380 = vector.broadcast %379 : vector<16x1xf32> to vector<16x16xf32>
    %381 = arith.mulf %376, %380 : vector<16x16xf32>
    %382 = arith.truncf %381 : vector<16x16xf32> to vector<16x16xbf16>
    %383 = arith.truncf %367 : vector<16x32xf32> to vector<16x32xbf16>
    %cst_147 = arith.constant dense<0.000000e+00> : vector<16x32xf32>
    %384 = tpu.matmul %382, %383, %cst_147 {dimension_numbers = #tpu.dot_dimension_numbers<[1], [0], [0], [1], [0, 0, 1, 1], [], []>} : vector<16x16xbf16>, vector<16x32xbf16>, vector<16x32xf32> -> vector<16x32xf32>
    %385 = vector.extract_strided_slice %243 {offsets = [96, 0], sizes = [32, 128], strides = [1, 1]} : vector<128x128xf32> to vector<32x128xf32>
    %386 = arith.truncf %384 : vector<16x32xf32> to vector<16x32xbf16>
    %387 = arith.truncf %385 : vector<32x128xf32> to vector<32x128xbf16>
    %cst_148 = arith.constant dense<0.000000e+00> : vector<16x128xf32>
    %388 = tpu.matmul %386, %387, %cst_148 {dimension_numbers = #tpu.dot_dimension_numbers<[1], [0], [0], [1], [0, 0, 1, 1], [], []>} : vector<16x32xbf16>, vector<32x128xbf16>, vector<16x128xf32> -> vector<16x128xf32>
    %389 = arith.addf %362, %388 : vector<16x128xf32>
    %390 = arith.addf %233, %389 : vector<16x128xf32>
    %391 = vector.broadcast %245 : vector<1x128xf32> to vector<16x128xf32>
    %392 = arith.addf %390, %391 : vector<16x128xf32>
    %cst_149 = arith.constant dense<0.000000e+00> : vector<16xf32>
    %393 = vector.multi_reduction <add>, %392, %cst_149 [1] : vector<16x128xf32> to vector<16xf32>
    %394 = vector.shape_cast %393 : vector<16xf32> to vector<16x1xf32>
    %cst_150 = arith.constant 1.280000e+02 : f32
    %395 = vector.broadcast %cst_150 : f32 to vector<16x1xf32>
    %396 = arith.divf %394, %395 : vector<16x1xf32>
    %397 = vector.broadcast %396 : vector<16x1xf32> to vector<16x128xf32>
    %398 = arith.subf %392, %397 : vector<16x128xf32>
    %399 = arith.mulf %398, %398 : vector<16x128xf32>
    %cst_151 = arith.constant dense<0.000000e+00> : vector<16xf32>
    %400 = vector.multi_reduction <add>, %399, %cst_151 [1] : vector<16x128xf32> to vector<16xf32>
    %401 = vector.shape_cast %400 : vector<16xf32> to vector<16x1xf32>
    %cst_152 = arith.constant 1.280000e+02 : f32
    %402 = vector.broadcast %cst_152 : f32 to vector<16x1xf32>
    %403 = arith.divf %401, %402 : vector<16x1xf32>
    %cst_153 = arith.constant 9.99999974E-6 : f32
    %404 = vector.broadcast %cst_153 : f32 to vector<16x1xf32>
    %405 = arith.addf %403, %404 : vector<16x1xf32>
    %406 = math.rsqrt %405 : vector<16x1xf32>
    %407 = vector.broadcast %406 : vector<16x1xf32> to vector<16x128xf32>
    %408 = arith.mulf %398, %407 : vector<16x128xf32>
    %409 = vector.broadcast %247 : vector<1x128xf32> to vector<16x128xf32>
    %410 = arith.mulf %408, %409 : vector<16x128xf32>
    %411 = vector.broadcast %249 : vector<1x128xf32> to vector<16x128xf32>
    %412 = arith.addf %410, %411 : vector<16x128xf32>
    %413 = arith.truncf %412 : vector<16x128xf32> to vector<16x128xbf16>
    %414 = arith.truncf %251 : vector<128x512xf32> to vector<128x512xbf16>
    %cst_154 = arith.constant dense<0.000000e+00> : vector<16x512xf32>
    %415 = tpu.matmul %413, %414, %cst_154 {dimension_numbers = #tpu.dot_dimension_numbers<[1], [0], [0], [1], [0, 0, 1, 1], [], []>} : vector<16x128xbf16>, vector<128x512xbf16>, vector<16x512xf32> -> vector<16x512xf32>
    %416 = vector.broadcast %253 : vector<1x512xf32> to vector<16x512xf32>
    %417 = arith.addf %415, %416 : vector<16x512xf32>
    %418 = arith.mulf %417, %417 : vector<16x512xf32>
    %419 = arith.mulf %417, %418 : vector<16x512xf32>
    %cst_155 = arith.constant 4.471500e-02 : f32
    %420 = vector.broadcast %cst_155 : f32 to vector<16x512xf32>
    %421 = arith.mulf %420, %419 : vector<16x512xf32>
    %422 = arith.addf %417, %421 : vector<16x512xf32>
    %cst_156 = arith.constant 0.797884583 : f32
    %423 = vector.broadcast %cst_156 : f32 to vector<16x512xf32>
    %424 = arith.mulf %423, %422 : vector<16x512xf32>
    %425 = math.tanh %424 : vector<16x512xf32>
    %cst_157 = arith.constant 1.000000e+00 : f32
    %426 = vector.broadcast %cst_157 : f32 to vector<16x512xf32>
    %427 = arith.addf %426, %425 : vector<16x512xf32>
    %cst_158 = arith.constant 5.000000e-01 : f32
    %428 = vector.broadcast %cst_158 : f32 to vector<16x512xf32>
    %429 = arith.mulf %428, %427 : vector<16x512xf32>
    %430 = arith.mulf %417, %429 : vector<16x512xf32>
    %431 = arith.truncf %430 : vector<16x512xf32> to vector<16x512xbf16>
    %432 = arith.truncf %255 : vector<512x128xf32> to vector<512x128xbf16>
    %cst_159 = arith.constant dense<0.000000e+00> : vector<16x128xf32>
    %433 = tpu.matmul %431, %432, %cst_159 {dimension_numbers = #tpu.dot_dimension_numbers<[1], [0], [0], [1], [0, 0, 1, 1], [], []>} : vector<16x512xbf16>, vector<512x128xbf16>, vector<16x128xf32> -> vector<16x128xf32>
    %434 = vector.broadcast %257 : vector<1x128xf32> to vector<16x128xf32>
    %435 = arith.addf %433, %434 : vector<16x128xf32>
    %436 = arith.addf %392, %435 : vector<16x128xf32>
    %c0_160 = arith.constant 0 : index
    %c0_161 = arith.constant 0 : index
    %437 = vector.load %arg13[%c0_160, %c0_161] : memref<1x128xf32, #tpu.memory_space<vmem>>, vector<1x128xf32>
    %c0_162 = arith.constant 0 : index
    %c0_163 = arith.constant 0 : index
    %438 = vector.load %arg14[%c0_162, %c0_163] : memref<1x128xf32, #tpu.memory_space<vmem>>, vector<1x128xf32>
    %cst_164 = arith.constant dense<0.000000e+00> : vector<16xf32>
    %439 = vector.multi_reduction <add>, %436, %cst_164 [1] : vector<16x128xf32> to vector<16xf32>
    %440 = vector.shape_cast %439 : vector<16xf32> to vector<16x1xf32>
    %cst_165 = arith.constant 1.280000e+02 : f32
    %441 = vector.broadcast %cst_165 : f32 to vector<16x1xf32>
    %442 = arith.divf %440, %441 : vector<16x1xf32>
    %443 = vector.broadcast %442 : vector<16x1xf32> to vector<16x128xf32>
    %444 = arith.subf %436, %443 : vector<16x128xf32>
    %445 = arith.mulf %444, %444 : vector<16x128xf32>
    %cst_166 = arith.constant dense<0.000000e+00> : vector<16xf32>
    %446 = vector.multi_reduction <add>, %445, %cst_166 [1] : vector<16x128xf32> to vector<16xf32>
    %447 = vector.shape_cast %446 : vector<16xf32> to vector<16x1xf32>
    %cst_167 = arith.constant 1.280000e+02 : f32
    %448 = vector.broadcast %cst_167 : f32 to vector<16x1xf32>
    %449 = arith.divf %447, %448 : vector<16x1xf32>
    %cst_168 = arith.constant 9.99999974E-6 : f32
    %450 = vector.broadcast %cst_168 : f32 to vector<16x1xf32>
    %451 = arith.addf %449, %450 : vector<16x1xf32>
    %452 = math.rsqrt %451 : vector<16x1xf32>
    %453 = vector.broadcast %452 : vector<16x1xf32> to vector<16x128xf32>
    %454 = arith.mulf %444, %453 : vector<16x128xf32>
    %455 = vector.broadcast %437 : vector<1x128xf32> to vector<16x128xf32>
    %456 = arith.mulf %454, %455 : vector<16x128xf32>
    %457 = vector.broadcast %438 : vector<1x128xf32> to vector<16x128xf32>
    %458 = arith.addf %456, %457 : vector<16x128xf32>
    %c0_169 = arith.constant 0 : index
    %c0_170 = arith.constant 0 : index
    %459 = vector.load %arg15[%c0_169, %c0_170] : memref<2x16xf32, #tpu.memory_space<vmem>>, vector<2x16xf32>
    %cst_171 = arith.constant dense<0.000000e+00> : vector<2x128xf32>
    %460 = tpu.matmul %459, %458, %cst_171 {dimension_numbers = #tpu.dot_dimension_numbers<[1], [0], [0], [1], [0, 0, 1, 1], [], []>} : vector<2x16xf32>, vector<16x128xf32>, vector<2x128xf32> -> vector<2x128xf32>
    %c0_172 = arith.constant 0 : index
    %c0_173 = arith.constant 0 : index
    %461 = vector.load %arg16[%c0_172, %c0_173] : memref<128x128xf32, #tpu.memory_space<vmem>>, vector<128x128xf32>
    %462 = arith.truncf %460 : vector<2x128xf32> to vector<2x128xbf16>
    %463 = arith.truncf %461 : vector<128x128xf32> to vector<128x128xbf16>
    %cst_174 = arith.constant dense<0.000000e+00> : vector<2x128xf32>
    %464 = tpu.matmul %462, %463, %cst_174 {dimension_numbers = #tpu.dot_dimension_numbers<[1], [0], [0], [1], [0, 0, 1, 1], [], []>} : vector<2x128xbf16>, vector<128x128xbf16>, vector<2x128xf32> -> vector<2x128xf32>
    %c0_175 = arith.constant 0 : index
    %c0_176 = arith.constant 0 : index
    %465 = vector.load %arg17[%c0_175, %c0_176] : memref<2x128xf32, #tpu.memory_space<vmem>>, vector<2x128xf32>
    tpu.vector_store %arg17[%c0_175, %c0_176], %464 {strides = array<i32>} : memref<2x128xf32, #tpu.memory_space<vmem>>, vector<2x128xf32>,
    return
  }
}

module attributes {stable_mosaic.version = 11 : i64} {
  func.func @_vision_tower_kernel(%arg0: memref<10x768xf32, #tpu.memory_space<vmem>>, %arg1: memref<768x128xf32, #tpu.memory_space<vmem>>, %arg2: memref<10x128xf32, #tpu.memory_space<vmem>>, %arg3: memref<1x128xf32, #tpu.memory_space<vmem>>, %arg4: memref<1x128xf32, #tpu.memory_space<vmem>>, %arg5: memref<2x1x128xf32, #tpu.memory_space<vmem>>, %arg6: memref<2x1x128xf32, #tpu.memory_space<vmem>>, %arg7: memref<2x128x384xf32, #tpu.memory_space<vmem>>, %arg8: memref<2x1x384xf32, #tpu.memory_space<vmem>>, %arg9: memref<2x128x128xf32, #tpu.memory_space<vmem>>, %arg10: memref<2x1x128xf32, #tpu.memory_space<vmem>>, %arg11: memref<2x1x128xf32, #tpu.memory_space<vmem>>, %arg12: memref<2x1x128xf32, #tpu.memory_space<vmem>>, %arg13: memref<2x128x512xf32, #tpu.memory_space<vmem>>, %arg14: memref<2x1x512xf32, #tpu.memory_space<vmem>>, %arg15: memref<2x512x128xf32, #tpu.memory_space<vmem>>, %arg16: memref<2x1x128xf32, #tpu.memory_space<vmem>>, %arg17: memref<1x128xf32, #tpu.memory_space<vmem>>, %arg18: memref<1x128xf32, #tpu.memory_space<vmem>>, %arg19: memref<128x128xf32, #tpu.memory_space<vmem>>, %arg20: memref<2x128xf32, #tpu.memory_space<vmem>>) attributes {dimension_semantics = [], scalar_prefetch = 0 : i64, scratch_operands = 0 : i64, tpu.core_type = #tpu.core_type<tc>} {
    %c0 = arith.constant 0 : index
    %c0_0 = arith.constant 0 : index
    %0 = vector.load %arg0[%c0, %c0_0] : memref<10x768xf32, #tpu.memory_space<vmem>>, vector<10x768xf32>
    %c0_1 = arith.constant 0 : index
    %c0_2 = arith.constant 0 : index
    %1 = vector.load %arg1[%c0_1, %c0_2] : memref<768x128xf32, #tpu.memory_space<vmem>>, vector<768x128xf32>
    %2 = arith.truncf %0 : vector<10x768xf32> to vector<10x768xbf16>
    %3 = arith.truncf %1 : vector<768x128xf32> to vector<768x128xbf16>
    %cst = arith.constant dense<0.000000e+00> : vector<10x128xf32>
    %4 = tpu.matmul %2, %3, %cst {dimension_numbers = #tpu.dot_dimension_numbers<[1], [0], [0], [1], [0, 0, 1, 1], [], []>} : vector<10x768xbf16>, vector<768x128xbf16>, vector<10x128xf32> -> vector<10x128xf32>
    %c0_3 = arith.constant 0 : index
    %c0_4 = arith.constant 0 : index
    %5 = vector.load %arg2[%c0_3, %c0_4] : memref<10x128xf32, #tpu.memory_space<vmem>>, vector<10x128xf32>
    %6 = arith.addf %4, %5 : vector<10x128xf32>
    %c0_5 = arith.constant 0 : index
    %c0_6 = arith.constant 0 : index
    %7 = vector.load %arg3[%c0_5, %c0_6] : memref<1x128xf32, #tpu.memory_space<vmem>>, vector<1x128xf32>
    %c0_7 = arith.constant 0 : index
    %c0_8 = arith.constant 0 : index
    %8 = vector.load %arg4[%c0_7, %c0_8] : memref<1x128xf32, #tpu.memory_space<vmem>>, vector<1x128xf32>
    %cst_9 = arith.constant dense<0.000000e+00> : vector<10xf32>
    %9 = vector.multi_reduction <add>, %6, %cst_9 [1] : vector<10x128xf32> to vector<10xf32>
    %10 = vector.shape_cast %9 : vector<10xf32> to vector<10x1xf32>
    %cst_10 = arith.constant 1.280000e+02 : f32
    %11 = vector.broadcast %cst_10 : f32 to vector<10x1xf32>
    %12 = arith.divf %10, %11 : vector<10x1xf32>
    %13 = vector.broadcast %12 : vector<10x1xf32> to vector<10x128xf32>
    %14 = arith.subf %6, %13 : vector<10x128xf32>
    %15 = arith.mulf %14, %14 : vector<10x128xf32>
    %cst_11 = arith.constant dense<0.000000e+00> : vector<10xf32>
    %16 = vector.multi_reduction <add>, %15, %cst_11 [1] : vector<10x128xf32> to vector<10xf32>
    %17 = vector.shape_cast %16 : vector<10xf32> to vector<10x1xf32>
    %cst_12 = arith.constant 1.280000e+02 : f32
    %18 = vector.broadcast %cst_12 : f32 to vector<10x1xf32>
    %19 = arith.divf %17, %18 : vector<10x1xf32>
    %cst_13 = arith.constant 9.99999974E-6 : f32
    %20 = vector.broadcast %cst_13 : f32 to vector<10x1xf32>
    %21 = arith.addf %19, %20 : vector<10x1xf32>
    %22 = math.rsqrt %21 : vector<10x1xf32>
    %23 = vector.broadcast %22 : vector<10x1xf32> to vector<10x128xf32>
    %24 = arith.mulf %14, %23 : vector<10x128xf32>
    %25 = vector.broadcast %7 : vector<1x128xf32> to vector<10x128xf32>
    %26 = arith.mulf %24, %25 : vector<10x128xf32>
    %27 = vector.broadcast %8 : vector<1x128xf32> to vector<10x128xf32>
    %28 = arith.addf %26, %27 : vector<10x128xf32>
    %29 = tpu.iota {dimensions = array<i32: 0>} : vector<10x10xi32>
    %30 = tpu.iota {dimensions = array<i32: 1>} : vector<10x10xi32>
    %c0_i32 = arith.constant 0 : i32
    %31 = vector.broadcast %c0_i32 : i32 to vector<10x10xi32>
    %32 = arith.cmpi sge, %29, %31 : vector<10x10xi32>
    %c5_i32 = arith.constant 5 : i32
    %33 = vector.broadcast %c5_i32 : i32 to vector<10x10xi32>
    %34 = arith.cmpi slt, %29, %33 : vector<10x10xi32>
    %35 = arith.andi %32, %34 : vector<10x10xi1>
    %c0_i32_14 = arith.constant 0 : i32
    %36 = vector.broadcast %c0_i32_14 : i32 to vector<10x10xi32>
    %37 = arith.cmpi sge, %30, %36 : vector<10x10xi32>
    %c5_i32_15 = arith.constant 5 : i32
    %38 = vector.broadcast %c5_i32_15 : i32 to vector<10x10xi32>
    %39 = arith.cmpi slt, %30, %38 : vector<10x10xi32>
    %40 = arith.andi %37, %39 : vector<10x10xi1>
    %41 = arith.andi %35, %40 : vector<10x10xi1>
    %c5_i32_16 = arith.constant 5 : i32
    %42 = vector.broadcast %c5_i32_16 : i32 to vector<10x10xi32>
    %43 = arith.cmpi sge, %29, %42 : vector<10x10xi32>
    %c10_i32 = arith.constant 10 : i32
    %44 = vector.broadcast %c10_i32 : i32 to vector<10x10xi32>
    %45 = arith.cmpi slt, %29, %44 : vector<10x10xi32>
    %46 = arith.andi %43, %45 : vector<10x10xi1>
    %c5_i32_17 = arith.constant 5 : i32
    %47 = vector.broadcast %c5_i32_17 : i32 to vector<10x10xi32>
    %48 = arith.cmpi sge, %30, %47 : vector<10x10xi32>
    %c10_i32_18 = arith.constant 10 : i32
    %49 = vector.broadcast %c10_i32_18 : i32 to vector<10x10xi32>
    %50 = arith.cmpi slt, %30, %49 : vector<10x10xi32>
    %51 = arith.andi %48, %50 : vector<10x10xi1>
    %52 = arith.andi %46, %51 : vector<10x10xi1>
    %53 = arith.ori %41, %52 : vector<10x10xi1>
    %cst_19 = arith.constant 0.000000e+00 : f32
    %cst_20 = arith.constant -1.000000e+09 : f32
    %54 = vector.broadcast %cst_19 : f32 to vector<10x10xf32>
    %55 = vector.broadcast %cst_20 : f32 to vector<10x10xf32>
    %56 = arith.select %53, %54, %55 : vector<10x10xi1>, vector<10x10xf32>
    %c0_21 = arith.constant 0 : index
    %c0_22 = arith.constant 0 : index
    %c0_23 = arith.constant 0 : index
    %57 = vector.load %arg5[%c0_21, %c0_22, %c0_23] : memref<2x1x128xf32, #tpu.memory_space<vmem>>, vector<1x1x128xf32>
    %58 = vector.shape_cast %57 : vector<1x1x128xf32> to vector<1x128xf32>
    %c0_24 = arith.constant 0 : index
    %c0_25 = arith.constant 0 : index
    %c0_26 = arith.constant 0 : index
    %59 = vector.load %arg6[%c0_24, %c0_25, %c0_26] : memref<2x1x128xf32, #tpu.memory_space<vmem>>, vector<1x1x128xf32>
    %60 = vector.shape_cast %59 : vector<1x1x128xf32> to vector<1x128xf32>
    %c0_27 = arith.constant 0 : index
    %c0_28 = arith.constant 0 : index
    %c0_29 = arith.constant 0 : index
    %61 = vector.load %arg7[%c0_27, %c0_28, %c0_29] : memref<2x128x384xf32, #tpu.memory_space<vmem>>, vector<1x128x384xf32>
    %62 = vector.shape_cast %61 : vector<1x128x384xf32> to vector<128x384xf32>
    %c0_30 = arith.constant 0 : index
    %c0_31 = arith.constant 0 : index
    %c0_32 = arith.constant 0 : index
    %63 = vector.load %arg8[%c0_30, %c0_31, %c0_32] : memref<2x1x384xf32, #tpu.memory_space<vmem>>, vector<1x1x384xf32>
    %64 = vector.shape_cast %63 : vector<1x1x384xf32> to vector<1x384xf32>
    %c0_33 = arith.constant 0 : index
    %c0_34 = arith.constant 0 : index
    %c0_35 = arith.constant 0 : index
    %65 = vector.load %arg9[%c0_33, %c0_34, %c0_35] : memref<2x128x128xf32, #tpu.memory_space<vmem>>, vector<1x128x128xf32>
    %66 = vector.shape_cast %65 : vector<1x128x128xf32> to vector<128x128xf32>
    %c0_36 = arith.constant 0 : index
    %c0_37 = arith.constant 0 : index
    %c0_38 = arith.constant 0 : index
    %67 = vector.load %arg10[%c0_36, %c0_37, %c0_38] : memref<2x1x128xf32, #tpu.memory_space<vmem>>, vector<1x1x128xf32>
    %68 = vector.shape_cast %67 : vector<1x1x128xf32> to vector<1x128xf32>
    %c0_39 = arith.constant 0 : index
    %c0_40 = arith.constant 0 : index
    %c0_41 = arith.constant 0 : index
    %69 = vector.load %arg11[%c0_39, %c0_40, %c0_41] : memref<2x1x128xf32, #tpu.memory_space<vmem>>, vector<1x1x128xf32>
    %70 = vector.shape_cast %69 : vector<1x1x128xf32> to vector<1x128xf32>
    %c0_42 = arith.constant 0 : index
    %c0_43 = arith.constant 0 : index
    %c0_44 = arith.constant 0 : index
    %71 = vector.load %arg12[%c0_42, %c0_43, %c0_44] : memref<2x1x128xf32, #tpu.memory_space<vmem>>, vector<1x1x128xf32>
    %72 = vector.shape_cast %71 : vector<1x1x128xf32> to vector<1x128xf32>
    %c0_45 = arith.constant 0 : index
    %c0_46 = arith.constant 0 : index
    %c0_47 = arith.constant 0 : index
    %73 = vector.load %arg13[%c0_45, %c0_46, %c0_47] : memref<2x128x512xf32, #tpu.memory_space<vmem>>, vector<1x128x512xf32>
    %74 = vector.shape_cast %73 : vector<1x128x512xf32> to vector<128x512xf32>
    %c0_48 = arith.constant 0 : index
    %c0_49 = arith.constant 0 : index
    %c0_50 = arith.constant 0 : index
    %75 = vector.load %arg14[%c0_48, %c0_49, %c0_50] : memref<2x1x512xf32, #tpu.memory_space<vmem>>, vector<1x1x512xf32>
    %76 = vector.shape_cast %75 : vector<1x1x512xf32> to vector<1x512xf32>
    %c0_51 = arith.constant 0 : index
    %c0_52 = arith.constant 0 : index
    %c0_53 = arith.constant 0 : index
    %77 = vector.load %arg15[%c0_51, %c0_52, %c0_53] : memref<2x512x128xf32, #tpu.memory_space<vmem>>, vector<1x512x128xf32>
    %78 = vector.shape_cast %77 : vector<1x512x128xf32> to vector<512x128xf32>
    %c0_54 = arith.constant 0 : index
    %c0_55 = arith.constant 0 : index
    %c0_56 = arith.constant 0 : index
    %79 = vector.load %arg16[%c0_54, %c0_55, %c0_56] : memref<2x1x128xf32, #tpu.memory_space<vmem>>, vector<1x1x128xf32>
    %80 = vector.shape_cast %79 : vector<1x1x128xf32> to vector<1x128xf32>
    %cst_57 = arith.constant dense<0.000000e+00> : vector<10xf32>
    %81 = vector.multi_reduction <add>, %28, %cst_57 [1] : vector<10x128xf32> to vector<10xf32>
    %82 = vector.shape_cast %81 : vector<10xf32> to vector<10x1xf32>
    %cst_58 = arith.constant 1.280000e+02 : f32
    %83 = vector.broadcast %cst_58 : f32 to vector<10x1xf32>
    %84 = arith.divf %82, %83 : vector<10x1xf32>
    %85 = vector.broadcast %84 : vector<10x1xf32> to vector<10x128xf32>
    %86 = arith.subf %28, %85 : vector<10x128xf32>
    %87 = arith.mulf %86, %86 : vector<10x128xf32>
    %cst_59 = arith.constant dense<0.000000e+00> : vector<10xf32>
    %88 = vector.multi_reduction <add>, %87, %cst_59 [1] : vector<10x128xf32> to vector<10xf32>
    %89 = vector.shape_cast %88 : vector<10xf32> to vector<10x1xf32>
    %cst_60 = arith.constant 1.280000e+02 : f32
    %90 = vector.broadcast %cst_60 : f32 to vector<10x1xf32>
    %91 = arith.divf %89, %90 : vector<10x1xf32>
    %cst_61 = arith.constant 9.99999974E-6 : f32
    %92 = vector.broadcast %cst_61 : f32 to vector<10x1xf32>
    %93 = arith.addf %91, %92 : vector<10x1xf32>
    %94 = math.rsqrt %93 : vector<10x1xf32>
    %95 = vector.broadcast %94 : vector<10x1xf32> to vector<10x128xf32>
    %96 = arith.mulf %86, %95 : vector<10x128xf32>
    %97 = vector.broadcast %58 : vector<1x128xf32> to vector<10x128xf32>
    %98 = arith.mulf %96, %97 : vector<10x128xf32>
    %99 = vector.broadcast %60 : vector<1x128xf32> to vector<10x128xf32>
    %100 = arith.addf %98, %99 : vector<10x128xf32>
    %101 = arith.truncf %100 : vector<10x128xf32> to vector<10x128xbf16>
    %102 = arith.truncf %62 : vector<128x384xf32> to vector<128x384xbf16>
    %cst_62 = arith.constant dense<0.000000e+00> : vector<10x384xf32>
    %103 = tpu.matmul %101, %102, %cst_62 {dimension_numbers = #tpu.dot_dimension_numbers<[1], [0], [0], [1], [0, 0, 1, 1], [], []>} : vector<10x128xbf16>, vector<128x384xbf16>, vector<10x384xf32> -> vector<10x384xf32>
    %104 = vector.broadcast %64 : vector<1x384xf32> to vector<10x384xf32>
    %105 = arith.addf %103, %104 : vector<10x384xf32>
    %106 = vector.extract_strided_slice %105 {offsets = [0, 0], sizes = [10, 32], strides = [1, 1]} : vector<10x384xf32> to vector<10x32xf32>
    %cst_63 = arith.constant 0.176776692 : f32
    %107 = vector.broadcast %cst_63 : f32 to vector<10x32xf32>
    %108 = arith.mulf %106, %107 : vector<10x32xf32>
    %109 = vector.extract_strided_slice %105 {offsets = [0, 128], sizes = [10, 32], strides = [1, 1]} : vector<10x384xf32> to vector<10x32xf32>
    %110 = vector.extract_strided_slice %105 {offsets = [0, 256], sizes = [10, 32], strides = [1, 1]} : vector<10x384xf32> to vector<10x32xf32>
    %111 = arith.truncf %108 : vector<10x32xf32> to vector<10x32xbf16>
    %112 = arith.truncf %109 : vector<10x32xf32> to vector<10x32xbf16>
    %cst_64 = arith.constant dense<0.000000e+00> : vector<10x10xf32>
    %113 = tpu.matmul %111, %112, %cst_64 {dimension_numbers = #tpu.dot_dimension_numbers<[1], [1], [0], [0], [0, 0, 1, 0], [], []>} : vector<10x32xbf16>, vector<10x32xbf16>, vector<10x10xf32> -> vector<10x10xf32>
    %114 = arith.addf %113, %56 : vector<10x10xf32>
    %cst_65 = arith.constant dense<0xFF800000> : vector<10xf32>
    %115 = vector.multi_reduction <maximumf>, %114, %cst_65 [1] : vector<10x10xf32> to vector<10xf32>
    %116 = vector.shape_cast %115 : vector<10xf32> to vector<10x1xf32>
    %117 = vector.broadcast %116 : vector<10x1xf32> to vector<10x10xf32>
    %118 = arith.subf %114, %117 : vector<10x10xf32>
    %119 = math.exp %118 : vector<10x10xf32>
    %cst_66 = arith.constant dense<0.000000e+00> : vector<10xf32>
    %120 = vector.multi_reduction <add>, %119, %cst_66 [1] : vector<10x10xf32> to vector<10xf32>
    %121 = vector.shape_cast %120 : vector<10xf32> to vector<10x1xf32>
    %122 = tpu.reciprocal %121 {approx = true} : vector<10x1xf32> -> vector<10x1xf32>
    %123 = vector.broadcast %122 : vector<10x1xf32> to vector<10x10xf32>
    %124 = arith.mulf %119, %123 : vector<10x10xf32>
    %125 = arith.truncf %124 : vector<10x10xf32> to vector<10x10xbf16>
    %126 = arith.truncf %110 : vector<10x32xf32> to vector<10x32xbf16>
    %cst_67 = arith.constant dense<0.000000e+00> : vector<10x32xf32>
    %127 = tpu.matmul %125, %126, %cst_67 {dimension_numbers = #tpu.dot_dimension_numbers<[1], [0], [0], [1], [0, 0, 1, 1], [], []>} : vector<10x10xbf16>, vector<10x32xbf16>, vector<10x32xf32> -> vector<10x32xf32>
    %128 = vector.extract_strided_slice %66 {offsets = [0, 0], sizes = [32, 128], strides = [1, 1]} : vector<128x128xf32> to vector<32x128xf32>
    %129 = arith.truncf %127 : vector<10x32xf32> to vector<10x32xbf16>
    %130 = arith.truncf %128 : vector<32x128xf32> to vector<32x128xbf16>
    %cst_68 = arith.constant dense<0.000000e+00> : vector<10x128xf32>
    %131 = tpu.matmul %129, %130, %cst_68 {dimension_numbers = #tpu.dot_dimension_numbers<[1], [0], [0], [1], [0, 0, 1, 1], [], []>} : vector<10x32xbf16>, vector<32x128xbf16>, vector<10x128xf32> -> vector<10x128xf32>
    %132 = vector.extract_strided_slice %105 {offsets = [0, 32], sizes = [10, 32], strides = [1, 1]} : vector<10x384xf32> to vector<10x32xf32>
    %cst_69 = arith.constant 0.176776692 : f32
    %133 = vector.broadcast %cst_69 : f32 to vector<10x32xf32>
    %134 = arith.mulf %132, %133 : vector<10x32xf32>
    %135 = vector.extract_strided_slice %105 {offsets = [0, 160], sizes = [10, 32], strides = [1, 1]} : vector<10x384xf32> to vector<10x32xf32>
    %136 = vector.extract_strided_slice %105 {offsets = [0, 288], sizes = [10, 32], strides = [1, 1]} : vector<10x384xf32> to vector<10x32xf32>
    %137 = arith.truncf %134 : vector<10x32xf32> to vector<10x32xbf16>
    %138 = arith.truncf %135 : vector<10x32xf32> to vector<10x32xbf16>
    %cst_70 = arith.constant dense<0.000000e+00> : vector<10x10xf32>
    %139 = tpu.matmul %137, %138, %cst_70 {dimension_numbers = #tpu.dot_dimension_numbers<[1], [1], [0], [0], [0, 0, 1, 0], [], []>} : vector<10x32xbf16>, vector<10x32xbf16>, vector<10x10xf32> -> vector<10x10xf32>
    %140 = arith.addf %139, %56 : vector<10x10xf32>
    %cst_71 = arith.constant dense<0xFF800000> : vector<10xf32>
    %141 = vector.multi_reduction <maximumf>, %140, %cst_71 [1] : vector<10x10xf32> to vector<10xf32>
    %142 = vector.shape_cast %141 : vector<10xf32> to vector<10x1xf32>
    %143 = vector.broadcast %142 : vector<10x1xf32> to vector<10x10xf32>
    %144 = arith.subf %140, %143 : vector<10x10xf32>
    %145 = math.exp %144 : vector<10x10xf32>
    %cst_72 = arith.constant dense<0.000000e+00> : vector<10xf32>
    %146 = vector.multi_reduction <add>, %145, %cst_72 [1] : vector<10x10xf32> to vector<10xf32>
    %147 = vector.shape_cast %146 : vector<10xf32> to vector<10x1xf32>
    %148 = tpu.reciprocal %147 {approx = true} : vector<10x1xf32> -> vector<10x1xf32>
    %149 = vector.broadcast %148 : vector<10x1xf32> to vector<10x10xf32>
    %150 = arith.mulf %145, %149 : vector<10x10xf32>
    %151 = arith.truncf %150 : vector<10x10xf32> to vector<10x10xbf16>
    %152 = arith.truncf %136 : vector<10x32xf32> to vector<10x32xbf16>
    %cst_73 = arith.constant dense<0.000000e+00> : vector<10x32xf32>
    %153 = tpu.matmul %151, %152, %cst_73 {dimension_numbers = #tpu.dot_dimension_numbers<[1], [0], [0], [1], [0, 0, 1, 1], [], []>} : vector<10x10xbf16>, vector<10x32xbf16>, vector<10x32xf32> -> vector<10x32xf32>
    %154 = vector.extract_strided_slice %66 {offsets = [32, 0], sizes = [32, 128], strides = [1, 1]} : vector<128x128xf32> to vector<32x128xf32>
    %155 = arith.truncf %153 : vector<10x32xf32> to vector<10x32xbf16>
    %156 = arith.truncf %154 : vector<32x128xf32> to vector<32x128xbf16>
    %cst_74 = arith.constant dense<0.000000e+00> : vector<10x128xf32>
    %157 = tpu.matmul %155, %156, %cst_74 {dimension_numbers = #tpu.dot_dimension_numbers<[1], [0], [0], [1], [0, 0, 1, 1], [], []>} : vector<10x32xbf16>, vector<32x128xbf16>, vector<10x128xf32> -> vector<10x128xf32>
    %158 = arith.addf %131, %157 : vector<10x128xf32>
    %159 = vector.extract_strided_slice %105 {offsets = [0, 64], sizes = [10, 32], strides = [1, 1]} : vector<10x384xf32> to vector<10x32xf32>
    %cst_75 = arith.constant 0.176776692 : f32
    %160 = vector.broadcast %cst_75 : f32 to vector<10x32xf32>
    %161 = arith.mulf %159, %160 : vector<10x32xf32>
    %162 = vector.extract_strided_slice %105 {offsets = [0, 192], sizes = [10, 32], strides = [1, 1]} : vector<10x384xf32> to vector<10x32xf32>
    %163 = vector.extract_strided_slice %105 {offsets = [0, 320], sizes = [10, 32], strides = [1, 1]} : vector<10x384xf32> to vector<10x32xf32>
    %164 = arith.truncf %161 : vector<10x32xf32> to vector<10x32xbf16>
    %165 = arith.truncf %162 : vector<10x32xf32> to vector<10x32xbf16>
    %cst_76 = arith.constant dense<0.000000e+00> : vector<10x10xf32>
    %166 = tpu.matmul %164, %165, %cst_76 {dimension_numbers = #tpu.dot_dimension_numbers<[1], [1], [0], [0], [0, 0, 1, 0], [], []>} : vector<10x32xbf16>, vector<10x32xbf16>, vector<10x10xf32> -> vector<10x10xf32>
    %167 = arith.addf %166, %56 : vector<10x10xf32>
    %cst_77 = arith.constant dense<0xFF800000> : vector<10xf32>
    %168 = vector.multi_reduction <maximumf>, %167, %cst_77 [1] : vector<10x10xf32> to vector<10xf32>
    %169 = vector.shape_cast %168 : vector<10xf32> to vector<10x1xf32>
    %170 = vector.broadcast %169 : vector<10x1xf32> to vector<10x10xf32>
    %171 = arith.subf %167, %170 : vector<10x10xf32>
    %172 = math.exp %171 : vector<10x10xf32>
    %cst_78 = arith.constant dense<0.000000e+00> : vector<10xf32>
    %173 = vector.multi_reduction <add>, %172, %cst_78 [1] : vector<10x10xf32> to vector<10xf32>
    %174 = vector.shape_cast %173 : vector<10xf32> to vector<10x1xf32>
    %175 = tpu.reciprocal %174 {approx = true} : vector<10x1xf32> -> vector<10x1xf32>
    %176 = vector.broadcast %175 : vector<10x1xf32> to vector<10x10xf32>
    %177 = arith.mulf %172, %176 : vector<10x10xf32>
    %178 = arith.truncf %177 : vector<10x10xf32> to vector<10x10xbf16>
    %179 = arith.truncf %163 : vector<10x32xf32> to vector<10x32xbf16>
    %cst_79 = arith.constant dense<0.000000e+00> : vector<10x32xf32>
    %180 = tpu.matmul %178, %179, %cst_79 {dimension_numbers = #tpu.dot_dimension_numbers<[1], [0], [0], [1], [0, 0, 1, 1], [], []>} : vector<10x10xbf16>, vector<10x32xbf16>, vector<10x32xf32> -> vector<10x32xf32>
    %181 = vector.extract_strided_slice %66 {offsets = [64, 0], sizes = [32, 128], strides = [1, 1]} : vector<128x128xf32> to vector<32x128xf32>
    %182 = arith.truncf %180 : vector<10x32xf32> to vector<10x32xbf16>
    %183 = arith.truncf %181 : vector<32x128xf32> to vector<32x128xbf16>
    %cst_80 = arith.constant dense<0.000000e+00> : vector<10x128xf32>
    %184 = tpu.matmul %182, %183, %cst_80 {dimension_numbers = #tpu.dot_dimension_numbers<[1], [0], [0], [1], [0, 0, 1, 1], [], []>} : vector<10x32xbf16>, vector<32x128xbf16>, vector<10x128xf32> -> vector<10x128xf32>
    %185 = arith.addf %158, %184 : vector<10x128xf32>
    %186 = vector.extract_strided_slice %105 {offsets = [0, 96], sizes = [10, 32], strides = [1, 1]} : vector<10x384xf32> to vector<10x32xf32>
    %cst_81 = arith.constant 0.176776692 : f32
    %187 = vector.broadcast %cst_81 : f32 to vector<10x32xf32>
    %188 = arith.mulf %186, %187 : vector<10x32xf32>
    %189 = vector.extract_strided_slice %105 {offsets = [0, 224], sizes = [10, 32], strides = [1, 1]} : vector<10x384xf32> to vector<10x32xf32>
    %190 = vector.extract_strided_slice %105 {offsets = [0, 352], sizes = [10, 32], strides = [1, 1]} : vector<10x384xf32> to vector<10x32xf32>
    %191 = arith.truncf %188 : vector<10x32xf32> to vector<10x32xbf16>
    %192 = arith.truncf %189 : vector<10x32xf32> to vector<10x32xbf16>
    %cst_82 = arith.constant dense<0.000000e+00> : vector<10x10xf32>
    %193 = tpu.matmul %191, %192, %cst_82 {dimension_numbers = #tpu.dot_dimension_numbers<[1], [1], [0], [0], [0, 0, 1, 0], [], []>} : vector<10x32xbf16>, vector<10x32xbf16>, vector<10x10xf32> -> vector<10x10xf32>
    %194 = arith.addf %193, %56 : vector<10x10xf32>
    %cst_83 = arith.constant dense<0xFF800000> : vector<10xf32>
    %195 = vector.multi_reduction <maximumf>, %194, %cst_83 [1] : vector<10x10xf32> to vector<10xf32>
    %196 = vector.shape_cast %195 : vector<10xf32> to vector<10x1xf32>
    %197 = vector.broadcast %196 : vector<10x1xf32> to vector<10x10xf32>
    %198 = arith.subf %194, %197 : vector<10x10xf32>
    %199 = math.exp %198 : vector<10x10xf32>
    %cst_84 = arith.constant dense<0.000000e+00> : vector<10xf32>
    %200 = vector.multi_reduction <add>, %199, %cst_84 [1] : vector<10x10xf32> to vector<10xf32>
    %201 = vector.shape_cast %200 : vector<10xf32> to vector<10x1xf32>
    %202 = tpu.reciprocal %201 {approx = true} : vector<10x1xf32> -> vector<10x1xf32>
    %203 = vector.broadcast %202 : vector<10x1xf32> to vector<10x10xf32>
    %204 = arith.mulf %199, %203 : vector<10x10xf32>
    %205 = arith.truncf %204 : vector<10x10xf32> to vector<10x10xbf16>
    %206 = arith.truncf %190 : vector<10x32xf32> to vector<10x32xbf16>
    %cst_85 = arith.constant dense<0.000000e+00> : vector<10x32xf32>
    %207 = tpu.matmul %205, %206, %cst_85 {dimension_numbers = #tpu.dot_dimension_numbers<[1], [0], [0], [1], [0, 0, 1, 1], [], []>} : vector<10x10xbf16>, vector<10x32xbf16>, vector<10x32xf32> -> vector<10x32xf32>
    %208 = vector.extract_strided_slice %66 {offsets = [96, 0], sizes = [32, 128], strides = [1, 1]} : vector<128x128xf32> to vector<32x128xf32>
    %209 = arith.truncf %207 : vector<10x32xf32> to vector<10x32xbf16>
    %210 = arith.truncf %208 : vector<32x128xf32> to vector<32x128xbf16>
    %cst_86 = arith.constant dense<0.000000e+00> : vector<10x128xf32>
    %211 = tpu.matmul %209, %210, %cst_86 {dimension_numbers = #tpu.dot_dimension_numbers<[1], [0], [0], [1], [0, 0, 1, 1], [], []>} : vector<10x32xbf16>, vector<32x128xbf16>, vector<10x128xf32> -> vector<10x128xf32>
    %212 = arith.addf %185, %211 : vector<10x128xf32>
    %213 = arith.addf %28, %212 : vector<10x128xf32>
    %214 = vector.broadcast %68 : vector<1x128xf32> to vector<10x128xf32>
    %215 = arith.addf %213, %214 : vector<10x128xf32>
    %cst_87 = arith.constant dense<0.000000e+00> : vector<10xf32>
    %216 = vector.multi_reduction <add>, %215, %cst_87 [1] : vector<10x128xf32> to vector<10xf32>
    %217 = vector.shape_cast %216 : vector<10xf32> to vector<10x1xf32>
    %cst_88 = arith.constant 1.280000e+02 : f32
    %218 = vector.broadcast %cst_88 : f32 to vector<10x1xf32>
    %219 = arith.divf %217, %218 : vector<10x1xf32>
    %220 = vector.broadcast %219 : vector<10x1xf32> to vector<10x128xf32>
    %221 = arith.subf %215, %220 : vector<10x128xf32>
    %222 = arith.mulf %221, %221 : vector<10x128xf32>
    %cst_89 = arith.constant dense<0.000000e+00> : vector<10xf32>
    %223 = vector.multi_reduction <add>, %222, %cst_89 [1] : vector<10x128xf32> to vector<10xf32>
    %224 = vector.shape_cast %223 : vector<10xf32> to vector<10x1xf32>
    %cst_90 = arith.constant 1.280000e+02 : f32
    %225 = vector.broadcast %cst_90 : f32 to vector<10x1xf32>
    %226 = arith.divf %224, %225 : vector<10x1xf32>
    %cst_91 = arith.constant 9.99999974E-6 : f32
    %227 = vector.broadcast %cst_91 : f32 to vector<10x1xf32>
    %228 = arith.addf %226, %227 : vector<10x1xf32>
    %229 = math.rsqrt %228 : vector<10x1xf32>
    %230 = vector.broadcast %229 : vector<10x1xf32> to vector<10x128xf32>
    %231 = arith.mulf %221, %230 : vector<10x128xf32>
    %232 = vector.broadcast %70 : vector<1x128xf32> to vector<10x128xf32>
    %233 = arith.mulf %231, %232 : vector<10x128xf32>
    %234 = vector.broadcast %72 : vector<1x128xf32> to vector<10x128xf32>
    %235 = arith.addf %233, %234 : vector<10x128xf32>
    %236 = arith.truncf %235 : vector<10x128xf32> to vector<10x128xbf16>
    %237 = arith.truncf %74 : vector<128x512xf32> to vector<128x512xbf16>
    %cst_92 = arith.constant dense<0.000000e+00> : vector<10x512xf32>
    %238 = tpu.matmul %236, %237, %cst_92 {dimension_numbers = #tpu.dot_dimension_numbers<[1], [0], [0], [1], [0, 0, 1, 1], [], []>} : vector<10x128xbf16>, vector<128x512xbf16>, vector<10x512xf32> -> vector<10x512xf32>
    %239 = vector.broadcast %76 : vector<1x512xf32> to vector<10x512xf32>
    %240 = arith.addf %238, %239 : vector<10x512xf32>
    %241 = arith.mulf %240, %240 : vector<10x512xf32>
    %242 = arith.mulf %240, %241 : vector<10x512xf32>
    %cst_93 = arith.constant 4.471500e-02 : f32
    %243 = vector.broadcast %cst_93 : f32 to vector<10x512xf32>
    %244 = arith.mulf %243, %242 : vector<10x512xf32>
    %245 = arith.addf %240, %244 : vector<10x512xf32>
    %cst_94 = arith.constant 0.797884583 : f32
    %246 = vector.broadcast %cst_94 : f32 to vector<10x512xf32>
    %247 = arith.mulf %246, %245 : vector<10x512xf32>
    %248 = math.tanh %247 : vector<10x512xf32>
    %cst_95 = arith.constant 1.000000e+00 : f32
    %249 = vector.broadcast %cst_95 : f32 to vector<10x512xf32>
    %250 = arith.addf %249, %248 : vector<10x512xf32>
    %cst_96 = arith.constant 5.000000e-01 : f32
    %251 = vector.broadcast %cst_96 : f32 to vector<10x512xf32>
    %252 = arith.mulf %251, %250 : vector<10x512xf32>
    %253 = arith.mulf %240, %252 : vector<10x512xf32>
    %254 = arith.truncf %253 : vector<10x512xf32> to vector<10x512xbf16>
    %255 = arith.truncf %78 : vector<512x128xf32> to vector<512x128xbf16>
    %cst_97 = arith.constant dense<0.000000e+00> : vector<10x128xf32>
    %256 = tpu.matmul %254, %255, %cst_97 {dimension_numbers = #tpu.dot_dimension_numbers<[1], [0], [0], [1], [0, 0, 1, 1], [], []>} : vector<10x512xbf16>, vector<512x128xbf16>, vector<10x128xf32> -> vector<10x128xf32>
    %257 = vector.broadcast %80 : vector<1x128xf32> to vector<10x128xf32>
    %258 = arith.addf %256, %257 : vector<10x128xf32>
    %259 = arith.addf %215, %258 : vector<10x128xf32>
    %c1 = arith.constant 1 : index
    %c0_98 = arith.constant 0 : index
    %c0_99 = arith.constant 0 : index
    %260 = vector.load %arg5[%c1, %c0_98, %c0_99] : memref<2x1x128xf32, #tpu.memory_space<vmem>>, vector<1x1x128xf32>
    %261 = vector.shape_cast %260 : vector<1x1x128xf32> to vector<1x128xf32>
    %c1_100 = arith.constant 1 : index
    %c0_101 = arith.constant 0 : index
    %c0_102 = arith.constant 0 : index
    %262 = vector.load %arg6[%c1_100, %c0_101, %c0_102] : memref<2x1x128xf32, #tpu.memory_space<vmem>>, vector<1x1x128xf32>
    %263 = vector.shape_cast %262 : vector<1x1x128xf32> to vector<1x128xf32>
    %c1_103 = arith.constant 1 : index
    %c0_104 = arith.constant 0 : index
    %c0_105 = arith.constant 0 : index
    %264 = vector.load %arg7[%c1_103, %c0_104, %c0_105] : memref<2x128x384xf32, #tpu.memory_space<vmem>>, vector<1x128x384xf32>
    %265 = vector.shape_cast %264 : vector<1x128x384xf32> to vector<128x384xf32>
    %c1_106 = arith.constant 1 : index
    %c0_107 = arith.constant 0 : index
    %c0_108 = arith.constant 0 : index
    %266 = vector.load %arg8[%c1_106, %c0_107, %c0_108] : memref<2x1x384xf32, #tpu.memory_space<vmem>>, vector<1x1x384xf32>
    %267 = vector.shape_cast %266 : vector<1x1x384xf32> to vector<1x384xf32>
    %c1_109 = arith.constant 1 : index
    %c0_110 = arith.constant 0 : index
    %c0_111 = arith.constant 0 : index
    %268 = vector.load %arg9[%c1_109, %c0_110, %c0_111] : memref<2x128x128xf32, #tpu.memory_space<vmem>>, vector<1x128x128xf32>
    %269 = vector.shape_cast %268 : vector<1x128x128xf32> to vector<128x128xf32>
    %c1_112 = arith.constant 1 : index
    %c0_113 = arith.constant 0 : index
    %c0_114 = arith.constant 0 : index
    %270 = vector.load %arg10[%c1_112, %c0_113, %c0_114] : memref<2x1x128xf32, #tpu.memory_space<vmem>>, vector<1x1x128xf32>
    %271 = vector.shape_cast %270 : vector<1x1x128xf32> to vector<1x128xf32>
    %c1_115 = arith.constant 1 : index
    %c0_116 = arith.constant 0 : index
    %c0_117 = arith.constant 0 : index
    %272 = vector.load %arg11[%c1_115, %c0_116, %c0_117] : memref<2x1x128xf32, #tpu.memory_space<vmem>>, vector<1x1x128xf32>
    %273 = vector.shape_cast %272 : vector<1x1x128xf32> to vector<1x128xf32>
    %c1_118 = arith.constant 1 : index
    %c0_119 = arith.constant 0 : index
    %c0_120 = arith.constant 0 : index
    %274 = vector.load %arg12[%c1_118, %c0_119, %c0_120] : memref<2x1x128xf32, #tpu.memory_space<vmem>>, vector<1x1x128xf32>
    %275 = vector.shape_cast %274 : vector<1x1x128xf32> to vector<1x128xf32>
    %c1_121 = arith.constant 1 : index
    %c0_122 = arith.constant 0 : index
    %c0_123 = arith.constant 0 : index
    %276 = vector.load %arg13[%c1_121, %c0_122, %c0_123] : memref<2x128x512xf32, #tpu.memory_space<vmem>>, vector<1x128x512xf32>
    %277 = vector.shape_cast %276 : vector<1x128x512xf32> to vector<128x512xf32>
    %c1_124 = arith.constant 1 : index
    %c0_125 = arith.constant 0 : index
    %c0_126 = arith.constant 0 : index
    %278 = vector.load %arg14[%c1_124, %c0_125, %c0_126] : memref<2x1x512xf32, #tpu.memory_space<vmem>>, vector<1x1x512xf32>
    %279 = vector.shape_cast %278 : vector<1x1x512xf32> to vector<1x512xf32>
    %c1_127 = arith.constant 1 : index
    %c0_128 = arith.constant 0 : index
    %c0_129 = arith.constant 0 : index
    %280 = vector.load %arg15[%c1_127, %c0_128, %c0_129] : memref<2x512x128xf32, #tpu.memory_space<vmem>>, vector<1x512x128xf32>
    %281 = vector.shape_cast %280 : vector<1x512x128xf32> to vector<512x128xf32>
    %c1_130 = arith.constant 1 : index
    %c0_131 = arith.constant 0 : index
    %c0_132 = arith.constant 0 : index
    %282 = vector.load %arg16[%c1_130, %c0_131, %c0_132] : memref<2x1x128xf32, #tpu.memory_space<vmem>>, vector<1x1x128xf32>
    %283 = vector.shape_cast %282 : vector<1x1x128xf32> to vector<1x128xf32>
    %cst_133 = arith.constant dense<0.000000e+00> : vector<10xf32>
    %284 = vector.multi_reduction <add>, %259, %cst_133 [1] : vector<10x128xf32> to vector<10xf32>
    %285 = vector.shape_cast %284 : vector<10xf32> to vector<10x1xf32>
    %cst_134 = arith.constant 1.280000e+02 : f32
    %286 = vector.broadcast %cst_134 : f32 to vector<10x1xf32>
    %287 = arith.divf %285, %286 : vector<10x1xf32>
    %288 = vector.broadcast %287 : vector<10x1xf32> to vector<10x128xf32>
    %289 = arith.subf %259, %288 : vector<10x128xf32>
    %290 = arith.mulf %289, %289 : vector<10x128xf32>
    %cst_135 = arith.constant dense<0.000000e+00> : vector<10xf32>
    %291 = vector.multi_reduction <add>, %290, %cst_135 [1] : vector<10x128xf32> to vector<10xf32>
    %292 = vector.shape_cast %291 : vector<10xf32> to vector<10x1xf32>
    %cst_136 = arith.constant 1.280000e+02 : f32
    %293 = vector.broadcast %cst_136 : f32 to vector<10x1xf32>
    %294 = arith.divf %292, %293 : vector<10x1xf32>
    %cst_137 = arith.constant 9.99999974E-6 : f32
    %295 = vector.broadcast %cst_137 : f32 to vector<10x1xf32>
    %296 = arith.addf %294, %295 : vector<10x1xf32>
    %297 = math.rsqrt %296 : vector<10x1xf32>
    %298 = vector.broadcast %297 : vector<10x1xf32> to vector<10x128xf32>
    %299 = arith.mulf %289, %298 : vector<10x128xf32>
    %300 = vector.broadcast %261 : vector<1x128xf32> to vector<10x128xf32>
    %301 = arith.mulf %299, %300 : vector<10x128xf32>
    %302 = vector.broadcast %263 : vector<1x128xf32> to vector<10x128xf32>
    %303 = arith.addf %301, %302 : vector<10x128xf32>
    %304 = arith.truncf %303 : vector<10x128xf32> to vector<10x128xbf16>
    %305 = arith.truncf %265 : vector<128x384xf32> to vector<128x384xbf16>
    %cst_138 = arith.constant dense<0.000000e+00> : vector<10x384xf32>
    %306 = tpu.matmul %304, %305, %cst_138 {dimension_numbers = #tpu.dot_dimension_numbers<[1], [0], [0], [1], [0, 0, 1, 1], [], []>} : vector<10x128xbf16>, vector<128x384xbf16>, vector<10x384xf32> -> vector<10x384xf32>
    %307 = vector.broadcast %267 : vector<1x384xf32> to vector<10x384xf32>
    %308 = arith.addf %306, %307 : vector<10x384xf32>
    %309 = vector.extract_strided_slice %308 {offsets = [0, 0], sizes = [10, 32], strides = [1, 1]} : vector<10x384xf32> to vector<10x32xf32>
    %cst_139 = arith.constant 0.176776692 : f32
    %310 = vector.broadcast %cst_139 : f32 to vector<10x32xf32>
    %311 = arith.mulf %309, %310 : vector<10x32xf32>
    %312 = vector.extract_strided_slice %308 {offsets = [0, 128], sizes = [10, 32], strides = [1, 1]} : vector<10x384xf32> to vector<10x32xf32>
    %313 = vector.extract_strided_slice %308 {offsets = [0, 256], sizes = [10, 32], strides = [1, 1]} : vector<10x384xf32> to vector<10x32xf32>
    %314 = arith.truncf %311 : vector<10x32xf32> to vector<10x32xbf16>
    %315 = arith.truncf %312 : vector<10x32xf32> to vector<10x32xbf16>
    %cst_140 = arith.constant dense<0.000000e+00> : vector<10x10xf32>
    %316 = tpu.matmul %314, %315, %cst_140 {dimension_numbers = #tpu.dot_dimension_numbers<[1], [1], [0], [0], [0, 0, 1, 0], [], []>} : vector<10x32xbf16>, vector<10x32xbf16>, vector<10x10xf32> -> vector<10x10xf32>
    %317 = arith.addf %316, %56 : vector<10x10xf32>
    %cst_141 = arith.constant dense<0xFF800000> : vector<10xf32>
    %318 = vector.multi_reduction <maximumf>, %317, %cst_141 [1] : vector<10x10xf32> to vector<10xf32>
    %319 = vector.shape_cast %318 : vector<10xf32> to vector<10x1xf32>
    %320 = vector.broadcast %319 : vector<10x1xf32> to vector<10x10xf32>
    %321 = arith.subf %317, %320 : vector<10x10xf32>
    %322 = math.exp %321 : vector<10x10xf32>
    %cst_142 = arith.constant dense<0.000000e+00> : vector<10xf32>
    %323 = vector.multi_reduction <add>, %322, %cst_142 [1] : vector<10x10xf32> to vector<10xf32>
    %324 = vector.shape_cast %323 : vector<10xf32> to vector<10x1xf32>
    %325 = tpu.reciprocal %324 {approx = true} : vector<10x1xf32> -> vector<10x1xf32>
    %326 = vector.broadcast %325 : vector<10x1xf32> to vector<10x10xf32>
    %327 = arith.mulf %322, %326 : vector<10x10xf32>
    %328 = arith.truncf %327 : vector<10x10xf32> to vector<10x10xbf16>
    %329 = arith.truncf %313 : vector<10x32xf32> to vector<10x32xbf16>
    %cst_143 = arith.constant dense<0.000000e+00> : vector<10x32xf32>
    %330 = tpu.matmul %328, %329, %cst_143 {dimension_numbers = #tpu.dot_dimension_numbers<[1], [0], [0], [1], [0, 0, 1, 1], [], []>} : vector<10x10xbf16>, vector<10x32xbf16>, vector<10x32xf32> -> vector<10x32xf32>
    %331 = vector.extract_strided_slice %269 {offsets = [0, 0], sizes = [32, 128], strides = [1, 1]} : vector<128x128xf32> to vector<32x128xf32>
    %332 = arith.truncf %330 : vector<10x32xf32> to vector<10x32xbf16>
    %333 = arith.truncf %331 : vector<32x128xf32> to vector<32x128xbf16>
    %cst_144 = arith.constant dense<0.000000e+00> : vector<10x128xf32>
    %334 = tpu.matmul %332, %333, %cst_144 {dimension_numbers = #tpu.dot_dimension_numbers<[1], [0], [0], [1], [0, 0, 1, 1], [], []>} : vector<10x32xbf16>, vector<32x128xbf16>, vector<10x128xf32> -> vector<10x128xf32>
    %335 = vector.extract_strided_slice %308 {offsets = [0, 32], sizes = [10, 32], strides = [1, 1]} : vector<10x384xf32> to vector<10x32xf32>
    %cst_145 = arith.constant 0.176776692 : f32
    %336 = vector.broadcast %cst_145 : f32 to vector<10x32xf32>
    %337 = arith.mulf %335, %336 : vector<10x32xf32>
    %338 = vector.extract_strided_slice %308 {offsets = [0, 160], sizes = [10, 32], strides = [1, 1]} : vector<10x384xf32> to vector<10x32xf32>
    %339 = vector.extract_strided_slice %308 {offsets = [0, 288], sizes = [10, 32], strides = [1, 1]} : vector<10x384xf32> to vector<10x32xf32>
    %340 = arith.truncf %337 : vector<10x32xf32> to vector<10x32xbf16>
    %341 = arith.truncf %338 : vector<10x32xf32> to vector<10x32xbf16>
    %cst_146 = arith.constant dense<0.000000e+00> : vector<10x10xf32>
    %342 = tpu.matmul %340, %341, %cst_146 {dimension_numbers = #tpu.dot_dimension_numbers<[1], [1], [0], [0], [0, 0, 1, 0], [], []>} : vector<10x32xbf16>, vector<10x32xbf16>, vector<10x10xf32> -> vector<10x10xf32>
    %343 = arith.addf %342, %56 : vector<10x10xf32>
    %cst_147 = arith.constant dense<0xFF800000> : vector<10xf32>
    %344 = vector.multi_reduction <maximumf>, %343, %cst_147 [1] : vector<10x10xf32> to vector<10xf32>
    %345 = vector.shape_cast %344 : vector<10xf32> to vector<10x1xf32>
    %346 = vector.broadcast %345 : vector<10x1xf32> to vector<10x10xf32>
    %347 = arith.subf %343, %346 : vector<10x10xf32>
    %348 = math.exp %347 : vector<10x10xf32>
    %cst_148 = arith.constant dense<0.000000e+00> : vector<10xf32>
    %349 = vector.multi_reduction <add>, %348, %cst_148 [1] : vector<10x10xf32> to vector<10xf32>
    %350 = vector.shape_cast %349 : vector<10xf32> to vector<10x1xf32>
    %351 = tpu.reciprocal %350 {approx = true} : vector<10x1xf32> -> vector<10x1xf32>
    %352 = vector.broadcast %351 : vector<10x1xf32> to vector<10x10xf32>
    %353 = arith.mulf %348, %352 : vector<10x10xf32>
    %354 = arith.truncf %353 : vector<10x10xf32> to vector<10x10xbf16>
    %355 = arith.truncf %339 : vector<10x32xf32> to vector<10x32xbf16>
    %cst_149 = arith.constant dense<0.000000e+00> : vector<10x32xf32>
    %356 = tpu.matmul %354, %355, %cst_149 {dimension_numbers = #tpu.dot_dimension_numbers<[1], [0], [0], [1], [0, 0, 1, 1], [], []>} : vector<10x10xbf16>, vector<10x32xbf16>, vector<10x32xf32> -> vector<10x32xf32>
    %357 = vector.extract_strided_slice %269 {offsets = [32, 0], sizes = [32, 128], strides = [1, 1]} : vector<128x128xf32> to vector<32x128xf32>
    %358 = arith.truncf %356 : vector<10x32xf32> to vector<10x32xbf16>
    %359 = arith.truncf %357 : vector<32x128xf32> to vector<32x128xbf16>
    %cst_150 = arith.constant dense<0.000000e+00> : vector<10x128xf32>
    %360 = tpu.matmul %358, %359, %cst_150 {dimension_numbers = #tpu.dot_dimension_numbers<[1], [0], [0], [1], [0, 0, 1, 1], [], []>} : vector<10x32xbf16>, vector<32x128xbf16>, vector<10x128xf32> -> vector<10x128xf32>
    %361 = arith.addf %334, %360 : vector<10x128xf32>
    %362 = vector.extract_strided_slice %308 {offsets = [0, 64], sizes = [10, 32], strides = [1, 1]} : vector<10x384xf32> to vector<10x32xf32>
    %cst_151 = arith.constant 0.176776692 : f32
    %363 = vector.broadcast %cst_151 : f32 to vector<10x32xf32>
    %364 = arith.mulf %362, %363 : vector<10x32xf32>
    %365 = vector.extract_strided_slice %308 {offsets = [0, 192], sizes = [10, 32], strides = [1, 1]} : vector<10x384xf32> to vector<10x32xf32>
    %366 = vector.extract_strided_slice %308 {offsets = [0, 320], sizes = [10, 32], strides = [1, 1]} : vector<10x384xf32> to vector<10x32xf32>
    %367 = arith.truncf %364 : vector<10x32xf32> to vector<10x32xbf16>
    %368 = arith.truncf %365 : vector<10x32xf32> to vector<10x32xbf16>
    %cst_152 = arith.constant dense<0.000000e+00> : vector<10x10xf32>
    %369 = tpu.matmul %367, %368, %cst_152 {dimension_numbers = #tpu.dot_dimension_numbers<[1], [1], [0], [0], [0, 0, 1, 0], [], []>} : vector<10x32xbf16>, vector<10x32xbf16>, vector<10x10xf32> -> vector<10x10xf32>
    %370 = arith.addf %369, %56 : vector<10x10xf32>
    %cst_153 = arith.constant dense<0xFF800000> : vector<10xf32>
    %371 = vector.multi_reduction <maximumf>, %370, %cst_153 [1] : vector<10x10xf32> to vector<10xf32>
    %372 = vector.shape_cast %371 : vector<10xf32> to vector<10x1xf32>
    %373 = vector.broadcast %372 : vector<10x1xf32> to vector<10x10xf32>
    %374 = arith.subf %370, %373 : vector<10x10xf32>
    %375 = math.exp %374 : vector<10x10xf32>
    %cst_154 = arith.constant dense<0.000000e+00> : vector<10xf32>
    %376 = vector.multi_reduction <add>, %375, %cst_154 [1] : vector<10x10xf32> to vector<10xf32>
    %377 = vector.shape_cast %376 : vector<10xf32> to vector<10x1xf32>
    %378 = tpu.reciprocal %377 {approx = true} : vector<10x1xf32> -> vector<10x1xf32>
    %379 = vector.broadcast %378 : vector<10x1xf32> to vector<10x10xf32>
    %380 = arith.mulf %375, %379 : vector<10x10xf32>
    %381 = arith.truncf %380 : vector<10x10xf32> to vector<10x10xbf16>
    %382 = arith.truncf %366 : vector<10x32xf32> to vector<10x32xbf16>
    %cst_155 = arith.constant dense<0.000000e+00> : vector<10x32xf32>
    %383 = tpu.matmul %381, %382, %cst_155 {dimension_numbers = #tpu.dot_dimension_numbers<[1], [0], [0], [1], [0, 0, 1, 1], [], []>} : vector<10x10xbf16>, vector<10x32xbf16>, vector<10x32xf32> -> vector<10x32xf32>
    %384 = vector.extract_strided_slice %269 {offsets = [64, 0], sizes = [32, 128], strides = [1, 1]} : vector<128x128xf32> to vector<32x128xf32>
    %385 = arith.truncf %383 : vector<10x32xf32> to vector<10x32xbf16>
    %386 = arith.truncf %384 : vector<32x128xf32> to vector<32x128xbf16>
    %cst_156 = arith.constant dense<0.000000e+00> : vector<10x128xf32>
    %387 = tpu.matmul %385, %386, %cst_156 {dimension_numbers = #tpu.dot_dimension_numbers<[1], [0], [0], [1], [0, 0, 1, 1], [], []>} : vector<10x32xbf16>, vector<32x128xbf16>, vector<10x128xf32> -> vector<10x128xf32>
    %388 = arith.addf %361, %387 : vector<10x128xf32>
    %389 = vector.extract_strided_slice %308 {offsets = [0, 96], sizes = [10, 32], strides = [1, 1]} : vector<10x384xf32> to vector<10x32xf32>
    %cst_157 = arith.constant 0.176776692 : f32
    %390 = vector.broadcast %cst_157 : f32 to vector<10x32xf32>
    %391 = arith.mulf %389, %390 : vector<10x32xf32>
    %392 = vector.extract_strided_slice %308 {offsets = [0, 224], sizes = [10, 32], strides = [1, 1]} : vector<10x384xf32> to vector<10x32xf32>
    %393 = vector.extract_strided_slice %308 {offsets = [0, 352], sizes = [10, 32], strides = [1, 1]} : vector<10x384xf32> to vector<10x32xf32>
    %394 = arith.truncf %391 : vector<10x32xf32> to vector<10x32xbf16>
    %395 = arith.truncf %392 : vector<10x32xf32> to vector<10x32xbf16>
    %cst_158 = arith.constant dense<0.000000e+00> : vector<10x10xf32>
    %396 = tpu.matmul %394, %395, %cst_158 {dimension_numbers = #tpu.dot_dimension_numbers<[1], [1], [0], [0], [0, 0, 1, 0], [], []>} : vector<10x32xbf16>, vector<10x32xbf16>, vector<10x10xf32> -> vector<10x10xf32>
    %397 = arith.addf %396, %56 : vector<10x10xf32>
    %cst_159 = arith.constant dense<0xFF800000> : vector<10xf32>
    %398 = vector.multi_reduction <maximumf>, %397, %cst_159 [1] : vector<10x10xf32> to vector<10xf32>
    %399 = vector.shape_cast %398 : vector<10xf32> to vector<10x1xf32>
    %400 = vector.broadcast %399 : vector<10x1xf32> to vector<10x10xf32>
    %401 = arith.subf %397, %400 : vector<10x10xf32>
    %402 = math.exp %401 : vector<10x10xf32>
    %cst_160 = arith.constant dense<0.000000e+00> : vector<10xf32>
    %403 = vector.multi_reduction <add>, %402, %cst_160 [1] : vector<10x10xf32> to vector<10xf32>
    %404 = vector.shape_cast %403 : vector<10xf32> to vector<10x1xf32>
    %405 = tpu.reciprocal %404 {approx = true} : vector<10x1xf32> -> vector<10x1xf32>
    %406 = vector.broadcast %405 : vector<10x1xf32> to vector<10x10xf32>
    %407 = arith.mulf %402, %406 : vector<10x10xf32>
    %408 = arith.truncf %407 : vector<10x10xf32> to vector<10x10xbf16>
    %409 = arith.truncf %393 : vector<10x32xf32> to vector<10x32xbf16>
    %cst_161 = arith.constant dense<0.000000e+00> : vector<10x32xf32>
    %410 = tpu.matmul %408, %409, %cst_161 {dimension_numbers = #tpu.dot_dimension_numbers<[1], [0], [0], [1], [0, 0, 1, 1], [], []>} : vector<10x10xbf16>, vector<10x32xbf16>, vector<10x32xf32> -> vector<10x32xf32>
    %411 = vector.extract_strided_slice %269 {offsets = [96, 0], sizes = [32, 128], strides = [1, 1]} : vector<128x128xf32> to vector<32x128xf32>
    %412 = arith.truncf %410 : vector<10x32xf32> to vector<10x32xbf16>
    %413 = arith.truncf %411 : vector<32x128xf32> to vector<32x128xbf16>
    %cst_162 = arith.constant dense<0.000000e+00> : vector<10x128xf32>
    %414 = tpu.matmul %412, %413, %cst_162 {dimension_numbers = #tpu.dot_dimension_numbers<[1], [0], [0], [1], [0, 0, 1, 1], [], []>} : vector<10x32xbf16>, vector<32x128xbf16>, vector<10x128xf32> -> vector<10x128xf32>
    %415 = arith.addf %388, %414 : vector<10x128xf32>
    %416 = arith.addf %259, %415 : vector<10x128xf32>
    %417 = vector.broadcast %271 : vector<1x128xf32> to vector<10x128xf32>
    %418 = arith.addf %416, %417 : vector<10x128xf32>
    %cst_163 = arith.constant dense<0.000000e+00> : vector<10xf32>
    %419 = vector.multi_reduction <add>, %418, %cst_163 [1] : vector<10x128xf32> to vector<10xf32>
    %420 = vector.shape_cast %419 : vector<10xf32> to vector<10x1xf32>
    %cst_164 = arith.constant 1.280000e+02 : f32
    %421 = vector.broadcast %cst_164 : f32 to vector<10x1xf32>
    %422 = arith.divf %420, %421 : vector<10x1xf32>
    %423 = vector.broadcast %422 : vector<10x1xf32> to vector<10x128xf32>
    %424 = arith.subf %418, %423 : vector<10x128xf32>
    %425 = arith.mulf %424, %424 : vector<10x128xf32>
    %cst_165 = arith.constant dense<0.000000e+00> : vector<10xf32>
    %426 = vector.multi_reduction <add>, %425, %cst_165 [1] : vector<10x128xf32> to vector<10xf32>
    %427 = vector.shape_cast %426 : vector<10xf32> to vector<10x1xf32>
    %cst_166 = arith.constant 1.280000e+02 : f32
    %428 = vector.broadcast %cst_166 : f32 to vector<10x1xf32>
    %429 = arith.divf %427, %428 : vector<10x1xf32>
    %cst_167 = arith.constant 9.99999974E-6 : f32
    %430 = vector.broadcast %cst_167 : f32 to vector<10x1xf32>
    %431 = arith.addf %429, %430 : vector<10x1xf32>
    %432 = math.rsqrt %431 : vector<10x1xf32>
    %433 = vector.broadcast %432 : vector<10x1xf32> to vector<10x128xf32>
    %434 = arith.mulf %424, %433 : vector<10x128xf32>
    %435 = vector.broadcast %273 : vector<1x128xf32> to vector<10x128xf32>
    %436 = arith.mulf %434, %435 : vector<10x128xf32>
    %437 = vector.broadcast %275 : vector<1x128xf32> to vector<10x128xf32>
    %438 = arith.addf %436, %437 : vector<10x128xf32>
    %439 = arith.truncf %438 : vector<10x128xf32> to vector<10x128xbf16>
    %440 = arith.truncf %277 : vector<128x512xf32> to vector<128x512xbf16>
    %cst_168 = arith.constant dense<0.000000e+00> : vector<10x512xf32>
    %441 = tpu.matmul %439, %440, %cst_168 {dimension_numbers = #tpu.dot_dimension_numbers<[1], [0], [0], [1], [0, 0, 1, 1], [], []>} : vector<10x128xbf16>, vector<128x512xbf16>, vector<10x512xf32> -> vector<10x512xf32>
    %442 = vector.broadcast %279 : vector<1x512xf32> to vector<10x512xf32>
    %443 = arith.addf %441, %442 : vector<10x512xf32>
    %444 = arith.mulf %443, %443 : vector<10x512xf32>
    %445 = arith.mulf %443, %444 : vector<10x512xf32>
    %cst_169 = arith.constant 4.471500e-02 : f32
    %446 = vector.broadcast %cst_169 : f32 to vector<10x512xf32>
    %447 = arith.mulf %446, %445 : vector<10x512xf32>
    %448 = arith.addf %443, %447 : vector<10x512xf32>
    %cst_170 = arith.constant 0.797884583 : f32
    %449 = vector.broadcast %cst_170 : f32 to vector<10x512xf32>
    %450 = arith.mulf %449, %448 : vector<10x512xf32>
    %451 = math.tanh %450 : vector<10x512xf32>
    %cst_171 = arith.constant 1.000000e+00 : f32
    %452 = vector.broadcast %cst_171 : f32 to vector<10x512xf32>
    %453 = arith.addf %452, %451 : vector<10x512xf32>
    %cst_172 = arith.constant 5.000000e-01 : f32
    %454 = vector.broadcast %cst_172 : f32 to vector<10x512xf32>
    %455 = arith.mulf %454, %453 : vector<10x512xf32>
    %456 = arith.mulf %443, %455 : vector<10x512xf32>
    %457 = arith.truncf %456 : vector<10x512xf32> to vector<10x512xbf16>
    %458 = arith.truncf %281 : vector<512x128xf32> to vector<512x128xbf16>
    %cst_173 = arith.constant dense<0.000000e+00> : vector<10x128xf32>
    %459 = tpu.matmul %457, %458, %cst_173 {dimension_numbers = #tpu.dot_dimension_numbers<[1], [0], [0], [1], [0, 0, 1, 1], [], []>} : vector<10x512xbf16>, vector<512x128xbf16>, vector<10x128xf32> -> vector<10x128xf32>
    %460 = vector.broadcast %283 : vector<1x128xf32> to vector<10x128xf32>
    %461 = arith.addf %459, %460 : vector<10x128xf32>
    %462 = arith.addf %418, %461 : vector<10x128xf32>
    %c0_174 = arith.constant 0 : index
    %c0_175 = arith.constant 0 : index
    %463 = vector.load %arg17[%c0_174, %c0_175] : memref<1x128xf32, #tpu.memory_space<vmem>>, vector<1x128xf32>
    %c0_176 = arith.constant 0 : index
    %c0_177 = arith.constant 0 : index
    %464 = vector.load %arg18[%c0_176, %c0_177] : memref<1x128xf32, #tpu.memory_space<vmem>>, vector<1x128xf32>
    %cst_178 = arith.constant dense<0.000000e+00> : vector<10xf32>
    %465 = vector.multi_reduction <add>, %462, %cst_178 [1] : vector<10x128xf32> to vector<10xf32>
    %466 = vector.shape_cast %465 : vector<10xf32> to vector<10x1xf32>
    %cst_179 = arith.constant 1.280000e+02 : f32
    %467 = vector.broadcast %cst_179 : f32 to vector<10x1xf32>
    %468 = arith.divf %466, %467 : vector<10x1xf32>
    %469 = vector.broadcast %468 : vector<10x1xf32> to vector<10x128xf32>
    %470 = arith.subf %462, %469 : vector<10x128xf32>
    %471 = arith.mulf %470, %470 : vector<10x128xf32>
    %cst_180 = arith.constant dense<0.000000e+00> : vector<10xf32>
    %472 = vector.multi_reduction <add>, %471, %cst_180 [1] : vector<10x128xf32> to vector<10xf32>
    %473 = vector.shape_cast %472 : vector<10xf32> to vector<10x1xf32>
    %cst_181 = arith.constant 1.280000e+02 : f32
    %474 = vector.broadcast %cst_181 : f32 to vector<10x1xf32>
    %475 = arith.divf %473, %474 : vector<10x1xf32>
    %cst_182 = arith.constant 9.99999974E-6 : f32
    %476 = vector.broadcast %cst_182 : f32 to vector<10x1xf32>
    %477 = arith.addf %475, %476 : vector<10x1xf32>
    %478 = math.rsqrt %477 : vector<10x1xf32>
    %479 = vector.broadcast %478 : vector<10x1xf32> to vector<10x128xf32>
    %480 = arith.mulf %470, %479 : vector<10x128xf32>
    %481 = vector.broadcast %463 : vector<1x128xf32> to vector<10x128xf32>
    %482 = arith.mulf %480, %481 : vector<10x128xf32>
    %483 = vector.broadcast %464 : vector<1x128xf32> to vector<10x128xf32>
    %484 = arith.addf %482, %483 : vector<10x128xf32>
    %485 = tpu.iota {dimensions = array<i32: 0>} : vector<2x10xi32>
    %486 = tpu.iota {dimensions = array<i32: 1>} : vector<2x10xi32>
    %c5_i32_183 = arith.constant 5 : i32
    %487 = vector.broadcast %c5_i32_183 : i32 to vector<2x10xi32>
    %488 = arith.muli %485, %487 : vector<2x10xi32>
    %489 = arith.cmpi eq, %486, %488 : vector<2x10xi32>
    %cst_184 = arith.constant 1.000000e+00 : f32
    %cst_185 = arith.constant 0.000000e+00 : f32
    %490 = vector.broadcast %cst_184 : f32 to vector<2x10xf32>
    %491 = vector.broadcast %cst_185 : f32 to vector<2x10xf32>
    %492 = arith.select %489, %490, %491 : vector<2x10xi1>, vector<2x10xf32>
    %cst_186 = arith.constant dense<0.000000e+00> : vector<2x128xf32>
    %493 = tpu.matmul %492, %484, %cst_186 {dimension_numbers = #tpu.dot_dimension_numbers<[1], [0], [0], [1], [0, 0, 1, 1], [], []>} : vector<2x10xf32>, vector<10x128xf32>, vector<2x128xf32> -> vector<2x128xf32>
    %c0_187 = arith.constant 0 : index
    %c0_188 = arith.constant 0 : index
    %494 = vector.load %arg19[%c0_187, %c0_188] : memref<128x128xf32, #tpu.memory_space<vmem>>, vector<128x128xf32>
    %495 = arith.truncf %493 : vector<2x128xf32> to vector<2x128xbf16>
    %496 = arith.truncf %494 : vector<128x128xf32> to vector<128x128xbf16>
    %cst_189 = arith.constant dense<0.000000e+00> : vector<2x128xf32>
    %497 = tpu.matmul %495, %496, %cst_189 {dimension_numbers = #tpu.dot_dimension_numbers<[1], [0], [0], [1], [0, 0, 1, 1], [], []>} : vector<2x128xbf16>, vector<128x128xbf16>, vector<2x128xf32> -> vector<2x128xf32>
    %c0_190 = arith.constant 0 : index
    %c0_191 = arith.constant 0 : index
    %498 = vector.load %arg20[%c0_190, %c0_191] : memref<2x128xf32, #tpu.memory_space<vmem>>, vector<2x128xf32>
    tpu.vector_store %arg20[%c0_190, %c0_191], %497 {strides = array<i32>} : memref<2x128xf32, #tpu.memory_space<vmem>>, vector<2x128xf32>,
    return
  }
}

module attributes {stable_mosaic.version = 11 : i64} {
  func.func @_clip_logits_kernel(%arg0: memref<2x128xf32, #tpu.memory_space<vmem>>, %arg1: memref<2x128xf32, #tpu.memory_space<vmem>>, %arg2: memref<2x2xf32, #tpu.memory_space<vmem>>) attributes {dimension_semantics = [], scalar_prefetch = 0 : i64, scratch_operands = 0 : i64, tpu.core_type = #tpu.core_type<tc>} {
    %c0 = arith.constant 0 : index
    %c0_0 = arith.constant 0 : index
    %0 = vector.load %arg0[%c0, %c0_0] : memref<2x128xf32, #tpu.memory_space<vmem>>, vector<2x128xf32>
    %c0_1 = arith.constant 0 : index
    %c0_2 = arith.constant 0 : index
    %1 = vector.load %arg1[%c0_1, %c0_2] : memref<2x128xf32, #tpu.memory_space<vmem>>, vector<2x128xf32>
    %2 = arith.mulf %0, %0 : vector<2x128xf32>
    %cst = arith.constant dense<0.000000e+00> : vector<2xf32>
    %3 = vector.multi_reduction <add>, %2, %cst [1] : vector<2x128xf32> to vector<2xf32>
    %4 = vector.shape_cast %3 : vector<2xf32> to vector<2x1xf32>
    %cst_3 = arith.constant 9.99999996E-13 : f32
    %5 = vector.broadcast %cst_3 : f32 to vector<2x1xf32>
    %6 = arith.addf %4, %5 : vector<2x1xf32>
    %7 = math.rsqrt %6 : vector<2x1xf32>
    %8 = vector.broadcast %7 : vector<2x1xf32> to vector<2x128xf32>
    %9 = arith.mulf %0, %8 : vector<2x128xf32>
    %10 = arith.mulf %1, %1 : vector<2x128xf32>
    %cst_4 = arith.constant dense<0.000000e+00> : vector<2xf32>
    %11 = vector.multi_reduction <add>, %10, %cst_4 [1] : vector<2x128xf32> to vector<2xf32>
    %12 = vector.shape_cast %11 : vector<2xf32> to vector<2x1xf32>
    %cst_5 = arith.constant 9.99999996E-13 : f32
    %13 = vector.broadcast %cst_5 : f32 to vector<2x1xf32>
    %14 = arith.addf %12, %13 : vector<2x1xf32>
    %15 = math.rsqrt %14 : vector<2x1xf32>
    %16 = vector.broadcast %15 : vector<2x1xf32> to vector<2x128xf32>
    %17 = arith.mulf %1, %16 : vector<2x128xf32>
    %cst_6 = arith.constant dense<0.000000e+00> : vector<2x2xf32>
    %18 = tpu.matmul %9, %17, %cst_6 {dimension_numbers = #tpu.dot_dimension_numbers<[1], [1], [0], [0], [0, 0, 1, 0], [], []>} : vector<2x128xf32>, vector<2x128xf32>, vector<2x2xf32> -> vector<2x2xf32>
    %c0_7 = arith.constant 0 : index
    %c0_8 = arith.constant 0 : index
    %19 = vector.load %arg2[%c0_7, %c0_8] : memref<2x2xf32, #tpu.memory_space<vmem>>, vector<2x2xf32>
    tpu.vector_store %arg2[%c0_7, %c0_8], %18 {strides = array<i32>} : memref<2x2xf32, #tpu.memory_space<vmem>>, vector<2x2xf32>,
    return
  }
}

</mosaic_0001>

<llo_original>
// kernel: tile.9
$region0: #{tile.9}
  %s0 = inlined_call_operand.vmem [shape: f32[2,5,128], index: 0, kind: input, shape index: {}]
  %s1 = inlined_call_operand.vmem [shape: f32[10,128], index: 1, kind: output, shape index: {}]
  %v2 = vld [vmem:[%s0] sm:$0x1f]
  %3 = vst [vmem:[%s1] sm:$0x1f] %v2
  %s4 = scalar_lea.vmem %s0, 8
  %v5 = vld [vmem:[%s4] sm:$0x1f]
  %s6 = scalar_lea.vmem %s1, 5
  %7 = vst [vmem:[%s6] sm:$0x1f] %v5

// kernel: hpsv2_forward.5
$region0: #{hpsv2_forward.5}
  #allocation0 [shape = 'u32[]', space=smem, size = 0x4, offset = 0x4, fixed_abs, tag = 'smem constant byte address 0x4 - core index']
  #allocation1 [shape = 'u32[144,128]{1,0:T(1,128)}', space=vmem, size = 0x12000, scoped, tag = 'internal scratch']
  %s0 = inlined_call_operand.vmem [shape: f32[2,128], index: 0, kind: input, shape index: {}]
  %s1 = inlined_call_operand.vmem [shape: f32[2,128], index: 1, kind: input, shape index: {}]
  %s2 = inlined_call_operand.hbm [shape: f32[2,2], index: 2, kind: output, shape index: {}]
  %s3 = sld [smem:[#allocation0]]
  $region18: #{hpsv2_forward.5} parent=0
    _
  %s5 = ssub.s32 1, %s3
  %s6 = scalar_select 0, %s5, %s3
  $region1: #{hpsv2_forward.5} parent=0
    #allocation2 [shape = 'u8[1024]{0}', space=vmem, size = 0x400, scoped, tag = 'output window, operand 0, single buffered']
    #allocation3 [shape = 's32[1]{0}', space=sflag, size = 0x4, scoped, tag = 'scoped memory for hpsv2_forward.5']
    %7 = vsyncpa [#allocation3], 0
    // Predicated region
    $region2: #{hpsv2_forward.5} parent=1 // pred_check
      _
    $region3: #{hpsv2_forward.5} parent=1 // pred_check_branch
      %9 = sbr.rel (0) target = $region5
    $region4: #{hpsv2_forward.5} parent=1 // pred_region
      _
    $region5: #{hpsv2_forward.5} parent=1 // pred_fallthru
      _
    // Predicated region
    $region6: #{hpsv2_forward.5} parent=1 // pred_check
      _
    $region7: #{hpsv2_forward.5} parent=1 // pred_check_branch
      %11 = sbr.rel (0) target = $region9
    $region8: #{hpsv2_forward.5} parent=1 // pred_region
      _
    $region9: #{hpsv2_forward.5} parent=1 // pred_fallthru
      _
    %v12 = vld [vmem:[%s0] sm:$0x3]
    %v13 = vld [vmem:[%s1] sm:$0x3]
    %v14 = vmul.f32 %v12, %v12
    %vm15 = vcmask 1041408
    %v16 = vsel %vm15, %v14, 0.0
    %17 = vadd.xlane.f32.xlu0 %v16
    %v18 = vpop.xlane.xlu0 %17
    %v19 = vadd.f32 %v18, 1e-12
    %v20 = vrsqrt.pop %v19
    %v21 = vmul.f32 %v12, %v20
    %v22 = vmul.f32 %v13, %v13
    %v23 = vsel %vm15, %v22, 0.0
    %24 = vadd.xlane.f32.xlu0 %v23
    %v25 = vpop.xlane.xlu0 %24
    %v26 = vadd.f32 %v25, 1e-12
    %v27 = vrsqrt.pop %v26
    %v28 = vmul.f32 %v13, %v27
    %29 = vmatprep.subr.mxu0 0.0
    %30 = vmatpush1.xpose.msra.mxu0 %v28
    %31 = vmatprep.subr.mxu0 0.0
    %32 = vmatpush1.xpose.msra.mxu0 0.0
    %33 = vmatprep.subr.mxu0 0.0
    %34 = vmatpush1.xpose.msra.mxu0 0.0
    %35 = vmatprep.subr.mxu0 0.0
    %36 = vmatpush1.xpose.msra.mxu0 0.0
    %37 = vmatprep.subr.mxu0 0.0
    %38 = vmatpush1.xpose.msra.mxu0 0.0
    %39 = vmatprep.subr.mxu0 0.0
    %40 = vmatpush1.xpose.msra.mxu0 0.0
    %41 = vmatprep.subr.mxu0 0.0
    %42 = vmatpush1.xpose.msra.mxu0 0.0
    %43 = vmatprep.subr.mxu0 0.0
    %44 = vmatpush1.xpose.msra.mxu0 0.0
    %45 = vmatprep.subr.mxu0 0.0
    %46 = vmatpush1.xpose.msra.mxu0 0.0
    %47 = vmatprep.subr.mxu0 0.0
    %48 = vmatpush1.xpose.msra.mxu0 0.0
    %49 = vmatprep.subr.mxu0 0.0
    %50 = vmatpush1.xpose.msra.mxu0 0.0
    %51 = vmatprep.subr.mxu0 0.0
    %52 = vmatpush1.xpose.msra.mxu0 0.0
    %53 = vmatprep.subr.mxu0 0.0
    %54 = vmatpush1.xpose.msra.mxu0 0.0
    %55 = vmatprep.subr.mxu0 0.0
    %56 = vmatpush1.xpose.msra.mxu0 0.0
    %57 = vmatprep.subr.mxu0 0.0
    %58 = vmatpush1.xpose.msra.mxu0 0.0
    %59 = vmatprep.subr.mxu0 0.0
    %60 = vmatpush1.xpose.msra.mxu0 0.0
    %61 = vmatprep.subr.mxu0 0.0
    %62 = vmatpush1.xpose.msra.mxu0 0.0
    %63 = vmatprep.subr.mxu0 0.0
    %64 = vmatpush1.xpose.msra.mxu0 0.0
    %65 = vmatprep.subr.mxu0 0.0
    %66 = vmatpush1.xpose.msra.mxu0 0.0
    %67 = vmatprep.subr.mxu0 0.0
    %68 = vmatpush1.xpose.msra.mxu0 0.0
    %69 = vmatprep.subr.mxu0 0.0
    %70 = vmatpush1.xpose.msra.mxu0 0.0
    %71 = vmatprep.subr.mxu0 0.0
    %72 = vmatpush1.xpose.msra.mxu0 0.0
    %73 = vmatprep.subr.mxu0 0.0
    %74 = vmatpush1.xpose.msra.mxu0 0.0
    %75 = vmatprep.subr.mxu0 0.0
    %76 = vmatpush1.xpose.msra.mxu0 0.0
    %77 = vmatprep.subr.mxu0 0.0
    %78 = vmatpush1.xpose.msra.mxu0 0.0
    %79 = vmatprep.subr.mxu0 0.0
    %80 = vmatpush1.xpose.msra.mxu0 0.0
    %81 = vmatprep.subr.mxu0 0.0
    %82 = vmatpush1.xpose.msra.mxu0 0.0
    %83 = vmatprep.subr.mxu0 0.0
    %84 = vmatpush1.xpose.msra.mxu0 0.0
    %85 = vmatprep.subr.mxu0 0.0
    %86 = vmatpush1.xpose.msra.mxu0 0.0
    %87 = vmatprep.subr.mxu0 0.0
    %88 = vmatpush1.xpose.msra.mxu0 0.0
    %89 = vmatprep.subr.mxu0 0.0
    %90 = vmatpush1.xpose.msra.mxu0 0.0
    %91 = vmatprep.subr.mxu0 0.0
    %92 = vmatpush1.xpose.msra.mxu0 0.0
    %93 = vmatprep.mubr.f32.mxu0 0.0
    %94 = vmatmul.mubr.f32.gmra.mrb[0].mxu0 %v21
    %v95 = vpop.f32.mrb[0].mxu0
    %v96 = vadd.f32 0.0, %v95
    %v97 = vpop.f32.mrb[0].mxu0
    %98 = vdwg.mxu0
    %vm99 = vcmask 9216
    %100 = vst.msk [vmem:[#allocation2] sm:$0x3] %vm99, %v96
    // Predicated region
    $region10: #{hpsv2_forward.5} parent=1 // pred_check
      _
    $region11: #{hpsv2_forward.5} parent=1 // pred_check_branch
      %102 = sbr.rel (0) target = $region13
    $region12: #{hpsv2_forward.5} parent=1 // pred_region
      %s104 = ssub.s32 32, 32
      %105 = vsyncadd [#allocation3], %s104
      %s107 = sshll.u32 [#allocation2], 4
      %s108 = int_to_ptr.vmem [resolvable:$true] %s107
      %110 = dma.vmem_to_hbm [thread:$0]  %s108, 32, %s2, [#allocation3]
    $region13: #{hpsv2_forward.5} parent=1 // pred_fallthru
      _
    // Predicated region
    $region14: #{hpsv2_forward.5} parent=1 // pred_check
      _
    $region15: #{hpsv2_forward.5} parent=1 // pred_check_branch
      %112 = sbr.rel (0) target = $region17
    $region16: #{hpsv2_forward.5} parent=1 // pred_region
      %113 = dma.done [#allocation3], 32
    $region17: #{hpsv2_forward.5} parent=1 // pred_fallthru
      _
    %114 = vsyncpa [#allocation3], 1

// kernel: hpsv2_forward.4
$region0: #{hpsv2_forward.4}
  #allocation0 [shape = 'u32[]', space=smem, size = 0x4, offset = 0x4, fixed_abs, tag = 'smem constant byte address 0x4 - core index']
  #allocation1 [shape = 'u32[144,128]{1,0:T(1,128)}', space=vmem, size = 0x12000, scoped, tag = 'internal scratch']
  %s0 = inlined_call_operand.vmem [shape: f32[16,128], index: 0, kind: input, shape index: {}]
  %s1 = inlined_call_operand.vmem [shape: f32[2,1,128], index: 1, kind: input, shape index: {}]
  %s2 = inlined_call_operand.vmem [shape: f32[2,1,128], index: 2, kind: input, shape index: {}]
  %s3 = inlined_call_operand.vmem [shape: f32[2,128,384], index: 3, kind: input, shape index: {}]
  %s4 = inlined_call_operand.vmem [shape: f32[2,1,384], index: 4, kind: input, shape index: {}]
  %s5 = inlined_call_operand.vmem [shape: f32[2,128,128], index: 5, kind: input, shape index: {}]
  %s6 = inlined_call_operand.vmem [shape: f32[2,1,128], index: 6, kind: input, shape index: {}]
  %s7 = inlined_call_operand.vmem [shape: f32[2,1,128], index: 7, kind: input, shape index: {}]
  %s8 = inlined_call_operand.vmem [shape: f32[2,1,128], index: 8, kind: input, shape index: {}]
  %s9 = inlined_call_operand.vmem [shape: f32[2,128,512], index: 9, kind: input, shape index: {}]
  %s10 = inlined_call_operand.vmem [shape: f32[2,1,512], index: 10, kind: input, shape index: {}]
  %s11 = inlined_call_operand.vmem [shape: f32[2,512,128], index: 11, kind: input, shape index: {}]
  %s12 = inlined_call_operand.vmem [shape: f32[2,1,128], index: 12, kind: input, shape index: {}]
  %s13 = inlined_call_operand.vmem [shape: f32[1,128], index: 13, kind: input, shape index: {}]
  %s14 = inlined_call_operand.vmem [shape: f32[1,128], index: 14, kind: input, shape index: {}]
  %s15 = inlined_call_operand.vmem [shape: f32[2,16], index: 15, kind: input, shape index: {}]
  %s16 = inlined_call_operand.vmem [shape: f32[128,128], index: 16, kind: input, shape index: {}]
  %s17 = inlined_call_operand.vmem [shape: f32[2,128], index: 17, kind: output, shape index: {}]
  %s18 = sld [smem:[#allocation0]]
  $region78: #{hpsv2_forward.4} parent=0
    _
  %s20 = ssub.s32 1, %s18
  %s21 = scalar_select 0, %s20, %s18
  // Predicated region
  $region2: #{hpsv2_forward.4} parent=0 // pred_check
    _
  $region3: #{hpsv2_forward.4} parent=0 // pred_check_branch
    %23 = sbr.rel (0) target = $region5
  $region4: #{hpsv2_forward.4} parent=0 // pred_region
    _
  $region5: #{hpsv2_forward.4} parent=0 // pred_fallthru
    _
  // Predicated region
  $region6: #{hpsv2_forward.4} parent=0 // pred_check
    _
  $region7: #{hpsv2_forward.4} parent=0 // pred_check_branch
    %25 = sbr.rel (0) target = $region9
  $region8: #{hpsv2_forward.4} parent=0 // pred_region
    _
  $region9: #{hpsv2_forward.4} parent=0 // pred_fallthru
    _
  // Predicated region
  $region10: #{hpsv2_forward.4} parent=0 // pred_check
    _
  $region11: #{hpsv2_forward.4} parent=0 // pred_check_branch
    %27 = sbr.rel (0) target = $region13
  $region12: #{hpsv2_forward.4} parent=0 // pred_region
    _
  $region13: #{hpsv2_forward.4} parent=0 // pred_fallthru
    _
  // Predicated region
  $region14: #{hpsv2_forward.4} parent=0 // pred_check
    _
  $region15: #{hpsv2_forward.4} parent=0 // pred_check_branch
    %29 = sbr.rel (0) target = $region17
  $region16: #{hpsv2_forward.4} parent=0 // pred_region
    _
  $region17: #{hpsv2_forward.4} parent=0 // pred_fallthru
    _
  // Predicated region
  $region18: #{hpsv2_forward.4} parent=0 // pred_check
    _
  $region19: #{hpsv2_forward.4} parent=0 // pred_check_branch
    %31 = sbr.rel (0) target = $region21
  $region20: #{hpsv2_forward.4} parent=0 // pred_region
    _
  $region21: #{hpsv2_forward.4} parent=0 // pred_fallthru
    _
  // Predicated region
  $region22: #{hpsv2_forward.4} parent=0 // pred_check
    _
  $region23: #{hpsv2_forward.4} parent=0 // pred_check_branch
    %33 = sbr.rel (0) target = $region25
  $region24: #{hpsv2_forward.4} parent=0 // pred_region
    _
  $region25: #{hpsv2_forward.4} parent=0 // pred_fallthru
    _
  // Predicated region
  $region26: #{hpsv2_forward.4} parent=0 // pred_check
    _
  $region27: #{hpsv2_forward.4} parent=0 // pred_check_branch
    %35 = sbr.rel (0) target = $region29
  $region28: #{hpsv2_forward.4} parent=0 // pred_region
    _
  $region29: #{hpsv2_forward.4} parent=0 // pred_fallthru
    _
  // Predicated region
  $region30: #{hpsv2_forward.4} parent=0 // pred_check
    _
  $region31: #{hpsv2_forward.4} parent=0 // pred_check_branch
    %37 = sbr.rel (0) target = $region33
  $region32: #{hpsv2_forward.4} parent=0 // pred_region
    _
  $region33: #{hpsv2_forward.4} parent=0 // pred_fallthru
    _
  // Predicated region
  $region34: #{hpsv2_forward.4} parent=0 // pred_check
    _
  $region35: #{hpsv2_forward.4} parent=0 // pred_check_branch
    %39 = sbr.rel (0) target = $region37
  $region36: #{hpsv2_forward.4} parent=0 // pred_region
    _
  $region37: #{hpsv2_forward.4} parent=0 // pred_fallthru
    _
  // Predicated region
  $region38: #{hpsv2_forward.4} parent=0 // pred_check
    _
  $region39: #{hpsv2_forward.4} parent=0 // pred_check_branch
    %41 = sbr.rel (0) target = $region41
  $region40: #{hpsv2_forward.4} parent=0 // pred_region
    _
  $region41: #{hpsv2_forward.4} parent=0 // pred_fallthru
    _
  // Predicated region
  $region42: #{hpsv2_forward.4} parent=0 // pred_check
    _
  $region43: #{hpsv2_forward.4} parent=0 // pred_check_branch
    %43 = sbr.rel (0) target = $region45
  $region44: #{hpsv2_forward.4} parent=0 // pred_region
    _
  $region45: #{hpsv2_forward.4} parent=0 // pred_fallthru
    _
  // Predicated region
  $region46: #{hpsv2_forward.4} parent=0 // pred_check
    _
  $region47: #{hpsv2_forward.4} parent=0 // pred_check_branch
    %45 = sbr.rel (0) target = $region49
  $region48: #{hpsv2_forward.4} parent=0 // pred_region
    _
  $region49: #{hpsv2_forward.4} parent=0 // pred_fallthru
    _
  // Predicated region
  $region50: #{hpsv2_forward.4} parent=0 // pred_check
    _
  $region51: #{hpsv2_forward.4} parent=0 // pred_check_branch
    %47 = sbr.rel (0) target = $region53
  $region52: #{hpsv2_forward.4} parent=0 // pred_region
    _
  $region53: #{hpsv2_forward.4} parent=0 // pred_fallthru
    _
  // Predicated region
  $region54: #{hpsv2_forward.4} parent=0 // pred_check
    _
  $region55: #{hpsv2_forward.4} parent=0 // pred_check_branch
    %49 = sbr.rel (0) target = $region57
  $region56: #{hpsv2_forward.4} parent=0 // pred_region
    _
  $region57: #{hpsv2_forward.4} parent=0 // pred_fallthru
    _
  // Predicated region
  $region58: #{hpsv2_forward.4} parent=0 // pred_check
    _
  $region59: #{hpsv2_forward.4} parent=0 // pred_check_branch
    %51 = sbr.rel (0) target = $region61
  $region60: #{hpsv2_forward.4} parent=0 // pred_region
    _
  $region61: #{hpsv2_forward.4} parent=0 // pred_fallthru
    _
  // Predicated region
  $region62: #{hpsv2_forward.4} parent=0 // pred_check
    _
  $region63: #{hpsv2_forward.4} parent=0 // pred_check_branch
    %53 = sbr.rel (0) target = $region65
  $region64: #{hpsv2_forward.4} parent=0 // pred_region
    _
  $region65: #{hpsv2_forward.4} parent=0 // pred_fallthru
    _
  // Predicated region
  $region66: #{hpsv2_forward.4} parent=0 // pred_check
    _
  $region67: #{hpsv2_forward.4} parent=0 // pred_check_branch
    %55 = sbr.rel (0) target = $region69
  $region68: #{hpsv2_forward.4} parent=0 // pred_region
    _
  $region69: #{hpsv2_forward.4} parent=0 // pred_fallthru
    _
  %v57 = vld [vmem:[%s0] sm:$0xff]
  %v58 = vld [vmem:[%s0 + $0x8] sm:$0xff]
  %v59 = vlaneseq
  %v60 = vshrl.u32 %v59, 7
  %v61 = vadd.s32 %v60, 8
  %v62 = vlaneseq
  %v63 = vand.u32 %v62, 127
  %vm64 = vcmp.ge.s32.totalorder %v60, 0
  %vm65 = vcmp.ge.s32.totalorder %v61, 0
  %vm66 = vcmp.lt.s32.totalorder %v60, 8
  %vm67 = vcmp.lt.s32.totalorder %v61, 8
  %vm68 = vmand %vm64, %vm66
  %vm69 = vmand %vm65, %vm67
  %vm70 = vcmp.ge.s32.totalorder %v63, 0
  %vm71 = vcmp.lt.s32.totalorder %v63, 8
  %vm72 = vmand %vm70, %vm71
  %vm73 = vmand %vm68, %vm72
  %vm74 = vmand %vm69, %vm72
  %vm75 = vcmp.ge.s32.totalorder %v60, 8
  %vm76 = vcmp.ge.s32.totalorder %v61, 8
  %vm77 = vcmp.lt.s32.totalorder %v60, 16
  %vm78 = vcmp.lt.s32.totalorder %v61, 16
  %vm79 = vmand %vm75, %vm77
  %vm80 = vmand %vm76, %vm78
  %vm81 = vcmp.ge.s32.totalorder %v63, 8
  %vm82 = vcmp.lt.s32.totalorder %v63, 16
  %vm83 = vmand %vm81, %vm82
  %vm84 = vmand %vm79, %vm83
  %vm85 = vmand %vm80, %vm83
  %vm86 = vmor %vm73, %vm84
  %vm87 = vmor %vm74, %vm85
  %vm88 = vcmp.le.s32.totalorder %v63, %v60
  %vm89 = vcmp.le.s32.totalorder %v63, %v61
  %vm90 = vmand %vm86, %vm88
  %vm91 = vmand %vm87, %vm89
  %v92 = vsel %vm90, 0.0, -1e+09
  %v93 = vsel %vm91, 0.0, -1e+09
  %v94 = vld [vmem:[%s1] sm:$0x1]
  %v95 = vld [vmem:[%s2] sm:$0x1]
  %v96 = vld [vmem:[%s3] sm:$0xff]
  %v97 = vld [vmem:[%s3 + $0x8] sm:$0xff]
  %v98 = vld [vmem:[%s3 + $0x10] sm:$0xff]
  %v99 = vld [vmem:[%s3 + $0x18] sm:$0xff]
  %v100 = vld [vmem:[%s3 + $0x20] sm:$0xff]
  %v101 = vld [vmem:[%s3 + $0x28] sm:$0xff]
  %v102 = vld [vmem:[%s3 + $0x30] sm:$0xff]
  %v103 = vld [vmem:[%s3 + $0x38] sm:$0xff]
  %v104 = vld [vmem:[%s3 + $0x40] sm:$0xff]
  %v105 = vld [vmem:[%s3 + $0x48] sm:$0xff]
  %v106 = vld [vmem:[%s3 + $0x50] sm:$0xff]
  %v107 = vld [vmem:[%s3 + $0x58] sm:$0xff]
  %v108 = vld [vmem:[%s3 + $0x60] sm:$0xff]
  %v109 = vld [vmem:[%s3 + $0x68] sm:$0xff]
  %v110 = vld [vmem:[%s3 + $0x70] sm:$0xff]
  %v111 = vld [vmem:[%s3 + $0x78] sm:$0xff]
  %v112 = vld [vmem:[%s3 + $0x80] sm:$0xff]
  %v113 = vld [vmem:[%s3 + $0x88] sm:$0xff]
  %v114 = vld [vmem:[%s3 + $0x90] sm:$0xff]
  %v115 = vld [vmem:[%s3 + $0x98] sm:$0xff]
  %v116 = vld [vmem:[%s3 + $0xa0] sm:$0xff]
  %v117 = vld [vmem:[%s3 + $0xa8] sm:$0xff]
  %v118 = vld [vmem:[%s3 + $0xb0] sm:$0xff]
  %v119 = vld [vmem:[%s3 + $0xb8] sm:$0xff]
  %v120 = vld [vmem:[%s3 + $0xc0] sm:$0xff]
  %v121 = vld [vmem:[%s3 + $0xc8] sm:$0xff]
  %v122 = vld [vmem:[%s3 + $0xd0] sm:$0xff]
  %v123 = vld [vmem:[%s3 + $0xd8] sm:$0xff]
  %v124 = vld [vmem:[%s3 + $0xe0] sm:$0xff]
  %v125 = vld [vmem:[%s3 + $0xe8] sm:$0xff]
  %v126 = vld [vmem:[%s3 + $0xf0] sm:$0xff]
  %v127 = vld [vmem:[%s3 + $0xf8] sm:$0xff]
  %v128 = vld [vmem:[%s3 + $0x100] sm:$0xff]
  %v129 = vld [vmem:[%s3 + $0x108] sm:$0xff]
  %v130 = vld [vmem:[%s3 + $0x110] sm:$0xff]
  %v131 = vld [vmem:[%s3 + $0x118] sm:$0xff]
  %v132 = vld [vmem:[%s3 + $0x120] sm:$0xff]
  %v133 = vld [vmem:[%s3 + $0x128] sm:$0xff]
  %v134 = vld [vmem:[%s3 + $0x130] sm:$0xff]
  %v135 = vld [vmem:[%s3 + $0x138] sm:$0xff]
  %v136 = vld [vmem:[%s3 + $0x140] sm:$0xff]
  %v137 = vld [vmem:[%s3 + $0x148] sm:$0xff]
  %v138 = vld [vmem:[%s3 + $0x150] sm:$0xff]
  %v139 = vld [vmem:[%s3 + $0x158] sm:$0xff]
  %v140 = vld [vmem:[%s3 + $0x160] sm:$0xff]
  %v141 = vld [vmem:[%s3 + $0x168] sm:$0xff]
  %v142 = vld [vmem:[%s3 + $0x170] sm:$0xff]
  %v143 = vld [vmem:[%s3 + $0x178] sm:$0xff]
  %v144 = vld [vmem:[%s4] sm:$0x7]
  %v145 = vld [vmem:[%s5] sm:$0xff]
  %v146 = vld [vmem:[%s5 + $0x8] sm:$0xff]
  %v147 = vld [vmem:[%s5 + $0x10] sm:$0xff]
  %v148 = vld [vmem:[%s5 + $0x18] sm:$0xff]
  %v149 = vld [vmem:[%s5 + $0x20] sm:$0xff]
  %v150 = vld [vmem:[%s5 + $0x28] sm:$0xff]
  %v151 = vld [vmem:[%s5 + $0x30] sm:$0xff]
  %v152 = vld [vmem:[%s5 + $0x38] sm:$0xff]
  %v153 = vld [vmem:[%s5 + $0x40] sm:$0xff]
  %v154 = vld [vmem:[%s5 + $0x48] sm:$0xff]
  %v155 = vld [vmem:[%s5 + $0x50] sm:$0xff]
  %v156 = vld [vmem:[%s5 + $0x58] sm:$0xff]
  %v157 = vld [vmem:[%s5 + $0x60] sm:$0xff]
  %v158 = vld [vmem:[%s5 + $0x68] sm:$0xff]
  %v159 = vld [vmem:[%s5 + $0x70] sm:$0xff]
  %v160 = vld [vmem:[%s5 + $0x78] sm:$0xff]
  %v161 = vld [vmem:[%s6] sm:$0x1]
  %v162 = vld [vmem:[%s7] sm:$0x1]
  %v163 = vld [vmem:[%s8] sm:$0x1]
  %v164 = vld [vmem:[%s9] sm:$0xff]
  %v165 = vld [vmem:[%s9 + $0x8] sm:$0xff]
  %v166 = vld [vmem:[%s9 + $0x10] sm:$0xff]
  %v167 = vld [vmem:[%s9 + $0x18] sm:$0xff]
  %v168 = vld [vmem:[%s9 + $0x20] sm:$0xff]
  %v169 = vld [vmem:[%s9 + $0x28] sm:$0xff]
  %v170 = vld [vmem:[%s9 + $0x30] sm:$0xff]
  %v171 = vld [vmem:[%s9 + $0x38] sm:$0xff]
  %v172 = vld [vmem:[%s9 + $0x40] sm:$0xff]
  %v173 = vld [vmem:[%s9 + $0x48] sm:$0xff]
  %v174 = vld [vmem:[%s9 + $0x50] sm:$0xff]
  %v175 = vld [vmem:[%s9 + $0x58] sm:$0xff]
  %v176 = vld [vmem:[%s9 + $0x60] sm:$0xff]
  %v177 = vld [vmem:[%s9 + $0x68] sm:$0xff]
  %v178 = vld [vmem:[%s9 + $0x70] sm:$0xff]
  %v179 = vld [vmem:[%s9 + $0x78] sm:$0xff]
  %v180 = vld [vmem:[%s9 + $0x80] sm:$0xff]
  %v181 = vld [vmem:[%s9 + $0x88] sm:$0xff]
  %v182 = vld [vmem:[%s9 + $0x90] sm:$0xff]
  %v183 = vld [vmem:[%s9 + $0x98] sm:$0xff]
  %v184 = vld [vmem:[%s9 + $0xa0] sm:$0xff]
  %v185 = vld [vmem:[%s9 + $0xa8] sm:$0xff]
  %v186 = vld [vmem:[%s9 + $0xb0] sm:$0xff]
  %v187 = vld [vmem:[%s9 + $0xb8] sm:$0xff]
  %v188 = vld [vmem:[%s9 + $0xc0] sm:$0xff]
  %v189 = vld [vmem:[%s9 + $0xc8] sm:$0xff]
  %v190 = vld [vmem:[%s9 + $0xd0] sm:$0xff]
  %v191 = vld [vmem:[%s9 + $0xd8] sm:$0xff]
  %v192 = vld [vmem:[%s9 + $0xe0] sm:$0xff]
  %v193 = vld [vmem:[%s9 + $0xe8] sm:$0xff]
  %v194 = vld [vmem:[%s9 + $0xf0] sm:$0xff]
  %v195 = vld [vmem:[%s9 + $0xf8] sm:$0xff]
  %v196 = vld [vmem:[%s9 + $0x100] sm:$0xff]
  %v197 = vld [vmem:[%s9 + $0x108] sm:$0xff]
  %v198 = vld [vmem:[%s9 + $0x110] sm:$0xff]
  %v199 = vld [vmem:[%s9 + $0x118] sm:$0xff]
  %v200 = vld [vmem:[%s9 + $0x120] sm:$0xff]
  %v201 = vld [vmem:[%s9 + $0x128] sm:$0xff]
  %v202 = vld [vmem:[%s9 + $0x130] sm:$0xff]
  %v203 = vld [vmem:[%s9 + $0x138] sm:$0xff]
  %v204 = vld [vmem:[%s9 + $0x140] sm:$0xff]
  %v205 = vld [vmem:[%s9 + $0x148] sm:$0xff]
  %v206 = vld [vmem:[%s9 + $0x150] sm:$0xff]
  %v207 = vld [vmem:[%s9 + $0x158] sm:$0xff]
  %v208 = vld [vmem:[%s9 + $0x160] sm:$0xff]
  %v209 = vld [vmem:[%s9 + $0x168] sm:$0xff]
  %v210 = vld [vmem:[%s9 + $0x170] sm:$0xff]
  %v211 = vld [vmem:[%s9 + $0x178] sm:$0xff]
  %v212 = vld [vmem:[%s9 + $0x180] sm:$0xff]
  %v213 = vld [vmem:[%s9 + $0x188] sm:$0xff]
  %v214 = vld [vmem:[%s9 + $0x190] sm:$0xff]
  %v215 = vld [vmem:[%s9 + $0x198] sm:$0xff]
  %v216 = vld [vmem:[%s9 + $0x1a0] sm:$0xff]
  %v217 = vld [vmem:[%s9 + $0x1a8] sm:$0xff]
  %v218 = vld [vmem:[%s9 + $0x1b0] sm:$0xff]
  %v219 = vld [vmem:[%s9 + $0x1b8] sm:$0xff]
  %v220 = vld [vmem:[%s9 + $0x1c0] sm:$0xff]
  %v221 = vld [vmem:[%s9 + $0x1c8] sm:$0xff]
  %v222 = vld [vmem:[%s9 + $0x1d0] sm:$0xff]
  %v223 = vld [vmem:[%s9 + $0x1d8] sm:$0xff]
  %v224 = vld [vmem:[%s9 + $0x1e0] sm:$0xff]
  %v225 = vld [vmem:[%s9 + $0x1e8] sm:$0xff]
  %v226 = vld [vmem:[%s9 + $0x1f0] sm:$0xff]
  %v227 = vld [vmem:[%s9 + $0x1f8] sm:$0xff]
  %v228 = vld [vmem:[%s10] sm:$0xf]
  %v229 = vld [vmem:[%s11] sm:$0xff]
  %v230 = vld [vmem:[%s11 + $0x8] sm:$0xff]
  %v231 = vld [vmem:[%s11 + $0x10] sm:$0xff]
  %v232 = vld [vmem:[%s11 + $0x18] sm:$0xff]
  %v233 = vld [vmem:[%s11 + $0x20] sm:$0xff]
  %v234 = vld [vmem:[%s11 + $0x28] sm:$0xff]
  %v235 = vld [vmem:[%s11 + $0x30] sm:$0xff]
  %v236 = vld [vmem:[%s11 + $0x38] sm:$0xff]
  %v237 = vld [vmem:[%s11 + $0x40] sm:$0xff]
  %v238 = vld [vmem:[%s11 + $0x48] sm:$0xff]
  %v239 = vld [vmem:[%s11 + $0x50] sm:$0xff]
  %v240 = vld [vmem:[%s11 + $0x58] sm:$0xff]
  %v241 = vld [vmem:[%s11 + $0x60] sm:$0xff]
  %v242 = vld [vmem:[%s11 + $0x68] sm:$0xff]
  %v243 = vld [vmem:[%s11 + $0x70] sm:$0xff]
  %v244 = vld [vmem:[%s11 + $0x78] sm:$0xff]
  %v245 = vld [vmem:[%s11 + $0x80] sm:$0xff]
  %v246 = vld [vmem:[%s11 + $0x88] sm:$0xff]
  %v247 = vld [vmem:[%s11 + $0x90] sm:$0xff]
  %v248 = vld [vmem:[%s11 + $0x98] sm:$0xff]
  %v249 = vld [vmem:[%s11 + $0xa0] sm:$0xff]
  %v250 = vld [vmem:[%s11 + $0xa8] sm:$0xff]
  %v251 = vld [vmem:[%s11 + $0xb0] sm:$0xff]
  %v252 = vld [vmem:[%s11 + $0xb8] sm:$0xff]
  %v253 = vld [vmem:[%s11 + $0xc0] sm:$0xff]
  %v254 = vld [vmem:[%s11 + $0xc8] sm:$0xff]
  %v255 = vld [vmem:[%s11 + $0xd0] sm:$0xff]
  %v256 = vld [vmem:[%s11 + $0xd8] sm:$0xff]
  %v257 = vld [vmem:[%s11 + $0xe0] sm:$0xff]
  %v258 = vld [vmem:[%s11 + $0xe8] sm:$0xff]
  %v259 = vld [vmem:[%s11 + $0xf0] sm:$0xff]
  %v260 = vld [vmem:[%s11 + $0xf8] sm:$0xff]
  %v261 = vld [vmem:[%s11 + $0x100] sm:$0xff]
  %v262 = vld [vmem:[%s11 + $0x108] sm:$0xff]
  %v263 = vld [vmem:[%s11 + $0x110] sm:$0xff]
  %v264 = vld [vmem:[%s11 + $0x118] sm:$0xff]
  %v265 = vld [vmem:[%s11 + $0x120] sm:$0xff]
  %v266 = vld [vmem:[%s11 + $0x128] sm:$0xff]
  %v267 = vld [vmem:[%s11 + $0x130] sm:$0xff]
  %v268 = vld [vmem:[%s11 + $0x138] sm:$0xff]
  %v269 = vld [vmem:[%s11 + $0x140] sm:$0xff]
  %v270 = vld [vmem:[%s11 + $0x148] sm:$0xff]
  %v271 = vld [vmem:[%s11 + $0x150] sm:$0xff]
  %v272 = vld [vmem:[%s11 + $0x158] sm:$0xff]
  %v273 = vld [vmem:[%s11 + $0x160] sm:$0xff]
  %v274 = vld [vmem:[%s11 + $0x168] sm:$0xff]
  %v275 = vld [vmem:[%s11 + $0x170] sm:$0xff]
  %v276 = vld [vmem:[%s11 + $0x178] sm:$0xff]
  %v277 = vld [vmem:[%s11 + $0x180] sm:$0xff]
  %v278 = vld [vmem:[%s11 + $0x188] sm:$0xff]
  %v279 = vld [vmem:[%s11 + $0x190] sm:$0xff]
  %v280 = vld [vmem:[%s11 + $0x198] sm:$0xff]
  %v281 = vld [vmem:[%s11 + $0x1a0] sm:$0xff]
  %v282 = vld [vmem:[%s11 + $0x1a8] sm:$0xff]
  %v283 = vld [vmem:[%s11 + $0x1b0] sm:$0xff]
  %v284 = vld [vmem:[%s11 + $0x1b8] sm:$0xff]
  %v285 = vld [vmem:[%s11 + $0x1c0] sm:$0xff]
  %v286 = vld [vmem:[%s11 + $0x1c8] sm:$0xff]
  %v287 = vld [vmem:[%s11 + $0x1d0] sm:$0xff]
  %v288 = vld [vmem:[%s11 + $0x1d8] sm:$0xff]
  %v289 = vld [vmem:[%s11 + $0x1e0] sm:$0xff]
  %v290 = vld [vmem:[%s11 + $0x1e8] sm:$0xff]
  %v291 = vld [vmem:[%s11 + $0x1f0] sm:$0xff]
  %v292 = vld [vmem:[%s11 + $0x1f8] sm:$0xff]
  %v293 = vld [vmem:[%s12] sm:$0x1]
  %294 = vadd.xlane.f32.xlu0 %v57
  %v295 = vpop.xlane.xlu0 %294
  %296 = vadd.xlane.f32.xlu0 %v58
  %v297 = vpop.xlane.xlu0 %296
  %v298 = vrcp.pop 128.0
  %v299 = vmul.f32 %v295, %v298
  %v300 = vmul.f32 %v297, %v298
  %v301 = vsub.f32 %v57, %v299
  %v302 = vsub.f32 %v58, %v300
  %v303 = vmul.f32 %v301, %v301
  %v304 = vmul.f32 %v302, %v302
  %305 = vadd.xlane.f32.xlu0 %v303
  %v306 = vpop.xlane.xlu0 %305
  %307 = vadd.xlane.f32.xlu0 %v304
  %v308 = vpop.xlane.xlu0 %307
  %v309 = vmul.f32 %v306, %v298
  %v310 = vmul.f32 %v308, %v298
  %v311 = vadd.f32 %v309, 1e-05
  %v312 = vadd.f32 %v310, 1e-05
  %v313 = vrsqrt.pop %v311
  %v314 = vrsqrt.pop %v312
  %v315 = vmul.f32 %v301, %v313
  %v316 = vmul.f32 %v302, %v314
  %v318 = vlaneseq
  %v319 = vshrl.u32 %v318, 7
  %v320 = vsub.s32 0, %v319
  %v321 = vrot.slane %v94, %v320
  %v323 = vmul.f32 %v315, %v321
  %v324 = vmul.f32 %v316, %v321
  %v326 = vlaneseq
  %v327 = vshrl.u32 %v326, 7
  %v328 = vsub.s32 0, %v327
  %v329 = vrot.slane %v95, %v328
  %v331 = vadd.f32 %v323, %v329
  %v332 = vadd.f32 %v324, %v329
  %v333 = vpack.c.bf16 %v332, %v331
  %v334 = vpack.c.bf16 %v99, %v96
  %v335 = vpack.c.bf16 %v100, %v97
  %v336 = vpack.c.bf16 %v101, %v98
  %v337 = vpack.c.bf16 %v105, %v102
  %v338 = vpack.c.bf16 %v106, %v103
  %v339 = vpack.c.bf16 %v107, %v104
  %v340 = vpack.c.bf16 %v111, %v108
  %v341 = vpack.c.bf16 %v112, %v109
  %v342 = vpack.c.bf16 %v113, %v110
  %v343 = vpack.c.bf16 %v117, %v114
  %v344 = vpack.c.bf16 %v118, %v115
  %v345 = vpack.c.bf16 %v119, %v116
  %v346 = vpack.c.bf16 %v123, %v120
  %v347 = vpack.c.bf16 %v124, %v121
  %v348 = vpack.c.bf16 %v125, %v122
  %v349 = vpack.c.bf16 %v129, %v126
  %v350 = vpack.c.bf16 %v130, %v127
  %v351 = vpack.c.bf16 %v131, %v128
  %v352 = vpack.c.bf16 %v135, %v132
  %v353 = vpack.c.bf16 %v136, %v133
  %v354 = vpack.c.bf16 %v137, %v134
  %v355 = vpack.c.bf16 %v141, %v138
  %v356 = vpack.c.bf16 %v142, %v139
  %v357 = vpack.c.bf16 %v143, %v140
  %v359 = vlaneseq
  %v360 = vshrl.u32 %v359, 7
  %v361 = vsub.s32 0, %v360
  %v362 = vrot.slane %v144, %v361
  %v363 = vlaneseq
  %v364 = vshrl.u32 %v363, 7
  %v365 = vsub.s32 1, %v364
  %v366 = vrot.slane %v144, %v365
  %v367 = vlaneseq
  %v368 = vshrl.u32 %v367, 7
  %v369 = vsub.s32 2, %v368
  %v370 = vrot.slane %v144, %v369
  %374 = vmatprep.subr.bf16.mxu0 %v335
  %375 = vmatpush1.bf16.msra.mxu0 %v334
  %376 = vmatprep.subr.bf16.mxu0 %v338
  %377 = vmatpush1.bf16.msra.mxu0 %v337
  %378 = vmatprep.subr.bf16.mxu0 %v341
  %379 = vmatpush1.bf16.msra.mxu0 %v340
  %380 = vmatprep.subr.bf16.mxu0 %v344
  %381 = vmatpush1.bf16.msra.mxu0 %v343
  %382 = vmatprep.subr.bf16.mxu0 %v347
  %383 = vmatpush1.bf16.msra.mxu0 %v346
  %384 = vmatprep.subr.bf16.mxu0 %v350
  %385 = vmatpush1.bf16.msra.mxu0 %v349
  %386 = vmatprep.subr.bf16.mxu0 %v353
  %387 = vmatpush1.bf16.msra.mxu0 %v352
  %388 = vmatprep.subr.bf16.mxu0 %v356
  %389 = vmatpush1.bf16.msra.mxu0 %v355
  %390 = vmatprep.subr.bf16.mxu0 0
  %391 = vmatpush1.bf16.msra.mxu0 0
  %392 = vmatprep.subr.bf16.mxu0 0
  %393 = vmatpush1.bf16.msra.mxu0 0
  %394 = vmatprep.subr.bf16.mxu0 0
  %395 = vmatpush1.bf16.msra.mxu0 0
  %396 = vmatprep.subr.bf16.mxu0 0
  %397 = vmatpush1.bf16.msra.mxu0 0
  %398 = vmatprep.subr.bf16.mxu0 0
  %399 = vmatpush1.bf16.msra.mxu0 0
  %400 = vmatprep.subr.bf16.mxu0 0
  %401 = vmatpush1.bf16.msra.mxu0 0
  %402 = vmatprep.subr.bf16.mxu0 0
  %403 = vmatpush1.bf16.msra.mxu0 0
  %404 = vmatprep.subr.bf16.mxu0 0
  %405 = vmatpush1.bf16.msra.mxu0 0
  %406 = vmatprep.mubr.bf16.mxu0 0
  %407 = vmatmul.mubr.bf16.gmra.mrb[0].mxu0 %v333
  %v408 = vpop.f32.mrb[0].mxu0
  %v409 = vadd.f32 %v362, %v408
  %v410 = vpop.f32.mrb[0].mxu0
  %v411 = vadd.f32 %v366, %v410
  %v412 = vpop.f32.mrb[0].mxu0
  %v413 = vadd.f32 %v362, %v412
  %v414 = vpop.f32.mrb[0].mxu0
  %v415 = vadd.f32 %v366, %v414
  %416 = vdwg.mxu0
  %417 = vmatprep.subr.bf16.mxu0 0
  %418 = vmatpush1.bf16.msra.mxu0 %v336
  %419 = vmatprep.subr.bf16.mxu0 0
  %420 = vmatpush1.bf16.msra.mxu0 %v339
  %421 = vmatprep.subr.bf16.mxu0 0
  %422 = vmatpush1.bf16.msra.mxu0 %v342
  %423 = vmatprep.subr.bf16.mxu0 0
  %424 = vmatpush1.bf16.msra.mxu0 %v345
  %425 = vmatprep.subr.bf16.mxu0 0
  %426 = vmatpush1.bf16.msra.mxu0 %v348
  %427 = vmatprep.subr.bf16.mxu0 0
  %428 = vmatpush1.bf16.msra.mxu0 %v351
  %429 = vmatprep.subr.bf16.mxu0 0
  %430 = vmatpush1.bf16.msra.mxu0 %v354
  %431 = vmatprep.subr.bf16.mxu0 0
  %432 = vmatpush1.bf16.msra.mxu0 %v357
  %433 = vmatprep.subr.bf16.mxu0 0
  %434 = vmatpush1.bf16.msra.mxu0 0
  %435 = vmatprep.subr.bf16.mxu0 0
  %436 = vmatpush1.bf16.msra.mxu0 0
  %437 = vmatprep.subr.bf16.mxu0 0
  %438 = vmatpush1.bf16.msra.mxu0 0
  %439 = vmatprep.subr.bf16.mxu0 0
  %440 = vmatpush1.bf16.msra.mxu0 0
  %441 = vmatprep.subr.bf16.mxu0 0
  %442 = vmatpush1.bf16.msra.mxu0 0
  %443 = vmatprep.subr.bf16.mxu0 0
  %444 = vmatpush1.bf16.msra.mxu0 0
  %445 = vmatprep.subr.bf16.mxu0 0
  %446 = vmatpush1.bf16.msra.mxu0 0
  %447 = vmatprep.subr.bf16.mxu0 0
  %448 = vmatpush1.bf16.msra.mxu0 0
  %449 = vmatprep.mubr.bf16.mxu0 0
  %450 = vmatmul.mubr.bf16.gmra.mrb[0].mxu0 %v333
  %v451 = vpop.f32.mrb[0].mxu0
  %v452 = vadd.f32 %v370, %v451
  %v453 = vpop.f32.mrb[0].mxu0
  %v454 = vpop.f32.mrb[0].mxu0
  %v455 = vadd.f32 %v370, %v454
  %v456 = vpop.f32.mrb[0].mxu0
  %457 = vdwg.mxu0
  %v458 = vmul.f32 %v409, 0.17677669
  %v459 = vmul.f32 %v413, 0.17677669
  %v460 = vpack.c.bf16 %v459, %v458
  %v461 = vpack.c.bf16 %v415, %v411
  %vm462 = vcmask 261120
  %v464 = vsel %vm462, %v460, 0
  %v467 = vsel %vm462, %v461, 0
  %469 = vmatprep.subr.bf16.mxu0 0
  %470 = vmatpush1.bf16.xpose.msra.mxu0 %v467
  %471 = vmatprep.subr.bf16.mxu0 0
  %472 = vmatpush1.bf16.xpose.msra.mxu0 0
  %473 = vmatprep.subr.bf16.mxu0 0
  %474 = vmatpush1.bf16.xpose.msra.mxu0 0
  %475 = vmatprep.subr.bf16.mxu0 0
  %476 = vmatpush1.bf16.xpose.msra.mxu0 0
  %477 = vmatprep.subr.bf16.mxu0 0
  %478 = vmatpush1.bf16.xpose.msra.mxu0 0
  %479 = vmatprep.subr.bf16.mxu0 0
  %480 = vmatpush1.bf16.xpose.msra.mxu0 0
  %481 = vmatprep.subr.bf16.mxu0 0
  %482 = vmatpush1.bf16.xpose.msra.mxu0 0
  %483 = vmatprep.subr.bf16.mxu0 0
  %484 = vmatpush1.bf16.xpose.msra.mxu0 0
  %485 = vmatprep.subr.bf16.mxu0 0
  %486 = vmatpush1.bf16.xpose.msra.mxu0 0
  %487 = vmatprep.subr.bf16.mxu0 0
  %488 = vmatpush1.bf16.xpose.msra.mxu0 0
  %489 = vmatprep.subr.bf16.mxu0 0
  %490 = vmatpush1.bf16.xpose.msra.mxu0 0
  %491 = vmatprep.subr.bf16.mxu0 0
  %492 = vmatpush1.bf16.xpose.msra.mxu0 0
  %493 = vmatprep.subr.bf16.mxu0 0
  %494 = vmatpush1.bf16.xpose.msra.mxu0 0
  %495 = vmatprep.subr.bf16.mxu0 0
  %496 = vmatpush1.bf16.xpose.msra.mxu0 0
  %497 = vmatprep.subr.bf16.mxu0 0
  %498 = vmatpush1.bf16.xpose.msra.mxu0 0
  %499 = vmatprep.subr.bf16.mxu0 0
  %500 = vmatpush1.bf16.xpose.msra.mxu0 0
  %501 = vmatprep.mubr.bf16.mxu0 0
  %502 = vmatmul.mubr.bf16.gmra.mrb[0].mxu0 %v464
  %v503 = vpop.f32.mrb[0].mxu0
  %v504 = vadd.f32 %v92, %v503
  %v505 = vpop.f32.mrb[0].mxu0
  %v506 = vpop.f32.mrb[0].mxu0
  %v507 = vadd.f32 %v93, %v506
  %v508 = vpop.f32.mrb[0].mxu0
  %509 = vdwg.mxu0
  %vm510 = vcmask 130048
  %v511 = vsel %vm510, %v504, -inf
  %512 = vmax.xlane.f32.xlu0 %v511
  %v513 = vpop.xlane.xlu0 %512
  %v514 = vsel %vm510, %v507, -inf
  %515 = vmax.xlane.f32.xlu0 %v514
  %v516 = vpop.xlane.xlu0 %515
  %v517 = vsub.f32 %v504, %v513
  %v518 = vsub.f32 %v507, %v516
  %v519 = vmul.f32 %v517, 1.442695
  %v520 = vpow.pop %v519
  %v521 = vmul.f32 %v518, 1.442695
  %v522 = vpow.pop %v521
  %v523 = vsel %vm510, %v520, 0.0
  %524 = vadd.xlane.f32.xlu0 %v523
  %v525 = vpop.xlane.xlu0 %524
  %v526 = vsel %vm510, %v522, 0.0
  %527 = vadd.xlane.f32.xlu0 %v526
  %v528 = vpop.xlane.xlu0 %527
  %v529 = vrcp.pop %v525
  %v530 = vrcp.pop %v528
  %v531 = vmul.f32 %v520, %v529
  %v532 = vmul.f32 %v522, %v530
  %v533 = vpack.c.bf16 %v532, %v531
  %v534 = vpack.c.bf16 %v455, %v452
  %v536 = vsel %vm510, %v533, 0
  %538 = vmatprep.subr.bf16.mxu0 0
  %539 = vmatpush1.bf16.msra.mxu0 %v534
  %540 = vmatprep.subr.bf16.mxu0 0
  %541 = vmatpush1.bf16.msra.mxu0 0
  %542 = vmatprep.subr.bf16.mxu0 0
  %543 = vmatpush1.bf16.msra.mxu0 0
  %544 = vmatprep.subr.bf16.mxu0 0
  %545 = vmatpush1.bf16.msra.mxu0 0
  %546 = vmatprep.subr.bf16.mxu0 0
  %547 = vmatpush1.bf16.msra.mxu0 0
  %548 = vmatprep.subr.bf16.mxu0 0
  %549 = vmatpush1.bf16.msra.mxu0 0
  %550 = vmatprep.subr.bf16.mxu0 0
  %551 = vmatpush1.bf16.msra.mxu0 0
  %552 = vmatprep.subr.bf16.mxu0 0
  %553 = vmatpush1.bf16.msra.mxu0 0
  %554 = vmatprep.subr.bf16.mxu0 0
  %555 = vmatpush1.bf16.msra.mxu0 0
  %556 = vmatprep.subr.bf16.mxu0 0
  %557 = vmatpush1.bf16.msra.mxu0 0
  %558 = vmatprep.subr.bf16.mxu0 0
  %559 = vmatpush1.bf16.msra.mxu0 0
  %560 = vmatprep.subr.bf16.mxu0 0
  %561 = vmatpush1.bf16.msra.mxu0 0
  %562 = vmatprep.subr.bf16.mxu0 0
  %563 = vmatpush1.bf16.msra.mxu0 0
  %564 = vmatprep.subr.bf16.mxu0 0
  %565 = vmatpush1.bf16.msra.mxu0 0
  %566 = vmatprep.subr.bf16.mxu0 0
  %567 = vmatpush1.bf16.msra.mxu0 0
  %568 = vmatprep.subr.bf16.mxu0 0
  %569 = vmatpush1.bf16.msra.mxu0 0
  %570 = vmatprep.mubr.bf16.mxu0 0
  %571 = vmatmul.mubr.bf16.gmra.mrb[0].mxu0 %v536
  %v572 = vpop.f32.mrb[0].mxu0
  %v573 = vadd.f32 0.0, %v572
  %v574 = vpop.f32.mrb[0].mxu0
  %v575 = vpop.f32.mrb[0].mxu0
  %v576 = vadd.f32 0.0, %v575
  %v577 = vpop.f32.mrb[0].mxu0
  %578 = vdwg.mxu0
  %v579 = vpack.c.bf16 %v576, %v573
  %v580 = vpack.c.bf16 %v146, %v145
  %v581 = vpack.c.bf16 %v148, %v147
  %583 = vrot.lane.b32.xlu0 %v460, 96
  %v584 = vpop.permute.xlu0 %583
  %586 = vrot.lane.b32.xlu0 %v461, 96
  %v587 = vpop.permute.xlu0 %586
  %v589 = vsel %vm462, %v584, 0
  %v592 = vsel %vm462, %v587, 0
  %594 = vmatprep.subr.bf16.mxu0 0
  %595 = vmatpush1.bf16.xpose.msra.mxu0 %v592
  %596 = vmatprep.subr.bf16.mxu0 0
  %597 = vmatpush1.bf16.xpose.msra.mxu0 0
  %598 = vmatprep.subr.bf16.mxu0 0
  %599 = vmatpush1.bf16.xpose.msra.mxu0 0
  %600 = vmatprep.subr.bf16.mxu0 0
  %601 = vmatpush1.bf16.xpose.msra.mxu0 0
  %602 = vmatprep.subr.bf16.mxu0 0
  %603 = vmatpush1.bf16.xpose.msra.mxu0 0
  %604 = vmatprep.subr.bf16.mxu0 0
  %605 = vmatpush1.bf16.xpose.msra.mxu0 0
  %606 = vmatprep.subr.bf16.mxu0 0
  %607 = vmatpush1.bf16.xpose.msra.mxu0 0
  %608 = vmatprep.subr.bf16.mxu0 0
  %609 = vmatpush1.bf16.xpose.msra.mxu0 0
  %610 = vmatprep.subr.bf16.mxu0 0
  %611 = vmatpush1.bf16.xpose.msra.mxu0 0
  %612 = vmatprep.subr.bf16.mxu0 0
  %613 = vmatpush1.bf16.xpose.msra.mxu0 0
  %614 = vmatprep.subr.bf16.mxu0 0
  %615 = vmatpush1.bf16.xpose.msra.mxu0 0
  %616 = vmatprep.subr.bf16.mxu0 0
  %617 = vmatpush1.bf16.xpose.msra.mxu0 0
  %618 = vmatprep.subr.bf16.mxu0 0
  %619 = vmatpush1.bf16.xpose.msra.mxu0 0
  %620 = vmatprep.subr.bf16.mxu0 0
  %621 = vmatpush1.bf16.xpose.msra.mxu0 0
  %622 = vmatprep.subr.bf16.mxu0 0
  %623 = vmatpush1.bf16.xpose.msra.mxu0 0
  %624 = vmatprep.subr.bf16.mxu0 0
  %625 = vmatpush1.bf16.xpose.msra.mxu0 0
  %626 = vmatprep.mubr.bf16.mxu0 0
  %627 = vmatmul.mubr.bf16.gmra.mrb[0].mxu0 %v589
  %v628 = vpop.f32.mrb[0].mxu0
  %v629 = vadd.f32 %v92, %v628
  %v630 = vpop.f32.mrb[0].mxu0
  %v631 = vpop.f32.mrb[0].mxu0
  %v632 = vadd.f32 %v93, %v631
  %v633 = vpop.f32.mrb[0].mxu0
  %634 = vdwg.mxu0
  %v635 = vsel %vm510, %v629, -inf
  %636 = vmax.xlane.f32.xlu0 %v635
  %v637 = vpop.xlane.xlu0 %636
  %v638 = vsel %vm510, %v632, -inf
  %639 = vmax.xlane.f32.xlu0 %v638
  %v640 = vpop.xlane.xlu0 %639
  %v641 = vsub.f32 %v629, %v637
  %v642 = vsub.f32 %v632, %v640
  %v643 = vmul.f32 %v641, 1.442695
  %v644 = vpow.pop %v643
  %v645 = vmul.f32 %v642, 1.442695
  %v646 = vpow.pop %v645
  %v647 = vsel %vm510, %v644, 0.0
  %648 = vadd.xlane.f32.xlu0 %v647
  %v649 = vpop.xlane.xlu0 %648
  %v650 = vsel %vm510, %v646, 0.0
  %651 = vadd.xlane.f32.xlu0 %v650
  %v652 = vpop.xlane.xlu0 %651
  %v653 = vrcp.pop %v649
  %v654 = vrcp.pop %v652
  %v655 = vmul.f32 %v644, %v653
  %v656 = vmul.f32 %v646, %v654
  %v657 = vpack.c.bf16 %v656, %v655
  %659 = vrot.lane.b32.xlu0 %v534, 96
  %v660 = vpop.permute.xlu0 %659
  %v663 = vsel %vm510, %v657, 0
  %665 = vmatprep.subr.bf16.mxu0 0
  %666 = vmatpush1.bf16.msra.mxu0 %v660
  %667 = vmatprep.subr.bf16.mxu0 0
  %668 = vmatpush1.bf16.msra.mxu0 0
  %669 = vmatprep.subr.bf16.mxu0 0
  %670 = vmatpush1.bf16.msra.mxu0 0
  %671 = vmatprep.subr.bf16.mxu0 0
  %672 = vmatpush1.bf16.msra.mxu0 0
  %673 = vmatprep.subr.bf16.mxu0 0
  %674 = vmatpush1.bf16.msra.mxu0 0
  %675 = vmatprep.subr.bf16.mxu0 0
  %676 = vmatpush1.bf16.msra.mxu0 0
  %677 = vmatprep.subr.bf16.mxu0 0
  %678 = vmatpush1.bf16.msra.mxu0 0
  %679 = vmatprep.subr.bf16.mxu0 0
  %680 = vmatpush1.bf16.msra.mxu0 0
  %681 = vmatprep.subr.bf16.mxu0 0
  %682 = vmatpush1.bf16.msra.mxu0 0
  %683 = vmatprep.subr.bf16.mxu0 0
  %684 = vmatpush1.bf16.msra.mxu0 0
  %685 = vmatprep.subr.bf16.mxu0 0
  %686 = vmatpush1.bf16.msra.mxu0 0
  %687 = vmatprep.subr.bf16.mxu0 0
  %688 = vmatpush1.bf16.msra.mxu0 0
  %689 = vmatprep.subr.bf16.mxu0 0
  %690 = vmatpush1.bf16.msra.mxu0 0
  %691 = vmatprep.subr.bf16.mxu0 0
  %692 = vmatpush1.bf16.msra.mxu0 0
  %693 = vmatprep.subr.bf16.mxu0 0
  %694 = vmatpush1.bf16.msra.mxu0 0
  %695 = vmatprep.subr.bf16.mxu0 0
  %696 = vmatpush1.bf16.msra.mxu0 0
  %697 = vmatprep.mubr.bf16.mxu0 0
  %698 = vmatmul.mubr.bf16.gmra.mrb[0].mxu0 %v663
  %v699 = vpop.f32.mrb[0].mxu0
  %v700 = vadd.f32 0.0, %v699
  %v701 = vpop.f32.mrb[0].mxu0
  %v702 = vpop.f32.mrb[0].mxu0
  %v703 = vadd.f32 0.0, %v702
  %v704 = vpop.f32.mrb[0].mxu0
  %705 = vdwg.mxu0
  %v706 = vpack.c.bf16 %v703, %v700
  %v707 = vpack.c.bf16 %v150, %v149
  %v708 = vpack.c.bf16 %v152, %v151
  %v710 = vsel %vm462, %v706, 0
  %712 = vmatprep.subr.bf16.mxu0 0
  %713 = vmatpush1.bf16.msra.mxu0 %v707
  %714 = vmatprep.subr.bf16.mxu0 0
  %715 = vmatpush1.bf16.msra.mxu0 %v708
  %716 = vmatprep.subr.bf16.mxu0 0
  %717 = vmatpush1.bf16.msra.mxu0 0
  %718 = vmatprep.subr.bf16.mxu0 0
  %719 = vmatpush1.bf16.msra.mxu0 0
  %720 = vmatprep.subr.bf16.mxu0 0
  %721 = vmatpush1.bf16.msra.mxu0 0
  %722 = vmatprep.subr.bf16.mxu0 0
  %723 = vmatpush1.bf16.msra.mxu0 0
  %724 = vmatprep.subr.bf16.mxu0 0
  %725 = vmatpush1.bf16.msra.mxu0 0
  %726 = vmatprep.subr.bf16.mxu0 0
  %727 = vmatpush1.bf16.msra.mxu0 0
  %728 = vmatprep.subr.bf16.mxu0 0
  %729 = vmatpush1.bf16.msra.mxu0 0
  %730 = vmatprep.subr.bf16.mxu0 0
  %731 = vmatpush1.bf16.msra.mxu0 0
  %732 = vmatprep.subr.bf16.mxu0 0
  %733 = vmatpush1.bf16.msra.mxu0 0
  %734 = vmatprep.subr.bf16.mxu0 0
  %735 = vmatpush1.bf16.msra.mxu0 0
  %736 = vmatprep.subr.bf16.mxu0 0
  %737 = vmatpush1.bf16.msra.mxu0 0
  %738 = vmatprep.subr.bf16.mxu0 0
  %739 = vmatpush1.bf16.msra.mxu0 0
  %740 = vmatprep.subr.bf16.mxu0 0
  %741 = vmatpush1.bf16.msra.mxu0 0
  %742 = vmatprep.subr.bf16.mxu0 0
  %743 = vmatpush1.bf16.msra.mxu0 0
  %744 = vmatprep.mubr.bf16.mxu0 0
  %745 = vmatmul.mubr.bf16.gmra.mrb[0].mxu0 %v710
  %v746 = vpop.f32.mrb[0].mxu0
  %v747 = vadd.f32 0.0, %v746
  %v748 = vpop.f32.mrb[0].mxu0
  %v749 = vpop.f32.mrb[0].mxu0
  %v750 = vadd.f32 0.0, %v749
  %v751 = vpop.f32.mrb[0].mxu0
  %752 = vdwg.mxu0
  %v754 = vsel %vm462, %v579, 0
  %756 = vmatprep.subr.bf16.mxu0 0
  %757 = vmatpush1.bf16.msra.mxu0 %v580
  %758 = vmatprep.subr.bf16.mxu0 0
  %759 = vmatpush1.bf16.msra.mxu0 %v581
  %760 = vmatprep.subr.bf16.mxu0 0
  %761 = vmatpush1.bf16.msra.mxu0 0
  %762 = vmatprep.subr.bf16.mxu0 0
  %763 = vmatpush1.bf16.msra.mxu0 0
  %764 = vmatprep.subr.bf16.mxu0 0
  %765 = vmatpush1.bf16.msra.mxu0 0
  %766 = vmatprep.subr.bf16.mxu0 0
  %767 = vmatpush1.bf16.msra.mxu0 0
  %768 = vmatprep.subr.bf16.mxu0 0
  %769 = vmatpush1.bf16.msra.mxu0 0
  %770 = vmatprep.subr.bf16.mxu0 0
  %771 = vmatpush1.bf16.msra.mxu0 0
  %772 = vmatprep.subr.bf16.mxu0 0
  %773 = vmatpush1.bf16.msra.mxu0 0
  %774 = vmatprep.subr.bf16.mxu0 0
  %775 = vmatpush1.bf16.msra.mxu0 0
  %776 = vmatprep.subr.bf16.mxu0 0
  %777 = vmatpush1.bf16.msra.mxu0 0
  %778 = vmatprep.subr.bf16.mxu0 0
  %779 = vmatpush1.bf16.msra.mxu0 0
  %780 = vmatprep.subr.bf16.mxu0 0
  %781 = vmatpush1.bf16.msra.mxu0 0
  %782 = vmatprep.subr.bf16.mxu0 0
  %783 = vmatpush1.bf16.msra.mxu0 0
  %784 = vmatprep.subr.bf16.mxu0 0
  %785 = vmatpush1.bf16.msra.mxu0 0
  %786 = vmatprep.subr.bf16.mxu0 0
  %787 = vmatpush1.bf16.msra.mxu0 0
  %788 = vmatprep.mubr.bf16.mxu0 0
  %789 = vmatmul.mubr.bf16.gmra.mrb[0].mxu0 %v754
  %v790 = vpop.f32.mrb[0].mxu0
  %v791 = vadd.f32 %v747, %v790
  %v792 = vpop.f32.mrb[0].mxu0
  %v793 = vpop.f32.mrb[0].mxu0
  %v794 = vadd.f32 %v750, %v793
  %v795 = vpop.f32.mrb[0].mxu0
  %796 = vdwg.mxu0
  %797 = vrot.lane.b32.xlu0 %v460, 64
  %v798 = vpop.permute.xlu0 %797
  %799 = vrot.lane.b32.xlu0 %v461, 64
  %v800 = vpop.permute.xlu0 %799
  %v802 = vsel %vm462, %v798, 0
  %v805 = vsel %vm462, %v800, 0
  %807 = vmatprep.subr.bf16.mxu0 0
  %808 = vmatpush1.bf16.xpose.msra.mxu0 %v805
  %809 = vmatprep.subr.bf16.mxu0 0
  %810 = vmatpush1.bf16.xpose.msra.mxu0 0
  %811 = vmatprep.subr.bf16.mxu0 0
  %812 = vmatpush1.bf16.xpose.msra.mxu0 0
  %813 = vmatprep.subr.bf16.mxu0 0
  %814 = vmatpush1.bf16.xpose.msra.mxu0 0
  %815 = vmatprep.subr.bf16.mxu0 0
  %816 = vmatpush1.bf16.xpose.msra.mxu0 0
  %817 = vmatprep.subr.bf16.mxu0 0
  %818 = vmatpush1.bf16.xpose.msra.mxu0 0
  %819 = vmatprep.subr.bf16.mxu0 0
  %820 = vmatpush1.bf16.xpose.msra.mxu0 0
  %821 = vmatprep.subr.bf16.mxu0 0
  %822 = vmatpush1.bf16.xpose.msra.mxu0 0
  %823 = vmatprep.subr.bf16.mxu0 0
  %824 = vmatpush1.bf16.xpose.msra.mxu0 0
  %825 = vmatprep.subr.bf16.mxu0 0
  %826 = vmatpush1.bf16.xpose.msra.mxu0 0
  %827 = vmatprep.subr.bf16.mxu0 0
  %828 = vmatpush1.bf16.xpose.msra.mxu0 0
  %829 = vmatprep.subr.bf16.mxu0 0
  %830 = vmatpush1.bf16.xpose.msra.mxu0 0
  %831 = vmatprep.subr.bf16.mxu0 0
  %832 = vmatpush1.bf16.xpose.msra.mxu0 0
  %833 = vmatprep.subr.bf16.mxu0 0
  %834 = vmatpush1.bf16.xpose.msra.mxu0 0
  %835 = vmatprep.subr.bf16.mxu0 0
  %836 = vmatpush1.bf16.xpose.msra.mxu0 0
  %837 = vmatprep.subr.bf16.mxu0 0
  %838 = vmatpush1.bf16.xpose.msra.mxu0 0
  %839 = vmatprep.mubr.bf16.mxu0 0
  %840 = vmatmul.mubr.bf16.gmra.mrb[0].mxu0 %v802
  %v841 = vpop.f32.mrb[0].mxu0
  %v842 = vadd.f32 %v92, %v841
  %v843 = vpop.f32.mrb[0].mxu0
  %v844 = vpop.f32.mrb[0].mxu0
  %v845 = vadd.f32 %v93, %v844
  %v846 = vpop.f32.mrb[0].mxu0
  %847 = vdwg.mxu0
  %v848 = vsel %vm510, %v842, -inf
  %849 = vmax.xlane.f32.xlu0 %v848
  %v850 = vpop.xlane.xlu0 %849
  %v851 = vsel %vm510, %v845, -inf
  %852 = vmax.xlane.f32.xlu0 %v851
  %v853 = vpop.xlane.xlu0 %852
  %v854 = vsub.f32 %v842, %v850
  %v855 = vsub.f32 %v845, %v853
  %v856 = vmul.f32 %v854, 1.442695
  %v857 = vpow.pop %v856
  %v858 = vmul.f32 %v855, 1.442695
  %v859 = vpow.pop %v858
  %v860 = vsel %vm510, %v857, 0.0
  %861 = vadd.xlane.f32.xlu0 %v860
  %v862 = vpop.xlane.xlu0 %861
  %v863 = vsel %vm510, %v859, 0.0
  %864 = vadd.xlane.f32.xlu0 %v863
  %v865 = vpop.xlane.xlu0 %864
  %v866 = vrcp.pop %v862
  %v867 = vrcp.pop %v865
  %v868 = vmul.f32 %v857, %v866
  %v869 = vmul.f32 %v859, %v867
  %v870 = vpack.c.bf16 %v869, %v868
  %871 = vrot.lane.b32.xlu0 %v534, 64
  %v872 = vpop.permute.xlu0 %871
  %v875 = vsel %vm510, %v870, 0
  %877 = vmatprep.subr.bf16.mxu0 0
  %878 = vmatpush1.bf16.msra.mxu0 %v872
  %879 = vmatprep.subr.bf16.mxu0 0
  %880 = vmatpush1.bf16.msra.mxu0 0
  %881 = vmatprep.subr.bf16.mxu0 0
  %882 = vmatpush1.bf16.msra.mxu0 0
  %883 = vmatprep.subr.bf16.mxu0 0
  %884 = vmatpush1.bf16.msra.mxu0 0
  %885 = vmatprep.subr.bf16.mxu0 0
  %886 = vmatpush1.bf16.msra.mxu0 0
  %887 = vmatprep.subr.bf16.mxu0 0
  %888 = vmatpush1.bf16.msra.mxu0 0
  %889 = vmatprep.subr.bf16.mxu0 0
  %890 = vmatpush1.bf16.msra.mxu0 0
  %891 = vmatprep.subr.bf16.mxu0 0
  %892 = vmatpush1.bf16.msra.mxu0 0
  %893 = vmatprep.subr.bf16.mxu0 0
  %894 = vmatpush1.bf16.msra.mxu0 0
  %895 = vmatprep.subr.bf16.mxu0 0
  %896 = vmatpush1.bf16.msra.mxu0 0
  %897 = vmatprep.subr.bf16.mxu0 0
  %898 = vmatpush1.bf16.msra.mxu0 0
  %899 = vmatprep.subr.bf16.mxu0 0
  %900 = vmatpush1.bf16.msra.mxu0 0
  %901 = vmatprep.subr.bf16.mxu0 0
  %902 = vmatpush1.bf16.msra.mxu0 0
  %903 = vmatprep.subr.bf16.mxu0 0
  %904 = vmatpush1.bf16.msra.mxu0 0
  %905 = vmatprep.subr.bf16.mxu0 0
  %906 = vmatpush1.bf16.msra.mxu0 0
  %907 = vmatprep.subr.bf16.mxu0 0
  %908 = vmatpush1.bf16.msra.mxu0 0
  %909 = vmatprep.mubr.bf16.mxu0 0
  %910 = vmatmul.mubr.bf16.gmra.mrb[0].mxu0 %v875
  %v911 = vpop.f32.mrb[0].mxu0
  %v912 = vadd.f32 0.0, %v911
  %v913 = vpop.f32.mrb[0].mxu0
  %v914 = vpop.f32.mrb[0].mxu0
  %v915 = vadd.f32 0.0, %v914
  %v916 = vpop.f32.mrb[0].mxu0
  %917 = vdwg.mxu0
  %v918 = vpack.c.bf16 %v915, %v912
  %v919 = vpack.c.bf16 %v154, %v153
  %v920 = vpack.c.bf16 %v156, %v155
  %v922 = vsel %vm462, %v918, 0
  %924 = vmatprep.subr.bf16.mxu0 0
  %925 = vmatpush1.bf16.msra.mxu0 %v919
  %926 = vmatprep.subr.bf16.mxu0 0
  %927 = vmatpush1.bf16.msra.mxu0 %v920
  %928 = vmatprep.subr.bf16.mxu0 0
  %929 = vmatpush1.bf16.msra.mxu0 0
  %930 = vmatprep.subr.bf16.mxu0 0
  %931 = vmatpush1.bf16.msra.mxu0 0
  %932 = vmatprep.subr.bf16.mxu0 0
  %933 = vmatpush1.bf16.msra.mxu0 0
  %934 = vmatprep.subr.bf16.mxu0 0
  %935 = vmatpush1.bf16.msra.mxu0 0
  %936 = vmatprep.subr.bf16.mxu0 0
  %937 = vmatpush1.bf16.msra.mxu0 0
  %938 = vmatprep.subr.bf16.mxu0 0
  %939 = vmatpush1.bf16.msra.mxu0 0
  %940 = vmatprep.subr.bf16.mxu0 0
  %941 = vmatpush1.bf16.msra.mxu0 0
  %942 = vmatprep.subr.bf16.mxu0 0
  %943 = vmatpush1.bf16.msra.mxu0 0
  %944 = vmatprep.subr.bf16.mxu0 0
  %945 = vmatpush1.bf16.msra.mxu0 0
  %946 = vmatprep.subr.bf16.mxu0 0
  %947 = vmatpush1.bf16.msra.mxu0 0
  %948 = vmatprep.subr.bf16.mxu0 0
  %949 = vmatpush1.bf16.msra.mxu0 0
  %950 = vmatprep.subr.bf16.mxu0 0
  %951 = vmatpush1.bf16.msra.mxu0 0
  %952 = vmatprep.subr.bf16.mxu0 0
  %953 = vmatpush1.bf16.msra.mxu0 0
  %954 = vmatprep.subr.bf16.mxu0 0
  %955 = vmatpush1.bf16.msra.mxu0 0
  %956 = vmatprep.mubr.bf16.mxu0 0
  %957 = vmatmul.mubr.bf16.gmra.mrb[0].mxu0 %v922
  %v958 = vpop.f32.mrb[0].mxu0
  %v959 = vadd.f32 0.0, %v958
  %v960 = vpop.f32.mrb[0].mxu0
  %v961 = vpop.f32.mrb[0].mxu0
  %v962 = vadd.f32 0.0, %v961
  %v963 = vpop.f32.mrb[0].mxu0
  %964 = vdwg.mxu0
  %v965 = vadd.f32 %v791, %v959
  %v966 = vadd.f32 %v794, %v962
  %967 = vrot.lane.b32.xlu0 %v460, 32
  %v968 = vpop.permute.xlu0 %967
  %969 = vrot.lane.b32.xlu0 %v461, 32
  %v970 = vpop.permute.xlu0 %969
  %v972 = vsel %vm462, %v968, 0
  %v975 = vsel %vm462, %v970, 0
  %977 = vmatprep.subr.bf16.mxu0 0
  %978 = vmatpush1.bf16.xpose.msra.mxu0 %v975
  %979 = vmatprep.subr.bf16.mxu0 0
  %980 = vmatpush1.bf16.xpose.msra.mxu0 0
  %981 = vmatprep.subr.bf16.mxu0 0
  %982 = vmatpush1.bf16.xpose.msra.mxu0 0
  %983 = vmatprep.subr.bf16.mxu0 0
  %984 = vmatpush1.bf16.xpose.msra.mxu0 0
  %985 = vmatprep.subr.bf16.mxu0 0
  %986 = vmatpush1.bf16.xpose.msra.mxu0 0
  %987 = vmatprep.subr.bf16.mxu0 0
  %988 = vmatpush1.bf16.xpose.msra.mxu0 0
  %989 = vmatprep.subr.bf16.mxu0 0
  %990 = vmatpush1.bf16.xpose.msra.mxu0 0
  %991 = vmatprep.subr.bf16.mxu0 0
  %992 = vmatpush1.bf16.xpose.msra.mxu0 0
  %993 = vmatprep.subr.bf16.mxu0 0
  %994 = vmatpush1.bf16.xpose.msra.mxu0 0
  %995 = vmatprep.subr.bf16.mxu0 0
  %996 = vmatpush1.bf16.xpose.msra.mxu0 0
  %997 = vmatprep.subr.bf16.mxu0 0
  %998 = vmatpush1.bf16.xpose.msra.mxu0 0
  %999 = vmatprep.subr.bf16.mxu0 0
  %1000 = vmatpush1.bf16.xpose.msra.mxu0 0
  %1001 = vmatprep.subr.bf16.mxu0 0
  %1002 = vmatpush1.bf16.xpose.msra.mxu0 0
  %1003 = vmatprep.subr.bf16.mxu0 0
  %1004 = vmatpush1.bf16.xpose.msra.mxu0 0
  %1005 = vmatprep.subr.bf16.mxu0 0
  %1006 = vmatpush1.bf16.xpose.msra.mxu0 0
  %1007 = vmatprep.subr.bf16.mxu0 0
  %1008 = vmatpush1.bf16.xpose.msra.mxu0 0
  %1009 = vmatprep.mubr.bf16.mxu0 0
  %1010 = vmatmul.mubr.bf16.gmra.mrb[0].mxu0 %v972
  %v1011 = vpop.f32.mrb[0].mxu0
  %v1012 = vadd.f32 %v92, %v1011
  %v1013 = vpop.f32.mrb[0].mxu0
  %v1014 = vpop.f32.mrb[0].mxu0
  %v1015 = vadd.f32 %v93, %v1014
  %v1016 = vpop.f32.mrb[0].mxu0
  %1017 = vdwg.mxu0
  %v1018 = vsel %vm510, %v1012, -inf
  %1019 = vmax.xlane.f32.xlu0 %v1018
  %v1020 = vpop.xlane.xlu0 %1019
  %v1021 = vsel %vm510, %v1015, -inf
  %1022 = vmax.xlane.f32.xlu0 %v1021
  %v1023 = vpop.xlane.xlu0 %1022
  %v1024 = vsub.f32 %v1012, %v1020
  %v1025 = vsub.f32 %v1015, %v1023
  %v1026 = vmul.f32 %v1024, 1.442695
  %v1027 = vpow.pop %v1026
  %v1028 = vmul.f32 %v1025, 1.442695
  %v1029 = vpow.pop %v1028
  %v1030 = vsel %vm510, %v1027, 0.0
  %1031 = vadd.xlane.f32.xlu0 %v1030
  %v1032 = vpop.xlane.xlu0 %1031
  %v1033 = vsel %vm510, %v1029, 0.0
  %1034 = vadd.xlane.f32.xlu0 %v1033
  %v1035 = vpop.xlane.xlu0 %1034
  %v1036 = vrcp.pop %v1032
  %v1037 = vrcp.pop %v1035
  %v1038 = vmul.f32 %v1027, %v1036
  %v1039 = vmul.f32 %v1029, %v1037
  %v1040 = vpack.c.bf16 %v1039, %v1038
  %1041 = vrot.lane.b32.xlu0 %v534, 32
  %v1042 = vpop.permute.xlu0 %1041
  %v1045 = vsel %vm510, %v1040, 0
  %1047 = vmatprep.subr.bf16.mxu0 0
  %1048 = vmatpush1.bf16.msra.mxu0 %v1042
  %1049 = vmatprep.subr.bf16.mxu0 0
  %1050 = vmatpush1.bf16.msra.mxu0 0
  %1051 = vmatprep.subr.bf16.mxu0 0
  %1052 = vmatpush1.bf16.msra.mxu0 0
  %1053 = vmatprep.subr.bf16.mxu0 0
  %1054 = vmatpush1.bf16.msra.mxu0 0
  %1055 = vmatprep.subr.bf16.mxu0 0
  %1056 = vmatpush1.bf16.msra.mxu0 0
  %1057 = vmatprep.subr.bf16.mxu0 0
  %1058 = vmatpush1.bf16.msra.mxu0 0
  %1059 = vmatprep.subr.bf16.mxu0 0
  %1060 = vmatpush1.bf16.msra.mxu0 0
  %1061 = vmatprep.subr.bf16.mxu0 0
  %1062 = vmatpush1.bf16.msra.mxu0 0
  %1063 = vmatprep.subr.bf16.mxu0 0
  %1064 = vmatpush1.bf16.msra.mxu0 0
  %1065 = vmatprep.subr.bf16.mxu0 0
  %1066 = vmatpush1.bf16.msra.mxu0 0
  %1067 = vmatprep.subr.bf16.mxu0 0
  %1068 = vmatpush1.bf16.msra.mxu0 0
  %1069 = vmatprep.subr.bf16.mxu0 0
  %1070 = vmatpush1.bf16.msra.mxu0 0
  %1071 = vmatprep.subr.bf16.mxu0 0
  %1072 = vmatpush1.bf16.msra.mxu0 0
  %1073 = vmatprep.subr.bf16.mxu0 0
  %1074 = vmatpush1.bf16.msra.mxu0 0
  %1075 = vmatprep.subr.bf16.mxu0 0
  %1076 = vmatpush1.bf16.msra.mxu0 0
  %1077 = vmatprep.subr.bf16.mxu0 0
  %1078 = vmatpush1.bf16.msra.mxu0 0
  %1079 = vmatprep.mubr.bf16.mxu0 0
  %1080 = vmatmul.mubr.bf16.gmra.mrb[0].mxu0 %v1045
  %v1081 = vpop.f32.mrb[0].mxu0
  %v1082 = vadd.f32 0.0, %v1081
  %v1083 = vpop.f32.mrb[0].mxu0
  %v1084 = vpop.f32.mrb[0].mxu0
  %v1085 = vadd.f32 0.0, %v1084
  %v1086 = vpop.f32.mrb[0].mxu0
  %1087 = vdwg.mxu0
  %v1088 = vpack.c.bf16 %v1085, %v1082
  %v1089 = vpack.c.bf16 %v158, %v157
  %v1090 = vpack.c.bf16 %v160, %v159
  %v1092 = vsel %vm462, %v1088, 0
  %1094 = vmatprep.subr.bf16.mxu0 0
  %1095 = vmatpush1.bf16.msra.mxu0 %v1089
  %1096 = vmatprep.subr.bf16.mxu0 0
  %1097 = vmatpush1.bf16.msra.mxu0 %v1090
  %1098 = vmatprep.subr.bf16.mxu0 0
  %1099 = vmatpush1.bf16.msra.mxu0 0
  %1100 = vmatprep.subr.bf16.mxu0 0
  %1101 = vmatpush1.bf16.msra.mxu0 0
  %1102 = vmatprep.subr.bf16.mxu0 0
  %1103 = vmatpush1.bf16.msra.mxu0 0
  %1104 = vmatprep.subr.bf16.mxu0 0
  %1105 = vmatpush1.bf16.msra.mxu0 0
  %1106 = vmatprep.subr.bf16.mxu0 0
  %1107 = vmatpush1.bf16.msra.mxu0 0
  %1108 = vmatprep.subr.bf16.mxu0 0
  %1109 = vmatpush1.bf16.msra.mxu0 0
  %1110 = vmatprep.subr.bf16.mxu0 0
  %1111 = vmatpush1.bf16.msra.mxu0 0
  %1112 = vmatprep.subr.bf16.mxu0 0
  %1113 = vmatpush1.bf16.msra.mxu0 0
  %1114 = vmatprep.subr.bf16.mxu0 0
  %1115 = vmatpush1.bf16.msra.mxu0 0
  %1116 = vmatprep.subr.bf16.mxu0 0
  %1117 = vmatpush1.bf16.msra.mxu0 0
  %1118 = vmatprep.subr.bf16.mxu0 0
  %1119 = vmatpush1.bf16.msra.mxu0 0
  %1120 = vmatprep.subr.bf16.mxu0 0
  %1121 = vmatpush1.bf16.msra.mxu0 0
  %1122 = vmatprep.subr.bf16.mxu0 0
  %1123 = vmatpush1.bf16.msra.mxu0 0
  %1124 = vmatprep.subr.bf16.mxu0 0
  %1125 = vmatpush1.bf16.msra.mxu0 0
  %1126 = vmatprep.mubr.bf16.mxu0 0
  %1127 = vmatmul.mubr.bf16.gmra.mrb[0].mxu0 %v1092
  %v1128 = vpop.f32.mrb[0].mxu0
  %v1129 = vadd.f32 0.0, %v1128
  %v1130 = vpop.f32.mrb[0].mxu0
  %v1131 = vpop.f32.mrb[0].mxu0
  %v1132 = vadd.f32 0.0, %v1131
  %v1133 = vpop.f32.mrb[0].mxu0
  %1134 = vdwg.mxu0
  %v1135 = vadd.f32 %v965, %v1129
  %v1136 = vadd.f32 %v966, %v1132
  %v1137 = vadd.f32 %v57, %v1135
  %v1138 = vadd.f32 %v58, %v1136
  %v1140 = vlaneseq
  %v1141 = vshrl.u32 %v1140, 7
  %v1142 = vsub.s32 0, %v1141
  %v1143 = vrot.slane %v161, %v1142
  %v1145 = vadd.f32 %v1137, %v1143
  %v1146 = vadd.f32 %v1138, %v1143
  %1147 = vadd.xlane.f32.xlu0 %v1145
  %v1148 = vpop.xlane.xlu0 %1147
  %1149 = vadd.xlane.f32.xlu0 %v1146
  %v1150 = vpop.xlane.xlu0 %1149
  %v1151 = vmul.f32 %v1148, %v298
  %v1152 = vmul.f32 %v1150, %v298
  %v1153 = vsub.f32 %v1145, %v1151
  %v1154 = vsub.f32 %v1146, %v1152
  %v1155 = vmul.f32 %v1153, %v1153
  %v1156 = vmul.f32 %v1154, %v1154
  %1157 = vadd.xlane.f32.xlu0 %v1155
  %v1158 = vpop.xlane.xlu0 %1157
  %1159 = vadd.xlane.f32.xlu0 %v1156
  %v1160 = vpop.xlane.xlu0 %1159
  %v1161 = vmul.f32 %v1158, %v298
  %v1162 = vmul.f32 %v1160, %v298
  %v1163 = vadd.f32 %v1161, 1e-05
  %v1164 = vadd.f32 %v1162, 1e-05
  %v1165 = vrsqrt.pop %v1163
  %v1166 = vrsqrt.pop %v1164
  %v1167 = vmul.f32 %v1153, %v1165
  %v1168 = vmul.f32 %v1154, %v1166
  %v1170 = vlaneseq
  %v1171 = vshrl.u32 %v1170, 7
  %v1172 = vsub.s32 0, %v1171
  %v1173 = vrot.slane %v162, %v1172
  %v1175 = vmul.f32 %v1167, %v1173
  %v1176 = vmul.f32 %v1168, %v1173
  %v1178 = vlaneseq
  %v1179 = vshrl.u32 %v1178, 7
  %v1180 = vsub.s32 0, %v1179
  %v1181 = vrot.slane %v163, %v1180
  %v1183 = vadd.f32 %v1175, %v1181
  %v1184 = vadd.f32 %v1176, %v1181
  %v1185 = vpack.c.bf16 %v1184, %v1183
  %v1186 = vpack.c.bf16 %v168, %v164
  %v1187 = vpack.c.bf16 %v169, %v165
  %v1188 = vpack.c.bf16 %v170, %v166
  %v1189 = vpack.c.bf16 %v171, %v167
  %v1190 = vpack.c.bf16 %v176, %v172
  %v1191 = vpack.c.bf16 %v177, %v173
  %v1192 = vpack.c.bf16 %v178, %v174
  %v1193 = vpack.c.bf16 %v179, %v175
  %v1194 = vpack.c.bf16 %v184, %v180
  %v1195 = vpack.c.bf16 %v185, %v181
  %v1196 = vpack.c.bf16 %v186, %v182
  %v1197 = vpack.c.bf16 %v187, %v183
  %v1198 = vpack.c.bf16 %v192, %v188
  %v1199 = vpack.c.bf16 %v193, %v189
  %v1200 = vpack.c.bf16 %v194, %v190
  %v1201 = vpack.c.bf16 %v195, %v191
  %v1202 = vpack.c.bf16 %v200, %v196
  %v1203 = vpack.c.bf16 %v201, %v197
  %v1204 = vpack.c.bf16 %v202, %v198
  %v1205 = vpack.c.bf16 %v203, %v199
  %v1206 = vpack.c.bf16 %v208, %v204
  %v1207 = vpack.c.bf16 %v209, %v205
  %v1208 = vpack.c.bf16 %v210, %v206
  %v1209 = vpack.c.bf16 %v211, %v207
  %v1210 = vpack.c.bf16 %v216, %v212
  %v1211 = vpack.c.bf16 %v217, %v213
  %v1212 = vpack.c.bf16 %v218, %v214
  %v1213 = vpack.c.bf16 %v219, %v215
  %v1214 = vpack.c.bf16 %v224, %v220
  %v1215 = vpack.c.bf16 %v225, %v221
  %v1216 = vpack.c.bf16 %v226, %v222
  %v1217 = vpack.c.bf16 %v227, %v223
  %v1219 = vlaneseq
  %v1220 = vshrl.u32 %v1219, 7
  %v1221 = vsub.s32 0, %v1220
  %v1222 = vrot.slane %v228, %v1221
  %v1223 = vlaneseq
  %v1224 = vshrl.u32 %v1223, 7
  %v1225 = vsub.s32 1, %v1224
  %v1226 = vrot.slane %v228, %v1225
  %v1227 = vlaneseq
  %v1228 = vshrl.u32 %v1227, 7
  %v1229 = vsub.s32 2, %v1228
  %v1230 = vrot.slane %v228, %v1229
  %v1231 = vlaneseq
  %v1232 = vshrl.u32 %v1231, 7
  %v1233 = vsub.s32 3, %v1232
  %v1234 = vrot.slane %v228, %v1233
  %1239 = vmatprep.subr.bf16.mxu0 %v1187
  %1240 = vmatpush1.bf16.msra.mxu0 %v1186
  %1241 = vmatprep.subr.bf16.mxu0 %v1191
  %1242 = vmatpush1.bf16.msra.mxu0 %v1190
  %1243 = vmatprep.subr.bf16.mxu0 %v1195
  %1244 = vmatpush1.bf16.msra.mxu0 %v1194
  %1245 = vmatprep.subr.bf16.mxu0 %v1199
  %1246 = vmatpush1.bf16.msra.mxu0 %v1198
  %1247 = vmatprep.subr.bf16.mxu0 %v1203
  %1248 = vmatpush1.bf16.msra.mxu0 %v1202
  %1249 = vmatprep.subr.bf16.mxu0 %v1207
  %1250 = vmatpush1.bf16.msra.mxu0 %v1206
  %1251 = vmatprep.subr.bf16.mxu0 %v1211
  %1252 = vmatpush1.bf16.msra.mxu0 %v1210
  %1253 = vmatprep.subr.bf16.mxu0 %v1215
  %1254 = vmatpush1.bf16.msra.mxu0 %v1214
  %1255 = vmatprep.subr.bf16.mxu0 0
  %1256 = vmatpush1.bf16.msra.mxu0 0
  %1257 = vmatprep.subr.bf16.mxu0 0
  %1258 = vmatpush1.bf16.msra.mxu0 0
  %1259 = vmatprep.subr.bf16.mxu0 0
  %1260 = vmatpush1.bf16.msra.mxu0 0
  %1261 = vmatprep.subr.bf16.mxu0 0
  %1262 = vmatpush1.bf16.msra.mxu0 0
  %1263 = vmatprep.subr.bf16.mxu0 0
  %1264 = vmatpush1.bf16.msra.mxu0 0
  %1265 = vmatprep.subr.bf16.mxu0 0
  %1266 = vmatpush1.bf16.msra.mxu0 0
  %1267 = vmatprep.subr.bf16.mxu0 0
  %1268 = vmatpush1.bf16.msra.mxu0 0
  %1269 = vmatprep.subr.bf16.mxu0 0
  %1270 = vmatpush1.bf16.msra.mxu0 0
  %1271 = vmatprep.mubr.bf16.mxu0 0
  %1272 = vmatmul.mubr.bf16.gmra.mrb[0].mxu0 %v1185
  %v1273 = vpop.f32.mrb[0].mxu0
  %v1274 = vadd.f32 %v1222, %v1273
  %v1275 = vpop.f32.mrb[0].mxu0
  %v1276 = vadd.f32 %v1226, %v1275
  %v1277 = vpop.f32.mrb[0].mxu0
  %v1278 = vadd.f32 %v1222, %v1277
  %v1279 = vpop.f32.mrb[0].mxu0
  %v1280 = vadd.f32 %v1226, %v1279
  %1281 = vdwg.mxu0
  %1282 = vmatprep.subr.bf16.mxu0 %v1189
  %1283 = vmatpush1.bf16.msra.mxu0 %v1188
  %1284 = vmatprep.subr.bf16.mxu0 %v1193
  %1285 = vmatpush1.bf16.msra.mxu0 %v1192
  %1286 = vmatprep.subr.bf16.mxu0 %v1197
  %1287 = vmatpush1.bf16.msra.mxu0 %v1196
  %1288 = vmatprep.subr.bf16.mxu0 %v1201
  %1289 = vmatpush1.bf16.msra.mxu0 %v1200
  %1290 = vmatprep.subr.bf16.mxu0 %v1205
  %1291 = vmatpush1.bf16.msra.mxu0 %v1204
  %1292 = vmatprep.subr.bf16.mxu0 %v1209
  %1293 = vmatpush1.bf16.msra.mxu0 %v1208
  %1294 = vmatprep.subr.bf16.mxu0 %v1213
  %1295 = vmatpush1.bf16.msra.mxu0 %v1212
  %1296 = vmatprep.subr.bf16.mxu0 %v1217
  %1297 = vmatpush1.bf16.msra.mxu0 %v1216
  %1298 = vmatprep.subr.bf16.mxu0 0
  %1299 = vmatpush1.bf16.msra.mxu0 0
  %1300 = vmatprep.subr.bf16.mxu0 0
  %1301 = vmatpush1.bf16.msra.mxu0 0
  %1302 = vmatprep.subr.bf16.mxu0 0
  %1303 = vmatpush1.bf16.msra.mxu0 0
  %1304 = vmatprep.subr.bf16.mxu0 0
  %1305 = vmatpush1.bf16.msra.mxu0 0
  %1306 = vmatprep.subr.bf16.mxu0 0
  %1307 = vmatpush1.bf16.msra.mxu0 0
  %1308 = vmatprep.subr.bf16.mxu0 0
  %1309 = vmatpush1.bf16.msra.mxu0 0
  %1310 = vmatprep.subr.bf16.mxu0 0
  %1311 = vmatpush1.bf16.msra.mxu0 0
  %1312 = vmatprep.subr.bf16.mxu0 0
  %1313 = vmatpush1.bf16.msra.mxu0 0
  %1314 = vmatprep.mubr.bf16.mxu0 0
  %1315 = vmatmul.mubr.bf16.gmra.mrb[0].mxu0 %v1185
  %v1316 = vpop.f32.mrb[0].mxu0
  %v1317 = vadd.f32 %v1230, %v1316
  %v1318 = vpop.f32.mrb[0].mxu0
  %v1319 = vadd.f32 %v1234, %v1318
  %v1320 = vpop.f32.mrb[0].mxu0
  %v1321 = vadd.f32 %v1230, %v1320
  %v1322 = vpop.f32.mrb[0].mxu0
  %v1323 = vadd.f32 %v1234, %v1322
  %1324 = vdwg.mxu0
  %v1325 = vmul.f32 %v1274, %v1274
  %v1326 = vmul.f32 %v1276, %v1276
  %v1327 = vmul.f32 %v1317, %v1317
  %v1328 = vmul.f32 %v1319, %v1319
  %v1329 = vmul.f32 %v1278, %v1278
  %v1330 = vmul.f32 %v1280, %v1280
  %v1331 = vmul.f32 %v1321, %v1321
  %v1332 = vmul.f32 %v1323, %v1323
  %v1333 = vmul.f32 %v1274, %v1325
  %v1334 = vmul.f32 %v1276, %v1326
  %v1335 = vmul.f32 %v1317, %v1327
  %v1336 = vmul.f32 %v1319, %v1328
  %v1337 = vmul.f32 %v1278, %v1329
  %v1338 = vmul.f32 %v1280, %v1330
  %v1339 = vmul.f32 %v1321, %v1331
  %v1340 = vmul.f32 %v1323, %v1332
  %v1341 = vmul.f32 %v1333, 0.044715
  %v1342 = vmul.f32 %v1334, 0.044715
  %v1343 = vmul.f32 %v1335, 0.044715
  %v1344 = vmul.f32 %v1336, 0.044715
  %v1345 = vmul.f32 %v1337, 0.044715
  %v1346 = vmul.f32 %v1338, 0.044715
  %v1347 = vmul.f32 %v1339, 0.044715
  %v1348 = vmul.f32 %v1340, 0.044715
  %v1349 = vadd.f32 %v1274, %v1341
  %v1350 = vadd.f32 %v1276, %v1342
  %v1351 = vadd.f32 %v1317, %v1343
  %v1352 = vadd.f32 %v1319, %v1344
  %v1353 = vadd.f32 %v1278, %v1345
  %v1354 = vadd.f32 %v1280, %v1346
  %v1355 = vadd.f32 %v1321, %v1347
  %v1356 = vadd.f32 %v1323, %v1348
  %v1357 = vmul.f32 %v1349, 0.7978846
  %v1358 = vmul.f32 %v1350, 0.7978846
  %v1359 = vmul.f32 %v1351, 0.7978846
  %v1360 = vmul.f32 %v1352, 0.7978846
  %v1361 = vmul.f32 %v1353, 0.7978846
  %v1362 = vmul.f32 %v1354, 0.7978846
  %v1363 = vmul.f32 %v1355, 0.7978846
  %v1364 = vmul.f32 %v1356, 0.7978846
  %v1365 = vtanh.pop %v1357
  %v1366 = vtanh.pop %v1358
  %v1367 = vtanh.pop %v1359
  %v1368 = vtanh.pop %v1360
  %v1369 = vtanh.pop %v1361
  %v1370 = vtanh.pop %v1362
  %v1371 = vtanh.pop %v1363
  %v1372 = vtanh.pop %v1364
  %v1373 = vadd.f32 %v1365, 1.0
  %v1374 = vadd.f32 %v1366, 1.0
  %v1375 = vadd.f32 %v1367, 1.0
  %v1376 = vadd.f32 %v1368, 1.0
  %v1377 = vadd.f32 %v1369, 1.0
  %v1378 = vadd.f32 %v1370, 1.0
  %v1379 = vadd.f32 %v1371, 1.0
  %v1380 = vadd.f32 %v1372, 1.0
  %v1381 = vmul.f32 %v1373, 0.5
  %v1382 = vmul.f32 %v1374, 0.5
  %v1383 = vmul.f32 %v1375, 0.5
  %v1384 = vmul.f32 %v1376, 0.5
  %v1385 = vmul.f32 %v1377, 0.5
  %v1386 = vmul.f32 %v1378, 0.5
  %v1387 = vmul.f32 %v1379, 0.5
  %v1388 = vmul.f32 %v1380, 0.5
  %v1389 = vmul.f32 %v1274, %v1381
  %v1390 = vmul.f32 %v1276, %v1382
  %v1391 = vmul.f32 %v1317, %v1383
  %v1392 = vmul.f32 %v1319, %v1384
  %v1393 = vmul.f32 %v1278, %v1385
  %v1394 = vmul.f32 %v1280, %v1386
  %v1395 = vmul.f32 %v1321, %v1387
  %v1396 = vmul.f32 %v1323, %v1388
  %v1397 = vpack.c.bf16 %v1393, %v1389
  %v1398 = vpack.c.bf16 %v1394, %v1390
  %v1399 = vpack.c.bf16 %v1395, %v1391
  %v1400 = vpack.c.bf16 %v1396, %v1392
  %v1401 = vpack.c.bf16 %v230, %v229
  %v1402 = vpack.c.bf16 %v232, %v231
  %v1403 = vpack.c.bf16 %v234, %v233
  %v1404 = vpack.c.bf16 %v236, %v235
  %v1405 = vpack.c.bf16 %v238, %v237
  %v1406 = vpack.c.bf16 %v240, %v239
  %v1407 = vpack.c.bf16 %v242, %v241
  %v1408 = vpack.c.bf16 %v244, %v243
  %v1409 = vpack.c.bf16 %v246, %v245
  %v1410 = vpack.c.bf16 %v248, %v247
  %v1411 = vpack.c.bf16 %v250, %v249
  %v1412 = vpack.c.bf16 %v252, %v251
  %v1413 = vpack.c.bf16 %v254, %v253
  %v1414 = vpack.c.bf16 %v256, %v255
  %v1415 = vpack.c.bf16 %v258, %v257
  %v1416 = vpack.c.bf16 %v260, %v259
  %v1417 = vpack.c.bf16 %v262, %v261
  %v1418 = vpack.c.bf16 %v264, %v263
  %v1419 = vpack.c.bf16 %v266, %v265
  %v1420 = vpack.c.bf16 %v268, %v267
  %v1421 = vpack.c.bf16 %v270, %v269
  %v1422 = vpack.c.bf16 %v272, %v271
  %v1423 = vpack.c.bf16 %v274, %v273
  %v1424 = vpack.c.bf16 %v276, %v275
  %v1425 = vpack.c.bf16 %v278, %v277
  %v1426 = vpack.c.bf16 %v280, %v279
  %v1427 = vpack.c.bf16 %v282, %v281
  %v1428 = vpack.c.bf16 %v284, %v283
  %v1429 = vpack.c.bf16 %v286, %v285
  %v1430 = vpack.c.bf16 %v288, %v287
  %v1431 = vpack.c.bf16 %v290, %v289
  %v1432 = vpack.c.bf16 %v292, %v291
  %v1434 = vlaneseq
  %v1435 = vshrl.u32 %v1434, 7
  %v1436 = vsub.s32 0, %v1435
  %v1437 = vrot.slane %v293, %v1436
  %1439 = vmatprep.subr.bf16.mxu0 0
  %1440 = vmatpush1.bf16.msra.mxu0 %v1401
  %1441 = vmatprep.subr.bf16.mxu0 0
  %1442 = vmatpush1.bf16.msra.mxu0 %v1402
  %1443 = vmatprep.subr.bf16.mxu0 0
  %1444 = vmatpush1.bf16.msra.mxu0 %v1403
  %1445 = vmatprep.subr.bf16.mxu0 0
  %1446 = vmatpush1.bf16.msra.mxu0 %v1404
  %1447 = vmatprep.subr.bf16.mxu0 0
  %1448 = vmatpush1.bf16.msra.mxu0 %v1405
  %1449 = vmatprep.subr.bf16.mxu0 0
  %1450 = vmatpush1.bf16.msra.mxu0 %v1406
  %1451 = vmatprep.subr.bf16.mxu0 0
  %1452 = vmatpush1.bf16.msra.mxu0 %v1407
  %1453 = vmatprep.subr.bf16.mxu0 0
  %1454 = vmatpush1.bf16.msra.mxu0 %v1408
  %1455 = vmatprep.subr.bf16.mxu0 0
  %1456 = vmatpush1.bf16.msra.mxu0 %v1409
  %1457 = vmatprep.subr.bf16.mxu0 0
  %1458 = vmatpush1.bf16.msra.mxu0 %v1410
  %1459 = vmatprep.subr.bf16.mxu0 0
  %1460 = vmatpush1.bf16.msra.mxu0 %v1411
  %1461 = vmatprep.subr.bf16.mxu0 0
  %1462 = vmatpush1.bf16.msra.mxu0 %v1412
  %1463 = vmatprep.subr.bf16.mxu0 0
  %1464 = vmatpush1.bf16.msra.mxu0 %v1413
  %1465 = vmatprep.subr.bf16.mxu0 0
  %1466 = vmatpush1.bf16.msra.mxu0 %v1414
  %1467 = vmatprep.subr.bf16.mxu0 0
  %1468 = vmatpush1.bf16.msra.mxu0 %v1415
  %1469 = vmatprep.subr.bf16.mxu0 0
  %1470 = vmatpush1.bf16.msra.mxu0 %v1416
  %1471 = vmatprep.mubr.bf16.mxu0 %v1398
  %1472 = vmatmul.mubr.bf16.gmra.mrb[0].mxu0 %v1397
  %v1473 = vpop.f32.mrb[0].mxu0
  %v1474 = vadd.f32 %v1437, %v1473
  %v1475 = vpop.f32.mrb[0].mxu0
  %v1476 = vpop.f32.mrb[0].mxu0
  %v1477 = vadd.f32 %v1437, %v1476
  %v1478 = vpop.f32.mrb[0].mxu0
  %1479 = vdwg.mxu0
  %1480 = vmatprep.subr.bf16.mxu0 0
  %1481 = vmatpush1.bf16.msra.mxu0 %v1417
  %1482 = vmatprep.subr.bf16.mxu0 0
  %1483 = vmatpush1.bf16.msra.mxu0 %v1418
  %1484 = vmatprep.subr.bf16.mxu0 0
  %1485 = vmatpush1.bf16.msra.mxu0 %v1419
  %1486 = vmatprep.subr.bf16.mxu0 0
  %1487 = vmatpush1.bf16.msra.mxu0 %v1420
  %1488 = vmatprep.subr.bf16.mxu0 0
  %1489 = vmatpush1.bf16.msra.mxu0 %v1421
  %1490 = vmatprep.subr.bf16.mxu0 0
  %1491 = vmatpush1.bf16.msra.mxu0 %v1422
  %1492 = vmatprep.subr.bf16.mxu0 0
  %1493 = vmatpush1.bf16.msra.mxu0 %v1423
  %1494 = vmatprep.subr.bf16.mxu0 0
  %1495 = vmatpush1.bf16.msra.mxu0 %v1424
  %1496 = vmatprep.subr.bf16.mxu0 0
  %1497 = vmatpush1.bf16.msra.mxu0 %v1425
  %1498 = vmatprep.subr.bf16.mxu0 0
  %1499 = vmatpush1.bf16.msra.mxu0 %v1426
  %1500 = vmatprep.subr.bf16.mxu0 0
  %1501 = vmatpush1.bf16.msra.mxu0 %v1427
  %1502 = vmatprep.subr.bf16.mxu0 0
  %1503 = vmatpush1.bf16.msra.mxu0 %v1428
  %1504 = vmatprep.subr.bf16.mxu0 0
  %1505 = vmatpush1.bf16.msra.mxu0 %v1429
  %1506 = vmatprep.subr.bf16.mxu0 0
  %1507 = vmatpush1.bf16.msra.mxu0 %v1430
  %1508 = vmatprep.subr.bf16.mxu0 0
  %1509 = vmatpush1.bf16.msra.mxu0 %v1431
  %1510 = vmatprep.subr.bf16.mxu0 0
  %1511 = vmatpush1.bf16.msra.mxu0 %v1432
  %1512 = vmatprep.mubr.bf16.mxu0 %v1400
  %1513 = vmatmul.mubr.bf16.gmra.mrb[0].mxu0 %v1399
  %v1514 = vpop.f32.mrb[0].mxu0
  %v1515 = vadd.f32 %v1474, %v1514
  %v1516 = vpop.f32.mrb[0].mxu0
  %v1517 = vpop.f32.mrb[0].mxu0
  %v1518 = vadd.f32 %v1477, %v1517
  %v1519 = vpop.f32.mrb[0].mxu0
  %1520 = vdwg.mxu0
  %v1521 = vadd.f32 %v1145, %v1515
  %v1522 = vadd.f32 %v1146, %v1518
  %s1523 = scalar_lea.vmem %s1, 1
  %v1524 = vld [vmem:[%s1523] sm:$0x1]
  %s1525 = scalar_lea.vmem %s2, 1
  %v1526 = vld [vmem:[%s1525] sm:$0x1]
  %s1527 = scalar_lea.vmem %s3, 384
  %v1528 = vld [vmem:[%s1527] sm:$0xff]
  %v1529 = vld [vmem:[%s1527 + $0x8] sm:$0xff]
  %v1530 = vld [vmem:[%s1527 + $0x10] sm:$0xff]
  %v1531 = vld [vmem:[%s1527 + $0x18] sm:$0xff]
  %v1532 = vld [vmem:[%s1527 + $0x20] sm:$0xff]
  %v1533 = vld [vmem:[%s1527 + $0x28] sm:$0xff]
  %v1534 = vld [vmem:[%s1527 + $0x30] sm:$0xff]
  %v1535 = vld [vmem:[%s1527 + $0x38] sm:$0xff]
  %v1536 = vld [vmem:[%s1527 + $0x40] sm:$0xff]
  %v1537 = vld [vmem:[%s1527 + $0x48] sm:$0xff]
  %v1538 = vld [vmem:[%s1527 + $0x50] sm:$0xff]
  %v1539 = vld [vmem:[%s1527 + $0x58] sm:$0xff]
  %v1540 = vld [vmem:[%s1527 + $0x60] sm:$0xff]
  %v1541 = vld [vmem:[%s1527 + $0x68] sm:$0xff]
  %v1542 = vld [vmem:[%s1527 + $0x70] sm:$0xff]
  %v1543 = vld [vmem:[%s1527 + $0x78] sm:$0xff]
  %v1544 = vld [vmem:[%s1527 + $0x80] sm:$0xff]
  %v1545 = vld [vmem:[%s1527 + $0x88] sm:$0xff]
  %v1546 = vld [vmem:[%s1527 + $0x90] sm:$0xff]
  %v1547 = vld [vmem:[%s1527 + $0x98] sm:$0xff]
  %v1548 = vld [vmem:[%s1527 + $0xa0] sm:$0xff]
  %v1549 = vld [vmem:[%s1527 + $0xa8] sm:$0xff]
  %v1550 = vld [vmem:[%s1527 + $0xb0] sm:$0xff]
  %v1551 = vld [vmem:[%s1527 + $0xb8] sm:$0xff]
  %v1552 = vld [vmem:[%s1527 + $0xc0] sm:$0xff]
  %v1553 = vld [vmem:[%s1527 + $0xc8] sm:$0xff]
  %v1554 = vld [vmem:[%s1527 + $0xd0] sm:$0xff]
  %v1555 = vld [vmem:[%s1527 + $0xd8] sm:$0xff]
  %v1556 = vld [vmem:[%s1527 + $0xe0] sm:$0xff]
  %v1557 = vld [vmem:[%s1527 + $0xe8] sm:$0xff]
  %v1558 = vld [vmem:[%s1527 + $0xf0] sm:$0xff]
  %v1559 = vld [vmem:[%s1527 + $0xf8] sm:$0xff]
  %v1560 = vld [vmem:[%s1527 + $0x100] sm:$0xff]
  %v1561 = vld [vmem:[%s1527 + $0x108] sm:$0xff]
  %v1562 = vld [vmem:[%s1527 + $0x110] sm:$0xff]
  %v1563 = vld [vmem:[%s1527 + $0x118] sm:$0xff]
  %v1564 = vld [vmem:[%s1527 + $0x120] sm:$0xff]
  %v1565 = vld [vmem:[%s1527 + $0x128] sm:$0xff]
  %v1566 = vld [vmem:[%s1527 + $0x130] sm:$0xff]
  %v1567 = vld [vmem:[%s1527 + $0x138] sm:$0xff]
  %v1568 = vld [vmem:[%s1527 + $0x140] sm:$0xff]
  %v1569 = vld [vmem:[%s1527 + $0x148] sm:$0xff]
  %v1570 = vld [vmem:[%s1527 + $0x150] sm:$0xff]
  %v1571 = vld [vmem:[%s1527 + $0x158] sm:$0xff]
  %v1572 = vld [vmem:[%s1527 + $0x160] sm:$0xff]
  %v1573 = vld [vmem:[%s1527 + $0x168] sm:$0xff]
  %v1574 = vld [vmem:[%s1527 + $0x170] sm:$0xff]
  %v1575 = vld [vmem:[%s1527 + $0x178] sm:$0xff]
  %s1576 = scalar_lea.vmem %s4, 3
  %v1577 = vld [vmem:[%s1576] sm:$0x7]
  %s1578 = scalar_lea.vmem %s5, 128
  %v1579 = vld [vmem:[%s1578] sm:$0xff]
  %v1580 = vld [vmem:[%s1578 + $0x8] sm:$0xff]
  %v1581 = vld [vmem:[%s1578 + $0x10] sm:$0xff]
  %v1582 = vld [vmem:[%s1578 + $0x18] sm:$0xff]
  %v1583 = vld [vmem:[%s1578 + $0x20] sm:$0xff]
  %v1584 = vld [vmem:[%s1578 + $0x28] sm:$0xff]
  %v1585 = vld [vmem:[%s1578 + $0x30] sm:$0xff]
  %v1586 = vld [vmem:[%s1578 + $0x38] sm:$0xff]
  %v1587 = vld [vmem:[%s1578 + $0x40] sm:$0xff]
  %v1588 = vld [vmem:[%s1578 + $0x48] sm:$0xff]
  %v1589 = vld [vmem:[%s1578 + $0x50] sm:$0xff]
  %v1590 = vld [vmem:[%s1578 + $0x58] sm:$0xff]
  %v1591 = vld [vmem:[%s1578 + $0x60] sm:$0xff]
  %v1592 = vld [vmem:[%s1578 + $0x68] sm:$0xff]
  %v1593 = vld [vmem:[%s1578 + $0x70] sm:$0xff]
  %v1594 = vld [vmem:[%s1578 + $0x78] sm:$0xff]
  %s1595 = scalar_lea.vmem %s6, 1
  %v1596 = vld [vmem:[%s1595] sm:$0x1]
  %s1597 = scalar_lea.vmem %s7, 1
  %v1598 = vld [vmem:[%s1597] sm:$0x1]
  %s1599 = scalar_lea.vmem %s8, 1
  %v1600 = vld [vmem:[%s1599] sm:$0x1]
  %s1601 = scalar_lea.vmem %s9, 512
  %v1602 = vld [vmem:[%s1601] sm:$0xff]
  %v1603 = vld [vmem:[%s1601 + $0x8] sm:$0xff]
  %v1604 = vld [vmem:[%s1601 + $0x10] sm:$0xff]
  %v1605 = vld [vmem:[%s1601 + $0x18] sm:$0xff]
  %v1606 = vld [vmem:[%s1601 + $0x20] sm:$0xff]
  %v1607 = vld [vmem:[%s1601 + $0x28] sm:$0xff]
  %v1608 = vld [vmem:[%s1601 + $0x30] sm:$0xff]
  %v1609 = vld [vmem:[%s1601 + $0x38] sm:$0xff]
  %v1610 = vld [vmem:[%s1601 + $0x40] sm:$0xff]
  %v1611 = vld [vmem:[%s1601 + $0x48] sm:$0xff]
  %v1612 = vld [vmem:[%s1601 + $0x50] sm:$0xff]
  %v1613 = vld [vmem:[%s1601 + $0x58] sm:$0xff]
  %v1614 = vld [vmem:[%s1601 + $0x60] sm:$0xff]
  %v1615 = vld [vmem:[%s1601 + $0x68] sm:$0xff]
  %v1616 = vld [vmem:[%s1601 + $0x70] sm:$0xff]
  %v1617 = vld [vmem:[%s1601 + $0x78] sm:$0xff]
  %v1618 = vld [vmem:[%s1601 + $0x80] sm:$0xff]
  %v1619 = vld [vmem:[%s1601 + $0x88] sm:$0xff]
  %v1620 = vld [vmem:[%s1601 + $0x90] sm:$0xff]
  %v1621 = vld [vmem:[%s1601 + $0x98] sm:$0xff]
  %v1622 = vld [vmem:[%s1601 + $0xa0] sm:$0xff]
  %v1623 = vld [vmem:[%s1601 + $0xa8] sm:$0xff]
  %v1624 = vld [vmem:[%s1601 + $0xb0] sm:$0xff]
  %v1625 = vld [vmem:[%s1601 + $0xb8] sm:$0xff]
  %v1626 = vld [vmem:[%s1601 + $0xc0] sm:$0xff]
  %v1627 = vld [vmem:[%s1601 + $0xc8] sm:$0xff]
  %v1628 = vld [vmem:[%s1601 + $0xd0] sm:$0xff]
  %v1629 = vld [vmem:[%s1601 + $0xd8] sm:$0xff]
  %v1630 = vld [vmem:[%s1601 + $0xe0] sm:$0xff]
  %v1631 = vld [vmem:[%s1601 + $0xe8] sm:$0xff]
  %v1632 = vld [vmem:[%s1601 + $0xf0] sm:$0xff]
  %v1633 = vld [vmem:[%s1601 + $0xf8] sm:$0xff]
  %v1634 = vld [vmem:[%s1601 + $0x100] sm:$0xff]
  %v1635 = vld [vmem:[%s1601 + $0x108] sm:$0xff]
  %v1636 = vld [vmem:[%s1601 + $0x110] sm:$0xff]
  %v1637 = vld [vmem:[%s1601 + $0x118] sm:$0xff]
  %v1638 = vld [vmem:[%s1601 + $0x120] sm:$0xff]
  %v1639 = vld [vmem:[%s1601 + $0x128] sm:$0xff]
  %v1640 = vld [vmem:[%s1601 + $0x130] sm:$0xff]
  %v1641 = vld [vmem:[%s1601 + $0x138] sm:$0xff]
  %v1642 = vld [vmem:[%s1601 + $0x140] sm:$0xff]
  %v1643 = vld [vmem:[%s1601 + $0x148] sm:$0xff]
  %v1644 = vld [vmem:[%s1601 + $0x150] sm:$0xff]
  %v1645 = vld [vmem:[%s1601 + $0x158] sm:$0xff]
  %v1646 = vld [vmem:[%s1601 + $0x160] sm:$0xff]
  %v1647 = vld [vmem:[%s1601 + $0x168] sm:$0xff]
  %v1648 = vld [vmem:[%s1601 + $0x170] sm:$0xff]
  %v1649 = vld [vmem:[%s1601 + $0x178] sm:$0xff]
  %v1650 = vld [vmem:[%s1601 + $0x180] sm:$0xff]
  %v1651 = vld [vmem:[%s1601 + $0x188] sm:$0xff]
  %v1652 = vld [vmem:[%s1601 + $0x190] sm:$0xff]
  %v1653 = vld [vmem:[%s1601 + $0x198] sm:$0xff]
  %v1654 = vld [vmem:[%s1601 + $0x1a0] sm:$0xff]
  %v1655 = vld [vmem:[%s1601 + $0x1a8] sm:$0xff]
  %v1656 = vld [vmem:[%s1601 + $0x1b0] sm:$0xff]
  %v1657 = vld [vmem:[%s1601 + $0x1b8] sm:$0xff]
  %v1658 = vld [vmem:[%s1601 + $0x1c0] sm:$0xff]
  %v1659 = vld [vmem:[%s1601 + $0x1c8] sm:$0xff]
  %v1660 = vld [vmem:[%s1601 + $0x1d0] sm:$0xff]
  %v1661 = vld [vmem:[%s1601 + $0x1d8] sm:$0xff]
  %v1662 = vld [vmem:[%s1601 + $0x1e0] sm:$0xff]
  %v1663 = vld [vmem:[%s1601 + $0x1e8] sm:$0xff]
  %v1664 = vld [vmem:[%s1601 + $0x1f0] sm:$0xff]
  %v1665 = vld [vmem:[%s1601 + $0x1f8] sm:$0xff]
  %s1666 = scalar_lea.vmem %s10, 4
  %v1667 = vld [vmem:[%s1666] sm:$0xf]
  %s1668 = scalar_lea.vmem %s11, 512
  %v1669 = vld [vmem:[%s1668] sm:$0xff]
  %v1670 = vld [vmem:[%s1668 + $0x8] sm:$0xff]
  %v1671 = vld [vmem:[%s1668 + $0x10] sm:$0xff]
  %v1672 = vld [vmem:[%s1668 + $0x18] sm:$0xff]
  %v1673 = vld [vmem:[%s1668 + $0x20] sm:$0xff]
  %v1674 = vld [vmem:[%s1668 + $0x28] sm:$0xff]
  %v1675 = vld [vmem:[%s1668 + $0x30] sm:$0xff]
  %v1676 = vld [vmem:[%s1668 + $0x38] sm:$0xff]
  %v1677 = vld [vmem:[%s1668 + $0x40] sm:$0xff]
  %v1678 = vld [vmem:[%s1668 + $0x48] sm:$0xff]
  %v1679 = vld [vmem:[%s1668 + $0x50] sm:$0xff]
  %v1680 = vld [vmem:[%s1668 + $0x58] sm:$0xff]
  %v1681 = vld [vmem:[%s1668 + $0x60] sm:$0xff]
  %v1682 = vld [vmem:[%s1668 + $0x68] sm:$0xff]
  %v1683 = vld [vmem:[%s1668 + $0x70] sm:$0xff]
  %v1684 = vld [vmem:[%s1668 + $0x78] sm:$0xff]
  %v1685 = vld [vmem:[%s1668 + $0x80] sm:$0xff]
  %v1686 = vld [vmem:[%s1668 + $0x88] sm:$0xff]
  %v1687 = vld [vmem:[%s1668 + $0x90] sm:$0xff]
  %v1688 = vld [vmem:[%s1668 + $0x98] sm:$0xff]
  %v1689 = vld [vmem:[%s1668 + $0xa0] sm:$0xff]
  %v1690 = vld [vmem:[%s1668 + $0xa8] sm:$0xff]
  %v1691 = vld [vmem:[%s1668 + $0xb0] sm:$0xff]
  %v1692 = vld [vmem:[%s1668 + $0xb8] sm:$0xff]
  %v1693 = vld [vmem:[%s1668 + $0xc0] sm:$0xff]
  %v1694 = vld [vmem:[%s1668 + $0xc8] sm:$0xff]
  %v1695 = vld [vmem:[%s1668 + $0xd0] sm:$0xff]
  %v1696 = vld [vmem:[%s1668 + $0xd8] sm:$0xff]
  %v1697 = vld [vmem:[%s1668 + $0xe0] sm:$0xff]
  %v1698 = vld [vmem:[%s1668 + $0xe8] sm:$0xff]
  %v1699 = vld [vmem:[%s1668 + $0xf0] sm:$0xff]
  %v1700 = vld [vmem:[%s1668 + $0xf8] sm:$0xff]
  %v1701 = vld [vmem:[%s1668 + $0x100] sm:$0xff]
  %v1702 = vld [vmem:[%s1668 + $0x108] sm:$0xff]
  %v1703 = vld [vmem:[%s1668 + $0x110] sm:$0xff]
  %v1704 = vld [vmem:[%s1668 + $0x118] sm:$0xff]
  %v1705 = vld [vmem:[%s1668 + $0x120] sm:$0xff]
  %v1706 = vld [vmem:[%s1668 + $0x128] sm:$0xff]
  %v1707 = vld [vmem:[%s1668 + $0x130] sm:$0xff]
  %v1708 = vld [vmem:[%s1668 + $0x138] sm:$0xff]
  %v1709 = vld [vmem:[%s1668 + $0x140] sm:$0xff]
  %v1710 = vld [vmem:[%s1668 + $0x148] sm:$0xff]
  %v1711 = vld [vmem:[%s1668 + $0x150] sm:$0xff]
  %v1712 = vld [vmem:[%s1668 + $0x158] sm:$0xff]
  %v1713 = vld [vmem:[%s1668 + $0x160] sm:$0xff]
  %v1714 = vld [vmem:[%s1668 + $0x168] sm:$0xff]
  %v1715 = vld [vmem:[%s1668 + $0x170] sm:$0xff]
  %v1716 = vld [vmem:[%s1668 + $0x178] sm:$0xff]
  %v1717 = vld [vmem:[%s1668 + $0x180] sm:$0xff]
  %v1718 = vld [vmem:[%s1668 + $0x188] sm:$0xff]
  %v1719 = vld [vmem:[%s1668 + $0x190] sm:$0xff]
  %v1720 = vld [vmem:[%s1668 + $0x198] sm:$0xff]
  %v1721 = vld [vmem:[%s1668 + $0x1a0] sm:$0xff]
  %v1722 = vld [vmem:[%s1668 + $0x1a8] sm:$0xff]
  %v1723 = vld [vmem:[%s1668 + $0x1b0] sm:$0xff]
  %v1724 = vld [vmem:[%s1668 + $0x1b8] sm:$0xff]
  %v1725 = vld [vmem:[%s1668 + $0x1c0] sm:$0xff]
  %v1726 = vld [vmem:[%s1668 + $0x1c8] sm:$0xff]
  %v1727 = vld [vmem:[%s1668 + $0x1d0] sm:$0xff]
  %v1728 = vld [vmem:[%s1668 + $0x1d8] sm:$0xff]
  %v1729 = vld [vmem:[%s1668 + $0x1e0] sm:$0xff]
  %v1730 = vld [vmem:[%s1668 + $0x1e8] sm:$0xff]
  %v1731 = vld [vmem:[%s1668 + $0x1f0] sm:$0xff]
  %v1732 = vld [vmem:[%s1668 + $0x1f8] sm:$0xff]
  %s1733 = scalar_lea.vmem %s12, 1
  %v1734 = vld [vmem:[%s1733] sm:$0x1]
  %1735 = vadd.xlane.f32.xlu0 %v1521
  %v1736 = vpop.xlane.xlu0 %1735
  %1737 = vadd.xlane.f32.xlu0 %v1522
  %v1738 = vpop.xlane.xlu0 %1737
  %v1739 = vmul.f32 %v1736, %v298
  %v1740 = vmul.f32 %v1738, %v298
  %v1741 = vsub.f32 %v1521, %v1739
  %v1742 = vsub.f32 %v1522, %v1740
  %v1743 = vmul.f32 %v1741, %v1741
  %v1744 = vmul.f32 %v1742, %v1742
  %1745 = vadd.xlane.f32.xlu0 %v1743
  %v1746 = vpop.xlane.xlu0 %1745
  %1747 = vadd.xlane.f32.xlu0 %v1744
  %v1748 = vpop.xlane.xlu0 %1747
  %v1749 = vmul.f32 %v1746, %v298
  %v1750 = vmul.f32 %v1748, %v298
  %v1751 = vadd.f32 %v1749, 1e-05
  %v1752 = vadd.f32 %v1750, 1e-05
  %v1753 = vrsqrt.pop %v1751
  %v1754 = vrsqrt.pop %v1752
  %v1755 = vmul.f32 %v1741, %v1753
  %v1756 = vmul.f32 %v1742, %v1754
  %v1758 = vlaneseq
  %v1759 = vshrl.u32 %v1758, 7
  %v1760 = vsub.s32 0, %v1759
  %v1761 = vrot.slane %v1524, %v1760
  %v1763 = vmul.f32 %v1755, %v1761
  %v1764 = vmul.f32 %v1756, %v1761
  %v1766 = vlaneseq
  %v1767 = vshrl.u32 %v1766, 7
  %v1768 = vsub.s32 0, %v1767
  %v1769 = vrot.slane %v1526, %v1768
  %v1771 = vadd.f32 %v1763, %v1769
  %v1772 = vadd.f32 %v1764, %v1769
  %v1773 = vpack.c.bf16 %v1772, %v1771
  %v1774 = vpack.c.bf16 %v1531, %v1528
  %v1775 = vpack.c.bf16 %v1532, %v1529
  %v1776 = vpack.c.bf16 %v1533, %v1530
  %v1777 = vpack.c.bf16 %v1537, %v1534
  %v1778 = vpack.c.bf16 %v1538, %v1535
  %v1779 = vpack.c.bf16 %v1539, %v1536
  %v1780 = vpack.c.bf16 %v1543, %v1540
  %v1781 = vpack.c.bf16 %v1544, %v1541
  %v1782 = vpack.c.bf16 %v1545, %v1542
  %v1783 = vpack.c.bf16 %v1549, %v1546
  %v1784 = vpack.c.bf16 %v1550, %v1547
  %v1785 = vpack.c.bf16 %v1551, %v1548
  %v1786 = vpack.c.bf16 %v1555, %v1552
  %v1787 = vpack.c.bf16 %v1556, %v1553
  %v1788 = vpack.c.bf16 %v1557, %v1554
  %v1789 = vpack.c.bf16 %v1561, %v1558
  %v1790 = vpack.c.bf16 %v1562, %v1559
  %v1791 = vpack.c.bf16 %v1563, %v1560
  %v1792 = vpack.c.bf16 %v1567, %v1564
  %v1793 = vpack.c.bf16 %v1568, %v1565
  %v1794 = vpack.c.bf16 %v1569, %v1566
  %v1795 = vpack.c.bf16 %v1573, %v1570
  %v1796 = vpack.c.bf16 %v1574, %v1571
  %v1797 = vpack.c.bf16 %v1575, %v1572
  %v1799 = vlaneseq
  %v1800 = vshrl.u32 %v1799, 7
  %v1801 = vsub.s32 0, %v1800
  %v1802 = vrot.slane %v1577, %v1801
  %v1803 = vlaneseq
  %v1804 = vshrl.u32 %v1803, 7
  %v1805 = vsub.s32 1, %v1804
  %v1806 = vrot.slane %v1577, %v1805
  %v1807 = vlaneseq
  %v1808 = vshrl.u32 %v1807, 7
  %v1809 = vsub.s32 2, %v1808
  %v1810 = vrot.slane %v1577, %v1809
  %1814 = vmatprep.subr.bf16.mxu0 %v1775
  %1815 = vmatpush1.bf16.msra.mxu0 %v1774
  %1816 = vmatprep.subr.bf16.mxu0 %v1778
  %1817 = vmatpush1.bf16.msra.mxu0 %v1777
  %1818 = vmatprep.subr.bf16.mxu0 %v1781
  %1819 = vmatpush1.bf16.msra.mxu0 %v1780
  %1820 = vmatprep.subr.bf16.mxu0 %v1784
  %1821 = vmatpush1.bf16.msra.mxu0 %v1783
  %1822 = vmatprep.subr.bf16.mxu0 %v1787
  %1823 = vmatpush1.bf16.msra.mxu0 %v1786
  %1824 = vmatprep.subr.bf16.mxu0 %v1790
  %1825 = vmatpush1.bf16.msra.mxu0 %v1789
  %1826 = vmatprep.subr.bf16.mxu0 %v1793
  %1827 = vmatpush1.bf16.msra.mxu0 %v1792
  %1828 = vmatprep.subr.bf16.mxu0 %v1796
  %1829 = vmatpush1.bf16.msra.mxu0 %v1795
  %1830 = vmatprep.subr.bf16.mxu0 0
  %1831 = vmatpush1.bf16.msra.mxu0 0
  %1832 = vmatprep.subr.bf16.mxu0 0
  %1833 = vmatpush1.bf16.msra.mxu0 0
  %1834 = vmatprep.subr.bf16.mxu0 0
  %1835 = vmatpush1.bf16.msra.mxu0 0
  %1836 = vmatprep.subr.bf16.mxu0 0
  %1837 = vmatpush1.bf16.msra.mxu0 0
  %1838 = vmatprep.subr.bf16.mxu0 0
  %1839 = vmatpush1.bf16.msra.mxu0 0
  %1840 = vmatprep.subr.bf16.mxu0 0
  %1841 = vmatpush1.bf16.msra.mxu0 0
  %1842 = vmatprep.subr.bf16.mxu0 0
  %1843 = vmatpush1.bf16.msra.mxu0 0
  %1844 = vmatprep.subr.bf16.mxu0 0
  %1845 = vmatpush1.bf16.msra.mxu0 0
  %1846 = vmatprep.mubr.bf16.mxu0 0
  %1847 = vmatmul.mubr.bf16.gmra.mrb[0].mxu0 %v1773
  %v1848 = vpop.f32.mrb[0].mxu0
  %v1849 = vadd.f32 %v1802, %v1848
  %v1850 = vpop.f32.mrb[0].mxu0
  %v1851 = vadd.f32 %v1806, %v1850
  %v1852 = vpop.f32.mrb[0].mxu0
  %v1853 = vadd.f32 %v1802, %v1852
  %v1854 = vpop.f32.mrb[0].mxu0
  %v1855 = vadd.f32 %v1806, %v1854
  %1856 = vdwg.mxu0
  %1857 = vmatprep.subr.bf16.mxu0 0
  %1858 = vmatpush1.bf16.msra.mxu0 %v1776
  %1859 = vmatprep.subr.bf16.mxu0 0
  %1860 = vmatpush1.bf16.msra.mxu0 %v1779
  %1861 = vmatprep.subr.bf16.mxu0 0
  %1862 = vmatpush1.bf16.msra.mxu0 %v1782
  %1863 = vmatprep.subr.bf16.mxu0 0
  %1864 = vmatpush1.bf16.msra.mxu0 %v1785
  %1865 = vmatprep.subr.bf16.mxu0 0
  %1866 = vmatpush1.bf16.msra.mxu0 %v1788
  %1867 = vmatprep.subr.bf16.mxu0 0
  %1868 = vmatpush1.bf16.msra.mxu0 %v1791
  %1869 = vmatprep.subr.bf16.mxu0 0
  %1870 = vmatpush1.bf16.msra.mxu0 %v1794
  %1871 = vmatprep.subr.bf16.mxu0 0
  %1872 = vmatpush1.bf16.msra.mxu0 %v1797
  %1873 = vmatprep.subr.bf16.mxu0 0
  %1874 = vmatpush1.bf16.msra.mxu0 0
  %1875 = vmatprep.subr.bf16.mxu0 0
  %1876 = vmatpush1.bf16.msra.mxu0 0
  %1877 = vmatprep.subr.bf16.mxu0 0
  %1878 = vmatpush1.bf16.msra.mxu0 0
  %1879 = vmatprep.subr.bf16.mxu0 0
  %1880 = vmatpush1.bf16.msra.mxu0 0
  %1881 = vmatprep.subr.bf16.mxu0 0
  %1882 = vmatpush1.bf16.msra.mxu0 0
  %1883 = vmatprep.subr.bf16.mxu0 0
  %1884 = vmatpush1.bf16.msra.mxu0 0
  %1885 = vmatprep.subr.bf16.mxu0 0
  %1886 = vmatpush1.bf16.msra.mxu0 0
  %1887 = vmatprep.subr.bf16.mxu0 0
  %1888 = vmatpush1.bf16.msra.mxu0 0
  %1889 = vmatprep.mubr.bf16.mxu0 0
  %1890 = vmatmul.mubr.bf16.gmra.mrb[0].mxu0 %v1773
  %v1891 = vpop.f32.mrb[0].mxu0
  %v1892 = vadd.f32 %v1810, %v1891
  %v1893 = vpop.f32.mrb[0].mxu0
  %v1894 = vpop.f32.mrb[0].mxu0
  %v1895 = vadd.f32 %v1810, %v1894
  %v1896 = vpop.f32.mrb[0].mxu0
  %1897 = vdwg.mxu0
  %v1898 = vmul.f32 %v1849, 0.17677669
  %v1899 = vmul.f32 %v1853, 0.17677669
  %v1900 = vpack.c.bf16 %v1899, %v1898
  %v1901 = vpack.c.bf16 %v1855, %v1851
  %v1903 = vsel %vm462, %v1900, 0
  %v1906 = vsel %vm462, %v1901, 0
  %1908 = vmatprep.subr.bf16.mxu0 0
  %1909 = vmatpush1.bf16.xpose.msra.mxu0 %v1906
  %1910 = vmatprep.subr.bf16.mxu0 0
  %1911 = vmatpush1.bf16.xpose.msra.mxu0 0
  %1912 = vmatprep.subr.bf16.mxu0 0
  %1913 = vmatpush1.bf16.xpose.msra.mxu0 0
  %1914 = vmatprep.subr.bf16.mxu0 0
  %1915 = vmatpush1.bf16.xpose.msra.mxu0 0
  %1916 = vmatprep.subr.bf16.mxu0 0
  %1917 = vmatpush1.bf16.xpose.msra.mxu0 0
  %1918 = vmatprep.subr.bf16.mxu0 0
  %1919 = vmatpush1.bf16.xpose.msra.mxu0 0
  %1920 = vmatprep.subr.bf16.mxu0 0
  %1921 = vmatpush1.bf16.xpose.msra.mxu0 0
  %1922 = vmatprep.subr.bf16.mxu0 0
  %1923 = vmatpush1.bf16.xpose.msra.mxu0 0
  %1924 = vmatprep.subr.bf16.mxu0 0
  %1925 = vmatpush1.bf16.xpose.msra.mxu0 0
  %1926 = vmatprep.subr.bf16.mxu0 0
  %1927 = vmatpush1.bf16.xpose.msra.mxu0 0
  %1928 = vmatprep.subr.bf16.mxu0 0
  %1929 = vmatpush1.bf16.xpose.msra.mxu0 0
  %1930 = vmatprep.subr.bf16.mxu0 0
  %1931 = vmatpush1.bf16.xpose.msra.mxu0 0
  %1932 = vmatprep.subr.bf16.mxu0 0
  %1933 = vmatpush1.bf16.xpose.msra.mxu0 0
  %1934 = vmatprep.subr.bf16.mxu0 0
  %1935 = vmatpush1.bf16.xpose.msra.mxu0 0
  %1936 = vmatprep.subr.bf16.mxu0 0
  %1937 = vmatpush1.bf16.xpose.msra.mxu0 0
  %1938 = vmatprep.subr.bf16.mxu0 0
  %1939 = vmatpush1.bf16.xpose.msra.mxu0 0
  %1940 = vmatprep.mubr.bf16.mxu0 0
  %1941 = vmatmul.mubr.bf16.gmra.mrb[0].mxu0 %v1903
  %v1942 = vpop.f32.mrb[0].mxu0
  %v1943 = vadd.f32 %v92, %v1942
  %v1944 = vpop.f32.mrb[0].mxu0
  %v1945 = vpop.f32.mrb[0].mxu0
  %v1946 = vadd.f32 %v93, %v1945
  %v1947 = vpop.f32.mrb[0].mxu0
  %1948 = vdwg.mxu0
  %v1949 = vsel %vm510, %v1943, -inf
  %1950 = vmax.xlane.f32.xlu0 %v1949
  %v1951 = vpop.xlane.xlu0 %1950
  %v1952 = vsel %vm510, %v1946, -inf
  %1953 = vmax.xlane.f32.xlu0 %v1952
  %v1954 = vpop.xlane.xlu0 %1953
  %v1955 = vsub.f32 %v1943, %v1951
  %v1956 = vsub.f32 %v1946, %v1954
  %v1957 = vmul.f32 %v1955, 1.442695
  %v1958 = vpow.pop %v1957
  %v1959 = vmul.f32 %v1956, 1.442695
  %v1960 = vpow.pop %v1959
  %v1961 = vsel %vm510, %v1958, 0.0
  %1962 = vadd.xlane.f32.xlu0 %v1961
  %v1963 = vpop.xlane.xlu0 %1962
  %v1964 = vsel %vm510, %v1960, 0.0
  %1965 = vadd.xlane.f32.xlu0 %v1964
  %v1966 = vpop.xlane.xlu0 %1965
  %v1967 = vrcp.pop %v1963
  %v1968 = vrcp.pop %v1966
  %v1969 = vmul.f32 %v1958, %v1967
  %v1970 = vmul.f32 %v1960, %v1968
  %v1971 = vpack.c.bf16 %v1970, %v1969
  %v1972 = vpack.c.bf16 %v1895, %v1892
  %v1974 = vsel %vm510, %v1971, 0
  %1976 = vmatprep.subr.bf16.mxu0 0
  %1977 = vmatpush1.bf16.msra.mxu0 %v1972
  %1978 = vmatprep.subr.bf16.mxu0 0
  %1979 = vmatpush1.bf16.msra.mxu0 0
  %1980 = vmatprep.subr.bf16.mxu0 0
  %1981 = vmatpush1.bf16.msra.mxu0 0
  %1982 = vmatprep.subr.bf16.mxu0 0
  %1983 = vmatpush1.bf16.msra.mxu0 0
  %1984 = vmatprep.subr.bf16.mxu0 0
  %1985 = vmatpush1.bf16.msra.mxu0 0
  %1986 = vmatprep.subr.bf16.mxu0 0
  %1987 = vmatpush1.bf16.msra.mxu0 0
  %1988 = vmatprep.subr.bf16.mxu0 0
  %1989 = vmatpush1.bf16.msra.mxu0 0
  %1990 = vmatprep.subr.bf16.mxu0 0
  %1991 = vmatpush1.bf16.msra.mxu0 0
  %1992 = vmatprep.subr.bf16.mxu0 0
  %1993 = vmatpush1.bf16.msra.mxu0 0
  %1994 = vmatprep.subr.bf16.mxu0 0
  %1995 = vmatpush1.bf16.msra.mxu0 0
  %1996 = vmatprep.subr.bf16.mxu0 0
  %1997 = vmatpush1.bf16.msra.mxu0 0
  %1998 = vmatprep.subr.bf16.mxu0 0
  %1999 = vmatpush1.bf16.msra.mxu0 0
  %2000 = vmatprep.subr.bf16.mxu0 0
  %2001 = vmatpush1.bf16.msra.mxu0 0
  %2002 = vmatprep.subr.bf16.mxu0 0
  %2003 = vmatpush1.bf16.msra.mxu0 0
  %2004 = vmatprep.subr.bf16.mxu0 0
  %2005 = vmatpush1.bf16.msra.mxu0 0
  %2006 = vmatprep.subr.bf16.mxu0 0
  %2007 = vmatpush1.bf16.msra.mxu0 0
  %2008 = vmatprep.mubr.bf16.mxu0 0
  %2009 = vmatmul.mubr.bf16.gmra.mrb[0].mxu0 %v1974
  %v2010 = vpop.f32.mrb[0].mxu0
  %v2011 = vadd.f32 0.0, %v2010
  %v2012 = vpop.f32.mrb[0].mxu0
  %v2013 = vpop.f32.mrb[0].mxu0
  %v2014 = vadd.f32 0.0, %v2013
  %v2015 = vpop.f32.mrb[0].mxu0
  %2016 = vdwg.mxu0
  %v2017 = vpack.c.bf16 %v2014, %v2011
  %v2018 = vpack.c.bf16 %v1580, %v1579
  %v2019 = vpack.c.bf16 %v1582, %v1581
  %2021 = vrot.lane.b32.xlu0 %v1900, 96
  %v2022 = vpop.permute.xlu0 %2021
  %2024 = vrot.lane.b32.xlu0 %v1901, 96
  %v2025 = vpop.permute.xlu0 %2024
  %v2027 = vsel %vm462, %v2022, 0
  %v2030 = vsel %vm462, %v2025, 0
  %2032 = vmatprep.subr.bf16.mxu0 0
  %2033 = vmatpush1.bf16.xpose.msra.mxu0 %v2030
  %2034 = vmatprep.subr.bf16.mxu0 0
  %2035 = vmatpush1.bf16.xpose.msra.mxu0 0
  %2036 = vmatprep.subr.bf16.mxu0 0
  %2037 = vmatpush1.bf16.xpose.msra.mxu0 0
  %2038 = vmatprep.subr.bf16.mxu0 0
  %2039 = vmatpush1.bf16.xpose.msra.mxu0 0
  %2040 = vmatprep.subr.bf16.mxu0 0
  %2041 = vmatpush1.bf16.xpose.msra.mxu0 0
  %2042 = vmatprep.subr.bf16.mxu0 0
  %2043 = vmatpush1.bf16.xpose.msra.mxu0 0
  %2044 = vmatprep.subr.bf16.mxu0 0
  %2045 = vmatpush1.bf16.xpose.msra.mxu0 0
  %2046 = vmatprep.subr.bf16.mxu0 0
  %2047 = vmatpush1.bf16.xpose.msra.mxu0 0
  %2048 = vmatprep.subr.bf16.mxu0 0
  %2049 = vmatpush1.bf16.xpose.msra.mxu0 0
  %2050 = vmatprep.subr.bf16.mxu0 0
  %2051 = vmatpush1.bf16.xpose.msra.mxu0 0
  %2052 = vmatprep.subr.bf16.mxu0 0
  %2053 = vmatpush1.bf16.xpose.msra.mxu0 0
  %2054 = vmatprep.subr.bf16.mxu0 0
  %2055 = vmatpush1.bf16.xpose.msra.mxu0 0
  %2056 = vmatprep.subr.bf16.mxu0 0
  %2057 = vmatpush1.bf16.xpose.msra.mxu0 0
  %2058 = vmatprep.subr.bf16.mxu0 0
  %2059 = vmatpush1.bf16.xpose.msra.mxu0 0
  %2060 = vmatprep.subr.bf16.mxu0 0
  %2061 = vmatpush1.bf16.xpose.msra.mxu0 0
  %2062 = vmatprep.subr.bf16.mxu0 0
  %2063 = vmatpush1.bf16.xpose.msra.mxu0 0
  %2064 = vmatprep.mubr.bf16.mxu0 0
  %2065 = vmatmul.mubr.bf16.gmra.mrb[0].mxu0 %v2027
  %v2066 = vpop.f32.mrb[0].mxu0
  %v2067 = vadd.f32 %v92, %v2066
  %v2068 = vpop.f32.mrb[0].mxu0
  %v2069 = vpop.f32.mrb[0].mxu0
  %v2070 = vadd.f32 %v93, %v2069
  %v2071 = vpop.f32.mrb[0].mxu0
  %2072 = vdwg.mxu0
  %v2073 = vsel %vm510, %v2067, -inf
  %2074 = vmax.xlane.f32.xlu0 %v2073
  %v2075 = vpop.xlane.xlu0 %2074
  %v2076 = vsel %vm510, %v2070, -inf
  %2077 = vmax.xlane.f32.xlu0 %v2076
  %v2078 = vpop.xlane.xlu0 %2077
  %v2079 = vsub.f32 %v2067, %v2075
  %v2080 = vsub.f32 %v2070, %v2078
  %v2081 = vmul.f32 %v2079, 1.442695
  %v2082 = vpow.pop %v2081
  %v2083 = vmul.f32 %v2080, 1.442695
  %v2084 = vpow.pop %v2083
  %v2085 = vsel %vm510, %v2082, 0.0
  %2086 = vadd.xlane.f32.xlu0 %v2085
  %v2087 = vpop.xlane.xlu0 %2086
  %v2088 = vsel %vm510, %v2084, 0.0
  %2089 = vadd.xlane.f32.xlu0 %v2088
  %v2090 = vpop.xlane.xlu0 %2089
  %v2091 = vrcp.pop %v2087
  %v2092 = vrcp.pop %v2090
  %v2093 = vmul.f32 %v2082, %v2091
  %v2094 = vmul.f32 %v2084, %v2092
  %v2095 = vpack.c.bf16 %v2094, %v2093
  %2097 = vrot.lane.b32.xlu0 %v1972, 96
  %v2098 = vpop.permute.xlu0 %2097
  %v2101 = vsel %vm510, %v2095, 0
  %2103 = vmatprep.subr.bf16.mxu0 0
  %2104 = vmatpush1.bf16.msra.mxu0 %v2098
  %2105 = vmatprep.subr.bf16.mxu0 0
  %2106 = vmatpush1.bf16.msra.mxu0 0
  %2107 = vmatprep.subr.bf16.mxu0 0
  %2108 = vmatpush1.bf16.msra.mxu0 0
  %2109 = vmatprep.subr.bf16.mxu0 0
  %2110 = vmatpush1.bf16.msra.mxu0 0
  %2111 = vmatprep.subr.bf16.mxu0 0
  %2112 = vmatpush1.bf16.msra.mxu0 0
  %2113 = vmatprep.subr.bf16.mxu0 0
  %2114 = vmatpush1.bf16.msra.mxu0 0
  %2115 = vmatprep.subr.bf16.mxu0 0
  %2116 = vmatpush1.bf16.msra.mxu0 0
  %2117 = vmatprep.subr.bf16.mxu0 0
  %2118 = vmatpush1.bf16.msra.mxu0 0
  %2119 = vmatprep.subr.bf16.mxu0 0
  %2120 = vmatpush1.bf16.msra.mxu0 0
  %2121 = vmatprep.subr.bf16.mxu0 0
  %2122 = vmatpush1.bf16.msra.mxu0 0
  %2123 = vmatprep.subr.bf16.mxu0 0
  %2124 = vmatpush1.bf16.msra.mxu0 0
  %2125 = vmatprep.subr.bf16.mxu0 0
  %2126 = vmatpush1.bf16.msra.mxu0 0
  %2127 = vmatprep.subr.bf16.mxu0 0
  %2128 = vmatpush1.bf16.msra.mxu0 0
  %2129 = vmatprep.subr.bf16.mxu0 0
  %2130 = vmatpush1.bf16.msra.mxu0 0
  %2131 = vmatprep.subr.bf16.mxu0 0
  %2132 = vmatpush1.bf16.msra.mxu0 0
  %2133 = vmatprep.subr.bf16.mxu0 0
  %2134 = vmatpush1.bf16.msra.mxu0 0
  %2135 = vmatprep.mubr.bf16.mxu0 0
  %2136 = vmatmul.mubr.bf16.gmra.mrb[0].mxu0 %v2101
  %v2137 = vpop.f32.mrb[0].mxu0
  %v2138 = vadd.f32 0.0, %v2137
  %v2139 = vpop.f32.mrb[0].mxu0
  %v2140 = vpop.f32.mrb[0].mxu0
  %v2141 = vadd.f32 0.0, %v2140
  %v2142 = vpop.f32.mrb[0].mxu0
  %2143 = vdwg.mxu0
  %v2144 = vpack.c.bf16 %v2141, %v2138
  %v2145 = vpack.c.bf16 %v1584, %v1583
  %v2146 = vpack.c.bf16 %v1586, %v1585
  %v2148 = vsel %vm462, %v2144, 0
  %2150 = vmatprep.subr.bf16.mxu0 0
  %2151 = vmatpush1.bf16.msra.mxu0 %v2145
  %2152 = vmatprep.subr.bf16.mxu0 0
  %2153 = vmatpush1.bf16.msra.mxu0 %v2146
  %2154 = vmatprep.subr.bf16.mxu0 0
  %2155 = vmatpush1.bf16.msra.mxu0 0
  %2156 = vmatprep.subr.bf16.mxu0 0
  %2157 = vmatpush1.bf16.msra.mxu0 0
  %2158 = vmatprep.subr.bf16.mxu0 0
  %2159 = vmatpush1.bf16.msra.mxu0 0
  %2160 = vmatprep.subr.bf16.mxu0 0
  %2161 = vmatpush1.bf16.msra.mxu0 0
  %2162 = vmatprep.subr.bf16.mxu0 0
  %2163 = vmatpush1.bf16.msra.mxu0 0
  %2164 = vmatprep.subr.bf16.mxu0 0
  %2165 = vmatpush1.bf16.msra.mxu0 0
  %2166 = vmatprep.subr.bf16.mxu0 0
  %2167 = vmatpush1.bf16.msra.mxu0 0
  %2168 = vmatprep.subr.bf16.mxu0 0
  %2169 = vmatpush1.bf16.msra.mxu0 0
  %2170 = vmatprep.subr.bf16.mxu0 0
  %2171 = vmatpush1.bf16.msra.mxu0 0
  %2172 = vmatprep.subr.bf16.mxu0 0
  %2173 = vmatpush1.bf16.msra.mxu0 0
  %2174 = vmatprep.subr.bf16.mxu0 0
  %2175 = vmatpush1.bf16.msra.mxu0 0
  %2176 = vmatprep.subr.bf16.mxu0 0
  %2177 = vmatpush1.bf16.msra.mxu0 0
  %2178 = vmatprep.subr.bf16.mxu0 0
  %2179 = vmatpush1.bf16.msra.mxu0 0
  %2180 = vmatprep.subr.bf16.mxu0 0
  %2181 = vmatpush1.bf16.msra.mxu0 0
  %2182 = vmatprep.mubr.bf16.mxu0 0
  %2183 = vmatmul.mubr.bf16.gmra.mrb[0].mxu0 %v2148
  %v2184 = vpop.f32.mrb[0].mxu0
  %v2185 = vadd.f32 0.0, %v2184
  %v2186 = vpop.f32.mrb[0].mxu0
  %v2187 = vpop.f32.mrb[0].mxu0
  %v2188 = vadd.f32 0.0, %v2187
  %v2189 = vpop.f32.mrb[0].mxu0
  %2190 = vdwg.mxu0
  %v2192 = vsel %vm462, %v2017, 0
  %2194 = vmatprep.subr.bf16.mxu0 0
  %2195 = vmatpush1.bf16.msra.mxu0 %v2018
  %2196 = vmatprep.subr.bf16.mxu0 0
  %2197 = vmatpush1.bf16.msra.mxu0 %v2019
  %2198 = vmatprep.subr.bf16.mxu0 0
  %2199 = vmatpush1.bf16.msra.mxu0 0
  %2200 = vmatprep.subr.bf16.mxu0 0
  %2201 = vmatpush1.bf16.msra.mxu0 0
  %2202 = vmatprep.subr.bf16.mxu0 0
  %2203 = vmatpush1.bf16.msra.mxu0 0
  %2204 = vmatprep.subr.bf16.mxu0 0
  %2205 = vmatpush1.bf16.msra.mxu0 0
  %2206 = vmatprep.subr.bf16.mxu0 0
  %2207 = vmatpush1.bf16.msra.mxu0 0
  %2208 = vmatprep.subr.bf16.mxu0 0
  %2209 = vmatpush1.bf16.msra.mxu0 0
  %2210 = vmatprep.subr.bf16.mxu0 0
  %2211 = vmatpush1.bf16.msra.mxu0 0
  %2212 = vmatprep.subr.bf16.mxu0 0
  %2213 = vmatpush1.bf16.msra.mxu0 0
  %2214 = vmatprep.subr.bf16.mxu0 0
  %2215 = vmatpush1.bf16.msra.mxu0 0
  %2216 = vmatprep.subr.bf16.mxu0 0
  %2217 = vmatpush1.bf16.msra.mxu0 0
  %2218 = vmatprep.subr.bf16.mxu0 0
  %2219 = vmatpush1.bf16.msra.mxu0 0
  %2220 = vmatprep.subr.bf16.mxu0 0
  %2221 = vmatpush1.bf16.msra.mxu0 0
  %2222 = vmatprep.subr.bf16.mxu0 0
  %2223 = vmatpush1.bf16.msra.mxu0 0
  %2224 = vmatprep.subr.bf16.mxu0 0
  %2225 = vmatpush1.bf16.msra.mxu0 0
  %2226 = vmatprep.mubr.bf16.mxu0 0
  %2227 = vmatmul.mubr.bf16.gmra.mrb[0].mxu0 %v2192
  %v2228 = vpop.f32.mrb[0].mxu0
  %v2229 = vadd.f32 %v2185, %v2228
  %v2230 = vpop.f32.mrb[0].mxu0
  %v2231 = vpop.f32.mrb[0].mxu0
  %v2232 = vadd.f32 %v2188, %v2231
  %v2233 = vpop.f32.mrb[0].mxu0
  %2234 = vdwg.mxu0
  %2235 = vrot.lane.b32.xlu0 %v1900, 64
  %v2236 = vpop.permute.xlu0 %2235
  %2237 = vrot.lane.b32.xlu0 %v1901, 64
  %v2238 = vpop.permute.xlu0 %2237
  %v2240 = vsel %vm462, %v2236, 0
  %v2243 = vsel %vm462, %v2238, 0
  %2245 = vmatprep.subr.bf16.mxu0 0
  %2246 = vmatpush1.bf16.xpose.msra.mxu0 %v2243
  %2247 = vmatprep.subr.bf16.mxu0 0
  %2248 = vmatpush1.bf16.xpose.msra.mxu0 0
  %2249 = vmatprep.subr.bf16.mxu0 0
  %2250 = vmatpush1.bf16.xpose.msra.mxu0 0
  %2251 = vmatprep.subr.bf16.mxu0 0
  %2252 = vmatpush1.bf16.xpose.msra.mxu0 0
  %2253 = vmatprep.subr.bf16.mxu0 0
  %2254 = vmatpush1.bf16.xpose.msra.mxu0 0
  %2255 = vmatprep.subr.bf16.mxu0 0
  %2256 = vmatpush1.bf16.xpose.msra.mxu0 0
  %2257 = vmatprep.subr.bf16.mxu0 0
  %2258 = vmatpush1.bf16.xpose.msra.mxu0 0
  %2259 = vmatprep.subr.bf16.mxu0 0
  %2260 = vmatpush1.bf16.xpose.msra.mxu0 0
  %2261 = vmatprep.subr.bf16.mxu0 0
  %2262 = vmatpush1.bf16.xpose.msra.mxu0 0
  %2263 = vmatprep.subr.bf16.mxu0 0
  %2264 = vmatpush1.bf16.xpose.msra.mxu0 0
  %2265 = vmatprep.subr.bf16.mxu0 0
  %2266 = vmatpush1.bf16.xpose.msra.mxu0 0
  %2267 = vmatprep.subr.bf16.mxu0 0
  %2268 = vmatpush1.bf16.xpose.msra.mxu0 0
  %2269 = vmatprep.subr.bf16.mxu0 0
  %2270 = vmatpush1.bf16.xpose.msra.mxu0 0
  %2271 = vmatprep.subr.bf16.mxu0 0
  %2272 = vmatpush1.bf16.xpose.msra.mxu0 0
  %2273 = vmatprep.subr.bf16.mxu0 0
  %2274 = vmatpush1.bf16.xpose.msra.mxu0 0
  %2275 = vmatprep.subr.bf16.mxu0 0
  %2276 = vmatpush1.bf16.xpose.msra.mxu0 0
  %2277 = vmatprep.mubr.bf16.mxu0 0
  %2278 = vmatmul.mubr.bf16.gmra.mrb[0].mxu0 %v2240
  %v2279 = vpop.f32.mrb[0].mxu0
  %v2280 = vadd.f32 %v92, %v2279
  %v2281 = vpop.f32.mrb[0].mxu0
  %v2282 = vpop.f32.mrb[0].mxu0
  %v2283 = vadd.f32 %v93, %v2282
  %v2284 = vpop.f32.mrb[0].mxu0
  %2285 = vdwg.mxu0
  %v2286 = vsel %vm510, %v2280, -inf
  %2287 = vmax.xlane.f32.xlu0 %v2286
  %v2288 = vpop.xlane.xlu0 %2287
  %v2289 = vsel %vm510, %v2283, -inf
  %2290 = vmax.xlane.f32.xlu0 %v2289
  %v2291 = vpop.xlane.xlu0 %2290
  %v2292 = vsub.f32 %v2280, %v2288
  %v2293 = vsub.f32 %v2283, %v2291
  %v2294 = vmul.f32 %v2292, 1.442695
  %v2295 = vpow.pop %v2294
  %v2296 = vmul.f32 %v2293, 1.442695
  %v2297 = vpow.pop %v2296
  %v2298 = vsel %vm510, %v2295, 0.0
  %2299 = vadd.xlane.f32.xlu0 %v2298
  %v2300 = vpop.xlane.xlu0 %2299
  %v2301 = vsel %vm510, %v2297, 0.0
  %2302 = vadd.xlane.f32.xlu0 %v2301
  %v2303 = vpop.xlane.xlu0 %2302
  %v2304 = vrcp.pop %v2300
  %v2305 = vrcp.pop %v2303
  %v2306 = vmul.f32 %v2295, %v2304
  %v2307 = vmul.f32 %v2297, %v2305
  %v2308 = vpack.c.bf16 %v2307, %v2306
  %2309 = vrot.lane.b32.xlu0 %v1972, 64
  %v2310 = vpop.permute.xlu0 %2309
  %v2313 = vsel %vm510, %v2308, 0
  %2315 = vmatprep.subr.bf16.mxu0 0
  %2316 = vmatpush1.bf16.msra.mxu0 %v2310
  %2317 = vmatprep.subr.bf16.mxu0 0
  %2318 = vmatpush1.bf16.msra.mxu0 0
  %2319 = vmatprep.subr.bf16.mxu0 0
  %2320 = vmatpush1.bf16.msra.mxu0 0
  %2321 = vmatprep.subr.bf16.mxu0 0
  %2322 = vmatpush1.bf16.msra.mxu0 0
  %2323 = vmatprep.subr.bf16.mxu0 0
  %2324 = vmatpush1.bf16.msra.mxu0 0
  %2325 = vmatprep.subr.bf16.mxu0 0
  %2326 = vmatpush1.bf16.msra.mxu0 0
  %2327 = vmatprep.subr.bf16.mxu0 0
  %2328 = vmatpush1.bf16.msra.mxu0 0
  %2329 = vmatprep.subr.bf16.mxu0 0
  %2330 = vmatpush1.bf16.msra.mxu0 0
  %2331 = vmatprep.subr.bf16.mxu0 0
  %2332 = vmatpush1.bf16.msra.mxu0 0
  %2333 = vmatprep.subr.bf16.mxu0 0
  %2334 = vmatpush1.bf16.msra.mxu0 0
  %2335 = vmatprep.subr.bf16.mxu0 0
  %2336 = vmatpush1.bf16.msra.mxu0 0
  %2337 = vmatprep.subr.bf16.mxu0 0
  %2338 = vmatpush1.bf16.msra.mxu0 0
  %2339 = vmatprep.subr.bf16.mxu0 0
  %2340 = vmatpush1.bf16.msra.mxu0 0
  %2341 = vmatprep.subr.bf16.mxu0 0
  %2342 = vmatpush1.bf16.msra.mxu0 0
  %2343 = vmatprep.subr.bf16.mxu0 0
  %2344 = vmatpush1.bf16.msra.mxu0 0
  %2345 = vmatprep.subr.bf16.mxu0 0
  %2346 = vmatpush1.bf16.msra.mxu0 0
  %2347 = vmatprep.mubr.bf16.mxu0 0
  %2348 = vmatmul.mubr.bf16.gmra.mrb[0].mxu0 %v2313
  %v2349 = vpop.f32.mrb[0].mxu0
  %v2350 = vadd.f32 0.0, %v2349
  %v2351 = vpop.f32.mrb[0].mxu0
  %v2352 = vpop.f32.mrb[0].mxu0
  %v2353 = vadd.f32 0.0, %v2352
  %v2354 = vpop.f32.mrb[0].mxu0
  %2355 = vdwg.mxu0
  %v2356 = vpack.c.bf16 %v2353, %v2350
  %v2357 = vpack.c.bf16 %v1588, %v1587
  %v2358 = vpack.c.bf16 %v1590, %v1589
  %v2360 = vsel %vm462, %v2356, 0
  %2362 = vmatprep.subr.bf16.mxu0 0
  %2363 = vmatpush1.bf16.msra.mxu0 %v2357
  %2364 = vmatprep.subr.bf16.mxu0 0
  %2365 = vmatpush1.bf16.msra.mxu0 %v2358
  %2366 = vmatprep.subr.bf16.mxu0 0
  %2367 = vmatpush1.bf16.msra.mxu0 0
  %2368 = vmatprep.subr.bf16.mxu0 0
  %2369 = vmatpush1.bf16.msra.mxu0 0
  %2370 = vmatprep.subr.bf16.mxu0 0
  %2371 = vmatpush1.bf16.msra.mxu0 0
  %2372 = vmatprep.subr.bf16.mxu0 0
  %2373 = vmatpush1.bf16.msra.mxu0 0
  %2374 = vmatprep.subr.bf16.mxu0 0
  %2375 = vmatpush1.bf16.msra.mxu0 0
  %2376 = vmatprep.subr.bf16.mxu0 0
  %2377 = vmatpush1.bf16.msra.mxu0 0
  %2378 = vmatprep.subr.bf16.mxu0 0
  %2379 = vmatpush1.bf16.msra.mxu0 0
  %2380 = vmatprep.subr.bf16.mxu0 0
  %2381 = vmatpush1.bf16.msra.mxu0 0
  %2382 = vmatprep.subr.bf16.mxu0 0
  %2383 = vmatpush1.bf16.msra.mxu0 0
  %2384 = vmatprep.subr.bf16.mxu0 0
  %2385 = vmatpush1.bf16.msra.mxu0 0
  %2386 = vmatprep.subr.bf16.mxu0 0
  %2387 = vmatpush1.bf16.msra.mxu0 0
  %2388 = vmatprep.subr.bf16.mxu0 0
  %2389 = vmatpush1.bf16.msra.mxu0 0
  %2390 = vmatprep.subr.bf16.mxu0 0
  %2391 = vmatpush1.bf16.msra.mxu0 0
  %2392 = vmatprep.subr.bf16.mxu0 0
  %2393 = vmatpush1.bf16.msra.mxu0 0
  %2394 = vmatprep.mubr.bf16.mxu0 0
  %2395 = vmatmul.mubr.bf16.gmra.mrb[0].mxu0 %v2360
  %v2396 = vpop.f32.mrb[0].mxu0
  %v2397 = vadd.f32 0.0, %v2396
  %v2398 = vpop.f32.mrb[0].mxu0
  %v2399 = vpop.f32.mrb[0].mxu0
  %v2400 = vadd.f32 0.0, %v2399
  %v2401 = vpop.f32.mrb[0].mxu0
  %2402 = vdwg.mxu0
  %v2403 = vadd.f32 %v2229, %v2397
  %v2404 = vadd.f32 %v2232, %v2400
  %2405 = vrot.lane.b32.xlu0 %v1900, 32
  %v2406 = vpop.permute.xlu0 %2405
  %2407 = vrot.lane.b32.xlu0 %v1901, 32
  %v2408 = vpop.permute.xlu0 %2407
  %v2410 = vsel %vm462, %v2406, 0
  %v2413 = vsel %vm462, %v2408, 0
  %2415 = vmatprep.subr.bf16.mxu0 0
  %2416 = vmatpush1.bf16.xpose.msra.mxu0 %v2413
  %2417 = vmatprep.subr.bf16.mxu0 0
  %2418 = vmatpush1.bf16.xpose.msra.mxu0 0
  %2419 = vmatprep.subr.bf16.mxu0 0
  %2420 = vmatpush1.bf16.xpose.msra.mxu0 0
  %2421 = vmatprep.subr.bf16.mxu0 0
  %2422 = vmatpush1.bf16.xpose.msra.mxu0 0
  %2423 = vmatprep.subr.bf16.mxu0 0
  %2424 = vmatpush1.bf16.xpose.msra.mxu0 0
  %2425 = vmatprep.subr.bf16.mxu0 0
  %2426 = vmatpush1.bf16.xpose.msra.mxu0 0
  %2427 = vmatprep.subr.bf16.mxu0 0
  %2428 = vmatpush1.bf16.xpose.msra.mxu0 0
  %2429 = vmatprep.subr.bf16.mxu0 0
  %2430 = vmatpush1.bf16.xpose.msra.mxu0 0
  %2431 = vmatprep.subr.bf16.mxu0 0
  %2432 = vmatpush1.bf16.xpose.msra.mxu0 0
  %2433 = vmatprep.subr.bf16.mxu0 0
  %2434 = vmatpush1.bf16.xpose.msra.mxu0 0
  %2435 = vmatprep.subr.bf16.mxu0 0
  %2436 = vmatpush1.bf16.xpose.msra.mxu0 0
  %2437 = vmatprep.subr.bf16.mxu0 0
  %2438 = vmatpush1.bf16.xpose.msra.mxu0 0
  %2439 = vmatprep.subr.bf16.mxu0 0
  %2440 = vmatpush1.bf16.xpose.msra.mxu0 0
  %2441 = vmatprep.subr.bf16.mxu0 0
  %2442 = vmatpush1.bf16.xpose.msra.mxu0 0
  %2443 = vmatprep.subr.bf16.mxu0 0
  %2444 = vmatpush1.bf16.xpose.msra.mxu0 0
  %2445 = vmatprep.subr.bf16.mxu0 0
  %2446 = vmatpush1.bf16.xpose.msra.mxu0 0
  %2447 = vmatprep.mubr.bf16.mxu0 0
  %2448 = vmatmul.mubr.bf16.gmra.mrb[0].mxu0 %v2410
  %v2449 = vpop.f32.mrb[0].mxu0
  %v2450 = vadd.f32 %v92, %v2449
  %v2451 = vpop.f32.mrb[0].mxu0
  %v2452 = vpop.f32.mrb[0].mxu0
  %v2453 = vadd.f32 %v93, %v2452
  %v2454 = vpop.f32.mrb[0].mxu0
  %2455 = vdwg.mxu0
  %v2456 = vsel %vm510, %v2450, -inf
  %2457 = vmax.xlane.f32.xlu0 %v2456
  %v2458 = vpop.xlane.xlu0 %2457
  %v2459 = vsel %vm510, %v2453, -inf
  %2460 = vmax.xlane.f32.xlu0 %v2459
  %v2461 = vpop.xlane.xlu0 %2460
  %v2462 = vsub.f32 %v2450, %v2458
  %v2463 = vsub.f32 %v2453, %v2461
  %v2464 = vmul.f32 %v2462, 1.442695
  %v2465 = vpow.pop %v2464
  %v2466 = vmul.f32 %v2463, 1.442695
  %v2467 = vpow.pop %v2466
  %v2468 = vsel %vm510, %v2465, 0.0
  %2469 = vadd.xlane.f32.xlu0 %v2468
  %v2470 = vpop.xlane.xlu0 %2469
  %v2471 = vsel %vm510, %v2467, 0.0
  %2472 = vadd.xlane.f32.xlu0 %v2471
  %v2473 = vpop.xlane.xlu0 %2472
  %v2474 = vrcp.pop %v2470
  %v2475 = vrcp.pop %v2473
  %v2476 = vmul.f32 %v2465, %v2474
  %v2477 = vmul.f32 %v2467, %v2475
  %v2478 = vpack.c.bf16 %v2477, %v2476
  %2479 = vrot.lane.b32.xlu0 %v1972, 32
  %v2480 = vpop.permute.xlu0 %2479
  %v2483 = vsel %vm510, %v2478, 0
  %2485 = vmatprep.subr.bf16.mxu0 0
  %2486 = vmatpush1.bf16.msra.mxu0 %v2480
  %2487 = vmatprep.subr.bf16.mxu0 0
  %2488 = vmatpush1.bf16.msra.mxu0 0
  %2489 = vmatprep.subr.bf16.mxu0 0
  %2490 = vmatpush1.bf16.msra.mxu0 0
  %2491 = vmatprep.subr.bf16.mxu0 0
  %2492 = vmatpush1.bf16.msra.mxu0 0
  %2493 = vmatprep.subr.bf16.mxu0 0
  %2494 = vmatpush1.bf16.msra.mxu0 0
  %2495 = vmatprep.subr.bf16.mxu0 0
  %2496 = vmatpush1.bf16.msra.mxu0 0
  %2497 = vmatprep.subr.bf16.mxu0 0
  %2498 = vmatpush1.bf16.msra.mxu0 0
  %2499 = vmatprep.subr.bf16.mxu0 0
  %2500 = vmatpush1.bf16.msra.mxu0 0
  %2501 = vmatprep.subr.bf16.mxu0 0
  %2502 = vmatpush1.bf16.msra.mxu0 0
  %2503 = vmatprep.subr.bf16.mxu0 0
  %2504 = vmatpush1.bf16.msra.mxu0 0
  %2505 = vmatprep.subr.bf16.mxu0 0
  %2506 = vmatpush1.bf16.msra.mxu0 0
  %2507 = vmatprep.subr.bf16.mxu0 0
  %2508 = vmatpush1.bf16.msra.mxu0 0
  %2509 = vmatprep.subr.bf16.mxu0 0
  %2510 = vmatpush1.bf16.msra.mxu0 0
  %2511 = vmatprep.subr.bf16.mxu0 0
  %2512 = vmatpush1.bf16.msra.mxu0 0
  %2513 = vmatprep.subr.bf16.mxu0 0
  %2514 = vmatpush1.bf16.msra.mxu0 0
  %2515 = vmatprep.subr.bf16.mxu0 0
  %2516 = vmatpush1.bf16.msra.mxu0 0
  %2517 = vmatprep.mubr.bf16.mxu0 0
  %2518 = vmatmul.mubr.bf16.gmra.mrb[0].mxu0 %v2483
  %v2519 = vpop.f32.mrb[0].mxu0
  %v2520 = vadd.f32 0.0, %v2519
  %v2521 = vpop.f32.mrb[0].mxu0
  %v2522 = vpop.f32.mrb[0].mxu0
  %v2523 = vadd.f32 0.0, %v2522
  %v2524 = vpop.f32.mrb[0].mxu0
  %2525 = vdwg.mxu0
  %v2526 = vpack.c.bf16 %v2523, %v2520
  %v2527 = vpack.c.bf16 %v1592, %v1591
  %v2528 = vpack.c.bf16 %v1594, %v1593
  %v2530 = vsel %vm462, %v2526, 0
  %2532 = vmatprep.subr.bf16.mxu0 0
  %2533 = vmatpush1.bf16.msra.mxu0 %v2527
  %2534 = vmatprep.subr.bf16.mxu0 0
  %2535 = vmatpush1.bf16.msra.mxu0 %v2528
  %2536 = vmatprep.subr.bf16.mxu0 0
  %2537 = vmatpush1.bf16.msra.mxu0 0
  %2538 = vmatprep.subr.bf16.mxu0 0
  %2539 = vmatpush1.bf16.msra.mxu0 0
  %2540 = vmatprep.subr.bf16.mxu0 0
  %2541 = vmatpush1.bf16.msra.mxu0 0
  %2542 = vmatprep.subr.bf16.mxu0 0
  %2543 = vmatpush1.bf16.msra.mxu0 0
  %2544 = vmatprep.subr.bf16.mxu0 0
  %2545 = vmatpush1.bf16.msra.mxu0 0
  %2546 = vmatprep.subr.bf16.mxu0 0
  %2547 = vmatpush1.bf16.msra.mxu0 0
  %2548 = vmatprep.subr.bf16.mxu0 0
  %2549 = vmatpush1.bf16.msra.mxu0 0
  %2550 = vmatprep.subr.bf16.mxu0 0
  %2551 = vmatpush1.bf16.msra.mxu0 0
  %2552 = vmatprep.subr.bf16.mxu0 0
  %2553 = vmatpush1.bf16.msra.mxu0 0
  %2554 = vmatprep.subr.bf16.mxu0 0
  %2555 = vmatpush1.bf16.msra.mxu0 0
  %2556 = vmatprep.subr.bf16.mxu0 0
  %2557 = vmatpush1.bf16.msra.mxu0 0
  %2558 = vmatprep.subr.bf16.mxu0 0
  %2559 = vmatpush1.bf16.msra.mxu0 0
  %2560 = vmatprep.subr.bf16.mxu0 0
  %2561 = vmatpush1.bf16.msra.mxu0 0
  %2562 = vmatprep.subr.bf16.mxu0 0
  %2563 = vmatpush1.bf16.msra.mxu0 0
  %2564 = vmatprep.mubr.bf16.mxu0 0
  %2565 = vmatmul.mubr.bf16.gmra.mrb[0].mxu0 %v2530
  %v2566 = vpop.f32.mrb[0].mxu0
  %v2567 = vadd.f32 0.0, %v2566
  %v2568 = vpop.f32.mrb[0].mxu0
  %v2569 = vpop.f32.mrb[0].mxu0
  %v2570 = vadd.f32 0.0, %v2569
  %v2571 = vpop.f32.mrb[0].mxu0
  %2572 = vdwg.mxu0
  %v2573 = vadd.f32 %v2403, %v2567
  %v2574 = vadd.f32 %v2404, %v2570
  %v2575 = vadd.f32 %v1521, %v2573
  %v2576 = vadd.f32 %v1522, %v2574
  %v2578 = vlaneseq
  %v2579 = vshrl.u32 %v2578, 7
  %v2580 = vsub.s32 0, %v2579
  %v2581 = vrot.slane %v1596, %v2580
  %v2583 = vadd.f32 %v2575, %v2581
  %v2584 = vadd.f32 %v2576, %v2581
  %2585 = vadd.xlane.f32.xlu0 %v2583
  %v2586 = vpop.xlane.xlu0 %2585
  %2587 = vadd.xlane.f32.xlu0 %v2584
  %v2588 = vpop.xlane.xlu0 %2587
  %v2589 = vmul.f32 %v2586, %v298
  %v2590 = vmul.f32 %v2588, %v298
  %v2591 = vsub.f32 %v2583, %v2589
  %v2592 = vsub.f32 %v2584, %v2590
  %v2593 = vmul.f32 %v2591, %v2591
  %v2594 = vmul.f32 %v2592, %v2592
  %2595 = vadd.xlane.f32.xlu0 %v2593
  %v2596 = vpop.xlane.xlu0 %2595
  %2597 = vadd.xlane.f32.xlu0 %v2594
  %v2598 = vpop.xlane.xlu0 %2597
  %v2599 = vmul.f32 %v2596, %v298
  %v2600 = vmul.f32 %v2598, %v298
  %v2601 = vadd.f32 %v2599, 1e-05
  %v2602 = vadd.f32 %v2600, 1e-05
  %v2603 = vrsqrt.pop %v2601
  %v2604 = vrsqrt.pop %v2602
  %v2605 = vmul.f32 %v2591, %v2603
  %v2606 = vmul.f32 %v2592, %v2604
  %v2608 = vlaneseq
  %v2609 = vshrl.u32 %v2608, 7
  %v2610 = vsub.s32 0, %v2609
  %v2611 = vrot.slane %v1598, %v2610
  %v2613 = vmul.f32 %v2605, %v2611
  %v2614 = vmul.f32 %v2606, %v2611
  %v2616 = vlaneseq
  %v2617 = vshrl.u32 %v2616, 7
  %v2618 = vsub.s32 0, %v2617
  %v2619 = vrot.slane %v1600, %v2618
  %v2621 = vadd.f32 %v2613, %v2619
  %v2622 = vadd.f32 %v2614, %v2619
  %v2623 = vpack.c.bf16 %v2622, %v2621
  %v2624 = vpack.c.bf16 %v1606, %v1602
  %v2625 = vpack.c.bf16 %v1607, %v1603
  %v2626 = vpack.c.bf16 %v1608, %v1604
  %v2627 = vpack.c.bf16 %v1609, %v1605
  %v2628 = vpack.c.bf16 %v1614, %v1610
  %v2629 = vpack.c.bf16 %v1615, %v1611
  %v2630 = vpack.c.bf16 %v1616, %v1612
  %v2631 = vpack.c.bf16 %v1617, %v1613
  %v2632 = vpack.c.bf16 %v1622, %v1618
  %v2633 = vpack.c.bf16 %v1623, %v1619
  %v2634 = vpack.c.bf16 %v1624, %v1620
  %v2635 = vpack.c.bf16 %v1625, %v1621
  %v2636 = vpack.c.bf16 %v1630, %v1626
  %v2637 = vpack.c.bf16 %v1631, %v1627
  %v2638 = vpack.c.bf16 %v1632, %v1628
  %v2639 = vpack.c.bf16 %v1633, %v1629
  %v2640 = vpack.c.bf16 %v1638, %v1634
  %v2641 = vpack.c.bf16 %v1639, %v1635
  %v2642 = vpack.c.bf16 %v1640, %v1636
  %v2643 = vpack.c.bf16 %v1641, %v1637
  %v2644 = vpack.c.bf16 %v1646, %v1642
  %v2645 = vpack.c.bf16 %v1647, %v1643
  %v2646 = vpack.c.bf16 %v1648, %v1644
  %v2647 = vpack.c.bf16 %v1649, %v1645
  %v2648 = vpack.c.bf16 %v1654, %v1650
  %v2649 = vpack.c.bf16 %v1655, %v1651
  %v2650 = vpack.c.bf16 %v1656, %v1652
  %v2651 = vpack.c.bf16 %v1657, %v1653
  %v2652 = vpack.c.bf16 %v1662, %v1658
  %v2653 = vpack.c.bf16 %v1663, %v1659
  %v2654 = vpack.c.bf16 %v1664, %v1660
  %v2655 = vpack.c.bf16 %v1665, %v1661
  %v2657 = vlaneseq
  %v2658 = vshrl.u32 %v2657, 7
  %v2659 = vsub.s32 0, %v2658
  %v2660 = vrot.slane %v1667, %v2659
  %v2661 = vlaneseq
  %v2662 = vshrl.u32 %v2661, 7
  %v2663 = vsub.s32 1, %v2662
  %v2664 = vrot.slane %v1667, %v2663
  %v2665 = vlaneseq
  %v2666 = vshrl.u32 %v2665, 7
  %v2667 = vsub.s32 2, %v2666
  %v2668 = vrot.slane %v1667, %v2667
  %v2669 = vlaneseq
  %v2670 = vshrl.u32 %v2669, 7
  %v2671 = vsub.s32 3, %v2670
  %v2672 = vrot.slane %v1667, %v2671
  %2677 = vmatprep.subr.bf16.mxu0 %v2625
  %2678 = vmatpush1.bf16.msra.mxu0 %v2624
  %2679 = vmatprep.subr.bf16.mxu0 %v2629
  %2680 = vmatpush1.bf16.msra.mxu0 %v2628
  %2681 = vmatprep.subr.bf16.mxu0 %v2633
  %2682 = vmatpush1.bf16.msra.mxu0 %v2632
  %2683 = vmatprep.subr.bf16.mxu0 %v2637
  %2684 = vmatpush1.bf16.msra.mxu0 %v2636
  %2685 = vmatprep.subr.bf16.mxu0 %v2641
  %2686 = vmatpush1.bf16.msra.mxu0 %v2640
  %2687 = vmatprep.subr.bf16.mxu0 %v2645
  %2688 = vmatpush1.bf16.msra.mxu0 %v2644
  %2689 = vmatprep.subr.bf16.mxu0 %v2649
  %2690 = vmatpush1.bf16.msra.mxu0 %v2648
  %2691 = vmatprep.subr.bf16.mxu0 %v2653
  %2692 = vmatpush1.bf16.msra.mxu0 %v2652
  %2693 = vmatprep.subr.bf16.mxu0 0
  %2694 = vmatpush1.bf16.msra.mxu0 0
  %2695 = vmatprep.subr.bf16.mxu0 0
  %2696 = vmatpush1.bf16.msra.mxu0 0
  %2697 = vmatprep.subr.bf16.mxu0 0
  %2698 = vmatpush1.bf16.msra.mxu0 0
  %2699 = vmatprep.subr.bf16.mxu0 0
  %2700 = vmatpush1.bf16.msra.mxu0 0
  %2701 = vmatprep.subr.bf16.mxu0 0
  %2702 = vmatpush1.bf16.msra.mxu0 0
  %2703 = vmatprep.subr.bf16.mxu0 0
  %2704 = vmatpush1.bf16.msra.mxu0 0
  %2705 = vmatprep.subr.bf16.mxu0 0
  %2706 = vmatpush1.bf16.msra.mxu0 0
  %2707 = vmatprep.subr.bf16.mxu0 0
  %2708 = vmatpush1.bf16.msra.mxu0 0
  %2709 = vmatprep.mubr.bf16.mxu0 0
  %2710 = vmatmul.mubr.bf16.gmra.mrb[0].mxu0 %v2623
  %v2711 = vpop.f32.mrb[0].mxu0
  %v2712 = vadd.f32 %v2660, %v2711
  %v2713 = vpop.f32.mrb[0].mxu0
  %v2714 = vadd.f32 %v2664, %v2713
  %v2715 = vpop.f32.mrb[0].mxu0
  %v2716 = vadd.f32 %v2660, %v2715
  %v2717 = vpop.f32.mrb[0].mxu0
  %v2718 = vadd.f32 %v2664, %v2717
  %2719 = vdwg.mxu0
  %2720 = vmatprep.subr.bf16.mxu0 %v2627
  %2721 = vmatpush1.bf16.msra.mxu0 %v2626
  %2722 = vmatprep.subr.bf16.mxu0 %v2631
  %2723 = vmatpush1.bf16.msra.mxu0 %v2630
  %2724 = vmatprep.subr.bf16.mxu0 %v2635
  %2725 = vmatpush1.bf16.msra.mxu0 %v2634
  %2726 = vmatprep.subr.bf16.mxu0 %v2639
  %2727 = vmatpush1.bf16.msra.mxu0 %v2638
  %2728 = vmatprep.subr.bf16.mxu0 %v2643
  %2729 = vmatpush1.bf16.msra.mxu0 %v2642
  %2730 = vmatprep.subr.bf16.mxu0 %v2647
  %2731 = vmatpush1.bf16.msra.mxu0 %v2646
  %2732 = vmatprep.subr.bf16.mxu0 %v2651
  %2733 = vmatpush1.bf16.msra.mxu0 %v2650
  %2734 = vmatprep.subr.bf16.mxu0 %v2655
  %2735 = vmatpush1.bf16.msra.mxu0 %v2654
  %2736 = vmatprep.subr.bf16.mxu0 0
  %2737 = vmatpush1.bf16.msra.mxu0 0
  %2738 = vmatprep.subr.bf16.mxu0 0
  %2739 = vmatpush1.bf16.msra.mxu0 0
  %2740 = vmatprep.subr.bf16.mxu0 0
  %2741 = vmatpush1.bf16.msra.mxu0 0
  %2742 = vmatprep.subr.bf16.mxu0 0
  %2743 = vmatpush1.bf16.msra.mxu0 0
  %2744 = vmatprep.subr.bf16.mxu0 0
  %2745 = vmatpush1.bf16.msra.mxu0 0
  %2746 = vmatprep.subr.bf16.mxu0 0
  %2747 = vmatpush1.bf16.msra.mxu0 0
  %2748 = vmatprep.subr.bf16.mxu0 0
  %2749 = vmatpush1.bf16.msra.mxu0 0
  %2750 = vmatprep.subr.bf16.mxu0 0
  %2751 = vmatpush1.bf16.msra.mxu0 0
  %2752 = vmatprep.mubr.bf16.mxu0 0
  %2753 = vmatmul.mubr.bf16.gmra.mrb[0].mxu0 %v2623
  %v2754 = vpop.f32.mrb[0].mxu0
  %v2755 = vadd.f32 %v2668, %v2754
  %v2756 = vpop.f32.mrb[0].mxu0
  %v2757 = vadd.f32 %v2672, %v2756
  %v2758 = vpop.f32.mrb[0].mxu0
  %v2759 = vadd.f32 %v2668, %v2758
  %v2760 = vpop.f32.mrb[0].mxu0
  %v2761 = vadd.f32 %v2672, %v2760
  %2762 = vdwg.mxu0
  %v2763 = vmul.f32 %v2712, %v2712
  %v2764 = vmul.f32 %v2714, %v2714
  %v2765 = vmul.f32 %v2755, %v2755
  %v2766 = vmul.f32 %v2757, %v2757
  %v2767 = vmul.f32 %v2716, %v2716
  %v2768 = vmul.f32 %v2718, %v2718
  %v2769 = vmul.f32 %v2759, %v2759
  %v2770 = vmul.f32 %v2761, %v2761
  %v2771 = vmul.f32 %v2712, %v2763
  %v2772 = vmul.f32 %v2714, %v2764
  %v2773 = vmul.f32 %v2755, %v2765
  %v2774 = vmul.f32 %v2757, %v2766
  %v2775 = vmul.f32 %v2716, %v2767
  %v2776 = vmul.f32 %v2718, %v2768
  %v2777 = vmul.f32 %v2759, %v2769
  %v2778 = vmul.f32 %v2761, %v2770
  %v2779 = vmul.f32 %v2771, 0.044715
  %v2780 = vmul.f32 %v2772, 0.044715
  %v2781 = vmul.f32 %v2773, 0.044715
  %v2782 = vmul.f32 %v2774, 0.044715
  %v2783 = vmul.f32 %v2775, 0.044715
  %v2784 = vmul.f32 %v2776, 0.044715
  %v2785 = vmul.f32 %v2777, 0.044715
  %v2786 = vmul.f32 %v2778, 0.044715
  %v2787 = vadd.f32 %v2712, %v2779
  %v2788 = vadd.f32 %v2714, %v2780
  %v2789 = vadd.f32 %v2755, %v2781
  %v2790 = vadd.f32 %v2757, %v2782
  %v2791 = vadd.f32 %v2716, %v2783
  %v2792 = vadd.f32 %v2718, %v2784
  %v2793 = vadd.f32 %v2759, %v2785
  %v2794 = vadd.f32 %v2761, %v2786
  %v2795 = vmul.f32 %v2787, 0.7978846
  %v2796 = vmul.f32 %v2788, 0.7978846
  %v2797 = vmul.f32 %v2789, 0.7978846
  %v2798 = vmul.f32 %v2790, 0.7978846
  %v2799 = vmul.f32 %v2791, 0.7978846
  %v2800 = vmul.f32 %v2792, 0.7978846
  %v2801 = vmul.f32 %v2793, 0.7978846
  %v2802 = vmul.f32 %v2794, 0.7978846
  %v2803 = vtanh.pop %v2795
  %v2804 = vtanh.pop %v2796
  %v2805 = vtanh.pop %v2797
  %v2806 = vtanh.pop %v2798
  %v2807 = vtanh.pop %v2799
  %v2808 = vtanh.pop %v2800
  %v2809 = vtanh.pop %v2801
  %v2810 = vtanh.pop %v2802
  %v2811 = vadd.f32 %v2803, 1.0
  %v2812 = vadd.f32 %v2804, 1.0
  %v2813 = vadd.f32 %v2805, 1.0
  %v2814 = vadd.f32 %v2806, 1.0
  %v2815 = vadd.f32 %v2807, 1.0
  %v2816 = vadd.f32 %v2808, 1.0
  %v2817 = vadd.f32 %v2809, 1.0
  %v2818 = vadd.f32 %v2810, 1.0
  %v2819 = vmul.f32 %v2811, 0.5
  %v2820 = vmul.f32 %v2812, 0.5
  %v2821 = vmul.f32 %v2813, 0.5
  %v2822 = vmul.f32 %v2814, 0.5
  %v2823 = vmul.f32 %v2815, 0.5
  %v2824 = vmul.f32 %v2816, 0.5
  %v2825 = vmul.f32 %v2817, 0.5
  %v2826 = vmul.f32 %v2818, 0.5
  %v2827 = vmul.f32 %v2712, %v2819
  %v2828 = vmul.f32 %v2714, %v2820
  %v2829 = vmul.f32 %v2755, %v2821
  %v2830 = vmul.f32 %v2757, %v2822
  %v2831 = vmul.f32 %v2716, %v2823
  %v2832 = vmul.f32 %v2718, %v2824
  %v2833 = vmul.f32 %v2759, %v2825
  %v2834 = vmul.f32 %v2761, %v2826
  %v2835 = vpack.c.bf16 %v2831, %v2827
  %v2836 = vpack.c.bf16 %v2832, %v2828
  %v2837 = vpack.c.bf16 %v2833, %v2829
  %v2838 = vpack.c.bf16 %v2834, %v2830
  %v2839 = vpack.c.bf16 %v1670, %v1669
  %v2840 = vpack.c.bf16 %v1672, %v1671
  %v2841 = vpack.c.bf16 %v1674, %v1673
  %v2842 = vpack.c.bf16 %v1676, %v1675
  %v2843 = vpack.c.bf16 %v1678, %v1677
  %v2844 = vpack.c.bf16 %v1680, %v1679
  %v2845 = vpack.c.bf16 %v1682, %v1681
  %v2846 = vpack.c.bf16 %v1684, %v1683
  %v2847 = vpack.c.bf16 %v1686, %v1685
  %v2848 = vpack.c.bf16 %v1688, %v1687
  %v2849 = vpack.c.bf16 %v1690, %v1689
  %v2850 = vpack.c.bf16 %v1692, %v1691
  %v2851 = vpack.c.bf16 %v1694, %v1693
  %v2852 = vpack.c.bf16 %v1696, %v1695
  %v2853 = vpack.c.bf16 %v1698, %v1697
  %v2854 = vpack.c.bf16 %v1700, %v1699
  %v2855 = vpack.c.bf16 %v1702, %v1701
  %v2856 = vpack.c.bf16 %v1704, %v1703
  %v2857 = vpack.c.bf16 %v1706, %v1705
  %v2858 = vpack.c.bf16 %v1708, %v1707
  %v2859 = vpack.c.bf16 %v1710, %v1709
  %v2860 = vpack.c.bf16 %v1712, %v1711
  %v2861 = vpack.c.bf16 %v1714, %v1713
  %v2862 = vpack.c.bf16 %v1716, %v1715
  %v2863 = vpack.c.bf16 %v1718, %v1717
  %v2864 = vpack.c.bf16 %v1720, %v1719
  %v2865 = vpack.c.bf16 %v1722, %v1721
  %v2866 = vpack.c.bf16 %v1724, %v1723
  %v2867 = vpack.c.bf16 %v1726, %v1725
  %v2868 = vpack.c.bf16 %v1728, %v1727
  %v2869 = vpack.c.bf16 %v1730, %v1729
  %v2870 = vpack.c.bf16 %v1732, %v1731
  %v2872 = vlaneseq
  %v2873 = vshrl.u32 %v2872, 7
  %v2874 = vsub.s32 0, %v2873
  %v2875 = vrot.slane %v1734, %v2874
  %2877 = vmatprep.subr.bf16.mxu0 0
  %2878 = vmatpush1.bf16.msra.mxu0 %v2839
  %2879 = vmatprep.subr.bf16.mxu0 0
  %2880 = vmatpush1.bf16.msra.mxu0 %v2840
  %2881 = vmatprep.subr.bf16.mxu0 0
  %2882 = vmatpush1.bf16.msra.mxu0 %v2841
  %2883 = vmatprep.subr.bf16.mxu0 0
  %2884 = vmatpush1.bf16.msra.mxu0 %v2842
  %2885 = vmatprep.subr.bf16.mxu0 0
  %2886 = vmatpush1.bf16.msra.mxu0 %v2843
  %2887 = vmatprep.subr.bf16.mxu0 0
  %2888 = vmatpush1.bf16.msra.mxu0 %v2844
  %2889 = vmatprep.subr.bf16.mxu0 0
  %2890 = vmatpush1.bf16.msra.mxu0 %v2845
  %2891 = vmatprep.subr.bf16.mxu0 0
  %2892 = vmatpush1.bf16.msra.mxu0 %v2846
  %2893 = vmatprep.subr.bf16.mxu0 0
  %2894 = vmatpush1.bf16.msra.mxu0 %v2847
  %2895 = vmatprep.subr.bf16.mxu0 0
  %2896 = vmatpush1.bf16.msra.mxu0 %v2848
  %2897 = vmatprep.subr.bf16.mxu0 0
  %2898 = vmatpush1.bf16.msra.mxu0 %v2849
  %2899 = vmatprep.subr.bf16.mxu0 0
  %2900 = vmatpush1.bf16.msra.mxu0 %v2850
  %2901 = vmatprep.subr.bf16.mxu0 0
  %2902 = vmatpush1.bf16.msra.mxu0 %v2851
  %2903 = vmatprep.subr.bf16.mxu0 0
  %2904 = vmatpush1.bf16.msra.mxu0 %v2852
  %2905 = vmatprep.subr.bf16.mxu0 0
  %2906 = vmatpush1.bf16.msra.mxu0 %v2853
  %2907 = vmatprep.subr.bf16.mxu0 0
  %2908 = vmatpush1.bf16.msra.mxu0 %v2854
  %2909 = vmatprep.mubr.bf16.mxu0 %v2836
  %2910 = vmatmul.mubr.bf16.gmra.mrb[0].mxu0 %v2835
  %v2911 = vpop.f32.mrb[0].mxu0
  %v2912 = vadd.f32 %v2875, %v2911
  %v2913 = vpop.f32.mrb[0].mxu0
  %v2914 = vpop.f32.mrb[0].mxu0
  %v2915 = vadd.f32 %v2875, %v2914
  %v2916 = vpop.f32.mrb[0].mxu0
  %2917 = vdwg.mxu0
  %2918 = vmatprep.subr.bf16.mxu0 0
  %2919 = vmatpush1.bf16.msra.mxu0 %v2855
  %2920 = vmatprep.subr.bf16.mxu0 0
  %2921 = vmatpush1.bf16.msra.mxu0 %v2856
  %2922 = vmatprep.subr.bf16.mxu0 0
  %2923 = vmatpush1.bf16.msra.mxu0 %v2857
  %2924 = vmatprep.subr.bf16.mxu0 0
  %2925 = vmatpush1.bf16.msra.mxu0 %v2858
  %2926 = vmatprep.subr.bf16.mxu0 0
  %2927 = vmatpush1.bf16.msra.mxu0 %v2859
  %2928 = vmatprep.subr.bf16.mxu0 0
  %2929 = vmatpush1.bf16.msra.mxu0 %v2860
  %2930 = vmatprep.subr.bf16.mxu0 0
  %2931 = vmatpush1.bf16.msra.mxu0 %v2861
  %2932 = vmatprep.subr.bf16.mxu0 0
  %2933 = vmatpush1.bf16.msra.mxu0 %v2862
  %2934 = vmatprep.subr.bf16.mxu0 0
  %2935 = vmatpush1.bf16.msra.mxu0 %v2863
  %2936 = vmatprep.subr.bf16.mxu0 0
  %2937 = vmatpush1.bf16.msra.mxu0 %v2864
  %2938 = vmatprep.subr.bf16.mxu0 0
  %2939 = vmatpush1.bf16.msra.mxu0 %v2865
  %2940 = vmatprep.subr.bf16.mxu0 0
  %2941 = vmatpush1.bf16.msra.mxu0 %v2866
  %2942 = vmatprep.subr.bf16.mxu0 0
  %2943 = vmatpush1.bf16.msra.mxu0 %v2867
  %2944 = vmatprep.subr.bf16.mxu0 0
  %2945 = vmatpush1.bf16.msra.mxu0 %v2868
  %2946 = vmatprep.subr.bf16.mxu0 0
  %2947 = vmatpush1.bf16.msra.mxu0 %v2869
  %2948 = vmatprep.subr.bf16.mxu0 0
  %2949 = vmatpush1.bf16.msra.mxu0 %v2870
  %2950 = vmatprep.mubr.bf16.mxu0 %v2838
  %2951 = vmatmul.mubr.bf16.gmra.mrb[0].mxu0 %v2837
  %v2952 = vpop.f32.mrb[0].mxu0
  %v2953 = vadd.f32 %v2912, %v2952
  %v2954 = vpop.f32.mrb[0].mxu0
  %v2955 = vpop.f32.mrb[0].mxu0
  %v2956 = vadd.f32 %v2915, %v2955
  %v2957 = vpop.f32.mrb[0].mxu0
  %2958 = vdwg.mxu0
  %v2959 = vadd.f32 %v2583, %v2953
  %v2960 = vadd.f32 %v2584, %v2956
  %v2961 = vld [vmem:[%s13] sm:$0x1]
  %v2962 = vld [vmem:[%s14] sm:$0x1]
  %2963 = vadd.xlane.f32.xlu0 %v2959
  %v2964 = vpop.xlane.xlu0 %2963
  %2965 = vadd.xlane.f32.xlu0 %v2960
  %v2966 = vpop.xlane.xlu0 %2965
  %v2967 = vmul.f32 %v2964, %v298
  %v2968 = vmul.f32 %v2966, %v298
  %v2969 = vsub.f32 %v2959, %v2967
  %v2970 = vsub.f32 %v2960, %v2968
  %v2971 = vmul.f32 %v2969, %v2969
  %v2972 = vmul.f32 %v2970, %v2970
  %2973 = vadd.xlane.f32.xlu0 %v2971
  %v2974 = vpop.xlane.xlu0 %2973
  %2975 = vadd.xlane.f32.xlu0 %v2972
  %v2976 = vpop.xlane.xlu0 %2975
  %v2977 = vmul.f32 %v2974, %v298
  %v2978 = vmul.f32 %v2976, %v298
  %v2979 = vadd.f32 %v2977, 1e-05
  %v2980 = vadd.f32 %v2978, 1e-05
  %v2981 = vrsqrt.pop %v2979
  %v2982 = vrsqrt.pop %v2980
  %v2983 = vmul.f32 %v2969, %v2981
  %v2984 = vmul.f32 %v2970, %v2982
  %v2986 = vlaneseq
  %v2987 = vshrl.u32 %v2986, 7
  %v2988 = vsub.s32 0, %v2987
  %v2989 = vrot.slane %v2961, %v2988
  %v2991 = vmul.f32 %v2983, %v2989
  %v2992 = vmul.f32 %v2984, %v2989
  %v2994 = vlaneseq
  %v2995 = vshrl.u32 %v2994, 7
  %v2996 = vsub.s32 0, %v2995
  %v2997 = vrot.slane %v2962, %v2996
  %v2999 = vadd.f32 %v2991, %v2997
  %v3000 = vadd.f32 %v2992, %v2997
  %v3001 = vld [vmem:[%s15] sm:$0x3]
  %v3003 = vsel %vm510, %v3001, 0
  %3005 = vmatprep.subr.mxu0 0.0
  %3006 = vmatpush1.msra.mxu0 %v2999
  %3007 = vmatprep.subr.mxu0 0.0
  %3008 = vmatpush1.msra.mxu0 %v3000
  %3009 = vmatprep.subr.mxu0 0.0
  %3010 = vmatpush1.msra.mxu0 0.0
  %3011 = vmatprep.subr.mxu0 0.0
  %3012 = vmatpush1.msra.mxu0 0.0
  %3013 = vmatprep.subr.mxu0 0.0
  %3014 = vmatpush1.msra.mxu0 0.0
  %3015 = vmatprep.subr.mxu0 0.0
  %3016 = vmatpush1.msra.mxu0 0.0
  %3017 = vmatprep.subr.mxu0 0.0
  %3018 = vmatpush1.msra.mxu0 0.0
  %3019 = vmatprep.subr.mxu0 0.0
  %3020 = vmatpush1.msra.mxu0 0.0
  %3021 = vmatprep.subr.mxu0 0.0
  %3022 = vmatpush1.msra.mxu0 0.0
  %3023 = vmatprep.subr.mxu0 0.0
  %3024 = vmatpush1.msra.mxu0 0.0
  %3025 = vmatprep.subr.mxu0 0.0
  %3026 = vmatpush1.msra.mxu0 0.0
  %3027 = vmatprep.subr.mxu0 0.0
  %3028 = vmatpush1.msra.mxu0 0.0
  %3029 = vmatprep.subr.mxu0 0.0
  %3030 = vmatpush1.msra.mxu0 0.0
  %3031 = vmatprep.subr.mxu0 0.0
  %3032 = vmatpush1.msra.mxu0 0.0
  %3033 = vmatprep.subr.mxu0 0.0
  %3034 = vmatpush1.msra.mxu0 0.0
  %3035 = vmatprep.subr.mxu0 0.0
  %3036 = vmatpush1.msra.mxu0 0.0
  %3037 = vmatprep.subr.mxu0 0.0
  %3038 = vmatpush1.msra.mxu0 0.0
  %3039 = vmatprep.subr.mxu0 0.0
  %3040 = vmatpush1.msra.mxu0 0.0
  %3041 = vmatprep.subr.mxu0 0.0
  %3042 = vmatpush1.msra.mxu0 0.0
  %3043 = vmatprep.subr.mxu0 0.0
  %3044 = vmatpush1.msra.mxu0 0.0
  %3045 = vmatprep.subr.mxu0 0.0
  %3046 = vmatpush1.msra.mxu0 0.0
  %3047 = vmatprep.subr.mxu0 0.0
  %3048 = vmatpush1.msra.mxu0 0.0
  %3049 = vmatprep.subr.mxu0 0.0
  %3050 = vmatpush1.msra.mxu0 0.0
  %3051 = vmatprep.subr.mxu0 0.0
  %3052 = vmatpush1.msra.mxu0 0.0
  %3053 = vmatprep.subr.mxu0 0.0
  %3054 = vmatpush1.msra.mxu0 0.0
  %3055 = vmatprep.subr.mxu0 0.0
  %3056 = vmatpush1.msra.mxu0 0.0
  %3057 = vmatprep.subr.mxu0 0.0
  %3058 = vmatpush1.msra.mxu0 0.0
  %3059 = vmatprep.subr.mxu0 0.0
  %3060 = vmatpush1.msra.mxu0 0.0
  %3061 = vmatprep.subr.mxu0 0.0
  %3062 = vmatpush1.msra.mxu0 0.0
  %3063 = vmatprep.subr.mxu0 0.0
  %3064 = vmatpush1.msra.mxu0 0.0
  %3065 = vmatprep.subr.mxu0 0.0
  %3066 = vmatpush1.msra.mxu0 0.0
  %3067 = vmatprep.subr.mxu0 0.0
  %3068 = vmatpush1.msra.mxu0 0.0
  %3069 = vmatprep.mubr.f32.mxu0 0.0
  %3070 = vmatmul.mubr.f32.gmra.mrb[0].mxu0 %v3003
  %v3071 = vpop.f32.mrb[0].mxu0
  %v3072 = vadd.f32 0.0, %v3071
  %v3073 = vpop.f32.mrb[0].mxu0
  %3074 = vdwg.mxu0
  %v3075 = vld [vmem:[%s16] sm:$0xff]
  %v3076 = vld [vmem:[%s16 + $0x8] sm:$0xff]
  %v3077 = vld [vmem:[%s16 + $0x10] sm:$0xff]
  %v3078 = vld [vmem:[%s16 + $0x18] sm:$0xff]
  %v3079 = vld [vmem:[%s16 + $0x20] sm:$0xff]
  %v3080 = vld [vmem:[%s16 + $0x28] sm:$0xff]
  %v3081 = vld [vmem:[%s16 + $0x30] sm:$0xff]
  %v3082 = vld [vmem:[%s16 + $0x38] sm:$0xff]
  %v3083 = vld [vmem:[%s16 + $0x40] sm:$0xff]
  %v3084 = vld [vmem:[%s16 + $0x48] sm:$0xff]
  %v3085 = vld [vmem:[%s16 + $0x50] sm:$0xff]
  %v3086 = vld [vmem:[%s16 + $0x58] sm:$0xff]
  %v3087 = vld [vmem:[%s16 + $0x60] sm:$0xff]
  %v3088 = vld [vmem:[%s16 + $0x68] sm:$0xff]
  %v3089 = vld [vmem:[%s16 + $0x70] sm:$0xff]
  %v3090 = vld [vmem:[%s16 + $0x78] sm:$0xff]
  %v3091 = vpack.c.bf16 %v3072, %v3072
  %v3092 = vpack.c.bf16 %v3076, %v3075
  %v3093 = vpack.c.bf16 %v3078, %v3077
  %v3094 = vpack.c.bf16 %v3080, %v3079
  %v3095 = vpack.c.bf16 %v3082, %v3081
  %v3096 = vpack.c.bf16 %v3084, %v3083
  %v3097 = vpack.c.bf16 %v3086, %v3085
  %v3098 = vpack.c.bf16 %v3088, %v3087
  %v3099 = vpack.c.bf16 %v3090, %v3089
  %3100 = vmatprep.subr.bf16.mxu0 0
  %3101 = vmatpush1.bf16.msra.mxu0 %v3092
  %3102 = vmatprep.subr.bf16.mxu0 0
  %3103 = vmatpush1.bf16.msra.mxu0 %v3093
  %3104 = vmatprep.subr.bf16.mxu0 0
  %3105 = vmatpush1.bf16.msra.mxu0 %v3094
  %3106 = vmatprep.subr.bf16.mxu0 0
  %3107 = vmatpush1.bf16.msra.mxu0 %v3095
  %3108 = vmatprep.subr.bf16.mxu0 0
  %3109 = vmatpush1.bf16.msra.mxu0 %v3096
  %3110 = vmatprep.subr.bf16.mxu0 0
  %3111 = vmatpush1.bf16.msra.mxu0 %v3097
  %3112 = vmatprep.subr.bf16.mxu0 0
  %3113 = vmatpush1.bf16.msra.mxu0 %v3098
  %3114 = vmatprep.subr.bf16.mxu0 0
  %3115 = vmatpush1.bf16.msra.mxu0 %v3099
  %3116 = vmatprep.subr.bf16.mxu0 0
  %3117 = vmatpush1.bf16.msra.mxu0 0
  %3118 = vmatprep.subr.bf16.mxu0 0
  %3119 = vmatpush1.bf16.msra.mxu0 0
  %3120 = vmatprep.subr.bf16.mxu0 0
  %3121 = vmatpush1.bf16.msra.mxu0 0
  %3122 = vmatprep.subr.bf16.mxu0 0
  %3123 = vmatpush1.bf16.msra.mxu0 0
  %3124 = vmatprep.subr.bf16.mxu0 0
  %3125 = vmatpush1.bf16.msra.mxu0 0
  %3126 = vmatprep.subr.bf16.mxu0 0
  %3127 = vmatpush1.bf16.msra.mxu0 0
  %3128 = vmatprep.subr.bf16.mxu0 0
  %3129 = vmatpush1.bf16.msra.mxu0 0
  %3130 = vmatprep.subr.bf16.mxu0 0
  %3131 = vmatpush1.bf16.msra.mxu0 0
  %3132 = vmatprep.mubr.bf16.mxu0 0
  %3133 = vmatmul.mubr.bf16.gmra.mrb[0].mxu0 %v3091
  %v3134 = vpop.f32.mrb[0].mxu0
  %v3135 = vadd.f32 0.0, %v3134
  %v3136 = vpop.f32.mrb[0].mxu0
  %v3137 = vpop.f32.mrb[0].mxu0
  %v3138 = vpop.f32.mrb[0].mxu0
  %3139 = vdwg.mxu0
  %3140 = vst [vmem:[%s17] sm:$0x3] %v3135
  // Predicated region
  $region70: #{hpsv2_forward.4} parent=0 // pred_check
    _
  $region71: #{hpsv2_forward.4} parent=0 // pred_check_branch
    %3142 = sbr.rel (0) target = $region73
  $region72: #{hpsv2_forward.4} parent=0 // pred_region
    _
  $region73: #{hpsv2_forward.4} parent=0 // pred_fallthru
    _
  // Predicated region
  $region74: #{hpsv2_forward.4} parent=0 // pred_check
    _
  $region75: #{hpsv2_forward.4} parent=0 // pred_check_branch
    %3144 = sbr.rel (0) target = $region77
  $region76: #{hpsv2_forward.4} parent=0 // pred_region
    _
  $region77: #{hpsv2_forward.4} parent=0 // pred_fallthru
    _

// kernel: hpsv2_forward.3
$region0: #{hpsv2_forward.3}
  #allocation0 [shape = 'u32[]', space=smem, size = 0x4, offset = 0x4, fixed_abs, tag = 'smem constant byte address 0x4 - core index']
  #allocation1 [shape = 'u32[144,128]{1,0:T(1,128)}', space=vmem, size = 0x12000, scoped, tag = 'internal scratch']
  %s0 = inlined_call_operand.vmem [shape: f32[10,768], index: 0, kind: input, shape index: {}]
  %s1 = inlined_call_operand.hbm [shape: f32[768,128], index: 1, kind: input, shape index: {}]
  %s2 = inlined_call_operand.vmem [shape: f32[10,128], index: 2, kind: input, shape index: {}]
  %s3 = inlined_call_operand.vmem [shape: f32[1,128], index: 3, kind: input, shape index: {}]
  %s4 = inlined_call_operand.hbm [shape: f32[1,128], index: 4, kind: input, shape index: {}]
  %s5 = inlined_call_operand.vmem [shape: f32[2,1,128], index: 5, kind: input, shape index: {}]
  %s6 = inlined_call_operand.vmem [shape: f32[2,1,128], index: 6, kind: input, shape index: {}]
  %s7 = inlined_call_operand.hbm [shape: f32[2,128,384], index: 7, kind: input, shape index: {}]
  %s8 = inlined_call_operand.vmem [shape: f32[2,1,384], index: 8, kind: input, shape index: {}]
  %s9 = inlined_call_operand.hbm [shape: f32[2,128,128], index: 9, kind: input, shape index: {}]
  %s10 = inlined_call_operand.vmem [shape: f32[2,1,128], index: 10, kind: input, shape index: {}]
  %s11 = inlined_call_operand.vmem [shape: f32[2,1,128], index: 11, kind: input, shape index: {}]
  %s12 = inlined_call_operand.vmem [shape: f32[2,1,128], index: 12, kind: input, shape index: {}]
  %s13 = inlined_call_operand.vmem [shape: f32[2,128,512], index: 13, kind: input, shape index: {}]
  %s14 = inlined_call_operand.vmem [shape: f32[2,1,512], index: 14, kind: input, shape index: {}]
  %s15 = inlined_call_operand.vmem [shape: f32[2,512,128], index: 15, kind: input, shape index: {}]
  %s16 = inlined_call_operand.vmem [shape: f32[2,1,128], index: 16, kind: input, shape index: {}]
  %s17 = inlined_call_operand.hbm [shape: f32[1,128], index: 17, kind: input, shape index: {}]
  %s18 = inlined_call_operand.hbm [shape: f32[1,128], index: 18, kind: input, shape index: {}]
  %s19 = inlined_call_operand.vmem [shape: f32[128,128], index: 19, kind: input, shape index: {}]
  %s20 = inlined_call_operand.vmem [shape: f32[2,128], index: 20, kind: output, shape index: {}]
  %s21 = sld [smem:[#allocation0]]
  $region114: #{hpsv2_forward.3} parent=0
    _
  %s23 = ssub.s32 1, %s21
  %s24 = scalar_select 0, %s23, %s21
  $region1: #{hpsv2_forward.3} parent=0
    #allocation2 [shape = 'u8[393216]{0}', space=vmem, size = 0x60000, scoped, tag = 'input window, operand 1, single buffered']
    #allocation3 [shape = 's32[1]{0}', space=sflag, size = 0x4, scoped, tag = 'scoped memory for hpsv2_forward.3']
    #allocation4 [shape = 'u8[512]{0}', space=vmem, size = 0x400, scoped, tag = 'input window, operand 4, single buffered']
    #allocation5 [shape = 's32[1]{0}', space=sflag, size = 0x4, scoped, tag = 'scoped memory for hpsv2_forward.3']
    #allocation6 [shape = 'u8[393216]{0}', space=vmem, size = 0x60000, scoped, tag = 'input window, operand 7, single buffered']
    #allocation7 [shape = 'u8[131072]{0}', space=vmem, size = 0x20000, scoped, tag = 'input window, operand 9, single buffered']
    #allocation8 [shape = 's32[1]{0}', space=sflag, size = 0x4, scoped, tag = 'scoped memory for hpsv2_forward.3']
    #allocation9 [shape = 'u8[512]{0}', space=vmem, size = 0x400, scoped, tag = 'input window, operand 17, single buffered']
    #allocation10 [shape = 'u8[512]{0}', space=vmem, size = 0x400, scoped, tag = 'input window, operand 18, single buffered']
    #allocation11 [shape = 's32[1]{0}', space=sflag, size = 0x4, scoped, tag = 'scoped memory for hpsv2_forward.3']
    %25 = vsyncpa [#allocation3], 0
    %26 = vsyncpa [#allocation5], 0
    %27 = vsyncpa [#allocation8], 0
    %28 = vsyncpa [#allocation11], 0
    // Predicated region
    $region2: #{hpsv2_forward.3} parent=1 // pred_check
      _
    $region3: #{hpsv2_forward.3} parent=1 // pred_check_branch
      %30 = sbr.rel (0) target = $region5
    $region4: #{hpsv2_forward.3} parent=1 // pred_region
      _
    $region5: #{hpsv2_forward.3} parent=1 // pred_fallthru
      _
    // Predicated region
    $region6: #{hpsv2_forward.3} parent=1 // pred_check
      _
    $region7: #{hpsv2_forward.3} parent=1 // pred_check_branch
      %32 = sbr.rel (0) target = $region9
    $region8: #{hpsv2_forward.3} parent=1 // pred_region
      %s34 = ssub.s32 12288, 12288
      %35 = vsyncadd [#allocation3], %s34
      %s36 = sshll.u32 [#allocation2], 4
      %s37 = int_to_ptr.vmem [resolvable:$true] %s36
      %42 = dma.hbm_to_vmem [thread:$0]  %s1, 12288, %s37, [#allocation3], 128, 128, 8
    $region9: #{hpsv2_forward.3} parent=1 // pred_fallthru
      _
    // Predicated region
    $region10: #{hpsv2_forward.3} parent=1 // pred_check
      _
    $region11: #{hpsv2_forward.3} parent=1 // pred_check_branch
      %44 = sbr.rel (0) target = $region13
    $region12: #{hpsv2_forward.3} parent=1 // pred_region
      _
    $region13: #{hpsv2_forward.3} parent=1 // pred_fallthru
      _
    // Predicated region
    $region14: #{hpsv2_forward.3} parent=1 // pred_check
      _
    $region15: #{hpsv2_forward.3} parent=1 // pred_check_branch
      %46 = sbr.rel (0) target = $region17
    $region16: #{hpsv2_forward.3} parent=1 // pred_region
      _
    $region17: #{hpsv2_forward.3} parent=1 // pred_fallthru
      _
    // Predicated region
    $region18: #{hpsv2_forward.3} parent=1 // pred_check
      _
    $region19: #{hpsv2_forward.3} parent=1 // pred_check_branch
      %48 = sbr.rel (0) target = $region21
    $region20: #{hpsv2_forward.3} parent=1 // pred_region
      %s50 = ssub.s32 16, 16
      %51 = vsyncadd [#allocation5], %s50
      %s53 = sshll.u32 [#allocation4], 4
      %s54 = int_to_ptr.vmem [resolvable:$true] %s53
      %56 = dma.hbm_to_vmem [thread:$0]  %s4, 16, %s54, [#allocation5]
    $region21: #{hpsv2_forward.3} parent=1 // pred_fallthru
      _
    // Predicated region
    $region22: #{hpsv2_forward.3} parent=1 // pred_check
      _
    $region23: #{hpsv2_forward.3} parent=1 // pred_check_branch
      %58 = sbr.rel (0) target = $region25
    $region24: #{hpsv2_forward.3} parent=1 // pred_region
      _
    $region25: #{hpsv2_forward.3} parent=1 // pred_fallthru
      _
    // Predicated region
    $region26: #{hpsv2_forward.3} parent=1 // pred_check
      _
    $region27: #{hpsv2_forward.3} parent=1 // pred_check_branch
      %60 = sbr.rel (0) target = $region29
    $region28: #{hpsv2_forward.3} parent=1 // pred_region
      _
    $region29: #{hpsv2_forward.3} parent=1 // pred_fallthru
      _
    // Predicated region
    $region30: #{hpsv2_forward.3} parent=1 // pred_check
      _
    $region31: #{hpsv2_forward.3} parent=1 // pred_check_branch
      %62 = sbr.rel (0) target = $region33
    $region32: #{hpsv2_forward.3} parent=1 // pred_region
      %s64 = ssub.s32 12288, 12288
      %65 = vsyncadd [#allocation5], %s64
      %s66 = sshll.u32 [#allocation6], 4
      %s67 = int_to_ptr.vmem [resolvable:$true] %s66
      %72 = dma.hbm_to_vmem [thread:$0]  %s7, 12288, %s67, [#allocation5], 384, 384, 24
    $region33: #{hpsv2_forward.3} parent=1 // pred_fallthru
      _
    // Predicated region
    $region34: #{hpsv2_forward.3} parent=1 // pred_check
      _
    $region35: #{hpsv2_forward.3} parent=1 // pred_check_branch
      %74 = sbr.rel (0) target = $region37
    $region36: #{hpsv2_forward.3} parent=1 // pred_region
      _
    $region37: #{hpsv2_forward.3} parent=1 // pred_fallthru
      _
    // Predicated region
    $region38: #{hpsv2_forward.3} parent=1 // pred_check
      _
    $region39: #{hpsv2_forward.3} parent=1 // pred_check_branch
      %76 = sbr.rel (0) target = $region41
    $region40: #{hpsv2_forward.3} parent=1 // pred_region
      %s78 = ssub.s32 4096, 4096
      %79 = vsyncadd [#allocation8], %s78
      %s80 = sshll.u32 [#allocation7], 4
      %s81 = int_to_ptr.vmem [resolvable:$true] %s80
      %86 = dma.hbm_to_vmem [thread:$0]  %s9, 4096, %s81, [#allocation8], 128, 128, 8
    $region41: #{hpsv2_forward.3} parent=1 // pred_fallthru
      _
    // Predicated region
    $region42: #{hpsv2_forward.3} parent=1 // pred_check
      _
    $region43: #{hpsv2_forward.3} parent=1 // pred_check_branch
      %88 = sbr.rel (0) target = $region45
    $region44: #{hpsv2_forward.3} parent=1 // pred_region
      _
    $region45: #{hpsv2_forward.3} parent=1 // pred_fallthru
      _
    // Predicated region
    $region46: #{hpsv2_forward.3} parent=1 // pred_check
      _
    $region47: #{hpsv2_forward.3} parent=1 // pred_check_branch
      %90 = sbr.rel (0) target = $region49
    $region48: #{hpsv2_forward.3} parent=1 // pred_region
      _
    $region49: #{hpsv2_forward.3} parent=1 // pred_fallthru
      _
    // Predicated region
    $region50: #{hpsv2_forward.3} parent=1 // pred_check
      _
    $region51: #{hpsv2_forward.3} parent=1 // pred_check_branch
      %92 = sbr.rel (0) target = $region53
    $region52: #{hpsv2_forward.3} parent=1 // pred_region
      _
    $region53: #{hpsv2_forward.3} parent=1 // pred_fallthru
      _
    // Predicated region
    $region54: #{hpsv2_forward.3} parent=1 // pred_check
      _
    $region55: #{hpsv2_forward.3} parent=1 // pred_check_branch
      %94 = sbr.rel (0) target = $region57
    $region56: #{hpsv2_forward.3} parent=1 // pred_region
      _
    $region57: #{hpsv2_forward.3} parent=1 // pred_fallthru
      _
    // Predicated region
    $region58: #{hpsv2_forward.3} parent=1 // pred_check
      _
    $region59: #{hpsv2_forward.3} parent=1 // pred_check_branch
      %96 = sbr.rel (0) target = $region61
    $region60: #{hpsv2_forward.3} parent=1 // pred_region
      _
    $region61: #{hpsv2_forward.3} parent=1 // pred_fallthru
      _
    // Predicated region
    $region62: #{hpsv2_forward.3} parent=1 // pred_check
      _
    $region63: #{hpsv2_forward.3} parent=1 // pred_check_branch
      %98 = sbr.rel (0) target = $region65
    $region64: #{hpsv2_forward.3} parent=1 // pred_region
      _
    $region65: #{hpsv2_forward.3} parent=1 // pred_fallthru
      _
    // Predicated region
    $region66: #{hpsv2_forward.3} parent=1 // pred_check
      _
    $region67: #{hpsv2_forward.3} parent=1 // pred_check_branch
      %100 = sbr.rel (0) target = $region69
    $region68: #{hpsv2_forward.3} parent=1 // pred_region
      _
    $region69: #{hpsv2_forward.3} parent=1 // pred_fallthru
      _
    // Predicated region
    $region70: #{hpsv2_forward.3} parent=1 // pred_check
      _
    $region71: #{hpsv2_forward.3} parent=1 // pred_check_branch
      %102 = sbr.rel (0) target = $region73
    $region72: #{hpsv2_forward.3} parent=1 // pred_region
      %s104 = ssub.s32 16, 16
      %105 = vsyncadd [#allocation8], %s104
      %s107 = sshll.u32 [#allocation9], 4
      %s108 = int_to_ptr.vmem [resolvable:$true] %s107
      %110 = dma.hbm_to_vmem [thread:$0]  %s17, 16, %s108, [#allocation8]
    $region73: #{hpsv2_forward.3} parent=1 // pred_fallthru
      _
    // Predicated region
    $region74: #{hpsv2_forward.3} parent=1 // pred_check
      _
    $region75: #{hpsv2_forward.3} parent=1 // pred_check_branch
      %112 = sbr.rel (0) target = $region77
    $region76: #{hpsv2_forward.3} parent=1 // pred_region
      %s114 = ssub.s32 16, 16
      %115 = vsyncadd [#allocation11], %s114
      %s117 = sshll.u32 [#allocation10], 4
      %s118 = int_to_ptr.vmem [resolvable:$true] %s117
      %120 = dma.hbm_to_vmem [thread:$0]  %s18, 16, %s118, [#allocation11]
    $region77: #{hpsv2_forward.3} parent=1 // pred_fallthru
      _
    // Predicated region
    $region78: #{hpsv2_forward.3} parent=1 // pred_check
      _
    $region79: #{hpsv2_forward.3} parent=1 // pred_check_branch
      %122 = sbr.rel (0) target = $region81
    $region80: #{hpsv2_forward.3} parent=1 // pred_region
      _
    $region81: #{hpsv2_forward.3} parent=1 // pred_fallthru
      _
    // Predicated region
    $region82: #{hpsv2_forward.3} parent=1 // pred_check
      _
    $region83: #{hpsv2_forward.3} parent=1 // pred_check_branch
      %124 = sbr.rel (0) target = $region85
    $region84: #{hpsv2_forward.3} parent=1 // pred_region
      %125 = dma.done [#allocation3], 12288
    $region85: #{hpsv2_forward.3} parent=1 // pred_fallthru
      _
    // Predicated region
    $region86: #{hpsv2_forward.3} parent=1 // pred_check
      _
    $region87: #{hpsv2_forward.3} parent=1 // pred_check_branch
      %127 = sbr.rel (0) target = $region89
    $region88: #{hpsv2_forward.3} parent=1 // pred_region
      %128 = dma.done [#allocation5], 16
    $region89: #{hpsv2_forward.3} parent=1 // pred_fallthru
      _
    // Predicated region
    $region90: #{hpsv2_forward.3} parent=1 // pred_check
      _
    $region91: #{hpsv2_forward.3} parent=1 // pred_check_branch
      %130 = sbr.rel (0) target = $region93
    $region92: #{hpsv2_forward.3} parent=1 // pred_region
      %131 = dma.done [#allocation5], 12288
    $region93: #{hpsv2_forward.3} parent=1 // pred_fallthru
      _
    // Predicated region
    $region94: #{hpsv2_forward.3} parent=1 // pred_check
      _
    $region95: #{hpsv2_forward.3} parent=1 // pred_check_branch
      %133 = sbr.rel (0) target = $region97
    $region96: #{hpsv2_forward.3} parent=1 // pred_region
      %134 = dma.done [#allocation8], 4096
    $region97: #{hpsv2_forward.3} parent=1 // pred_fallthru
      _
    // Predicated region
    $region98: #{hpsv2_forward.3} parent=1 // pred_check
      _
    $region99: #{hpsv2_forward.3} parent=1 // pred_check_branch
      %136 = sbr.rel (0) target = $region101
    $region100: #{hpsv2_forward.3} parent=1 // pred_region
      %137 = dma.done [#allocation8], 16
    $region101: #{hpsv2_forward.3} parent=1 // pred_fallthru
      _
    // Predicated region
    $region102: #{hpsv2_forward.3} parent=1 // pred_check
      _
    $region103: #{hpsv2_forward.3} parent=1 // pred_check_branch
      %139 = sbr.rel (0) target = $region105
    $region104: #{hpsv2_forward.3} parent=1 // pred_region
      %140 = dma.done [#allocation11], 16
    $region105: #{hpsv2_forward.3} parent=1 // pred_fallthru
      _
    %v142 = vld [vmem:[%s0] sm:$0xff]
    %v143 = vld [vmem:[%s0 + $0x8] sm:$0xff]
    %v144 = vld [vmem:[%s0 + $0x10] sm:$0xff]
    %v145 = vld [vmem:[%s0 + $0x18] sm:$0xff]
    %v146 = vld [vmem:[%s0 + $0x20] sm:$0xff]
    %v147 = vld [vmem:[%s0 + $0x28] sm:$0xff]
    %v148 = vld [vmem:[%s0 + $0x30] sm:$0x3]
    %v149 = vld [vmem:[%s0 + $0x38] sm:$0x3]
    %v150 = vld [vmem:[%s0 + $0x40] sm:$0x3]
    %v151 = vld [vmem:[%s0 + $0x48] sm:$0x3]
    %v152 = vld [vmem:[%s0 + $0x50] sm:$0x3]
    %v153 = vld [vmem:[%s0 + $0x58] sm:$0x3]
    %v154 = vld [vmem:[#allocation2] sm:$0xff]
    %v155 = vld [vmem:[#allocation2 + $0x8] sm:$0xff]
    %v156 = vld [vmem:[#allocation2 + $0x10] sm:$0xff]
    %v157 = vld [vmem:[#allocation2 + $0x18] sm:$0xff]
    %v158 = vld [vmem:[#allocation2 + $0x20] sm:$0xff]
    %v159 = vld [vmem:[#allocation2 + $0x28] sm:$0xff]
    %v160 = vld [vmem:[#allocation2 + $0x30] sm:$0xff]
    %v161 = vld [vmem:[#allocation2 + $0x38] sm:$0xff]
    %v162 = vld [vmem:[#allocation2 + $0x40] sm:$0xff]
    %v163 = vld [vmem:[#allocation2 + $0x48] sm:$0xff]
    %v164 = vld [vmem:[#allocation2 + $0x50] sm:$0xff]
    %v165 = vld [vmem:[#allocation2 + $0x58] sm:$0xff]
    %v166 = vld [vmem:[#allocation2 + $0x60] sm:$0xff]
    %v167 = vld [vmem:[#allocation2 + $0x68] sm:$0xff]
    %v168 = vld [vmem:[#allocation2 + $0x70] sm:$0xff]
    %v169 = vld [vmem:[#allocation2 + $0x78] sm:$0xff]
    %v170 = vld [vmem:[#allocation2 + $0x80] sm:$0xff]
    %v171 = vld [vmem:[#allocation2 + $0x88] sm:$0xff]
    %v172 = vld [vmem:[#allocation2 + $0x90] sm:$0xff]
    %v173 = vld [vmem:[#allocation2 + $0x98] sm:$0xff]
    %v174 = vld [vmem:[#allocation2 + $0xa0] sm:$0xff]
    %v175 = vld [vmem:[#allocation2 + $0xa8] sm:$0xff]
    %v176 = vld [vmem:[#allocation2 + $0xb0] sm:$0xff]
    %v177 = vld [vmem:[#allocation2 + $0xb8] sm:$0xff]
    %v178 = vld [vmem:[#allocation2 + $0xc0] sm:$0xff]
    %v179 = vld [vmem:[#allocation2 + $0xc8] sm:$0xff]
    %v180 = vld [vmem:[#allocation2 + $0xd0] sm:$0xff]
    %v181 = vld [vmem:[#allocation2 + $0xd8] sm:$0xff]
    %v182 = vld [vmem:[#allocation2 + $0xe0] sm:$0xff]
    %v183 = vld [vmem:[#allocation2 + $0xe8] sm:$0xff]
    %v184 = vld [vmem:[#allocation2 + $0xf0] sm:$0xff]
    %v185 = vld [vmem:[#allocation2 + $0xf8] sm:$0xff]
    %v186 = vld [vmem:[#allocation2 + $0x100] sm:$0xff]
    %v187 = vld [vmem:[#allocation2 + $0x108] sm:$0xff]
    %v188 = vld [vmem:[#allocation2 + $0x110] sm:$0xff]
    %v189 = vld [vmem:[#allocation2 + $0x118] sm:$0xff]
    %v190 = vld [vmem:[#allocation2 + $0x120] sm:$0xff]
    %v191 = vld [vmem:[#allocation2 + $0x128] sm:$0xff]
    %v192 = vld [vmem:[#allocation2 + $0x130] sm:$0xff]
    %v193 = vld [vmem:[#allocation2 + $0x138] sm:$0xff]
    %v194 = vld [vmem:[#allocation2 + $0x140] sm:$0xff]
    %v195 = vld [vmem:[#allocation2 + $0x148] sm:$0xff]
    %v196 = vld [vmem:[#allocation2 + $0x150] sm:$0xff]
    %v197 = vld [vmem:[#allocation2 + $0x158] sm:$0xff]
    %v198 = vld [vmem:[#allocation2 + $0x160] sm:$0xff]
    %v199 = vld [vmem:[#allocation2 + $0x168] sm:$0xff]
    %v200 = vld [vmem:[#allocation2 + $0x170] sm:$0xff]
    %v201 = vld [vmem:[#allocation2 + $0x178] sm:$0xff]
    %v202 = vld [vmem:[#allocation2 + $0x180] sm:$0xff]
    %v203 = vld [vmem:[#allocation2 + $0x188] sm:$0xff]
    %v204 = vld [vmem:[#allocation2 + $0x190] sm:$0xff]
    %v205 = vld [vmem:[#allocation2 + $0x198] sm:$0xff]
    %v206 = vld [vmem:[#allocation2 + $0x1a0] sm:$0xff]
    %v207 = vld [vmem:[#allocation2 + $0x1a8] sm:$0xff]
    %v208 = vld [vmem:[#allocation2 + $0x1b0] sm:$0xff]
    %v209 = vld [vmem:[#allocation2 + $0x1b8] sm:$0xff]
    %v210 = vld [vmem:[#allocation2 + $0x1c0] sm:$0xff]
    %v211 = vld [vmem:[#allocation2 + $0x1c8] sm:$0xff]
    %v212 = vld [vmem:[#allocation2 + $0x1d0] sm:$0xff]
    %v213 = vld [vmem:[#allocation2 + $0x1d8] sm:$0xff]
    %v214 = vld [vmem:[#allocation2 + $0x1e0] sm:$0xff]
    %v215 = vld [vmem:[#allocation2 + $0x1e8] sm:$0xff]
    %v216 = vld [vmem:[#allocation2 + $0x1f0] sm:$0xff]
    %v217 = vld [vmem:[#allocation2 + $0x1f8] sm:$0xff]
    %v218 = vld [vmem:[#allocation2 + $0x200] sm:$0xff]
    %v219 = vld [vmem:[#allocation2 + $0x208] sm:$0xff]
    %v220 = vld [vmem:[#allocation2 + $0x210] sm:$0xff]
    %v221 = vld [vmem:[#allocation2 + $0x218] sm:$0xff]
    %v222 = vld [vmem:[#allocation2 + $0x220] sm:$0xff]
    %v223 = vld [vmem:[#allocation2 + $0x228] sm:$0xff]
    %v224 = vld [vmem:[#allocation2 + $0x230] sm:$0xff]
    %v225 = vld [vmem:[#allocation2 + $0x238] sm:$0xff]
    %v226 = vld [vmem:[#allocation2 + $0x240] sm:$0xff]
    %v227 = vld [vmem:[#allocation2 + $0x248] sm:$0xff]
    %v228 = vld [vmem:[#allocation2 + $0x250] sm:$0xff]
    %v229 = vld [vmem:[#allocation2 + $0x258] sm:$0xff]
    %v230 = vld [vmem:[#allocation2 + $0x260] sm:$0xff]
    %v231 = vld [vmem:[#allocation2 + $0x268] sm:$0xff]
    %v232 = vld [vmem:[#allocation2 + $0x270] sm:$0xff]
    %v233 = vld [vmem:[#allocation2 + $0x278] sm:$0xff]
    %v234 = vld [vmem:[#allocation2 + $0x280] sm:$0xff]
    %v235 = vld [vmem:[#allocation2 + $0x288] sm:$0xff]
    %v236 = vld [vmem:[#allocation2 + $0x290] sm:$0xff]
    %v237 = vld [vmem:[#allocation2 + $0x298] sm:$0xff]
    %v238 = vld [vmem:[#allocation2 + $0x2a0] sm:$0xff]
    %v239 = vld [vmem:[#allocation2 + $0x2a8] sm:$0xff]
    %v240 = vld [vmem:[#allocation2 + $0x2b0] sm:$0xff]
    %v241 = vld [vmem:[#allocation2 + $0x2b8] sm:$0xff]
    %v242 = vld [vmem:[#allocation2 + $0x2c0] sm:$0xff]
    %v243 = vld [vmem:[#allocation2 + $0x2c8] sm:$0xff]
    %v244 = vld [vmem:[#allocation2 + $0x2d0] sm:$0xff]
    %v245 = vld [vmem:[#allocation2 + $0x2d8] sm:$0xff]
    %v246 = vld [vmem:[#allocation2 + $0x2e0] sm:$0xff]
    %v247 = vld [vmem:[#allocation2 + $0x2e8] sm:$0xff]
    %v248 = vld [vmem:[#allocation2 + $0x2f0] sm:$0xff]
    %v249 = vld [vmem:[#allocation2 + $0x2f8] sm:$0xff]
    %v250 = vpack.c.bf16 %v148, %v142
    %v251 = vpack.c.bf16 %v149, %v143
    %v252 = vpack.c.bf16 %v150, %v144
    %v253 = vpack.c.bf16 %v151, %v145
    %v254 = vpack.c.bf16 %v152, %v146
    %v255 = vpack.c.bf16 %v153, %v147
    %v256 = vpack.c.bf16 %v155, %v154
    %v257 = vpack.c.bf16 %v157, %v156
    %v258 = vpack.c.bf16 %v159, %v158
    %v259 = vpack.c.bf16 %v161, %v160
    %v260 = vpack.c.bf16 %v163, %v162
    %v261 = vpack.c.bf16 %v165, %v164
    %v262 = vpack.c.bf16 %v167, %v166
    %v263 = vpack.c.bf16 %v169, %v168
    %v264 = vpack.c.bf16 %v171, %v170
    %v265 = vpack.c.bf16 %v173, %v172
    %v266 = vpack.c.bf16 %v175, %v174
    %v267 = vpack.c.bf16 %v177, %v176
    %v268 = vpack.c.bf16 %v179, %v178
    %v269 = vpack.c.bf16 %v181, %v180
    %v270 = vpack.c.bf16 %v183, %v182
    %v271 = vpack.c.bf16 %v185, %v184
    %v272 = vpack.c.bf16 %v187, %v186
    %v273 = vpack.c.bf16 %v189, %v188
    %v274 = vpack.c.bf16 %v191, %v190
    %v275 = vpack.c.bf16 %v193, %v192
    %v276 = vpack.c.bf16 %v195, %v194
    %v277 = vpack.c.bf16 %v197, %v196
    %v278 = vpack.c.bf16 %v199, %v198
    %v279 = vpack.c.bf16 %v201, %v200
    %v280 = vpack.c.bf16 %v203, %v202
    %v281 = vpack.c.bf16 %v205, %v204
    %v282 = vpack.c.bf16 %v207, %v206
    %v283 = vpack.c.bf16 %v209, %v208
    %v284 = vpack.c.bf16 %v211, %v210
    %v285 = vpack.c.bf16 %v213, %v212
    %v286 = vpack.c.bf16 %v215, %v214
    %v287 = vpack.c.bf16 %v217, %v216
    %v288 = vpack.c.bf16 %v219, %v218
    %v289 = vpack.c.bf16 %v221, %v220
    %v290 = vpack.c.bf16 %v223, %v222
    %v291 = vpack.c.bf16 %v225, %v224
    %v292 = vpack.c.bf16 %v227, %v226
    %v293 = vpack.c.bf16 %v229, %v228
    %v294 = vpack.c.bf16 %v231, %v230
    %v295 = vpack.c.bf16 %v233, %v232
    %v296 = vpack.c.bf16 %v235, %v234
    %v297 = vpack.c.bf16 %v237, %v236
    %v298 = vpack.c.bf16 %v239, %v238
    %v299 = vpack.c.bf16 %v241, %v240
    %v300 = vpack.c.bf16 %v243, %v242
    %v301 = vpack.c.bf16 %v245, %v244
    %v302 = vpack.c.bf16 %v247, %v246
    %v303 = vpack.c.bf16 %v249, %v248
    %v304 = vld [vmem:[%s2] sm:$0xff]
    %v305 = vld [vmem:[%s2 + $0x8] sm:$0x3]
    %306 = vmatprep.subr.bf16.mxu0 0
    %307 = vmatpush1.bf16.msra.mxu0 %v256
    %308 = vmatprep.subr.bf16.mxu0 0
    %309 = vmatpush1.bf16.msra.mxu0 %v257
    %310 = vmatprep.subr.bf16.mxu0 0
    %311 = vmatpush1.bf16.msra.mxu0 %v258
    %312 = vmatprep.subr.bf16.mxu0 0
    %313 = vmatpush1.bf16.msra.mxu0 %v259
    %314 = vmatprep.subr.bf16.mxu0 0
    %315 = vmatpush1.bf16.msra.mxu0 %v260
    %316 = vmatprep.subr.bf16.mxu0 0
    %317 = vmatpush1.bf16.msra.mxu0 %v261
    %318 = vmatprep.subr.bf16.mxu0 0
    %319 = vmatpush1.bf16.msra.mxu0 %v262
    %320 = vmatprep.subr.bf16.mxu0 0
    %321 = vmatpush1.bf16.msra.mxu0 %v263
    %322 = vmatprep.subr.bf16.mxu0 0
    %323 = vmatpush1.bf16.msra.mxu0 %v264
    %324 = vmatprep.subr.bf16.mxu0 0
    %325 = vmatpush1.bf16.msra.mxu0 %v265
    %326 = vmatprep.subr.bf16.mxu0 0
    %327 = vmatpush1.bf16.msra.mxu0 %v266
    %328 = vmatprep.subr.bf16.mxu0 0
    %329 = vmatpush1.bf16.msra.mxu0 %v267
    %330 = vmatprep.subr.bf16.mxu0 0
    %331 = vmatpush1.bf16.msra.mxu0 %v268
    %332 = vmatprep.subr.bf16.mxu0 0
    %333 = vmatpush1.bf16.msra.mxu0 %v269
    %334 = vmatprep.subr.bf16.mxu0 0
    %335 = vmatpush1.bf16.msra.mxu0 %v270
    %336 = vmatprep.subr.bf16.mxu0 0
    %337 = vmatpush1.bf16.msra.mxu0 %v271
    %338 = vmatprep.mubr.bf16.mxu0 %v251
    %339 = vmatmul.mubr.bf16.gmra.mrb[0].mxu0 %v250
    %v340 = vpop.f32.mrb[0].mxu0
    %v341 = vadd.f32 %v304, %v340
    %v342 = vpop.f32.mrb[0].mxu0
    %v343 = vpop.f32.mrb[0].mxu0
    %v344 = vadd.f32 %v305, %v343
    %v345 = vpop.f32.mrb[0].mxu0
    %346 = vdwg.mxu0
    %347 = vmatprep.subr.bf16.mxu0 0
    %348 = vmatpush1.bf16.msra.mxu0 %v272
    %349 = vmatprep.subr.bf16.mxu0 0
    %350 = vmatpush1.bf16.msra.mxu0 %v273
    %351 = vmatprep.subr.bf16.mxu0 0
    %352 = vmatpush1.bf16.msra.mxu0 %v274
    %353 = vmatprep.subr.bf16.mxu0 0
    %354 = vmatpush1.bf16.msra.mxu0 %v275
    %355 = vmatprep.subr.bf16.mxu0 0
    %356 = vmatpush1.bf16.msra.mxu0 %v276
    %357 = vmatprep.subr.bf16.mxu0 0
    %358 = vmatpush1.bf16.msra.mxu0 %v277
    %359 = vmatprep.subr.bf16.mxu0 0
    %360 = vmatpush1.bf16.msra.mxu0 %v278
    %361 = vmatprep.subr.bf16.mxu0 0
    %362 = vmatpush1.bf16.msra.mxu0 %v279
    %363 = vmatprep.subr.bf16.mxu0 0
    %364 = vmatpush1.bf16.msra.mxu0 %v280
    %365 = vmatprep.subr.bf16.mxu0 0
    %366 = vmatpush1.bf16.msra.mxu0 %v281
    %367 = vmatprep.subr.bf16.mxu0 0
    %368 = vmatpush1.bf16.msra.mxu0 %v282
    %369 = vmatprep.subr.bf16.mxu0 0
    %370 = vmatpush1.bf16.msra.mxu0 %v283
    %371 = vmatprep.subr.bf16.mxu0 0
    %372 = vmatpush1.bf16.msra.mxu0 %v284
    %373 = vmatprep.subr.bf16.mxu0 0
    %374 = vmatpush1.bf16.msra.mxu0 %v285
    %375 = vmatprep.subr.bf16.mxu0 0
    %376 = vmatpush1.bf16.msra.mxu0 %v286
    %377 = vmatprep.subr.bf16.mxu0 0
    %378 = vmatpush1.bf16.msra.mxu0 %v287
    %379 = vmatprep.mubr.bf16.mxu0 %v253
    %380 = vmatmul.mubr.bf16.gmra.mrb[0].mxu0 %v252
    %v381 = vpop.f32.mrb[0].mxu0
    %v382 = vadd.f32 %v341, %v381
    %v383 = vpop.f32.mrb[0].mxu0
    %v384 = vpop.f32.mrb[0].mxu0
    %v385 = vadd.f32 %v344, %v384
    %v386 = vpop.f32.mrb[0].mxu0
    %387 = vdwg.mxu0
    %388 = vmatprep.subr.bf16.mxu0 0
    %389 = vmatpush1.bf16.msra.mxu0 %v288
    %390 = vmatprep.subr.bf16.mxu0 0
    %391 = vmatpush1.bf16.msra.mxu0 %v289
    %392 = vmatprep.subr.bf16.mxu0 0
    %393 = vmatpush1.bf16.msra.mxu0 %v290
    %394 = vmatprep.subr.bf16.mxu0 0
    %395 = vmatpush1.bf16.msra.mxu0 %v291
    %396 = vmatprep.subr.bf16.mxu0 0
    %397 = vmatpush1.bf16.msra.mxu0 %v292
    %398 = vmatprep.subr.bf16.mxu0 0
    %399 = vmatpush1.bf16.msra.mxu0 %v293
    %400 = vmatprep.subr.bf16.mxu0 0
    %401 = vmatpush1.bf16.msra.mxu0 %v294
    %402 = vmatprep.subr.bf16.mxu0 0
    %403 = vmatpush1.bf16.msra.mxu0 %v295
    %404 = vmatprep.subr.bf16.mxu0 0
    %405 = vmatpush1.bf16.msra.mxu0 %v296
    %406 = vmatprep.subr.bf16.mxu0 0
    %407 = vmatpush1.bf16.msra.mxu0 %v297
    %408 = vmatprep.subr.bf16.mxu0 0
    %409 = vmatpush1.bf16.msra.mxu0 %v298
    %410 = vmatprep.subr.bf16.mxu0 0
    %411 = vmatpush1.bf16.msra.mxu0 %v299
    %412 = vmatprep.subr.bf16.mxu0 0
    %413 = vmatpush1.bf16.msra.mxu0 %v300
    %414 = vmatprep.subr.bf16.mxu0 0
    %415 = vmatpush1.bf16.msra.mxu0 %v301
    %416 = vmatprep.subr.bf16.mxu0 0
    %417 = vmatpush1.bf16.msra.mxu0 %v302
    %418 = vmatprep.subr.bf16.mxu0 0
    %419 = vmatpush1.bf16.msra.mxu0 %v303
    %420 = vmatprep.mubr.bf16.mxu0 %v255
    %421 = vmatmul.mubr.bf16.gmra.mrb[0].mxu0 %v254
    %v422 = vpop.f32.mrb[0].mxu0
    %v423 = vadd.f32 %v382, %v422
    %v424 = vpop.f32.mrb[0].mxu0
    %v425 = vpop.f32.mrb[0].mxu0
    %v426 = vadd.f32 %v385, %v425
    %v427 = vpop.f32.mrb[0].mxu0
    %428 = vdwg.mxu0
    %v429 = vld [vmem:[%s3] sm:$0x1]
    %v430 = vld [vmem:[#allocation4] sm:$0x1]
    %431 = vadd.xlane.f32.xlu0 %v423
    %v432 = vpop.xlane.xlu0 %431
    %vm433 = vcmask 1041408
    %v434 = vsel %vm433, %v426, 0.0
    %435 = vadd.xlane.f32.xlu0 %v434
    %v436 = vpop.xlane.xlu0 %435
    %v437 = vrcp.pop 128.0
    %v438 = vmul.f32 %v432, %v437
    %v439 = vmul.f32 %v436, %v437
    %v440 = vsub.f32 %v423, %v438
    %v441 = vsub.f32 %v426, %v439
    %v442 = vmul.f32 %v440, %v440
    %v443 = vmul.f32 %v441, %v441
    %444 = vadd.xlane.f32.xlu0 %v442
    %v445 = vpop.xlane.xlu0 %444
    %v446 = vsel %vm433, %v443, 0.0
    %447 = vadd.xlane.f32.xlu0 %v446
    %v448 = vpop.xlane.xlu0 %447
    %v449 = vmul.f32 %v445, %v437
    %v450 = vmul.f32 %v448, %v437
    %v451 = vadd.f32 %v449, 1e-05
    %v452 = vadd.f32 %v450, 1e-05
    %v453 = vrsqrt.pop %v451
    %v454 = vrsqrt.pop %v452
    %v455 = vmul.f32 %v440, %v453
    %v456 = vmul.f32 %v441, %v454
    %v458 = vlaneseq
    %v459 = vshrl.u32 %v458, 7
    %v460 = vsub.s32 0, %v459
    %v461 = vrot.slane %v429, %v460
    %v463 = vmul.f32 %v455, %v461
    %v464 = vmul.f32 %v456, %v461
    %v466 = vlaneseq
    %v467 = vshrl.u32 %v466, 7
    %v468 = vsub.s32 0, %v467
    %v469 = vrot.slane %v430, %v468
    %v471 = vadd.f32 %v463, %v469
    %v472 = vadd.f32 %v464, %v469
    %v473 = vlaneseq
    %v474 = vshrl.u32 %v473, 7
    %v475 = vadd.s32 %v474, 8
    %v476 = vlaneseq
    %v477 = vand.u32 %v476, 127
    %vm478 = vcmp.ge.s32.totalorder %v474, 0
    %vm479 = vcmp.ge.s32.totalorder %v475, 0
    %vm480 = vcmp.lt.s32.totalorder %v474, 5
    %vm481 = vcmp.lt.s32.totalorder %v475, 5
    %vm482 = vmand %vm478, %vm480
    %vm483 = vmand %vm479, %vm481
    %vm484 = vcmp.ge.s32.totalorder %v477, 0
    %vm485 = vcmp.lt.s32.totalorder %v477, 5
    %vm486 = vmand %vm484, %vm485
    %vm487 = vmand %vm482, %vm486
    %vm488 = vmand %vm483, %vm486
    %vm489 = vcmp.ge.s32.totalorder %v474, 5
    %vm490 = vcmp.ge.s32.totalorder %v475, 5
    %vm491 = vcmp.lt.s32.totalorder %v474, 10
    %vm492 = vcmp.lt.s32.totalorder %v475, 10
    %vm493 = vmand %vm489, %vm491
    %vm494 = vmand %vm490, %vm492
    %vm495 = vcmp.ge.s32.totalorder %v477, 5
    %vm496 = vcmp.lt.s32.totalorder %v477, 10
    %vm497 = vmand %vm495, %vm496
    %vm498 = vmand %vm493, %vm497
    %vm499 = vmand %vm494, %vm497
    %vm500 = vmor %vm487, %vm498
    %vm501 = vmor %vm488, %vm499
    %v502 = vsel %vm500, 0.0, -1e+09
    %v503 = vsel %vm501, 0.0, -1e+09
    %v504 = vld [vmem:[%s5] sm:$0x1]
    %v505 = vld [vmem:[%s6] sm:$0x1]
    %v506 = vld [vmem:[#allocation6] sm:$0xff]
    %v507 = vld [vmem:[#allocation6 + $0x8] sm:$0xff]
    %v508 = vld [vmem:[#allocation6 + $0x10] sm:$0xff]
    %v509 = vld [vmem:[#allocation6 + $0x18] sm:$0xff]
    %v510 = vld [vmem:[#allocation6 + $0x20] sm:$0xff]
    %v511 = vld [vmem:[#allocation6 + $0x28] sm:$0xff]
    %v512 = vld [vmem:[#allocation6 + $0x30] sm:$0xff]
    %v513 = vld [vmem:[#allocation6 + $0x38] sm:$0xff]
    %v514 = vld [vmem:[#allocation6 + $0x40] sm:$0xff]
    %v515 = vld [vmem:[#allocation6 + $0x48] sm:$0xff]
    %v516 = vld [vmem:[#allocation6 + $0x50] sm:$0xff]
    %v517 = vld [vmem:[#allocation6 + $0x58] sm:$0xff]
    %v518 = vld [vmem:[#allocation6 + $0x60] sm:$0xff]
    %v519 = vld [vmem:[#allocation6 + $0x68] sm:$0xff]
    %v520 = vld [vmem:[#allocation6 + $0x70] sm:$0xff]
    %v521 = vld [vmem:[#allocation6 + $0x78] sm:$0xff]
    %v522 = vld [vmem:[#allocation6 + $0x80] sm:$0xff]
    %v523 = vld [vmem:[#allocation6 + $0x88] sm:$0xff]
    %v524 = vld [vmem:[#allocation6 + $0x90] sm:$0xff]
    %v525 = vld [vmem:[#allocation6 + $0x98] sm:$0xff]
    %v526 = vld [vmem:[#allocation6 + $0xa0] sm:$0xff]
    %v527 = vld [vmem:[#allocation6 + $0xa8] sm:$0xff]
    %v528 = vld [vmem:[#allocation6 + $0xb0] sm:$0xff]
    %v529 = vld [vmem:[#allocation6 + $0xb8] sm:$0xff]
    %v530 = vld [vmem:[#allocation6 + $0xc0] sm:$0xff]
    %v531 = vld [vmem:[#allocation6 + $0xc8] sm:$0xff]
    %v532 = vld [vmem:[#allocation6 + $0xd0] sm:$0xff]
    %v533 = vld [vmem:[#allocation6 + $0xd8] sm:$0xff]
    %v534 = vld [vmem:[#allocation6 + $0xe0] sm:$0xff]
    %v535 = vld [vmem:[#allocation6 + $0xe8] sm:$0xff]
    %v536 = vld [vmem:[#allocation6 + $0xf0] sm:$0xff]
    %v537 = vld [vmem:[#allocation6 + $0xf8] sm:$0xff]
    %v538 = vld [vmem:[#allocation6 + $0x100] sm:$0xff]
    %v539 = vld [vmem:[#allocation6 + $0x108] sm:$0xff]
    %v540 = vld [vmem:[#allocation6 + $0x110] sm:$0xff]
    %v541 = vld [vmem:[#allocation6 + $0x118] sm:$0xff]
    %v542 = vld [vmem:[#allocation6 + $0x120] sm:$0xff]
    %v543 = vld [vmem:[#allocation6 + $0x128] sm:$0xff]
    %v544 = vld [vmem:[#allocation6 + $0x130] sm:$0xff]
    %v545 = vld [vmem:[#allocation6 + $0x138] sm:$0xff]
    %v546 = vld [vmem:[#allocation6 + $0x140] sm:$0xff]
    %v547 = vld [vmem:[#allocation6 + $0x148] sm:$0xff]
    %v548 = vld [vmem:[#allocation6 + $0x150] sm:$0xff]
    %v549 = vld [vmem:[#allocation6 + $0x158] sm:$0xff]
    %v550 = vld [vmem:[#allocation6 + $0x160] sm:$0xff]
    %v551 = vld [vmem:[#allocation6 + $0x168] sm:$0xff]
    %v552 = vld [vmem:[#allocation6 + $0x170] sm:$0xff]
    %v553 = vld [vmem:[#allocation6 + $0x178] sm:$0xff]
    %v554 = vld [vmem:[%s8] sm:$0x7]
    %v555 = vld [vmem:[#allocation7] sm:$0xff]
    %v556 = vld [vmem:[#allocation7 + $0x8] sm:$0xff]
    %v557 = vld [vmem:[#allocation7 + $0x10] sm:$0xff]
    %v558 = vld [vmem:[#allocation7 + $0x18] sm:$0xff]
    %v559 = vld [vmem:[#allocation7 + $0x20] sm:$0xff]
    %v560 = vld [vmem:[#allocation7 + $0x28] sm:$0xff]
    %v561 = vld [vmem:[#allocation7 + $0x30] sm:$0xff]
    %v562 = vld [vmem:[#allocation7 + $0x38] sm:$0xff]
    %v563 = vld [vmem:[#allocation7 + $0x40] sm:$0xff]
    %v564 = vld [vmem:[#allocation7 + $0x48] sm:$0xff]
    %v565 = vld [vmem:[#allocation7 + $0x50] sm:$0xff]
    %v566 = vld [vmem:[#allocation7 + $0x58] sm:$0xff]
    %v567 = vld [vmem:[#allocation7 + $0x60] sm:$0xff]
    %v568 = vld [vmem:[#allocation7 + $0x68] sm:$0xff]
    %v569 = vld [vmem:[#allocation7 + $0x70] sm:$0xff]
    %v570 = vld [vmem:[#allocation7 + $0x78] sm:$0xff]
    %v571 = vld [vmem:[%s10] sm:$0x1]
    %v572 = vld [vmem:[%s11] sm:$0x1]
    %v573 = vld [vmem:[%s12] sm:$0x1]
    %v574 = vld [vmem:[%s13] sm:$0xff]
    %v575 = vld [vmem:[%s13 + $0x8] sm:$0xff]
    %v576 = vld [vmem:[%s13 + $0x10] sm:$0xff]
    %v577 = vld [vmem:[%s13 + $0x18] sm:$0xff]
    %v578 = vld [vmem:[%s13 + $0x20] sm:$0xff]
    %v579 = vld [vmem:[%s13 + $0x28] sm:$0xff]
    %v580 = vld [vmem:[%s13 + $0x30] sm:$0xff]
    %v581 = vld [vmem:[%s13 + $0x38] sm:$0xff]
    %v582 = vld [vmem:[%s13 + $0x40] sm:$0xff]
    %v583 = vld [vmem:[%s13 + $0x48] sm:$0xff]
    %v584 = vld [vmem:[%s13 + $0x50] sm:$0xff]
    %v585 = vld [vmem:[%s13 + $0x58] sm:$0xff]
    %v586 = vld [vmem:[%s13 + $0x60] sm:$0xff]
    %v587 = vld [vmem:[%s13 + $0x68] sm:$0xff]
    %v588 = vld [vmem:[%s13 + $0x70] sm:$0xff]
    %v589 = vld [vmem:[%s13 + $0x78] sm:$0xff]
    %v590 = vld [vmem:[%s13 + $0x80] sm:$0xff]
    %v591 = vld [vmem:[%s13 + $0x88] sm:$0xff]
    %v592 = vld [vmem:[%s13 + $0x90] sm:$0xff]
    %v593 = vld [vmem:[%s13 + $0x98] sm:$0xff]
    %v594 = vld [vmem:[%s13 + $0xa0] sm:$0xff]
    %v595 = vld [vmem:[%s13 + $0xa8] sm:$0xff]
    %v596 = vld [vmem:[%s13 + $0xb0] sm:$0xff]
    %v597 = vld [vmem:[%s13 + $0xb8] sm:$0xff]
    %v598 = vld [vmem:[%s13 + $0xc0] sm:$0xff]
    %v599 = vld [vmem:[%s13 + $0xc8] sm:$0xff]
    %v600 = vld [vmem:[%s13 + $0xd0] sm:$0xff]
    %v601 = vld [vmem:[%s13 + $0xd8] sm:$0xff]
    %v602 = vld [vmem:[%s13 + $0xe0] sm:$0xff]
    %v603 = vld [vmem:[%s13 + $0xe8] sm:$0xff]
    %v604 = vld [vmem:[%s13 + $0xf0] sm:$0xff]
    %v605 = vld [vmem:[%s13 + $0xf8] sm:$0xff]
    %v606 = vld [vmem:[%s13 + $0x100] sm:$0xff]
    %v607 = vld [vmem:[%s13 + $0x108] sm:$0xff]
    %v608 = vld [vmem:[%s13 + $0x110] sm:$0xff]
    %v609 = vld [vmem:[%s13 + $0x118] sm:$0xff]
    %v610 = vld [vmem:[%s13 + $0x120] sm:$0xff]
    %v611 = vld [vmem:[%s13 + $0x128] sm:$0xff]
    %v612 = vld [vmem:[%s13 + $0x130] sm:$0xff]
    %v613 = vld [vmem:[%s13 + $0x138] sm:$0xff]
    %v614 = vld [vmem:[%s13 + $0x140] sm:$0xff]
    %v615 = vld [vmem:[%s13 + $0x148] sm:$0xff]
    %v616 = vld [vmem:[%s13 + $0x150] sm:$0xff]
    %v617 = vld [vmem:[%s13 + $0x158] sm:$0xff]
    %v618 = vld [vmem:[%s13 + $0x160] sm:$0xff]
    %v619 = vld [vmem:[%s13 + $0x168] sm:$0xff]
    %v620 = vld [vmem:[%s13 + $0x170] sm:$0xff]
    %v621 = vld [vmem:[%s13 + $0x178] sm:$0xff]
    %v622 = vld [vmem:[%s13 + $0x180] sm:$0xff]
    %v623 = vld [vmem:[%s13 + $0x188] sm:$0xff]
    %v624 = vld [vmem:[%s13 + $0x190] sm:$0xff]
    %v625 = vld [vmem:[%s13 + $0x198] sm:$0xff]
    %v626 = vld [vmem:[%s13 + $0x1a0] sm:$0xff]
    %v627 = vld [vmem:[%s13 + $0x1a8] sm:$0xff]
    %v628 = vld [vmem:[%s13 + $0x1b0] sm:$0xff]
    %v629 = vld [vmem:[%s13 + $0x1b8] sm:$0xff]
    %v630 = vld [vmem:[%s13 + $0x1c0] sm:$0xff]
    %v631 = vld [vmem:[%s13 + $0x1c8] sm:$0xff]
    %v632 = vld [vmem:[%s13 + $0x1d0] sm:$0xff]
    %v633 = vld [vmem:[%s13 + $0x1d8] sm:$0xff]
    %v634 = vld [vmem:[%s13 + $0x1e0] sm:$0xff]
    %v635 = vld [vmem:[%s13 + $0x1e8] sm:$0xff]
    %v636 = vld [vmem:[%s13 + $0x1f0] sm:$0xff]
    %v637 = vld [vmem:[%s13 + $0x1f8] sm:$0xff]
    %v638 = vld [vmem:[%s14] sm:$0xf]
    %v639 = vld [vmem:[%s15] sm:$0xff]
    %v640 = vld [vmem:[%s15 + $0x8] sm:$0xff]
    %v641 = vld [vmem:[%s15 + $0x10] sm:$0xff]
    %v642 = vld [vmem:[%s15 + $0x18] sm:$0xff]
    %v643 = vld [vmem:[%s15 + $0x20] sm:$0xff]
    %v644 = vld [vmem:[%s15 + $0x28] sm:$0xff]
    %v645 = vld [vmem:[%s15 + $0x30] sm:$0xff]
    %v646 = vld [vmem:[%s15 + $0x38] sm:$0xff]
    %v647 = vld [vmem:[%s15 + $0x40] sm:$0xff]
    %v648 = vld [vmem:[%s15 + $0x48] sm:$0xff]
    %v649 = vld [vmem:[%s15 + $0x50] sm:$0xff]
    %v650 = vld [vmem:[%s15 + $0x58] sm:$0xff]
    %v651 = vld [vmem:[%s15 + $0x60] sm:$0xff]
    %v652 = vld [vmem:[%s15 + $0x68] sm:$0xff]
    %v653 = vld [vmem:[%s15 + $0x70] sm:$0xff]
    %v654 = vld [vmem:[%s15 + $0x78] sm:$0xff]
    %v655 = vld [vmem:[%s15 + $0x80] sm:$0xff]
    %v656 = vld [vmem:[%s15 + $0x88] sm:$0xff]
    %v657 = vld [vmem:[%s15 + $0x90] sm:$0xff]
    %v658 = vld [vmem:[%s15 + $0x98] sm:$0xff]
    %v659 = vld [vmem:[%s15 + $0xa0] sm:$0xff]
    %v660 = vld [vmem:[%s15 + $0xa8] sm:$0xff]
    %v661 = vld [vmem:[%s15 + $0xb0] sm:$0xff]
    %v662 = vld [vmem:[%s15 + $0xb8] sm:$0xff]
    %v663 = vld [vmem:[%s15 + $0xc0] sm:$0xff]
    %v664 = vld [vmem:[%s15 + $0xc8] sm:$0xff]
    %v665 = vld [vmem:[%s15 + $0xd0] sm:$0xff]
    %v666 = vld [vmem:[%s15 + $0xd8] sm:$0xff]
    %v667 = vld [vmem:[%s15 + $0xe0] sm:$0xff]
    %v668 = vld [vmem:[%s15 + $0xe8] sm:$0xff]
    %v669 = vld [vmem:[%s15 + $0xf0] sm:$0xff]
    %v670 = vld [vmem:[%s15 + $0xf8] sm:$0xff]
    %v671 = vld [vmem:[%s15 + $0x100] sm:$0xff]
    %v672 = vld [vmem:[%s15 + $0x108] sm:$0xff]
    %v673 = vld [vmem:[%s15 + $0x110] sm:$0xff]
    %v674 = vld [vmem:[%s15 + $0x118] sm:$0xff]
    %v675 = vld [vmem:[%s15 + $0x120] sm:$0xff]
    %v676 = vld [vmem:[%s15 + $0x128] sm:$0xff]
    %v677 = vld [vmem:[%s15 + $0x130] sm:$0xff]
    %v678 = vld [vmem:[%s15 + $0x138] sm:$0xff]
    %v679 = vld [vmem:[%s15 + $0x140] sm:$0xff]
    %v680 = vld [vmem:[%s15 + $0x148] sm:$0xff]
    %v681 = vld [vmem:[%s15 + $0x150] sm:$0xff]
    %v682 = vld [vmem:[%s15 + $0x158] sm:$0xff]
    %v683 = vld [vmem:[%s15 + $0x160] sm:$0xff]
    %v684 = vld [vmem:[%s15 + $0x168] sm:$0xff]
    %v685 = vld [vmem:[%s15 + $0x170] sm:$0xff]
    %v686 = vld [vmem:[%s15 + $0x178] sm:$0xff]
    %v687 = vld [vmem:[%s15 + $0x180] sm:$0xff]
    %v688 = vld [vmem:[%s15 + $0x188] sm:$0xff]
    %v689 = vld [vmem:[%s15 + $0x190] sm:$0xff]
    %v690 = vld [vmem:[%s15 + $0x198] sm:$0xff]
    %v691 = vld [vmem:[%s15 + $0x1a0] sm:$0xff]
    %v692 = vld [vmem:[%s15 + $0x1a8] sm:$0xff]
    %v693 = vld [vmem:[%s15 + $0x1b0] sm:$0xff]
    %v694 = vld [vmem:[%s15 + $0x1b8] sm:$0xff]
    %v695 = vld [vmem:[%s15 + $0x1c0] sm:$0xff]
    %v696 = vld [vmem:[%s15 + $0x1c8] sm:$0xff]
    %v697 = vld [vmem:[%s15 + $0x1d0] sm:$0xff]
    %v698 = vld [vmem:[%s15 + $0x1d8] sm:$0xff]
    %v699 = vld [vmem:[%s15 + $0x1e0] sm:$0xff]
    %v700 = vld [vmem:[%s15 + $0x1e8] sm:$0xff]
    %v701 = vld [vmem:[%s15 + $0x1f0] sm:$0xff]
    %v702 = vld [vmem:[%s15 + $0x1f8] sm:$0xff]
    %v703 = vld [vmem:[%s16] sm:$0x1]
    %704 = vadd.xlane.f32.xlu0 %v471
    %v705 = vpop.xlane.xlu0 %704
    %v706 = vsel %vm433, %v472, 0.0
    %707 = vadd.xlane.f32.xlu0 %v706
    %v708 = vpop.xlane.xlu0 %707
    %v709 = vmul.f32 %v705, %v437
    %v710 = vmul.f32 %v708, %v437
    %v711 = vsub.f32 %v471, %v709
    %v712 = vsub.f32 %v472, %v710
    %v713 = vmul.f32 %v711, %v711
    %v714 = vmul.f32 %v712, %v712
    %715 = vadd.xlane.f32.xlu0 %v713
    %v716 = vpop.xlane.xlu0 %715
    %v717 = vsel %vm433, %v714, 0.0
    %718 = vadd.xlane.f32.xlu0 %v717
    %v719 = vpop.xlane.xlu0 %718
    %v720 = vmul.f32 %v716, %v437
    %v721 = vmul.f32 %v719, %v437
    %v722 = vadd.f32 %v720, 1e-05
    %v723 = vadd.f32 %v721, 1e-05
    %v724 = vrsqrt.pop %v722
    %v725 = vrsqrt.pop %v723
    %v726 = vmul.f32 %v711, %v724
    %v727 = vmul.f32 %v712, %v725
    %v729 = vlaneseq
    %v730 = vshrl.u32 %v729, 7
    %v731 = vsub.s32 0, %v730
    %v732 = vrot.slane %v504, %v731
    %v734 = vmul.f32 %v726, %v732
    %v735 = vmul.f32 %v727, %v732
    %v737 = vlaneseq
    %v738 = vshrl.u32 %v737, 7
    %v739 = vsub.s32 0, %v738
    %v740 = vrot.slane %v505, %v739
    %v742 = vadd.f32 %v734, %v740
    %v743 = vadd.f32 %v735, %v740
    %v744 = vpack.c.bf16 %v743, %v742
    %v745 = vpack.c.bf16 %v509, %v506
    %v746 = vpack.c.bf16 %v510, %v507
    %v747 = vpack.c.bf16 %v511, %v508
    %v748 = vpack.c.bf16 %v515, %v512
    %v749 = vpack.c.bf16 %v516, %v513
    %v750 = vpack.c.bf16 %v517, %v514
    %v751 = vpack.c.bf16 %v521, %v518
    %v752 = vpack.c.bf16 %v522, %v519
    %v753 = vpack.c.bf16 %v523, %v520
    %v754 = vpack.c.bf16 %v527, %v524
    %v755 = vpack.c.bf16 %v528, %v525
    %v756 = vpack.c.bf16 %v529, %v526
    %v757 = vpack.c.bf16 %v533, %v530
    %v758 = vpack.c.bf16 %v534, %v531
    %v759 = vpack.c.bf16 %v535, %v532
    %v760 = vpack.c.bf16 %v539, %v536
    %v761 = vpack.c.bf16 %v540, %v537
    %v762 = vpack.c.bf16 %v541, %v538
    %v763 = vpack.c.bf16 %v545, %v542
    %v764 = vpack.c.bf16 %v546, %v543
    %v765 = vpack.c.bf16 %v547, %v544
    %v766 = vpack.c.bf16 %v551, %v548
    %v767 = vpack.c.bf16 %v552, %v549
    %v768 = vpack.c.bf16 %v553, %v550
    %v770 = vlaneseq
    %v771 = vshrl.u32 %v770, 7
    %v772 = vsub.s32 0, %v771
    %v773 = vrot.slane %v554, %v772
    %v774 = vlaneseq
    %v775 = vshrl.u32 %v774, 7
    %v776 = vsub.s32 1, %v775
    %v777 = vrot.slane %v554, %v776
    %v778 = vlaneseq
    %v779 = vshrl.u32 %v778, 7
    %v780 = vsub.s32 2, %v779
    %v781 = vrot.slane %v554, %v780
    %785 = vmatprep.subr.bf16.mxu0 %v746
    %786 = vmatpush1.bf16.msra.mxu0 %v745
    %787 = vmatprep.subr.bf16.mxu0 %v749
    %788 = vmatpush1.bf16.msra.mxu0 %v748
    %789 = vmatprep.subr.bf16.mxu0 %v752
    %790 = vmatpush1.bf16.msra.mxu0 %v751
    %791 = vmatprep.subr.bf16.mxu0 %v755
    %792 = vmatpush1.bf16.msra.mxu0 %v754
    %793 = vmatprep.subr.bf16.mxu0 %v758
    %794 = vmatpush1.bf16.msra.mxu0 %v757
    %795 = vmatprep.subr.bf16.mxu0 %v761
    %796 = vmatpush1.bf16.msra.mxu0 %v760
    %797 = vmatprep.subr.bf16.mxu0 %v764
    %798 = vmatpush1.bf16.msra.mxu0 %v763
    %799 = vmatprep.subr.bf16.mxu0 %v767
    %800 = vmatpush1.bf16.msra.mxu0 %v766
    %801 = vmatprep.subr.bf16.mxu0 0
    %802 = vmatpush1.bf16.msra.mxu0 0
    %803 = vmatprep.subr.bf16.mxu0 0
    %804 = vmatpush1.bf16.msra.mxu0 0
    %805 = vmatprep.subr.bf16.mxu0 0
    %806 = vmatpush1.bf16.msra.mxu0 0
    %807 = vmatprep.subr.bf16.mxu0 0
    %808 = vmatpush1.bf16.msra.mxu0 0
    %809 = vmatprep.subr.bf16.mxu0 0
    %810 = vmatpush1.bf16.msra.mxu0 0
    %811 = vmatprep.subr.bf16.mxu0 0
    %812 = vmatpush1.bf16.msra.mxu0 0
    %813 = vmatprep.subr.bf16.mxu0 0
    %814 = vmatpush1.bf16.msra.mxu0 0
    %815 = vmatprep.subr.bf16.mxu0 0
    %816 = vmatpush1.bf16.msra.mxu0 0
    %817 = vmatprep.mubr.bf16.mxu0 0
    %818 = vmatmul.mubr.bf16.gmra.mrb[0].mxu0 %v744
    %v819 = vpop.f32.mrb[0].mxu0
    %v820 = vadd.f32 %v773, %v819
    %v821 = vpop.f32.mrb[0].mxu0
    %v822 = vadd.f32 %v777, %v821
    %v823 = vpop.f32.mrb[0].mxu0
    %v824 = vadd.f32 %v773, %v823
    %v825 = vpop.f32.mrb[0].mxu0
    %v826 = vadd.f32 %v777, %v825
    %827 = vdwg.mxu0
    %828 = vmatprep.subr.bf16.mxu0 0
    %829 = vmatpush1.bf16.msra.mxu0 %v747
    %830 = vmatprep.subr.bf16.mxu0 0
    %831 = vmatpush1.bf16.msra.mxu0 %v750
    %832 = vmatprep.subr.bf16.mxu0 0
    %833 = vmatpush1.bf16.msra.mxu0 %v753
    %834 = vmatprep.subr.bf16.mxu0 0
    %835 = vmatpush1.bf16.msra.mxu0 %v756
    %836 = vmatprep.subr.bf16.mxu0 0
    %837 = vmatpush1.bf16.msra.mxu0 %v759
    %838 = vmatprep.subr.bf16.mxu0 0
    %839 = vmatpush1.bf16.msra.mxu0 %v762
    %840 = vmatprep.subr.bf16.mxu0 0
    %841 = vmatpush1.bf16.msra.mxu0 %v765
    %842 = vmatprep.subr.bf16.mxu0 0
    %843 = vmatpush1.bf16.msra.mxu0 %v768
    %844 = vmatprep.subr.bf16.mxu0 0
    %845 = vmatpush1.bf16.msra.mxu0 0
    %846 = vmatprep.subr.bf16.mxu0 0
    %847 = vmatpush1.bf16.msra.mxu0 0
    %848 = vmatprep.subr.bf16.mxu0 0
    %849 = vmatpush1.bf16.msra.mxu0 0
    %850 = vmatprep.subr.bf16.mxu0 0
    %851 = vmatpush1.bf16.msra.mxu0 0
    %852 = vmatprep.subr.bf16.mxu0 0
    %853 = vmatpush1.bf16.msra.mxu0 0
    %854 = vmatprep.subr.bf16.mxu0 0
    %855 = vmatpush1.bf16.msra.mxu0 0
    %856 = vmatprep.subr.bf16.mxu0 0
    %857 = vmatpush1.bf16.msra.mxu0 0
    %858 = vmatprep.subr.bf16.mxu0 0
    %859 = vmatpush1.bf16.msra.mxu0 0
    %860 = vmatprep.mubr.bf16.mxu0 0
    %861 = vmatmul.mubr.bf16.gmra.mrb[0].mxu0 %v744
    %v862 = vpop.f32.mrb[0].mxu0
    %v863 = vadd.f32 %v781, %v862
    %v864 = vpop.f32.mrb[0].mxu0
    %v865 = vpop.f32.mrb[0].mxu0
    %v866 = vadd.f32 %v781, %v865
    %v867 = vpop.f32.mrb[0].mxu0
    %868 = vdwg.mxu0
    %v869 = vmul.f32 %v820, 0.17677669
    %v870 = vmul.f32 %v824, 0.17677669
    %v871 = vpack.c.bf16 %v870, %v869
    %v872 = vpack.c.bf16 %v826, %v822
    %vm873 = vcmask 261120
    %v875 = vsel %vm873, %v871, 0
    %v878 = vsel %vm873, %v872, 0
    %880 = vmatprep.subr.bf16.mxu0 0
    %881 = vmatpush1.bf16.xpose.msra.mxu0 %v878
    %882 = vmatprep.subr.bf16.mxu0 0
    %883 = vmatpush1.bf16.xpose.msra.mxu0 0
    %884 = vmatprep.subr.bf16.mxu0 0
    %885 = vmatpush1.bf16.xpose.msra.mxu0 0
    %886 = vmatprep.subr.bf16.mxu0 0
    %887 = vmatpush1.bf16.xpose.msra.mxu0 0
    %888 = vmatprep.subr.bf16.mxu0 0
    %889 = vmatpush1.bf16.xpose.msra.mxu0 0
    %890 = vmatprep.subr.bf16.mxu0 0
    %891 = vmatpush1.bf16.xpose.msra.mxu0 0
    %892 = vmatprep.subr.bf16.mxu0 0
    %893 = vmatpush1.bf16.xpose.msra.mxu0 0
    %894 = vmatprep.subr.bf16.mxu0 0
    %895 = vmatpush1.bf16.xpose.msra.mxu0 0
    %896 = vmatprep.subr.bf16.mxu0 0
    %897 = vmatpush1.bf16.xpose.msra.mxu0 0
    %898 = vmatprep.subr.bf16.mxu0 0
    %899 = vmatpush1.bf16.xpose.msra.mxu0 0
    %900 = vmatprep.subr.bf16.mxu0 0
    %901 = vmatpush1.bf16.xpose.msra.mxu0 0
    %902 = vmatprep.subr.bf16.mxu0 0
    %903 = vmatpush1.bf16.xpose.msra.mxu0 0
    %904 = vmatprep.subr.bf16.mxu0 0
    %905 = vmatpush1.bf16.xpose.msra.mxu0 0
    %906 = vmatprep.subr.bf16.mxu0 0
    %907 = vmatpush1.bf16.xpose.msra.mxu0 0
    %908 = vmatprep.subr.bf16.mxu0 0
    %909 = vmatpush1.bf16.xpose.msra.mxu0 0
    %910 = vmatprep.subr.bf16.mxu0 0
    %911 = vmatpush1.bf16.xpose.msra.mxu0 0
    %912 = vmatprep.mubr.bf16.mxu0 0
    %913 = vmatmul.mubr.bf16.gmra.mrb[0].mxu0 %v875
    %v914 = vpop.f32.mrb[0].mxu0
    %v915 = vadd.f32 %v502, %v914
    %v916 = vpop.f32.mrb[0].mxu0
    %v917 = vpop.f32.mrb[0].mxu0
    %v918 = vadd.f32 %v503, %v917
    %v919 = vpop.f32.mrb[0].mxu0
    %920 = vdwg.mxu0
    %vm921 = vcmask 80896
    %v922 = vsel %vm921, %v915, -inf
    %923 = vmax.xlane.f32.xlu0 %v922
    %v924 = vpop.xlane.xlu0 %923
    %vm925 = vcmask 74752
    %v926 = vsel %vm925, %v918, -inf
    %927 = vmax.xlane.f32.xlu0 %v926
    %v928 = vpop.xlane.xlu0 %927
    %v929 = vsub.f32 %v915, %v924
    %v930 = vsub.f32 %v918, %v928
    %v931 = vmul.f32 %v929, 1.442695
    %v932 = vpow.pop %v931
    %v933 = vmul.f32 %v930, 1.442695
    %v934 = vpow.pop %v933
    %v935 = vsel %vm921, %v932, 0.0
    %936 = vadd.xlane.f32.xlu0 %v935
    %v937 = vpop.xlane.xlu0 %936
    %v938 = vsel %vm925, %v934, 0.0
    %939 = vadd.xlane.f32.xlu0 %v938
    %v940 = vpop.xlane.xlu0 %939
    %v941 = vrcp.pop %v937
    %v942 = vrcp.pop %v940
    %v943 = vmul.f32 %v932, %v941
    %v944 = vmul.f32 %v934, %v942
    %v945 = vpack.c.bf16 %v944, %v943
    %v946 = vpack.c.bf16 %v866, %v863
    %v948 = vsel %vm921, %v945, 0
    %vm950 = vcmask 1044480
    %v952 = vsel %vm950, %v946, 0
    %954 = vmatprep.subr.bf16.mxu0 0
    %955 = vmatpush1.bf16.msra.mxu0 %v952
    %956 = vmatprep.subr.bf16.mxu0 0
    %957 = vmatpush1.bf16.msra.mxu0 0
    %958 = vmatprep.subr.bf16.mxu0 0
    %959 = vmatpush1.bf16.msra.mxu0 0
    %960 = vmatprep.subr.bf16.mxu0 0
    %961 = vmatpush1.bf16.msra.mxu0 0
    %962 = vmatprep.subr.bf16.mxu0 0
    %963 = vmatpush1.bf16.msra.mxu0 0
    %964 = vmatprep.subr.bf16.mxu0 0
    %965 = vmatpush1.bf16.msra.mxu0 0
    %966 = vmatprep.subr.bf16.mxu0 0
    %967 = vmatpush1.bf16.msra.mxu0 0
    %968 = vmatprep.subr.bf16.mxu0 0
    %969 = vmatpush1.bf16.msra.mxu0 0
    %970 = vmatprep.subr.bf16.mxu0 0
    %971 = vmatpush1.bf16.msra.mxu0 0
    %972 = vmatprep.subr.bf16.mxu0 0
    %973 = vmatpush1.bf16.msra.mxu0 0
    %974 = vmatprep.subr.bf16.mxu0 0
    %975 = vmatpush1.bf16.msra.mxu0 0
    %976 = vmatprep.subr.bf16.mxu0 0
    %977 = vmatpush1.bf16.msra.mxu0 0
    %978 = vmatprep.subr.bf16.mxu0 0
    %979 = vmatpush1.bf16.msra.mxu0 0
    %980 = vmatprep.subr.bf16.mxu0 0
    %981 = vmatpush1.bf16.msra.mxu0 0
    %982 = vmatprep.subr.bf16.mxu0 0
    %983 = vmatpush1.bf16.msra.mxu0 0
    %984 = vmatprep.subr.bf16.mxu0 0
    %985 = vmatpush1.bf16.msra.mxu0 0
    %986 = vmatprep.mubr.bf16.mxu0 0
    %987 = vmatmul.mubr.bf16.gmra.mrb[0].mxu0 %v948
    %v988 = vpop.f32.mrb[0].mxu0
    %v989 = vadd.f32 0.0, %v988
    %v990 = vpop.f32.mrb[0].mxu0
    %v991 = vpop.f32.mrb[0].mxu0
    %v992 = vadd.f32 0.0, %v991
    %v993 = vpop.f32.mrb[0].mxu0
    %994 = vdwg.mxu0
    %v995 = vpack.c.bf16 %v992, %v989
    %v996 = vpack.c.bf16 %v556, %v555
    %v997 = vpack.c.bf16 %v558, %v557
    %999 = vrot.lane.b32.xlu0 %v871, 96
    %v1000 = vpop.permute.xlu0 %999
    %1002 = vrot.lane.b32.xlu0 %v872, 96
    %v1003 = vpop.permute.xlu0 %1002
    %v1005 = vsel %vm873, %v1000, 0
    %v1008 = vsel %vm873, %v1003, 0
    %1010 = vmatprep.subr.bf16.mxu0 0
    %1011 = vmatpush1.bf16.xpose.msra.mxu0 %v1008
    %1012 = vmatprep.subr.bf16.mxu0 0
    %1013 = vmatpush1.bf16.xpose.msra.mxu0 0
    %1014 = vmatprep.subr.bf16.mxu0 0
    %1015 = vmatpush1.bf16.xpose.msra.mxu0 0
    %1016 = vmatprep.subr.bf16.mxu0 0
    %1017 = vmatpush1.bf16.xpose.msra.mxu0 0
    %1018 = vmatprep.subr.bf16.mxu0 0
    %1019 = vmatpush1.bf16.xpose.msra.mxu0 0
    %1020 = vmatprep.subr.bf16.mxu0 0
    %1021 = vmatpush1.bf16.xpose.msra.mxu0 0
    %1022 = vmatprep.subr.bf16.mxu0 0
    %1023 = vmatpush1.bf16.xpose.msra.mxu0 0
    %1024 = vmatprep.subr.bf16.mxu0 0
    %1025 = vmatpush1.bf16.xpose.msra.mxu0 0
    %1026 = vmatprep.subr.bf16.mxu0 0
    %1027 = vmatpush1.bf16.xpose.msra.mxu0 0
    %1028 = vmatprep.subr.bf16.mxu0 0
    %1029 = vmatpush1.bf16.xpose.msra.mxu0 0
    %1030 = vmatprep.subr.bf16.mxu0 0
    %1031 = vmatpush1.bf16.xpose.msra.mxu0 0
    %1032 = vmatprep.subr.bf16.mxu0 0
    %1033 = vmatpush1.bf16.xpose.msra.mxu0 0
    %1034 = vmatprep.subr.bf16.mxu0 0
    %1035 = vmatpush1.bf16.xpose.msra.mxu0 0
    %1036 = vmatprep.subr.bf16.mxu0 0
    %1037 = vmatpush1.bf16.xpose.msra.mxu0 0
    %1038 = vmatprep.subr.bf16.mxu0 0
    %1039 = vmatpush1.bf16.xpose.msra.mxu0 0
    %1040 = vmatprep.subr.bf16.mxu0 0
    %1041 = vmatpush1.bf16.xpose.msra.mxu0 0
    %1042 = vmatprep.mubr.bf16.mxu0 0
    %1043 = vmatmul.mubr.bf16.gmra.mrb[0].mxu0 %v1005
    %v1044 = vpop.f32.mrb[0].mxu0
    %v1045 = vadd.f32 %v502, %v1044
    %v1046 = vpop.f32.mrb[0].mxu0
    %v1047 = vpop.f32.mrb[0].mxu0
    %v1048 = vadd.f32 %v503, %v1047
    %v1049 = vpop.f32.mrb[0].mxu0
    %1050 = vdwg.mxu0
    %v1051 = vsel %vm921, %v1045, -inf
    %1052 = vmax.xlane.f32.xlu0 %v1051
    %v1053 = vpop.xlane.xlu0 %1052
    %v1054 = vsel %vm925, %v1048, -inf
    %1055 = vmax.xlane.f32.xlu0 %v1054
    %v1056 = vpop.xlane.xlu0 %1055
    %v1057 = vsub.f32 %v1045, %v1053
    %v1058 = vsub.f32 %v1048, %v1056
    %v1059 = vmul.f32 %v1057, 1.442695
    %v1060 = vpow.pop %v1059
    %v1061 = vmul.f32 %v1058, 1.442695
    %v1062 = vpow.pop %v1061
    %v1063 = vsel %vm921, %v1060, 0.0
    %1064 = vadd.xlane.f32.xlu0 %v1063
    %v1065 = vpop.xlane.xlu0 %1064
    %v1066 = vsel %vm925, %v1062, 0.0
    %1067 = vadd.xlane.f32.xlu0 %v1066
    %v1068 = vpop.xlane.xlu0 %1067
    %v1069 = vrcp.pop %v1065
    %v1070 = vrcp.pop %v1068
    %v1071 = vmul.f32 %v1060, %v1069
    %v1072 = vmul.f32 %v1062, %v1070
    %v1073 = vpack.c.bf16 %v1072, %v1071
    %1075 = vrot.lane.b32.xlu0 %v946, 96
    %v1076 = vpop.permute.xlu0 %1075
    %v1078 = vsel %vm921, %v1073, 0
    %v1081 = vsel %vm950, %v1076, 0
    %1083 = vmatprep.subr.bf16.mxu0 0
    %1084 = vmatpush1.bf16.msra.mxu0 %v1081
    %1085 = vmatprep.subr.bf16.mxu0 0
    %1086 = vmatpush1.bf16.msra.mxu0 0
    %1087 = vmatprep.subr.bf16.mxu0 0
    %1088 = vmatpush1.bf16.msra.mxu0 0
    %1089 = vmatprep.subr.bf16.mxu0 0
    %1090 = vmatpush1.bf16.msra.mxu0 0
    %1091 = vmatprep.subr.bf16.mxu0 0
    %1092 = vmatpush1.bf16.msra.mxu0 0
    %1093 = vmatprep.subr.bf16.mxu0 0
    %1094 = vmatpush1.bf16.msra.mxu0 0
    %1095 = vmatprep.subr.bf16.mxu0 0
    %1096 = vmatpush1.bf16.msra.mxu0 0
    %1097 = vmatprep.subr.bf16.mxu0 0
    %1098 = vmatpush1.bf16.msra.mxu0 0
    %1099 = vmatprep.subr.bf16.mxu0 0
    %1100 = vmatpush1.bf16.msra.mxu0 0
    %1101 = vmatprep.subr.bf16.mxu0 0
    %1102 = vmatpush1.bf16.msra.mxu0 0
    %1103 = vmatprep.subr.bf16.mxu0 0
    %1104 = vmatpush1.bf16.msra.mxu0 0
    %1105 = vmatprep.subr.bf16.mxu0 0
    %1106 = vmatpush1.bf16.msra.mxu0 0
    %1107 = vmatprep.subr.bf16.mxu0 0
    %1108 = vmatpush1.bf16.msra.mxu0 0
    %1109 = vmatprep.subr.bf16.mxu0 0
    %1110 = vmatpush1.bf16.msra.mxu0 0
    %1111 = vmatprep.subr.bf16.mxu0 0
    %1112 = vmatpush1.bf16.msra.mxu0 0
    %1113 = vmatprep.subr.bf16.mxu0 0
    %1114 = vmatpush1.bf16.msra.mxu0 0
    %1115 = vmatprep.mubr.bf16.mxu0 0
    %1116 = vmatmul.mubr.bf16.gmra.mrb[0].mxu0 %v1078
    %v1117 = vpop.f32.mrb[0].mxu0
    %v1118 = vadd.f32 0.0, %v1117
    %v1119 = vpop.f32.mrb[0].mxu0
    %v1120 = vpop.f32.mrb[0].mxu0
    %v1121 = vadd.f32 0.0, %v1120
    %v1122 = vpop.f32.mrb[0].mxu0
    %1123 = vdwg.mxu0
    %v1124 = vpack.c.bf16 %v1121, %v1118
    %v1125 = vpack.c.bf16 %v560, %v559
    %v1126 = vpack.c.bf16 %v562, %v561
    %v1128 = vsel %vm873, %v1124, 0
    %1130 = vmatprep.subr.bf16.mxu0 0
    %1131 = vmatpush1.bf16.msra.mxu0 %v1125
    %1132 = vmatprep.subr.bf16.mxu0 0
    %1133 = vmatpush1.bf16.msra.mxu0 %v1126
    %1134 = vmatprep.subr.bf16.mxu0 0
    %1135 = vmatpush1.bf16.msra.mxu0 0
    %1136 = vmatprep.subr.bf16.mxu0 0
    %1137 = vmatpush1.bf16.msra.mxu0 0
    %1138 = vmatprep.subr.bf16.mxu0 0
    %1139 = vmatpush1.bf16.msra.mxu0 0
    %1140 = vmatprep.subr.bf16.mxu0 0
    %1141 = vmatpush1.bf16.msra.mxu0 0
    %1142 = vmatprep.subr.bf16.mxu0 0
    %1143 = vmatpush1.bf16.msra.mxu0 0
    %1144 = vmatprep.subr.bf16.mxu0 0
    %1145 = vmatpush1.bf16.msra.mxu0 0
    %1146 = vmatprep.subr.bf16.mxu0 0
    %1147 = vmatpush1.bf16.msra.mxu0 0
    %1148 = vmatprep.subr.bf16.mxu0 0
    %1149 = vmatpush1.bf16.msra.mxu0 0
    %1150 = vmatprep.subr.bf16.mxu0 0
    %1151 = vmatpush1.bf16.msra.mxu0 0
    %1152 = vmatprep.subr.bf16.mxu0 0
    %1153 = vmatpush1.bf16.msra.mxu0 0
    %1154 = vmatprep.subr.bf16.mxu0 0
    %1155 = vmatpush1.bf16.msra.mxu0 0
    %1156 = vmatprep.subr.bf16.mxu0 0
    %1157 = vmatpush1.bf16.msra.mxu0 0
    %1158 = vmatprep.subr.bf16.mxu0 0
    %1159 = vmatpush1.bf16.msra.mxu0 0
    %1160 = vmatprep.subr.bf16.mxu0 0
    %1161 = vmatpush1.bf16.msra.mxu0 0
    %1162 = vmatprep.mubr.bf16.mxu0 0
    %1163 = vmatmul.mubr.bf16.gmra.mrb[0].mxu0 %v1128
    %v1164 = vpop.f32.mrb[0].mxu0
    %v1165 = vadd.f32 0.0, %v1164
    %v1166 = vpop.f32.mrb[0].mxu0
    %v1167 = vpop.f32.mrb[0].mxu0
    %v1168 = vadd.f32 0.0, %v1167
    %v1169 = vpop.f32.mrb[0].mxu0
    %1170 = vdwg.mxu0
    %v1172 = vsel %vm873, %v995, 0
    %1174 = vmatprep.subr.bf16.mxu0 0
    %1175 = vmatpush1.bf16.msra.mxu0 %v996
    %1176 = vmatprep.subr.bf16.mxu0 0
    %1177 = vmatpush1.bf16.msra.mxu0 %v997
    %1178 = vmatprep.subr.bf16.mxu0 0
    %1179 = vmatpush1.bf16.msra.mxu0 0
    %1180 = vmatprep.subr.bf16.mxu0 0
    %1181 = vmatpush1.bf16.msra.mxu0 0
    %1182 = vmatprep.subr.bf16.mxu0 0
    %1183 = vmatpush1.bf16.msra.mxu0 0
    %1184 = vmatprep.subr.bf16.mxu0 0
    %1185 = vmatpush1.bf16.msra.mxu0 0
    %1186 = vmatprep.subr.bf16.mxu0 0
    %1187 = vmatpush1.bf16.msra.mxu0 0
    %1188 = vmatprep.subr.bf16.mxu0 0
    %1189 = vmatpush1.bf16.msra.mxu0 0
    %1190 = vmatprep.subr.bf16.mxu0 0
    %1191 = vmatpush1.bf16.msra.mxu0 0
    %1192 = vmatprep.subr.bf16.mxu0 0
    %1193 = vmatpush1.bf16.msra.mxu0 0
    %1194 = vmatprep.subr.bf16.mxu0 0
    %1195 = vmatpush1.bf16.msra.mxu0 0
    %1196 = vmatprep.subr.bf16.mxu0 0
    %1197 = vmatpush1.bf16.msra.mxu0 0
    %1198 = vmatprep.subr.bf16.mxu0 0
    %1199 = vmatpush1.bf16.msra.mxu0 0
    %1200 = vmatprep.subr.bf16.mxu0 0
    %1201 = vmatpush1.bf16.msra.mxu0 0
    %1202 = vmatprep.subr.bf16.mxu0 0
    %1203 = vmatpush1.bf16.msra.mxu0 0
    %1204 = vmatprep.subr.bf16.mxu0 0
    %1205 = vmatpush1.bf16.msra.mxu0 0
    %1206 = vmatprep.mubr.bf16.mxu0 0
    %1207 = vmatmul.mubr.bf16.gmra.mrb[0].mxu0 %v1172
    %v1208 = vpop.f32.mrb[0].mxu0
    %v1209 = vadd.f32 %v1165, %v1208
    %v1210 = vpop.f32.mrb[0].mxu0
    %v1211 = vpop.f32.mrb[0].mxu0
    %v1212 = vadd.f32 %v1168, %v1211
    %v1213 = vpop.f32.mrb[0].mxu0
    %1214 = vdwg.mxu0
    %1215 = vrot.lane.b32.xlu0 %v871, 64
    %v1216 = vpop.permute.xlu0 %1215
    %1217 = vrot.lane.b32.xlu0 %v872, 64
    %v1218 = vpop.permute.xlu0 %1217
    %v1220 = vsel %vm873, %v1216, 0
    %v1223 = vsel %vm873, %v1218, 0
    %1225 = vmatprep.subr.bf16.mxu0 0
    %1226 = vmatpush1.bf16.xpose.msra.mxu0 %v1223
    %1227 = vmatprep.subr.bf16.mxu0 0
    %1228 = vmatpush1.bf16.xpose.msra.mxu0 0
    %1229 = vmatprep.subr.bf16.mxu0 0
    %1230 = vmatpush1.bf16.xpose.msra.mxu0 0
    %1231 = vmatprep.subr.bf16.mxu0 0
    %1232 = vmatpush1.bf16.xpose.msra.mxu0 0
    %1233 = vmatprep.subr.bf16.mxu0 0
    %1234 = vmatpush1.bf16.xpose.msra.mxu0 0
    %1235 = vmatprep.subr.bf16.mxu0 0
    %1236 = vmatpush1.bf16.xpose.msra.mxu0 0
    %1237 = vmatprep.subr.bf16.mxu0 0
    %1238 = vmatpush1.bf16.xpose.msra.mxu0 0
    %1239 = vmatprep.subr.bf16.mxu0 0
    %1240 = vmatpush1.bf16.xpose.msra.mxu0 0
    %1241 = vmatprep.subr.bf16.mxu0 0
    %1242 = vmatpush1.bf16.xpose.msra.mxu0 0
    %1243 = vmatprep.subr.bf16.mxu0 0
    %1244 = vmatpush1.bf16.xpose.msra.mxu0 0
    %1245 = vmatprep.subr.bf16.mxu0 0
    %1246 = vmatpush1.bf16.xpose.msra.mxu0 0
    %1247 = vmatprep.subr.bf16.mxu0 0
    %1248 = vmatpush1.bf16.xpose.msra.mxu0 0
    %1249 = vmatprep.subr.bf16.mxu0 0
    %1250 = vmatpush1.bf16.xpose.msra.mxu0 0
    %1251 = vmatprep.subr.bf16.mxu0 0
    %1252 = vmatpush1.bf16.xpose.msra.mxu0 0
    %1253 = vmatprep.subr.bf16.mxu0 0
    %1254 = vmatpush1.bf16.xpose.msra.mxu0 0
    %1255 = vmatprep.subr.bf16.mxu0 0
    %1256 = vmatpush1.bf16.xpose.msra.mxu0 0
    %1257 = vmatprep.mubr.bf16.mxu0 0
    %1258 = vmatmul.mubr.bf16.gmra.mrb[0].mxu0 %v1220
    %v1259 = vpop.f32.mrb[0].mxu0
    %v1260 = vadd.f32 %v502, %v1259
    %v1261 = vpop.f32.mrb[0].mxu0
    %v1262 = vpop.f32.mrb[0].mxu0
    %v1263 = vadd.f32 %v503, %v1262
    %v1264 = vpop.f32.mrb[0].mxu0
    %1265 = vdwg.mxu0
    %v1266 = vsel %vm921, %v1260, -inf
    %1267 = vmax.xlane.f32.xlu0 %v1266
    %v1268 = vpop.xlane.xlu0 %1267
    %v1269 = vsel %vm925, %v1263, -inf
    %1270 = vmax.xlane.f32.xlu0 %v1269
    %v1271 = vpop.xlane.xlu0 %1270
    %v1272 = vsub.f32 %v1260, %v1268
    %v1273 = vsub.f32 %v1263, %v1271
    %v1274 = vmul.f32 %v1272, 1.442695
    %v1275 = vpow.pop %v1274
    %v1276 = vmul.f32 %v1273, 1.442695
    %v1277 = vpow.pop %v1276
    %v1278 = vsel %vm921, %v1275, 0.0
    %1279 = vadd.xlane.f32.xlu0 %v1278
    %v1280 = vpop.xlane.xlu0 %1279
    %v1281 = vsel %vm925, %v1277, 0.0
    %1282 = vadd.xlane.f32.xlu0 %v1281
    %v1283 = vpop.xlane.xlu0 %1282
    %v1284 = vrcp.pop %v1280
    %v1285 = vrcp.pop %v1283
    %v1286 = vmul.f32 %v1275, %v1284
    %v1287 = vmul.f32 %v1277, %v1285
    %v1288 = vpack.c.bf16 %v1287, %v1286
    %1289 = vrot.lane.b32.xlu0 %v946, 64
    %v1290 = vpop.permute.xlu0 %1289
    %v1292 = vsel %vm921, %v1288, 0
    %v1295 = vsel %vm950, %v1290, 0
    %1297 = vmatprep.subr.bf16.mxu0 0
    %1298 = vmatpush1.bf16.msra.mxu0 %v1295
    %1299 = vmatprep.subr.bf16.mxu0 0
    %1300 = vmatpush1.bf16.msra.mxu0 0
    %1301 = vmatprep.subr.bf16.mxu0 0
    %1302 = vmatpush1.bf16.msra.mxu0 0
    %1303 = vmatprep.subr.bf16.mxu0 0
    %1304 = vmatpush1.bf16.msra.mxu0 0
    %1305 = vmatprep.subr.bf16.mxu0 0
    %1306 = vmatpush1.bf16.msra.mxu0 0
    %1307 = vmatprep.subr.bf16.mxu0 0
    %1308 = vmatpush1.bf16.msra.mxu0 0
    %1309 = vmatprep.subr.bf16.mxu0 0
    %1310 = vmatpush1.bf16.msra.mxu0 0
    %1311 = vmatprep.subr.bf16.mxu0 0
    %1312 = vmatpush1.bf16.msra.mxu0 0
    %1313 = vmatprep.subr.bf16.mxu0 0
    %1314 = vmatpush1.bf16.msra.mxu0 0
    %1315 = vmatprep.subr.bf16.mxu0 0
    %1316 = vmatpush1.bf16.msra.mxu0 0
    %1317 = vmatprep.subr.bf16.mxu0 0
    %1318 = vmatpush1.bf16.msra.mxu0 0
    %1319 = vmatprep.subr.bf16.mxu0 0
    %1320 = vmatpush1.bf16.msra.mxu0 0
    %1321 = vmatprep.subr.bf16.mxu0 0
    %1322 = vmatpush1.bf16.msra.mxu0 0
    %1323 = vmatprep.subr.bf16.mxu0 0
    %1324 = vmatpush1.bf16.msra.mxu0 0
    %1325 = vmatprep.subr.bf16.mxu0 0
    %1326 = vmatpush1.bf16.msra.mxu0 0
    %1327 = vmatprep.subr.bf16.mxu0 0
    %1328 = vmatpush1.bf16.msra.mxu0 0
    %1329 = vmatprep.mubr.bf16.mxu0 0
    %1330 = vmatmul.mubr.bf16.gmra.mrb[0].mxu0 %v1292
    %v1331 = vpop.f32.mrb[0].mxu0
    %v1332 = vadd.f32 0.0, %v1331
    %v1333 = vpop.f32.mrb[0].mxu0
    %v1334 = vpop.f32.mrb[0].mxu0
    %v1335 = vadd.f32 0.0, %v1334
    %v1336 = vpop.f32.mrb[0].mxu0
    %1337 = vdwg.mxu0
    %v1338 = vpack.c.bf16 %v1335, %v1332
    %v1339 = vpack.c.bf16 %v564, %v563
    %v1340 = vpack.c.bf16 %v566, %v565
    %v1342 = vsel %vm873, %v1338, 0
    %1344 = vmatprep.subr.bf16.mxu0 0
    %1345 = vmatpush1.bf16.msra.mxu0 %v1339
    %1346 = vmatprep.subr.bf16.mxu0 0
    %1347 = vmatpush1.bf16.msra.mxu0 %v1340
    %1348 = vmatprep.subr.bf16.mxu0 0
    %1349 = vmatpush1.bf16.msra.mxu0 0
    %1350 = vmatprep.subr.bf16.mxu0 0
    %1351 = vmatpush1.bf16.msra.mxu0 0
    %1352 = vmatprep.subr.bf16.mxu0 0
    %1353 = vmatpush1.bf16.msra.mxu0 0
    %1354 = vmatprep.subr.bf16.mxu0 0
    %1355 = vmatpush1.bf16.msra.mxu0 0
    %1356 = vmatprep.subr.bf16.mxu0 0
    %1357 = vmatpush1.bf16.msra.mxu0 0
    %1358 = vmatprep.subr.bf16.mxu0 0
    %1359 = vmatpush1.bf16.msra.mxu0 0
    %1360 = vmatprep.subr.bf16.mxu0 0
    %1361 = vmatpush1.bf16.msra.mxu0 0
    %1362 = vmatprep.subr.bf16.mxu0 0
    %1363 = vmatpush1.bf16.msra.mxu0 0
    %1364 = vmatprep.subr.bf16.mxu0 0
    %1365 = vmatpush1.bf16.msra.mxu0 0
    %1366 = vmatprep.subr.bf16.mxu0 0
    %1367 = vmatpush1.bf16.msra.mxu0 0
    %1368 = vmatprep.subr.bf16.mxu0 0
    %1369 = vmatpush1.bf16.msra.mxu0 0
    %1370 = vmatprep.subr.bf16.mxu0 0
    %1371 = vmatpush1.bf16.msra.mxu0 0
    %1372 = vmatprep.subr.bf16.mxu0 0
    %1373 = vmatpush1.bf16.msra.mxu0 0
    %1374 = vmatprep.subr.bf16.mxu0 0
    %1375 = vmatpush1.bf16.msra.mxu0 0
    %1376 = vmatprep.mubr.bf16.mxu0 0
    %1377 = vmatmul.mubr.bf16.gmra.mrb[0].mxu0 %v1342
    %v1378 = vpop.f32.mrb[0].mxu0
    %v1379 = vadd.f32 0.0, %v1378
    %v1380 = vpop.f32.mrb[0].mxu0
    %v1381 = vpop.f32.mrb[0].mxu0
    %v1382 = vadd.f32 0.0, %v1381
    %v1383 = vpop.f32.mrb[0].mxu0
    %1384 = vdwg.mxu0
    %v1385 = vadd.f32 %v1209, %v1379
    %v1386 = vadd.f32 %v1212, %v1382
    %1387 = vrot.lane.b32.xlu0 %v871, 32
    %v1388 = vpop.permute.xlu0 %1387
    %1389 = vrot.lane.b32.xlu0 %v872, 32
    %v1390 = vpop.permute.xlu0 %1389
    %v1392 = vsel %vm873, %v1388, 0
    %v1395 = vsel %vm873, %v1390, 0
    %1397 = vmatprep.subr.bf16.mxu0 0
    %1398 = vmatpush1.bf16.xpose.msra.mxu0 %v1395
    %1399 = vmatprep.subr.bf16.mxu0 0
    %1400 = vmatpush1.bf16.xpose.msra.mxu0 0
    %1401 = vmatprep.subr.bf16.mxu0 0
    %1402 = vmatpush1.bf16.xpose.msra.mxu0 0
    %1403 = vmatprep.subr.bf16.mxu0 0
    %1404 = vmatpush1.bf16.xpose.msra.mxu0 0
    %1405 = vmatprep.subr.bf16.mxu0 0
    %1406 = vmatpush1.bf16.xpose.msra.mxu0 0
    %1407 = vmatprep.subr.bf16.mxu0 0
    %1408 = vmatpush1.bf16.xpose.msra.mxu0 0
    %1409 = vmatprep.subr.bf16.mxu0 0
    %1410 = vmatpush1.bf16.xpose.msra.mxu0 0
    %1411 = vmatprep.subr.bf16.mxu0 0
    %1412 = vmatpush1.bf16.xpose.msra.mxu0 0
    %1413 = vmatprep.subr.bf16.mxu0 0
    %1414 = vmatpush1.bf16.xpose.msra.mxu0 0
    %1415 = vmatprep.subr.bf16.mxu0 0
    %1416 = vmatpush1.bf16.xpose.msra.mxu0 0
    %1417 = vmatprep.subr.bf16.mxu0 0
    %1418 = vmatpush1.bf16.xpose.msra.mxu0 0
    %1419 = vmatprep.subr.bf16.mxu0 0
    %1420 = vmatpush1.bf16.xpose.msra.mxu0 0
    %1421 = vmatprep.subr.bf16.mxu0 0
    %1422 = vmatpush1.bf16.xpose.msra.mxu0 0
    %1423 = vmatprep.subr.bf16.mxu0 0
    %1424 = vmatpush1.bf16.xpose.msra.mxu0 0
    %1425 = vmatprep.subr.bf16.mxu0 0
    %1426 = vmatpush1.bf16.xpose.msra.mxu0 0
    %1427 = vmatprep.subr.bf16.mxu0 0
    %1428 = vmatpush1.bf16.xpose.msra.mxu0 0
    %1429 = vmatprep.mubr.bf16.mxu0 0
    %1430 = vmatmul.mubr.bf16.gmra.mrb[0].mxu0 %v1392
    %v1431 = vpop.f32.mrb[0].mxu0
    %v1432 = vadd.f32 %v502, %v1431
    %v1433 = vpop.f32.mrb[0].mxu0
    %v1434 = vpop.f32.mrb[0].mxu0
    %v1435 = vadd.f32 %v503, %v1434
    %v1436 = vpop.f32.mrb[0].mxu0
    %1437 = vdwg.mxu0
    %v1438 = vsel %vm921, %v1432, -inf
    %1439 = vmax.xlane.f32.xlu0 %v1438
    %v1440 = vpop.xlane.xlu0 %1439
    %v1441 = vsel %vm925, %v1435, -inf
    %1442 = vmax.xlane.f32.xlu0 %v1441
    %v1443 = vpop.xlane.xlu0 %1442
    %v1444 = vsub.f32 %v1432, %v1440
    %v1445 = vsub.f32 %v1435, %v1443
    %v1446 = vmul.f32 %v1444, 1.442695
    %v1447 = vpow.pop %v1446
    %v1448 = vmul.f32 %v1445, 1.442695
    %v1449 = vpow.pop %v1448
    %v1450 = vsel %vm921, %v1447, 0.0
    %1451 = vadd.xlane.f32.xlu0 %v1450
    %v1452 = vpop.xlane.xlu0 %1451
    %v1453 = vsel %vm925, %v1449, 0.0
    %1454 = vadd.xlane.f32.xlu0 %v1453
    %v1455 = vpop.xlane.xlu0 %1454
    %v1456 = vrcp.pop %v1452
    %v1457 = vrcp.pop %v1455
    %v1458 = vmul.f32 %v1447, %v1456
    %v1459 = vmul.f32 %v1449, %v1457
    %v1460 = vpack.c.bf16 %v1459, %v1458
    %1461 = vrot.lane.b32.xlu0 %v946, 32
    %v1462 = vpop.permute.xlu0 %1461
    %v1464 = vsel %vm921, %v1460, 0
    %v1467 = vsel %vm950, %v1462, 0
    %1469 = vmatprep.subr.bf16.mxu0 0
    %1470 = vmatpush1.bf16.msra.mxu0 %v1467
    %1471 = vmatprep.subr.bf16.mxu0 0
    %1472 = vmatpush1.bf16.msra.mxu0 0
    %1473 = vmatprep.subr.bf16.mxu0 0
    %1474 = vmatpush1.bf16.msra.mxu0 0
    %1475 = vmatprep.subr.bf16.mxu0 0
    %1476 = vmatpush1.bf16.msra.mxu0 0
    %1477 = vmatprep.subr.bf16.mxu0 0
    %1478 = vmatpush1.bf16.msra.mxu0 0
    %1479 = vmatprep.subr.bf16.mxu0 0
    %1480 = vmatpush1.bf16.msra.mxu0 0
    %1481 = vmatprep.subr.bf16.mxu0 0
    %1482 = vmatpush1.bf16.msra.mxu0 0
    %1483 = vmatprep.subr.bf16.mxu0 0
    %1484 = vmatpush1.bf16.msra.mxu0 0
    %1485 = vmatprep.subr.bf16.mxu0 0
    %1486 = vmatpush1.bf16.msra.mxu0 0
    %1487 = vmatprep.subr.bf16.mxu0 0
    %1488 = vmatpush1.bf16.msra.mxu0 0
    %1489 = vmatprep.subr.bf16.mxu0 0
    %1490 = vmatpush1.bf16.msra.mxu0 0
    %1491 = vmatprep.subr.bf16.mxu0 0
    %1492 = vmatpush1.bf16.msra.mxu0 0
    %1493 = vmatprep.subr.bf16.mxu0 0
    %1494 = vmatpush1.bf16.msra.mxu0 0
    %1495 = vmatprep.subr.bf16.mxu0 0
    %1496 = vmatpush1.bf16.msra.mxu0 0
    %1497 = vmatprep.subr.bf16.mxu0 0
    %1498 = vmatpush1.bf16.msra.mxu0 0
    %1499 = vmatprep.subr.bf16.mxu0 0
    %1500 = vmatpush1.bf16.msra.mxu0 0
    %1501 = vmatprep.mubr.bf16.mxu0 0
    %1502 = vmatmul.mubr.bf16.gmra.mrb[0].mxu0 %v1464
    %v1503 = vpop.f32.mrb[0].mxu0
    %v1504 = vadd.f32 0.0, %v1503
    %v1505 = vpop.f32.mrb[0].mxu0
    %v1506 = vpop.f32.mrb[0].mxu0
    %v1507 = vadd.f32 0.0, %v1506
    %v1508 = vpop.f32.mrb[0].mxu0
    %1509 = vdwg.mxu0
    %v1510 = vpack.c.bf16 %v1507, %v1504
    %v1511 = vpack.c.bf16 %v568, %v567
    %v1512 = vpack.c.bf16 %v570, %v569
    %v1514 = vsel %vm873, %v1510, 0
    %1516 = vmatprep.subr.bf16.mxu0 0
    %1517 = vmatpush1.bf16.msra.mxu0 %v1511
    %1518 = vmatprep.subr.bf16.mxu0 0
    %1519 = vmatpush1.bf16.msra.mxu0 %v1512
    %1520 = vmatprep.subr.bf16.mxu0 0
    %1521 = vmatpush1.bf16.msra.mxu0 0
    %1522 = vmatprep.subr.bf16.mxu0 0
    %1523 = vmatpush1.bf16.msra.mxu0 0
    %1524 = vmatprep.subr.bf16.mxu0 0
    %1525 = vmatpush1.bf16.msra.mxu0 0
    %1526 = vmatprep.subr.bf16.mxu0 0
    %1527 = vmatpush1.bf16.msra.mxu0 0
    %1528 = vmatprep.subr.bf16.mxu0 0
    %1529 = vmatpush1.bf16.msra.mxu0 0
    %1530 = vmatprep.subr.bf16.mxu0 0
    %1531 = vmatpush1.bf16.msra.mxu0 0
    %1532 = vmatprep.subr.bf16.mxu0 0
    %1533 = vmatpush1.bf16.msra.mxu0 0
    %1534 = vmatprep.subr.bf16.mxu0 0
    %1535 = vmatpush1.bf16.msra.mxu0 0
    %1536 = vmatprep.subr.bf16.mxu0 0
    %1537 = vmatpush1.bf16.msra.mxu0 0
    %1538 = vmatprep.subr.bf16.mxu0 0
    %1539 = vmatpush1.bf16.msra.mxu0 0
    %1540 = vmatprep.subr.bf16.mxu0 0
    %1541 = vmatpush1.bf16.msra.mxu0 0
    %1542 = vmatprep.subr.bf16.mxu0 0
    %1543 = vmatpush1.bf16.msra.mxu0 0
    %1544 = vmatprep.subr.bf16.mxu0 0
    %1545 = vmatpush1.bf16.msra.mxu0 0
    %1546 = vmatprep.subr.bf16.mxu0 0
    %1547 = vmatpush1.bf16.msra.mxu0 0
    %1548 = vmatprep.mubr.bf16.mxu0 0
    %1549 = vmatmul.mubr.bf16.gmra.mrb[0].mxu0 %v1514
    %v1550 = vpop.f32.mrb[0].mxu0
    %v1551 = vadd.f32 0.0, %v1550
    %v1552 = vpop.f32.mrb[0].mxu0
    %v1553 = vpop.f32.mrb[0].mxu0
    %v1554 = vadd.f32 0.0, %v1553
    %v1555 = vpop.f32.mrb[0].mxu0
    %1556 = vdwg.mxu0
    %v1557 = vadd.f32 %v1385, %v1551
    %v1558 = vadd.f32 %v1386, %v1554
    %v1559 = vadd.f32 %v471, %v1557
    %v1560 = vadd.f32 %v472, %v1558
    %v1562 = vlaneseq
    %v1563 = vshrl.u32 %v1562, 7
    %v1564 = vsub.s32 0, %v1563
    %v1565 = vrot.slane %v571, %v1564
    %v1567 = vadd.f32 %v1559, %v1565
    %v1568 = vadd.f32 %v1560, %v1565
    %1569 = vadd.xlane.f32.xlu0 %v1567
    %v1570 = vpop.xlane.xlu0 %1569
    %v1571 = vsel %vm433, %v1568, 0.0
    %1572 = vadd.xlane.f32.xlu0 %v1571
    %v1573 = vpop.xlane.xlu0 %1572
    %v1574 = vmul.f32 %v1570, %v437
    %v1575 = vmul.f32 %v1573, %v437
    %v1576 = vsub.f32 %v1567, %v1574
    %v1577 = vsub.f32 %v1568, %v1575
    %v1578 = vmul.f32 %v1576, %v1576
    %v1579 = vmul.f32 %v1577, %v1577
    %1580 = vadd.xlane.f32.xlu0 %v1578
    %v1581 = vpop.xlane.xlu0 %1580
    %v1582 = vsel %vm433, %v1579, 0.0
    %1583 = vadd.xlane.f32.xlu0 %v1582
    %v1584 = vpop.xlane.xlu0 %1583
    %v1585 = vmul.f32 %v1581, %v437
    %v1586 = vmul.f32 %v1584, %v437
    %v1587 = vadd.f32 %v1585, 1e-05
    %v1588 = vadd.f32 %v1586, 1e-05
    %v1589 = vrsqrt.pop %v1587
    %v1590 = vrsqrt.pop %v1588
    %v1591 = vmul.f32 %v1576, %v1589
    %v1592 = vmul.f32 %v1577, %v1590
    %v1594 = vlaneseq
    %v1595 = vshrl.u32 %v1594, 7
    %v1596 = vsub.s32 0, %v1595
    %v1597 = vrot.slane %v572, %v1596
    %v1599 = vmul.f32 %v1591, %v1597
    %v1600 = vmul.f32 %v1592, %v1597
    %v1602 = vlaneseq
    %v1603 = vshrl.u32 %v1602, 7
    %v1604 = vsub.s32 0, %v1603
    %v1605 = vrot.slane %v573, %v1604
    %v1607 = vadd.f32 %v1599, %v1605
    %v1608 = vadd.f32 %v1600, %v1605
    %v1609 = vpack.c.bf16 %v1608, %v1607
    %v1610 = vpack.c.bf16 %v578, %v574
    %v1611 = vpack.c.bf16 %v579, %v575
    %v1612 = vpack.c.bf16 %v580, %v576
    %v1613 = vpack.c.bf16 %v581, %v577
    %v1614 = vpack.c.bf16 %v586, %v582
    %v1615 = vpack.c.bf16 %v587, %v583
    %v1616 = vpack.c.bf16 %v588, %v584
    %v1617 = vpack.c.bf16 %v589, %v585
    %v1618 = vpack.c.bf16 %v594, %v590
    %v1619 = vpack.c.bf16 %v595, %v591
    %v1620 = vpack.c.bf16 %v596, %v592
    %v1621 = vpack.c.bf16 %v597, %v593
    %v1622 = vpack.c.bf16 %v602, %v598
    %v1623 = vpack.c.bf16 %v603, %v599
    %v1624 = vpack.c.bf16 %v604, %v600
    %v1625 = vpack.c.bf16 %v605, %v601
    %v1626 = vpack.c.bf16 %v610, %v606
    %v1627 = vpack.c.bf16 %v611, %v607
    %v1628 = vpack.c.bf16 %v612, %v608
    %v1629 = vpack.c.bf16 %v613, %v609
    %v1630 = vpack.c.bf16 %v618, %v614
    %v1631 = vpack.c.bf16 %v619, %v615
    %v1632 = vpack.c.bf16 %v620, %v616
    %v1633 = vpack.c.bf16 %v621, %v617
    %v1634 = vpack.c.bf16 %v626, %v622
    %v1635 = vpack.c.bf16 %v627, %v623
    %v1636 = vpack.c.bf16 %v628, %v624
    %v1637 = vpack.c.bf16 %v629, %v625
    %v1638 = vpack.c.bf16 %v634, %v630
    %v1639 = vpack.c.bf16 %v635, %v631
    %v1640 = vpack.c.bf16 %v636, %v632
    %v1641 = vpack.c.bf16 %v637, %v633
    %v1643 = vlaneseq
    %v1644 = vshrl.u32 %v1643, 7
    %v1645 = vsub.s32 0, %v1644
    %v1646 = vrot.slane %v638, %v1645
    %v1647 = vlaneseq
    %v1648 = vshrl.u32 %v1647, 7
    %v1649 = vsub.s32 1, %v1648
    %v1650 = vrot.slane %v638, %v1649
    %v1651 = vlaneseq
    %v1652 = vshrl.u32 %v1651, 7
    %v1653 = vsub.s32 2, %v1652
    %v1654 = vrot.slane %v638, %v1653
    %v1655 = vlaneseq
    %v1656 = vshrl.u32 %v1655, 7
    %v1657 = vsub.s32 3, %v1656
    %v1658 = vrot.slane %v638, %v1657
    %1663 = vmatprep.subr.bf16.mxu0 %v1611
    %1664 = vmatpush1.bf16.msra.mxu0 %v1610
    %1665 = vmatprep.subr.bf16.mxu0 %v1615
    %1666 = vmatpush1.bf16.msra.mxu0 %v1614
    %1667 = vmatprep.subr.bf16.mxu0 %v1619
    %1668 = vmatpush1.bf16.msra.mxu0 %v1618
    %1669 = vmatprep.subr.bf16.mxu0 %v1623
    %1670 = vmatpush1.bf16.msra.mxu0 %v1622
    %1671 = vmatprep.subr.bf16.mxu0 %v1627
    %1672 = vmatpush1.bf16.msra.mxu0 %v1626
    %1673 = vmatprep.subr.bf16.mxu0 %v1631
    %1674 = vmatpush1.bf16.msra.mxu0 %v1630
    %1675 = vmatprep.subr.bf16.mxu0 %v1635
    %1676 = vmatpush1.bf16.msra.mxu0 %v1634
    %1677 = vmatprep.subr.bf16.mxu0 %v1639
    %1678 = vmatpush1.bf16.msra.mxu0 %v1638
    %1679 = vmatprep.subr.bf16.mxu0 0
    %1680 = vmatpush1.bf16.msra.mxu0 0
    %1681 = vmatprep.subr.bf16.mxu0 0
    %1682 = vmatpush1.bf16.msra.mxu0 0
    %1683 = vmatprep.subr.bf16.mxu0 0
    %1684 = vmatpush1.bf16.msra.mxu0 0
    %1685 = vmatprep.subr.bf16.mxu0 0
    %1686 = vmatpush1.bf16.msra.mxu0 0
    %1687 = vmatprep.subr.bf16.mxu0 0
    %1688 = vmatpush1.bf16.msra.mxu0 0
    %1689 = vmatprep.subr.bf16.mxu0 0
    %1690 = vmatpush1.bf16.msra.mxu0 0
    %1691 = vmatprep.subr.bf16.mxu0 0
    %1692 = vmatpush1.bf16.msra.mxu0 0
    %1693 = vmatprep.subr.bf16.mxu0 0
    %1694 = vmatpush1.bf16.msra.mxu0 0
    %1695 = vmatprep.mubr.bf16.mxu0 0
    %1696 = vmatmul.mubr.bf16.gmra.mrb[0].mxu0 %v1609
    %v1697 = vpop.f32.mrb[0].mxu0
    %v1698 = vadd.f32 %v1646, %v1697
    %v1699 = vpop.f32.mrb[0].mxu0
    %v1700 = vadd.f32 %v1650, %v1699
    %v1701 = vpop.f32.mrb[0].mxu0
    %v1702 = vadd.f32 %v1646, %v1701
    %v1703 = vpop.f32.mrb[0].mxu0
    %v1704 = vadd.f32 %v1650, %v1703
    %1705 = vdwg.mxu0
    %1706 = vmatprep.subr.bf16.mxu0 %v1613
    %1707 = vmatpush1.bf16.msra.mxu0 %v1612
    %1708 = vmatprep.subr.bf16.mxu0 %v1617
    %1709 = vmatpush1.bf16.msra.mxu0 %v1616
    %1710 = vmatprep.subr.bf16.mxu0 %v1621
    %1711 = vmatpush1.bf16.msra.mxu0 %v1620
    %1712 = vmatprep.subr.bf16.mxu0 %v1625
    %1713 = vmatpush1.bf16.msra.mxu0 %v1624
    %1714 = vmatprep.subr.bf16.mxu0 %v1629
    %1715 = vmatpush1.bf16.msra.mxu0 %v1628
    %1716 = vmatprep.subr.bf16.mxu0 %v1633
    %1717 = vmatpush1.bf16.msra.mxu0 %v1632
    %1718 = vmatprep.subr.bf16.mxu0 %v1637
    %1719 = vmatpush1.bf16.msra.mxu0 %v1636
    %1720 = vmatprep.subr.bf16.mxu0 %v1641
    %1721 = vmatpush1.bf16.msra.mxu0 %v1640
    %1722 = vmatprep.subr.bf16.mxu0 0
    %1723 = vmatpush1.bf16.msra.mxu0 0
    %1724 = vmatprep.subr.bf16.mxu0 0
    %1725 = vmatpush1.bf16.msra.mxu0 0
    %1726 = vmatprep.subr.bf16.mxu0 0
    %1727 = vmatpush1.bf16.msra.mxu0 0
    %1728 = vmatprep.subr.bf16.mxu0 0
    %1729 = vmatpush1.bf16.msra.mxu0 0
    %1730 = vmatprep.subr.bf16.mxu0 0
    %1731 = vmatpush1.bf16.msra.mxu0 0
    %1732 = vmatprep.subr.bf16.mxu0 0
    %1733 = vmatpush1.bf16.msra.mxu0 0
    %1734 = vmatprep.subr.bf16.mxu0 0
    %1735 = vmatpush1.bf16.msra.mxu0 0
    %1736 = vmatprep.subr.bf16.mxu0 0
    %1737 = vmatpush1.bf16.msra.mxu0 0
    %1738 = vmatprep.mubr.bf16.mxu0 0
    %1739 = vmatmul.mubr.bf16.gmra.mrb[0].mxu0 %v1609
    %v1740 = vpop.f32.mrb[0].mxu0
    %v1741 = vadd.f32 %v1654, %v1740
    %v1742 = vpop.f32.mrb[0].mxu0
    %v1743 = vadd.f32 %v1658, %v1742
    %v1744 = vpop.f32.mrb[0].mxu0
    %v1745 = vadd.f32 %v1654, %v1744
    %v1746 = vpop.f32.mrb[0].mxu0
    %v1747 = vadd.f32 %v1658, %v1746
    %1748 = vdwg.mxu0
    %v1749 = vmul.f32 %v1698, %v1698
    %v1750 = vmul.f32 %v1700, %v1700
    %v1751 = vmul.f32 %v1741, %v1741
    %v1752 = vmul.f32 %v1743, %v1743
    %v1753 = vmul.f32 %v1702, %v1702
    %v1754 = vmul.f32 %v1704, %v1704
    %v1755 = vmul.f32 %v1745, %v1745
    %v1756 = vmul.f32 %v1747, %v1747
    %v1757 = vmul.f32 %v1698, %v1749
    %v1758 = vmul.f32 %v1700, %v1750
    %v1759 = vmul.f32 %v1741, %v1751
    %v1760 = vmul.f32 %v1743, %v1752
    %v1761 = vmul.f32 %v1702, %v1753
    %v1762 = vmul.f32 %v1704, %v1754
    %v1763 = vmul.f32 %v1745, %v1755
    %v1764 = vmul.f32 %v1747, %v1756
    %v1765 = vmul.f32 %v1757, 0.044715
    %v1766 = vmul.f32 %v1758, 0.044715
    %v1767 = vmul.f32 %v1759, 0.044715
    %v1768 = vmul.f32 %v1760, 0.044715
    %v1769 = vmul.f32 %v1761, 0.044715
    %v1770 = vmul.f32 %v1762, 0.044715
    %v1771 = vmul.f32 %v1763, 0.044715
    %v1772 = vmul.f32 %v1764, 0.044715
    %v1773 = vadd.f32 %v1698, %v1765
    %v1774 = vadd.f32 %v1700, %v1766
    %v1775 = vadd.f32 %v1741, %v1767
    %v1776 = vadd.f32 %v1743, %v1768
    %v1777 = vadd.f32 %v1702, %v1769
    %v1778 = vadd.f32 %v1704, %v1770
    %v1779 = vadd.f32 %v1745, %v1771
    %v1780 = vadd.f32 %v1747, %v1772
    %v1781 = vmul.f32 %v1773, 0.7978846
    %v1782 = vmul.f32 %v1774, 0.7978846
    %v1783 = vmul.f32 %v1775, 0.7978846
    %v1784 = vmul.f32 %v1776, 0.7978846
    %v1785 = vmul.f32 %v1777, 0.7978846
    %v1786 = vmul.f32 %v1778, 0.7978846
    %v1787 = vmul.f32 %v1779, 0.7978846
    %v1788 = vmul.f32 %v1780, 0.7978846
    %v1789 = vtanh.pop %v1781
    %v1790 = vtanh.pop %v1782
    %v1791 = vtanh.pop %v1783
    %v1792 = vtanh.pop %v1784
    %v1793 = vtanh.pop %v1785
    %v1794 = vtanh.pop %v1786
    %v1795 = vtanh.pop %v1787
    %v1796 = vtanh.pop %v1788
    %v1797 = vadd.f32 %v1789, 1.0
    %v1798 = vadd.f32 %v1790, 1.0
    %v1799 = vadd.f32 %v1791, 1.0
    %v1800 = vadd.f32 %v1792, 1.0
    %v1801 = vadd.f32 %v1793, 1.0
    %v1802 = vadd.f32 %v1794, 1.0
    %v1803 = vadd.f32 %v1795, 1.0
    %v1804 = vadd.f32 %v1796, 1.0
    %v1805 = vmul.f32 %v1797, 0.5
    %v1806 = vmul.f32 %v1798, 0.5
    %v1807 = vmul.f32 %v1799, 0.5
    %v1808 = vmul.f32 %v1800, 0.5
    %v1809 = vmul.f32 %v1801, 0.5
    %v1810 = vmul.f32 %v1802, 0.5
    %v1811 = vmul.f32 %v1803, 0.5
    %v1812 = vmul.f32 %v1804, 0.5
    %v1813 = vmul.f32 %v1698, %v1805
    %v1814 = vmul.f32 %v1700, %v1806
    %v1815 = vmul.f32 %v1741, %v1807
    %v1816 = vmul.f32 %v1743, %v1808
    %v1817 = vmul.f32 %v1702, %v1809
    %v1818 = vmul.f32 %v1704, %v1810
    %v1819 = vmul.f32 %v1745, %v1811
    %v1820 = vmul.f32 %v1747, %v1812
    %v1821 = vpack.c.bf16 %v1817, %v1813
    %v1822 = vpack.c.bf16 %v1818, %v1814
    %v1823 = vpack.c.bf16 %v1819, %v1815
    %v1824 = vpack.c.bf16 %v1820, %v1816
    %v1825 = vpack.c.bf16 %v640, %v639
    %v1826 = vpack.c.bf16 %v642, %v641
    %v1827 = vpack.c.bf16 %v644, %v643
    %v1828 = vpack.c.bf16 %v646, %v645
    %v1829 = vpack.c.bf16 %v648, %v647
    %v1830 = vpack.c.bf16 %v650, %v649
    %v1831 = vpack.c.bf16 %v652, %v651
    %v1832 = vpack.c.bf16 %v654, %v653
    %v1833 = vpack.c.bf16 %v656, %v655
    %v1834 = vpack.c.bf16 %v658, %v657
    %v1835 = vpack.c.bf16 %v660, %v659
    %v1836 = vpack.c.bf16 %v662, %v661
    %v1837 = vpack.c.bf16 %v664, %v663
    %v1838 = vpack.c.bf16 %v666, %v665
    %v1839 = vpack.c.bf16 %v668, %v667
    %v1840 = vpack.c.bf16 %v670, %v669
    %v1841 = vpack.c.bf16 %v672, %v671
    %v1842 = vpack.c.bf16 %v674, %v673
    %v1843 = vpack.c.bf16 %v676, %v675
    %v1844 = vpack.c.bf16 %v678, %v677
    %v1845 = vpack.c.bf16 %v680, %v679
    %v1846 = vpack.c.bf16 %v682, %v681
    %v1847 = vpack.c.bf16 %v684, %v683
    %v1848 = vpack.c.bf16 %v686, %v685
    %v1849 = vpack.c.bf16 %v688, %v687
    %v1850 = vpack.c.bf16 %v690, %v689
    %v1851 = vpack.c.bf16 %v692, %v691
    %v1852 = vpack.c.bf16 %v694, %v693
    %v1853 = vpack.c.bf16 %v696, %v695
    %v1854 = vpack.c.bf16 %v698, %v697
    %v1855 = vpack.c.bf16 %v700, %v699
    %v1856 = vpack.c.bf16 %v702, %v701
    %v1858 = vlaneseq
    %v1859 = vshrl.u32 %v1858, 7
    %v1860 = vsub.s32 0, %v1859
    %v1861 = vrot.slane %v703, %v1860
    %1863 = vmatprep.subr.bf16.mxu0 0
    %1864 = vmatpush1.bf16.msra.mxu0 %v1825
    %1865 = vmatprep.subr.bf16.mxu0 0
    %1866 = vmatpush1.bf16.msra.mxu0 %v1826
    %1867 = vmatprep.subr.bf16.mxu0 0
    %1868 = vmatpush1.bf16.msra.mxu0 %v1827
    %1869 = vmatprep.subr.bf16.mxu0 0
    %1870 = vmatpush1.bf16.msra.mxu0 %v1828
    %1871 = vmatprep.subr.bf16.mxu0 0
    %1872 = vmatpush1.bf16.msra.mxu0 %v1829
    %1873 = vmatprep.subr.bf16.mxu0 0
    %1874 = vmatpush1.bf16.msra.mxu0 %v1830
    %1875 = vmatprep.subr.bf16.mxu0 0
    %1876 = vmatpush1.bf16.msra.mxu0 %v1831
    %1877 = vmatprep.subr.bf16.mxu0 0
    %1878 = vmatpush1.bf16.msra.mxu0 %v1832
    %1879 = vmatprep.subr.bf16.mxu0 0
    %1880 = vmatpush1.bf16.msra.mxu0 %v1833
    %1881 = vmatprep.subr.bf16.mxu0 0
    %1882 = vmatpush1.bf16.msra.mxu0 %v1834
    %1883 = vmatprep.subr.bf16.mxu0 0
    %1884 = vmatpush1.bf16.msra.mxu0 %v1835
    %1885 = vmatprep.subr.bf16.mxu0 0
    %1886 = vmatpush1.bf16.msra.mxu0 %v1836
    %1887 = vmatprep.subr.bf16.mxu0 0
    %1888 = vmatpush1.bf16.msra.mxu0 %v1837
    %1889 = vmatprep.subr.bf16.mxu0 0
    %1890 = vmatpush1.bf16.msra.mxu0 %v1838
    %1891 = vmatprep.subr.bf16.mxu0 0
    %1892 = vmatpush1.bf16.msra.mxu0 %v1839
    %1893 = vmatprep.subr.bf16.mxu0 0
    %1894 = vmatpush1.bf16.msra.mxu0 %v1840
    %1895 = vmatprep.mubr.bf16.mxu0 %v1822
    %1896 = vmatmul.mubr.bf16.gmra.mrb[0].mxu0 %v1821
    %v1897 = vpop.f32.mrb[0].mxu0
    %v1898 = vadd.f32 %v1861, %v1897
    %v1899 = vpop.f32.mrb[0].mxu0
    %v1900 = vpop.f32.mrb[0].mxu0
    %v1901 = vadd.f32 %v1861, %v1900
    %v1902 = vpop.f32.mrb[0].mxu0
    %1903 = vdwg.mxu0
    %1904 = vmatprep.subr.bf16.mxu0 0
    %1905 = vmatpush1.bf16.msra.mxu0 %v1841
    %1906 = vmatprep.subr.bf16.mxu0 0
    %1907 = vmatpush1.bf16.msra.mxu0 %v1842
    %1908 = vmatprep.subr.bf16.mxu0 0
    %1909 = vmatpush1.bf16.msra.mxu0 %v1843
    %1910 = vmatprep.subr.bf16.mxu0 0
    %1911 = vmatpush1.bf16.msra.mxu0 %v1844
    %1912 = vmatprep.subr.bf16.mxu0 0
    %1913 = vmatpush1.bf16.msra.mxu0 %v1845
    %1914 = vmatprep.subr.bf16.mxu0 0
    %1915 = vmatpush1.bf16.msra.mxu0 %v1846
    %1916 = vmatprep.subr.bf16.mxu0 0
    %1917 = vmatpush1.bf16.msra.mxu0 %v1847
    %1918 = vmatprep.subr.bf16.mxu0 0
    %1919 = vmatpush1.bf16.msra.mxu0 %v1848
    %1920 = vmatprep.subr.bf16.mxu0 0
    %1921 = vmatpush1.bf16.msra.mxu0 %v1849
    %1922 = vmatprep.subr.bf16.mxu0 0
    %1923 = vmatpush1.bf16.msra.mxu0 %v1850
    %1924 = vmatprep.subr.bf16.mxu0 0
    %1925 = vmatpush1.bf16.msra.mxu0 %v1851
    %1926 = vmatprep.subr.bf16.mxu0 0
    %1927 = vmatpush1.bf16.msra.mxu0 %v1852
    %1928 = vmatprep.subr.bf16.mxu0 0
    %1929 = vmatpush1.bf16.msra.mxu0 %v1853
    %1930 = vmatprep.subr.bf16.mxu0 0
    %1931 = vmatpush1.bf16.msra.mxu0 %v1854
    %1932 = vmatprep.subr.bf16.mxu0 0
    %1933 = vmatpush1.bf16.msra.mxu0 %v1855
    %1934 = vmatprep.subr.bf16.mxu0 0
    %1935 = vmatpush1.bf16.msra.mxu0 %v1856
    %1936 = vmatprep.mubr.bf16.mxu0 %v1824
    %1937 = vmatmul.mubr.bf16.gmra.mrb[0].mxu0 %v1823
    %v1938 = vpop.f32.mrb[0].mxu0
    %v1939 = vadd.f32 %v1898, %v1938
    %v1940 = vpop.f32.mrb[0].mxu0
    %v1941 = vpop.f32.mrb[0].mxu0
    %v1942 = vadd.f32 %v1901, %v1941
    %v1943 = vpop.f32.mrb[0].mxu0
    %1944 = vdwg.mxu0
    %v1945 = vadd.f32 %v1567, %v1939
    %v1946 = vadd.f32 %v1568, %v1942
    %s1947 = scalar_lea.vmem %s5, 1
    %v1948 = vld [vmem:[%s1947] sm:$0x1]
    %s1949 = scalar_lea.vmem %s6, 1
    %v1950 = vld [vmem:[%s1949] sm:$0x1]
    %s1951 = scalar_lea.vmem [#allocation6], 384
    %v1952 = vld [vmem:[%s1951] sm:$0xff]
    %v1953 = vld [vmem:[%s1951 + $0x8] sm:$0xff]
    %v1954 = vld [vmem:[%s1951 + $0x10] sm:$0xff]
    %v1955 = vld [vmem:[%s1951 + $0x18] sm:$0xff]
    %v1956 = vld [vmem:[%s1951 + $0x20] sm:$0xff]
    %v1957 = vld [vmem:[%s1951 + $0x28] sm:$0xff]
    %v1958 = vld [vmem:[%s1951 + $0x30] sm:$0xff]
    %v1959 = vld [vmem:[%s1951 + $0x38] sm:$0xff]
    %v1960 = vld [vmem:[%s1951 + $0x40] sm:$0xff]
    %v1961 = vld [vmem:[%s1951 + $0x48] sm:$0xff]
    %v1962 = vld [vmem:[%s1951 + $0x50] sm:$0xff]
    %v1963 = vld [vmem:[%s1951 + $0x58] sm:$0xff]
    %v1964 = vld [vmem:[%s1951 + $0x60] sm:$0xff]
    %v1965 = vld [vmem:[%s1951 + $0x68] sm:$0xff]
    %v1966 = vld [vmem:[%s1951 + $0x70] sm:$0xff]
    %v1967 = vld [vmem:[%s1951 + $0x78] sm:$0xff]
    %v1968 = vld [vmem:[%s1951 + $0x80] sm:$0xff]
    %v1969 = vld [vmem:[%s1951 + $0x88] sm:$0xff]
    %v1970 = vld [vmem:[%s1951 + $0x90] sm:$0xff]
    %v1971 = vld [vmem:[%s1951 + $0x98] sm:$0xff]
    %v1972 = vld [vmem:[%s1951 + $0xa0] sm:$0xff]
    %v1973 = vld [vmem:[%s1951 + $0xa8] sm:$0xff]
    %v1974 = vld [vmem:[%s1951 + $0xb0] sm:$0xff]
    %v1975 = vld [vmem:[%s1951 + $0xb8] sm:$0xff]
    %v1976 = vld [vmem:[%s1951 + $0xc0] sm:$0xff]
    %v1977 = vld [vmem:[%s1951 + $0xc8] sm:$0xff]
    %v1978 = vld [vmem:[%s1951 + $0xd0] sm:$0xff]
    %v1979 = vld [vmem:[%s1951 + $0xd8] sm:$0xff]
    %v1980 = vld [vmem:[%s1951 + $0xe0] sm:$0xff]
    %v1981 = vld [vmem:[%s1951 + $0xe8] sm:$0xff]
    %v1982 = vld [vmem:[%s1951 + $0xf0] sm:$0xff]
    %v1983 = vld [vmem:[%s1951 + $0xf8] sm:$0xff]
    %v1984 = vld [vmem:[%s1951 + $0x100] sm:$0xff]
    %v1985 = vld [vmem:[%s1951 + $0x108] sm:$0xff]
    %v1986 = vld [vmem:[%s1951 + $0x110] sm:$0xff]
    %v1987 = vld [vmem:[%s1951 + $0x118] sm:$0xff]
    %v1988 = vld [vmem:[%s1951 + $0x120] sm:$0xff]
    %v1989 = vld [vmem:[%s1951 + $0x128] sm:$0xff]
    %v1990 = vld [vmem:[%s1951 + $0x130] sm:$0xff]
    %v1991 = vld [vmem:[%s1951 + $0x138] sm:$0xff]
    %v1992 = vld [vmem:[%s1951 + $0x140] sm:$0xff]
    %v1993 = vld [vmem:[%s1951 + $0x148] sm:$0xff]
    %v1994 = vld [vmem:[%s1951 + $0x150] sm:$0xff]
    %v1995 = vld [vmem:[%s1951 + $0x158] sm:$0xff]
    %v1996 = vld [vmem:[%s1951 + $0x160] sm:$0xff]
    %v1997 = vld [vmem:[%s1951 + $0x168] sm:$0xff]
    %v1998 = vld [vmem:[%s1951 + $0x170] sm:$0xff]
    %v1999 = vld [vmem:[%s1951 + $0x178] sm:$0xff]
    %s2000 = scalar_lea.vmem %s8, 3
    %v2001 = vld [vmem:[%s2000] sm:$0x7]
    %s2002 = scalar_lea.vmem [#allocation7], 128
    %v2003 = vld [vmem:[%s2002] sm:$0xff]
    %v2004 = vld [vmem:[%s2002 + $0x8] sm:$0xff]
    %v2005 = vld [vmem:[%s2002 + $0x10] sm:$0xff]
    %v2006 = vld [vmem:[%s2002 + $0x18] sm:$0xff]
    %v2007 = vld [vmem:[%s2002 + $0x20] sm:$0xff]
    %v2008 = vld [vmem:[%s2002 + $0x28] sm:$0xff]
    %v2009 = vld [vmem:[%s2002 + $0x30] sm:$0xff]
    %v2010 = vld [vmem:[%s2002 + $0x38] sm:$0xff]
    %v2011 = vld [vmem:[%s2002 + $0x40] sm:$0xff]
    %v2012 = vld [vmem:[%s2002 + $0x48] sm:$0xff]
    %v2013 = vld [vmem:[%s2002 + $0x50] sm:$0xff]
    %v2014 = vld [vmem:[%s2002 + $0x58] sm:$0xff]
    %v2015 = vld [vmem:[%s2002 + $0x60] sm:$0xff]
    %v2016 = vld [vmem:[%s2002 + $0x68] sm:$0xff]
    %v2017 = vld [vmem:[%s2002 + $0x70] sm:$0xff]
    %v2018 = vld [vmem:[%s2002 + $0x78] sm:$0xff]
    %s2019 = scalar_lea.vmem %s10, 1
    %v2020 = vld [vmem:[%s2019] sm:$0x1]
    %s2021 = scalar_lea.vmem %s11, 1
    %v2022 = vld [vmem:[%s2021] sm:$0x1]
    %s2023 = scalar_lea.vmem %s12, 1
    %v2024 = vld [vmem:[%s2023] sm:$0x1]
    %s2025 = scalar_lea.vmem %s13, 512
    %v2026 = vld [vmem:[%s2025] sm:$0xff]
    %v2027 = vld [vmem:[%s2025 + $0x8] sm:$0xff]
    %v2028 = vld [vmem:[%s2025 + $0x10] sm:$0xff]
    %v2029 = vld [vmem:[%s2025 + $0x18] sm:$0xff]
    %v2030 = vld [vmem:[%s2025 + $0x20] sm:$0xff]
    %v2031 = vld [vmem:[%s2025 + $0x28] sm:$0xff]
    %v2032 = vld [vmem:[%s2025 + $0x30] sm:$0xff]
    %v2033 = vld [vmem:[%s2025 + $0x38] sm:$0xff]
    %v2034 = vld [vmem:[%s2025 + $0x40] sm:$0xff]
    %v2035 = vld [vmem:[%s2025 + $0x48] sm:$0xff]
    %v2036 = vld [vmem:[%s2025 + $0x50] sm:$0xff]
    %v2037 = vld [vmem:[%s2025 + $0x58] sm:$0xff]
    %v2038 = vld [vmem:[%s2025 + $0x60] sm:$0xff]
    %v2039 = vld [vmem:[%s2025 + $0x68] sm:$0xff]
    %v2040 = vld [vmem:[%s2025 + $0x70] sm:$0xff]
    %v2041 = vld [vmem:[%s2025 + $0x78] sm:$0xff]
    %v2042 = vld [vmem:[%s2025 + $0x80] sm:$0xff]
    %v2043 = vld [vmem:[%s2025 + $0x88] sm:$0xff]
    %v2044 = vld [vmem:[%s2025 + $0x90] sm:$0xff]
    %v2045 = vld [vmem:[%s2025 + $0x98] sm:$0xff]
    %v2046 = vld [vmem:[%s2025 + $0xa0] sm:$0xff]
    %v2047 = vld [vmem:[%s2025 + $0xa8] sm:$0xff]
    %v2048 = vld [vmem:[%s2025 + $0xb0] sm:$0xff]
    %v2049 = vld [vmem:[%s2025 + $0xb8] sm:$0xff]
    %v2050 = vld [vmem:[%s2025 + $0xc0] sm:$0xff]
    %v2051 = vld [vmem:[%s2025 + $0xc8] sm:$0xff]
    %v2052 = vld [vmem:[%s2025 + $0xd0] sm:$0xff]
    %v2053 = vld [vmem:[%s2025 + $0xd8] sm:$0xff]
    %v2054 = vld [vmem:[%s2025 + $0xe0] sm:$0xff]
    %v2055 = vld [vmem:[%s2025 + $0xe8] sm:$0xff]
    %v2056 = vld [vmem:[%s2025 + $0xf0] sm:$0xff]
    %v2057 = vld [vmem:[%s2025 + $0xf8] sm:$0xff]
    %v2058 = vld [vmem:[%s2025 + $0x100] sm:$0xff]
    %v2059 = vld [vmem:[%s2025 + $0x108] sm:$0xff]
    %v2060 = vld [vmem:[%s2025 + $0x110] sm:$0xff]
    %v2061 = vld [vmem:[%s2025 + $0x118] sm:$0xff]
    %v2062 = vld [vmem:[%s2025 + $0x120] sm:$0xff]
    %v2063 = vld [vmem:[%s2025 + $0x128] sm:$0xff]
    %v2064 = vld [vmem:[%s2025 + $0x130] sm:$0xff]
    %v2065 = vld [vmem:[%s2025 + $0x138] sm:$0xff]
    %v2066 = vld [vmem:[%s2025 + $0x140] sm:$0xff]
    %v2067 = vld [vmem:[%s2025 + $0x148] sm:$0xff]
    %v2068 = vld [vmem:[%s2025 + $0x150] sm:$0xff]
    %v2069 = vld [vmem:[%s2025 + $0x158] sm:$0xff]
    %v2070 = vld [vmem:[%s2025 + $0x160] sm:$0xff]
    %v2071 = vld [vmem:[%s2025 + $0x168] sm:$0xff]
    %v2072 = vld [vmem:[%s2025 + $0x170] sm:$0xff]
    %v2073 = vld [vmem:[%s2025 + $0x178] sm:$0xff]
    %v2074 = vld [vmem:[%s2025 + $0x180] sm:$0xff]
    %v2075 = vld [vmem:[%s2025 + $0x188] sm:$0xff]
    %v2076 = vld [vmem:[%s2025 + $0x190] sm:$0xff]
    %v2077 = vld [vmem:[%s2025 + $0x198] sm:$0xff]
    %v2078 = vld [vmem:[%s2025 + $0x1a0] sm:$0xff]
    %v2079 = vld [vmem:[%s2025 + $0x1a8] sm:$0xff]
    %v2080 = vld [vmem:[%s2025 + $0x1b0] sm:$0xff]
    %v2081 = vld [vmem:[%s2025 + $0x1b8] sm:$0xff]
    %v2082 = vld [vmem:[%s2025 + $0x1c0] sm:$0xff]
    %v2083 = vld [vmem:[%s2025 + $0x1c8] sm:$0xff]
    %v2084 = vld [vmem:[%s2025 + $0x1d0] sm:$0xff]
    %v2085 = vld [vmem:[%s2025 + $0x1d8] sm:$0xff]
    %v2086 = vld [vmem:[%s2025 + $0x1e0] sm:$0xff]
    %v2087 = vld [vmem:[%s2025 + $0x1e8] sm:$0xff]
    %v2088 = vld [vmem:[%s2025 + $0x1f0] sm:$0xff]
    %v2089 = vld [vmem:[%s2025 + $0x1f8] sm:$0xff]
    %s2090 = scalar_lea.vmem %s14, 4
    %v2091 = vld [vmem:[%s2090] sm:$0xf]
    %s2092 = scalar_lea.vmem %s15, 512
    %v2093 = vld [vmem:[%s2092] sm:$0xff]
    %v2094 = vld [vmem:[%s2092 + $0x8] sm:$0xff]
    %v2095 = vld [vmem:[%s2092 + $0x10] sm:$0xff]
    %v2096 = vld [vmem:[%s2092 + $0x18] sm:$0xff]
    %v2097 = vld [vmem:[%s2092 + $0x20] sm:$0xff]
    %v2098 = vld [vmem:[%s2092 + $0x28] sm:$0xff]
    %v2099 = vld [vmem:[%s2092 + $0x30] sm:$0xff]
    %v2100 = vld [vmem:[%s2092 + $0x38] sm:$0xff]
    %v2101 = vld [vmem:[%s2092 + $0x40] sm:$0xff]
    %v2102 = vld [vmem:[%s2092 + $0x48] sm:$0xff]
    %v2103 = vld [vmem:[%s2092 + $0x50] sm:$0xff]
    %v2104 = vld [vmem:[%s2092 + $0x58] sm:$0xff]
    %v2105 = vld [vmem:[%s2092 + $0x60] sm:$0xff]
    %v2106 = vld [vmem:[%s2092 + $0x68] sm:$0xff]
    %v2107 = vld [vmem:[%s2092 + $0x70] sm:$0xff]
    %v2108 = vld [vmem:[%s2092 + $0x78] sm:$0xff]
    %v2109 = vld [vmem:[%s2092 + $0x80] sm:$0xff]
    %v2110 = vld [vmem:[%s2092 + $0x88] sm:$0xff]
    %v2111 = vld [vmem:[%s2092 + $0x90] sm:$0xff]
    %v2112 = vld [vmem:[%s2092 + $0x98] sm:$0xff]
    %v2113 = vld [vmem:[%s2092 + $0xa0] sm:$0xff]
    %v2114 = vld [vmem:[%s2092 + $0xa8] sm:$0xff]
    %v2115 = vld [vmem:[%s2092 + $0xb0] sm:$0xff]
    %v2116 = vld [vmem:[%s2092 + $0xb8] sm:$0xff]
    %v2117 = vld [vmem:[%s2092 + $0xc0] sm:$0xff]
    %v2118 = vld [vmem:[%s2092 + $0xc8] sm:$0xff]
    %v2119 = vld [vmem:[%s2092 + $0xd0] sm:$0xff]
    %v2120 = vld [vmem:[%s2092 + $0xd8] sm:$0xff]
    %v2121 = vld [vmem:[%s2092 + $0xe0] sm:$0xff]
    %v2122 = vld [vmem:[%s2092 + $0xe8] sm:$0xff]
    %v2123 = vld [vmem:[%s2092 + $0xf0] sm:$0xff]
    %v2124 = vld [vmem:[%s2092 + $0xf8] sm:$0xff]
    %v2125 = vld [vmem:[%s2092 + $0x100] sm:$0xff]
    %v2126 = vld [vmem:[%s2092 + $0x108] sm:$0xff]
    %v2127 = vld [vmem:[%s2092 + $0x110] sm:$0xff]
    %v2128 = vld [vmem:[%s2092 + $0x118] sm:$0xff]
    %v2129 = vld [vmem:[%s2092 + $0x120] sm:$0xff]
    %v2130 = vld [vmem:[%s2092 + $0x128] sm:$0xff]
    %v2131 = vld [vmem:[%s2092 + $0x130] sm:$0xff]
    %v2132 = vld [vmem:[%s2092 + $0x138] sm:$0xff]
    %v2133 = vld [vmem:[%s2092 + $0x140] sm:$0xff]
    %v2134 = vld [vmem:[%s2092 + $0x148] sm:$0xff]
    %v2135 = vld [vmem:[%s2092 + $0x150] sm:$0xff]
    %v2136 = vld [vmem:[%s2092 + $0x158] sm:$0xff]
    %v2137 = vld [vmem:[%s2092 + $0x160] sm:$0xff]
    %v2138 = vld [vmem:[%s2092 + $0x168] sm:$0xff]
    %v2139 = vld [vmem:[%s2092 + $0x170] sm:$0xff]
    %v2140 = vld [vmem:[%s2092 + $0x178] sm:$0xff]
    %v2141 = vld [vmem:[%s2092 + $0x180] sm:$0xff]
    %v2142 = vld [vmem:[%s2092 + $0x188] sm:$0xff]
    %v2143 = vld [vmem:[%s2092 + $0x190] sm:$0xff]
    %v2144 = vld [vmem:[%s2092 + $0x198] sm:$0xff]
    %v2145 = vld [vmem:[%s2092 + $0x1a0] sm:$0xff]
    %v2146 = vld [vmem:[%s2092 + $0x1a8] sm:$0xff]
    %v2147 = vld [vmem:[%s2092 + $0x1b0] sm:$0xff]
    %v2148 = vld [vmem:[%s2092 + $0x1b8] sm:$0xff]
    %v2149 = vld [vmem:[%s2092 + $0x1c0] sm:$0xff]
    %v2150 = vld [vmem:[%s2092 + $0x1c8] sm:$0xff]
    %v2151 = vld [vmem:[%s2092 + $0x1d0] sm:$0xff]
    %v2152 = vld [vmem:[%s2092 + $0x1d8] sm:$0xff]
    %v2153 = vld [vmem:[%s2092 + $0x1e0] sm:$0xff]
    %v2154 = vld [vmem:[%s2092 + $0x1e8] sm:$0xff]
    %v2155 = vld [vmem:[%s2092 + $0x1f0] sm:$0xff]
    %v2156 = vld [vmem:[%s2092 + $0x1f8] sm:$0xff]
    %s2157 = scalar_lea.vmem %s16, 1
    %v2158 = vld [vmem:[%s2157] sm:$0x1]
    %2159 = vadd.xlane.f32.xlu0 %v1945
    %v2160 = vpop.xlane.xlu0 %2159
    %v2161 = vsel %vm433, %v1946, 0.0
    %2162 = vadd.xlane.f32.xlu0 %v2161
    %v2163 = vpop.xlane.xlu0 %2162
    %v2164 = vmul.f32 %v2160, %v437
    %v2165 = vmul.f32 %v2163, %v437
    %v2166 = vsub.f32 %v1945, %v2164
    %v2167 = vsub.f32 %v1946, %v2165
    %v2168 = vmul.f32 %v2166, %v2166
    %v2169 = vmul.f32 %v2167, %v2167
    %2170 = vadd.xlane.f32.xlu0 %v2168
    %v2171 = vpop.xlane.xlu0 %2170
    %v2172 = vsel %vm433, %v2169, 0.0
    %2173 = vadd.xlane.f32.xlu0 %v2172
    %v2174 = vpop.xlane.xlu0 %2173
    %v2175 = vmul.f32 %v2171, %v437
    %v2176 = vmul.f32 %v2174, %v437
    %v2177 = vadd.f32 %v2175, 1e-05
    %v2178 = vadd.f32 %v2176, 1e-05
    %v2179 = vrsqrt.pop %v2177
    %v2180 = vrsqrt.pop %v2178
    %v2181 = vmul.f32 %v2166, %v2179
    %v2182 = vmul.f32 %v2167, %v2180
    %v2184 = vlaneseq
    %v2185 = vshrl.u32 %v2184, 7
    %v2186 = vsub.s32 0, %v2185
    %v2187 = vrot.slane %v1948, %v2186
    %v2189 = vmul.f32 %v2181, %v2187
    %v2190 = vmul.f32 %v2182, %v2187
    %v2192 = vlaneseq
    %v2193 = vshrl.u32 %v2192, 7
    %v2194 = vsub.s32 0, %v2193
    %v2195 = vrot.slane %v1950, %v2194
    %v2197 = vadd.f32 %v2189, %v2195
    %v2198 = vadd.f32 %v2190, %v2195
    %v2199 = vpack.c.bf16 %v2198, %v2197
    %v2200 = vpack.c.bf16 %v1955, %v1952
    %v2201 = vpack.c.bf16 %v1956, %v1953
    %v2202 = vpack.c.bf16 %v1957, %v1954
    %v2203 = vpack.c.bf16 %v1961, %v1958
    %v2204 = vpack.c.bf16 %v1962, %v1959
    %v2205 = vpack.c.bf16 %v1963, %v1960
    %v2206 = vpack.c.bf16 %v1967, %v1964
    %v2207 = vpack.c.bf16 %v1968, %v1965
    %v2208 = vpack.c.bf16 %v1969, %v1966
    %v2209 = vpack.c.bf16 %v1973, %v1970
    %v2210 = vpack.c.bf16 %v1974, %v1971
    %v2211 = vpack.c.bf16 %v1975, %v1972
    %v2212 = vpack.c.bf16 %v1979, %v1976
    %v2213 = vpack.c.bf16 %v1980, %v1977
    %v2214 = vpack.c.bf16 %v1981, %v1978
    %v2215 = vpack.c.bf16 %v1985, %v1982
    %v2216 = vpack.c.bf16 %v1986, %v1983
    %v2217 = vpack.c.bf16 %v1987, %v1984
    %v2218 = vpack.c.bf16 %v1991, %v1988
    %v2219 = vpack.c.bf16 %v1992, %v1989
    %v2220 = vpack.c.bf16 %v1993, %v1990
    %v2221 = vpack.c.bf16 %v1997, %v1994
    %v2222 = vpack.c.bf16 %v1998, %v1995
    %v2223 = vpack.c.bf16 %v1999, %v1996
    %v2225 = vlaneseq
    %v2226 = vshrl.u32 %v2225, 7
    %v2227 = vsub.s32 0, %v2226
    %v2228 = vrot.slane %v2001, %v2227
    %v2229 = vlaneseq
    %v2230 = vshrl.u32 %v2229, 7
    %v2231 = vsub.s32 1, %v2230
    %v2232 = vrot.slane %v2001, %v2231
    %v2233 = vlaneseq
    %v2234 = vshrl.u32 %v2233, 7
    %v2235 = vsub.s32 2, %v2234
    %v2236 = vrot.slane %v2001, %v2235
    %2240 = vmatprep.subr.bf16.mxu0 %v2201
    %2241 = vmatpush1.bf16.msra.mxu0 %v2200
    %2242 = vmatprep.subr.bf16.mxu0 %v2204
    %2243 = vmatpush1.bf16.msra.mxu0 %v2203
    %2244 = vmatprep.subr.bf16.mxu0 %v2207
    %2245 = vmatpush1.bf16.msra.mxu0 %v2206
    %2246 = vmatprep.subr.bf16.mxu0 %v2210
    %2247 = vmatpush1.bf16.msra.mxu0 %v2209
    %2248 = vmatprep.subr.bf16.mxu0 %v2213
    %2249 = vmatpush1.bf16.msra.mxu0 %v2212
    %2250 = vmatprep.subr.bf16.mxu0 %v2216
    %2251 = vmatpush1.bf16.msra.mxu0 %v2215
    %2252 = vmatprep.subr.bf16.mxu0 %v2219
    %2253 = vmatpush1.bf16.msra.mxu0 %v2218
    %2254 = vmatprep.subr.bf16.mxu0 %v2222
    %2255 = vmatpush1.bf16.msra.mxu0 %v2221
    %2256 = vmatprep.subr.bf16.mxu0 0
    %2257 = vmatpush1.bf16.msra.mxu0 0
    %2258 = vmatprep.subr.bf16.mxu0 0
    %2259 = vmatpush1.bf16.msra.mxu0 0
    %2260 = vmatprep.subr.bf16.mxu0 0
    %2261 = vmatpush1.bf16.msra.mxu0 0
    %2262 = vmatprep.subr.bf16.mxu0 0
    %2263 = vmatpush1.bf16.msra.mxu0 0
    %2264 = vmatprep.subr.bf16.mxu0 0
    %2265 = vmatpush1.bf16.msra.mxu0 0
    %2266 = vmatprep.subr.bf16.mxu0 0
    %2267 = vmatpush1.bf16.msra.mxu0 0
    %2268 = vmatprep.subr.bf16.mxu0 0
    %2269 = vmatpush1.bf16.msra.mxu0 0
    %2270 = vmatprep.subr.bf16.mxu0 0
    %2271 = vmatpush1.bf16.msra.mxu0 0
    %2272 = vmatprep.mubr.bf16.mxu0 0
    %2273 = vmatmul.mubr.bf16.gmra.mrb[0].mxu0 %v2199
    %v2274 = vpop.f32.mrb[0].mxu0
    %v2275 = vadd.f32 %v2228, %v2274
    %v2276 = vpop.f32.mrb[0].mxu0
    %v2277 = vadd.f32 %v2232, %v2276
    %v2278 = vpop.f32.mrb[0].mxu0
    %v2279 = vadd.f32 %v2228, %v2278
    %v2280 = vpop.f32.mrb[0].mxu0
    %v2281 = vadd.f32 %v2232, %v2280
    %2282 = vdwg.mxu0
    %2283 = vmatprep.subr.bf16.mxu0 0
    %2284 = vmatpush1.bf16.msra.mxu0 %v2202
    %2285 = vmatprep.subr.bf16.mxu0 0
    %2286 = vmatpush1.bf16.msra.mxu0 %v2205
    %2287 = vmatprep.subr.bf16.mxu0 0
    %2288 = vmatpush1.bf16.msra.mxu0 %v2208
    %2289 = vmatprep.subr.bf16.mxu0 0
    %2290 = vmatpush1.bf16.msra.mxu0 %v2211
    %2291 = vmatprep.subr.bf16.mxu0 0
    %2292 = vmatpush1.bf16.msra.mxu0 %v2214
    %2293 = vmatprep.subr.bf16.mxu0 0
    %2294 = vmatpush1.bf16.msra.mxu0 %v2217
    %2295 = vmatprep.subr.bf16.mxu0 0
    %2296 = vmatpush1.bf16.msra.mxu0 %v2220
    %2297 = vmatprep.subr.bf16.mxu0 0
    %2298 = vmatpush1.bf16.msra.mxu0 %v2223
    %2299 = vmatprep.subr.bf16.mxu0 0
    %2300 = vmatpush1.bf16.msra.mxu0 0
    %2301 = vmatprep.subr.bf16.mxu0 0
    %2302 = vmatpush1.bf16.msra.mxu0 0
    %2303 = vmatprep.subr.bf16.mxu0 0
    %2304 = vmatpush1.bf16.msra.mxu0 0
    %2305 = vmatprep.subr.bf16.mxu0 0
    %2306 = vmatpush1.bf16.msra.mxu0 0
    %2307 = vmatprep.subr.bf16.mxu0 0
    %2308 = vmatpush1.bf16.msra.mxu0 0
    %2309 = vmatprep.subr.bf16.mxu0 0
    %2310 = vmatpush1.bf16.msra.mxu0 0
    %2311 = vmatprep.subr.bf16.mxu0 0
    %2312 = vmatpush1.bf16.msra.mxu0 0
    %2313 = vmatprep.subr.bf16.mxu0 0
    %2314 = vmatpush1.bf16.msra.mxu0 0
    %2315 = vmatprep.mubr.bf16.mxu0 0
    %2316 = vmatmul.mubr.bf16.gmra.mrb[0].mxu0 %v2199
    %v2317 = vpop.f32.mrb[0].mxu0
    %v2318 = vadd.f32 %v2236, %v2317
    %v2319 = vpop.f32.mrb[0].mxu0
    %v2320 = vpop.f32.mrb[0].mxu0
    %v2321 = vadd.f32 %v2236, %v2320
    %v2322 = vpop.f32.mrb[0].mxu0
    %2323 = vdwg.mxu0
    %v2324 = vmul.f32 %v2275, 0.17677669
    %v2325 = vmul.f32 %v2279, 0.17677669
    %v2326 = vpack.c.bf16 %v2325, %v2324
    %v2327 = vpack.c.bf16 %v2281, %v2277
    %v2329 = vsel %vm873, %v2326, 0
    %v2332 = vsel %vm873, %v2327, 0
    %2334 = vmatprep.subr.bf16.mxu0 0
    %2335 = vmatpush1.bf16.xpose.msra.mxu0 %v2332
    %2336 = vmatprep.subr.bf16.mxu0 0
    %2337 = vmatpush1.bf16.xpose.msra.mxu0 0
    %2338 = vmatprep.subr.bf16.mxu0 0
    %2339 = vmatpush1.bf16.xpose.msra.mxu0 0
    %2340 = vmatprep.subr.bf16.mxu0 0
    %2341 = vmatpush1.bf16.xpose.msra.mxu0 0
    %2342 = vmatprep.subr.bf16.mxu0 0
    %2343 = vmatpush1.bf16.xpose.msra.mxu0 0
    %2344 = vmatprep.subr.bf16.mxu0 0
    %2345 = vmatpush1.bf16.xpose.msra.mxu0 0
    %2346 = vmatprep.subr.bf16.mxu0 0
    %2347 = vmatpush1.bf16.xpose.msra.mxu0 0
    %2348 = vmatprep.subr.bf16.mxu0 0
    %2349 = vmatpush1.bf16.xpose.msra.mxu0 0
    %2350 = vmatprep.subr.bf16.mxu0 0
    %2351 = vmatpush1.bf16.xpose.msra.mxu0 0
    %2352 = vmatprep.subr.bf16.mxu0 0
    %2353 = vmatpush1.bf16.xpose.msra.mxu0 0
    %2354 = vmatprep.subr.bf16.mxu0 0
    %2355 = vmatpush1.bf16.xpose.msra.mxu0 0
    %2356 = vmatprep.subr.bf16.mxu0 0
    %2357 = vmatpush1.bf16.xpose.msra.mxu0 0
    %2358 = vmatprep.subr.bf16.mxu0 0
    %2359 = vmatpush1.bf16.xpose.msra.mxu0 0
    %2360 = vmatprep.subr.bf16.mxu0 0
    %2361 = vmatpush1.bf16.xpose.msra.mxu0 0
    %2362 = vmatprep.subr.bf16.mxu0 0
    %2363 = vmatpush1.bf16.xpose.msra.mxu0 0
    %2364 = vmatprep.subr.bf16.mxu0 0
    %2365 = vmatpush1.bf16.xpose.msra.mxu0 0
    %2366 = vmatprep.mubr.bf16.mxu0 0
    %2367 = vmatmul.mubr.bf16.gmra.mrb[0].mxu0 %v2329
    %v2368 = vpop.f32.mrb[0].mxu0
    %v2369 = vadd.f32 %v502, %v2368
    %v2370 = vpop.f32.mrb[0].mxu0
    %v2371 = vpop.f32.mrb[0].mxu0
    %v2372 = vadd.f32 %v503, %v2371
    %v2373 = vpop.f32.mrb[0].mxu0
    %2374 = vdwg.mxu0
    %v2375 = vsel %vm921, %v2369, -inf
    %2376 = vmax.xlane.f32.xlu0 %v2375
    %v2377 = vpop.xlane.xlu0 %2376
    %v2378 = vsel %vm925, %v2372, -inf
    %2379 = vmax.xlane.f32.xlu0 %v2378
    %v2380 = vpop.xlane.xlu0 %2379
    %v2381 = vsub.f32 %v2369, %v2377
    %v2382 = vsub.f32 %v2372, %v2380
    %v2383 = vmul.f32 %v2381, 1.442695
    %v2384 = vpow.pop %v2383
    %v2385 = vmul.f32 %v2382, 1.442695
    %v2386 = vpow.pop %v2385
    %v2387 = vsel %vm921, %v2384, 0.0
    %2388 = vadd.xlane.f32.xlu0 %v2387
    %v2389 = vpop.xlane.xlu0 %2388
    %v2390 = vsel %vm925, %v2386, 0.0
    %2391 = vadd.xlane.f32.xlu0 %v2390
    %v2392 = vpop.xlane.xlu0 %2391
    %v2393 = vrcp.pop %v2389
    %v2394 = vrcp.pop %v2392
    %v2395 = vmul.f32 %v2384, %v2393
    %v2396 = vmul.f32 %v2386, %v2394
    %v2397 = vpack.c.bf16 %v2396, %v2395
    %v2398 = vpack.c.bf16 %v2321, %v2318
    %v2400 = vsel %vm921, %v2397, 0
    %v2403 = vsel %vm950, %v2398, 0
    %2405 = vmatprep.subr.bf16.mxu0 0
    %2406 = vmatpush1.bf16.msra.mxu0 %v2403
    %2407 = vmatprep.subr.bf16.mxu0 0
    %2408 = vmatpush1.bf16.msra.mxu0 0
    %2409 = vmatprep.subr.bf16.mxu0 0
    %2410 = vmatpush1.bf16.msra.mxu0 0
    %2411 = vmatprep.subr.bf16.mxu0 0
    %2412 = vmatpush1.bf16.msra.mxu0 0
    %2413 = vmatprep.subr.bf16.mxu0 0
    %2414 = vmatpush1.bf16.msra.mxu0 0
    %2415 = vmatprep.subr.bf16.mxu0 0
    %2416 = vmatpush1.bf16.msra.mxu0 0
    %2417 = vmatprep.subr.bf16.mxu0 0
    %2418 = vmatpush1.bf16.msra.mxu0 0
    %2419 = vmatprep.subr.bf16.mxu0 0
    %2420 = vmatpush1.bf16.msra.mxu0 0
    %2421 = vmatprep.subr.bf16.mxu0 0
    %2422 = vmatpush1.bf16.msra.mxu0 0
    %2423 = vmatprep.subr.bf16.mxu0 0
    %2424 = vmatpush1.bf16.msra.mxu0 0
    %2425 = vmatprep.subr.bf16.mxu0 0
    %2426 = vmatpush1.bf16.msra.mxu0 0
    %2427 = vmatprep.subr.bf16.mxu0 0
    %2428 = vmatpush1.bf16.msra.mxu0 0
    %2429 = vmatprep.subr.bf16.mxu0 0
    %2430 = vmatpush1.bf16.msra.mxu0 0
    %2431 = vmatprep.subr.bf16.mxu0 0
    %2432 = vmatpush1.bf16.msra.mxu0 0
    %2433 = vmatprep.subr.bf16.mxu0 0
    %2434 = vmatpush1.bf16.msra.mxu0 0
    %2435 = vmatprep.subr.bf16.mxu0 0
    %2436 = vmatpush1.bf16.msra.mxu0 0
    %2437 = vmatprep.mubr.bf16.mxu0 0
    %2438 = vmatmul.mubr.bf16.gmra.mrb[0].mxu0 %v2400
    %v2439 = vpop.f32.mrb[0].mxu0
    %v2440 = vadd.f32 0.0, %v2439
    %v2441 = vpop.f32.mrb[0].mxu0
    %v2442 = vpop.f32.mrb[0].mxu0
    %v2443 = vadd.f32 0.0, %v2442
    %v2444 = vpop.f32.mrb[0].mxu0
    %2445 = vdwg.mxu0
    %v2446 = vpack.c.bf16 %v2443, %v2440
    %v2447 = vpack.c.bf16 %v2004, %v2003
    %v2448 = vpack.c.bf16 %v2006, %v2005
    %2450 = vrot.lane.b32.xlu0 %v2326, 96
    %v2451 = vpop.permute.xlu0 %2450
    %2453 = vrot.lane.b32.xlu0 %v2327, 96
    %v2454 = vpop.permute.xlu0 %2453
    %v2456 = vsel %vm873, %v2451, 0
    %v2459 = vsel %vm873, %v2454, 0
    %2461 = vmatprep.subr.bf16.mxu0 0
    %2462 = vmatpush1.bf16.xpose.msra.mxu0 %v2459
    %2463 = vmatprep.subr.bf16.mxu0 0
    %2464 = vmatpush1.bf16.xpose.msra.mxu0 0
    %2465 = vmatprep.subr.bf16.mxu0 0
    %2466 = vmatpush1.bf16.xpose.msra.mxu0 0
    %2467 = vmatprep.subr.bf16.mxu0 0
    %2468 = vmatpush1.bf16.xpose.msra.mxu0 0
    %2469 = vmatprep.subr.bf16.mxu0 0
    %2470 = vmatpush1.bf16.xpose.msra.mxu0 0
    %2471 = vmatprep.subr.bf16.mxu0 0
    %2472 = vmatpush1.bf16.xpose.msra.mxu0 0
    %2473 = vmatprep.subr.bf16.mxu0 0
    %2474 = vmatpush1.bf16.xpose.msra.mxu0 0
    %2475 = vmatprep.subr.bf16.mxu0 0
    %2476 = vmatpush1.bf16.xpose.msra.mxu0 0
    %2477 = vmatprep.subr.bf16.mxu0 0
    %2478 = vmatpush1.bf16.xpose.msra.mxu0 0
    %2479 = vmatprep.subr.bf16.mxu0 0
    %2480 = vmatpush1.bf16.xpose.msra.mxu0 0
    %2481 = vmatprep.subr.bf16.mxu0 0
    %2482 = vmatpush1.bf16.xpose.msra.mxu0 0
    %2483 = vmatprep.subr.bf16.mxu0 0
    %2484 = vmatpush1.bf16.xpose.msra.mxu0 0
    %2485 = vmatprep.subr.bf16.mxu0 0
    %2486 = vmatpush1.bf16.xpose.msra.mxu0 0
    %2487 = vmatprep.subr.bf16.mxu0 0
    %2488 = vmatpush1.bf16.xpose.msra.mxu0 0
    %2489 = vmatprep.subr.bf16.mxu0 0
    %2490 = vmatpush1.bf16.xpose.msra.mxu0 0
    %2491 = vmatprep.subr.bf16.mxu0 0
    %2492 = vmatpush1.bf16.xpose.msra.mxu0 0
    %2493 = vmatprep.mubr.bf16.mxu0 0
    %2494 = vmatmul.mubr.bf16.gmra.mrb[0].mxu0 %v2456
    %v2495 = vpop.f32.mrb[0].mxu0
    %v2496 = vadd.f32 %v502, %v2495
    %v2497 = vpop.f32.mrb[0].mxu0
    %v2498 = vpop.f32.mrb[0].mxu0
    %v2499 = vadd.f32 %v503, %v2498
    %v2500 = vpop.f32.mrb[0].mxu0
    %2501 = vdwg.mxu0
    %v2502 = vsel %vm921, %v2496, -inf
    %2503 = vmax.xlane.f32.xlu0 %v2502
    %v2504 = vpop.xlane.xlu0 %2503
    %v2505 = vsel %vm925, %v2499, -inf
    %2506 = vmax.xlane.f32.xlu0 %v2505
    %v2507 = vpop.xlane.xlu0 %2506
    %v2508 = vsub.f32 %v2496, %v2504
    %v2509 = vsub.f32 %v2499, %v2507
    %v2510 = vmul.f32 %v2508, 1.442695
    %v2511 = vpow.pop %v2510
    %v2512 = vmul.f32 %v2509, 1.442695
    %v2513 = vpow.pop %v2512
    %v2514 = vsel %vm921, %v2511, 0.0
    %2515 = vadd.xlane.f32.xlu0 %v2514
    %v2516 = vpop.xlane.xlu0 %2515
    %v2517 = vsel %vm925, %v2513, 0.0
    %2518 = vadd.xlane.f32.xlu0 %v2517
    %v2519 = vpop.xlane.xlu0 %2518
    %v2520 = vrcp.pop %v2516
    %v2521 = vrcp.pop %v2519
    %v2522 = vmul.f32 %v2511, %v2520
    %v2523 = vmul.f32 %v2513, %v2521
    %v2524 = vpack.c.bf16 %v2523, %v2522
    %2526 = vrot.lane.b32.xlu0 %v2398, 96
    %v2527 = vpop.permute.xlu0 %2526
    %v2529 = vsel %vm921, %v2524, 0
    %v2532 = vsel %vm950, %v2527, 0
    %2534 = vmatprep.subr.bf16.mxu0 0
    %2535 = vmatpush1.bf16.msra.mxu0 %v2532
    %2536 = vmatprep.subr.bf16.mxu0 0
    %2537 = vmatpush1.bf16.msra.mxu0 0
    %2538 = vmatprep.subr.bf16.mxu0 0
    %2539 = vmatpush1.bf16.msra.mxu0 0
    %2540 = vmatprep.subr.bf16.mxu0 0
    %2541 = vmatpush1.bf16.msra.mxu0 0
    %2542 = vmatprep.subr.bf16.mxu0 0
    %2543 = vmatpush1.bf16.msra.mxu0 0
    %2544 = vmatprep.subr.bf16.mxu0 0
    %2545 = vmatpush1.bf16.msra.mxu0 0
    %2546 = vmatprep.subr.bf16.mxu0 0
    %2547 = vmatpush1.bf16.msra.mxu0 0
    %2548 = vmatprep.subr.bf16.mxu0 0
    %2549 = vmatpush1.bf16.msra.mxu0 0
    %2550 = vmatprep.subr.bf16.mxu0 0
    %2551 = vmatpush1.bf16.msra.mxu0 0
    %2552 = vmatprep.subr.bf16.mxu0 0
    %2553 = vmatpush1.bf16.msra.mxu0 0
    %2554 = vmatprep.subr.bf16.mxu0 0
    %2555 = vmatpush1.bf16.msra.mxu0 0
    %2556 = vmatprep.subr.bf16.mxu0 0
    %2557 = vmatpush1.bf16.msra.mxu0 0
    %2558 = vmatprep.subr.bf16.mxu0 0
    %2559 = vmatpush1.bf16.msra.mxu0 0
    %2560 = vmatprep.subr.bf16.mxu0 0
    %2561 = vmatpush1.bf16.msra.mxu0 0
    %2562 = vmatprep.subr.bf16.mxu0 0
    %2563 = vmatpush1.bf16.msra.mxu0 0
    %2564 = vmatprep.subr.bf16.mxu0 0
    %2565 = vmatpush1.bf16.msra.mxu0 0
    %2566 = vmatprep.mubr.bf16.mxu0 0
    %2567 = vmatmul.mubr.bf16.gmra.mrb[0].mxu0 %v2529
    %v2568 = vpop.f32.mrb[0].mxu0
    %v2569 = vadd.f32 0.0, %v2568
    %v2570 = vpop.f32.mrb[0].mxu0
    %v2571 = vpop.f32.mrb[0].mxu0
    %v2572 = vadd.f32 0.0, %v2571
    %v2573 = vpop.f32.mrb[0].mxu0
    %2574 = vdwg.mxu0
    %v2575 = vpack.c.bf16 %v2572, %v2569
    %v2576 = vpack.c.bf16 %v2008, %v2007
    %v2577 = vpack.c.bf16 %v2010, %v2009
    %v2579 = vsel %vm873, %v2575, 0
    %2581 = vmatprep.subr.bf16.mxu0 0
    %2582 = vmatpush1.bf16.msra.mxu0 %v2576
    %2583 = vmatprep.subr.bf16.mxu0 0
    %2584 = vmatpush1.bf16.msra.mxu0 %v2577
    %2585 = vmatprep.subr.bf16.mxu0 0
    %2586 = vmatpush1.bf16.msra.mxu0 0
    %2587 = vmatprep.subr.bf16.mxu0 0
    %2588 = vmatpush1.bf16.msra.mxu0 0
    %2589 = vmatprep.subr.bf16.mxu0 0
    %2590 = vmatpush1.bf16.msra.mxu0 0
    %2591 = vmatprep.subr.bf16.mxu0 0
    %2592 = vmatpush1.bf16.msra.mxu0 0
    %2593 = vmatprep.subr.bf16.mxu0 0
    %2594 = vmatpush1.bf16.msra.mxu0 0
    %2595 = vmatprep.subr.bf16.mxu0 0
    %2596 = vmatpush1.bf16.msra.mxu0 0
    %2597 = vmatprep.subr.bf16.mxu0 0
    %2598 = vmatpush1.bf16.msra.mxu0 0
    %2599 = vmatprep.subr.bf16.mxu0 0
    %2600 = vmatpush1.bf16.msra.mxu0 0
    %2601 = vmatprep.subr.bf16.mxu0 0
    %2602 = vmatpush1.bf16.msra.mxu0 0
    %2603 = vmatprep.subr.bf16.mxu0 0
    %2604 = vmatpush1.bf16.msra.mxu0 0
    %2605 = vmatprep.subr.bf16.mxu0 0
    %2606 = vmatpush1.bf16.msra.mxu0 0
    %2607 = vmatprep.subr.bf16.mxu0 0
    %2608 = vmatpush1.bf16.msra.mxu0 0
    %2609 = vmatprep.subr.bf16.mxu0 0
    %2610 = vmatpush1.bf16.msra.mxu0 0
    %2611 = vmatprep.subr.bf16.mxu0 0
    %2612 = vmatpush1.bf16.msra.mxu0 0
    %2613 = vmatprep.mubr.bf16.mxu0 0
    %2614 = vmatmul.mubr.bf16.gmra.mrb[0].mxu0 %v2579
    %v2615 = vpop.f32.mrb[0].mxu0
    %v2616 = vadd.f32 0.0, %v2615
    %v2617 = vpop.f32.mrb[0].mxu0
    %v2618 = vpop.f32.mrb[0].mxu0
    %v2619 = vadd.f32 0.0, %v2618
    %v2620 = vpop.f32.mrb[0].mxu0
    %2621 = vdwg.mxu0
    %v2623 = vsel %vm873, %v2446, 0
    %2625 = vmatprep.subr.bf16.mxu0 0
    %2626 = vmatpush1.bf16.msra.mxu0 %v2447
    %2627 = vmatprep.subr.bf16.mxu0 0
    %2628 = vmatpush1.bf16.msra.mxu0 %v2448
    %2629 = vmatprep.subr.bf16.mxu0 0
    %2630 = vmatpush1.bf16.msra.mxu0 0
    %2631 = vmatprep.subr.bf16.mxu0 0
    %2632 = vmatpush1.bf16.msra.mxu0 0
    %2633 = vmatprep.subr.bf16.mxu0 0
    %2634 = vmatpush1.bf16.msra.mxu0 0
    %2635 = vmatprep.subr.bf16.mxu0 0
    %2636 = vmatpush1.bf16.msra.mxu0 0
    %2637 = vmatprep.subr.bf16.mxu0 0
    %2638 = vmatpush1.bf16.msra.mxu0 0
    %2639 = vmatprep.subr.bf16.mxu0 0
    %2640 = vmatpush1.bf16.msra.mxu0 0
    %2641 = vmatprep.subr.bf16.mxu0 0
    %2642 = vmatpush1.bf16.msra.mxu0 0
    %2643 = vmatprep.subr.bf16.mxu0 0
    %2644 = vmatpush1.bf16.msra.mxu0 0
    %2645 = vmatprep.subr.bf16.mxu0 0
    %2646 = vmatpush1.bf16.msra.mxu0 0
    %2647 = vmatprep.subr.bf16.mxu0 0
    %2648 = vmatpush1.bf16.msra.mxu0 0
    %2649 = vmatprep.subr.bf16.mxu0 0
    %2650 = vmatpush1.bf16.msra.mxu0 0
    %2651 = vmatprep.subr.bf16.mxu0 0
    %2652 = vmatpush1.bf16.msra.mxu0 0
    %2653 = vmatprep.subr.bf16.mxu0 0
    %2654 = vmatpush1.bf16.msra.mxu0 0
    %2655 = vmatprep.subr.bf16.mxu0 0
    %2656 = vmatpush1.bf16.msra.mxu0 0
    %2657 = vmatprep.mubr.bf16.mxu0 0
    %2658 = vmatmul.mubr.bf16.gmra.mrb[0].mxu0 %v2623
    %v2659 = vpop.f32.mrb[0].mxu0
    %v2660 = vadd.f32 %v2616, %v2659
    %v2661 = vpop.f32.mrb[0].mxu0
    %v2662 = vpop.f32.mrb[0].mxu0
    %v2663 = vadd.f32 %v2619, %v2662
    %v2664 = vpop.f32.mrb[0].mxu0
    %2665 = vdwg.mxu0
    %2666 = vrot.lane.b32.xlu0 %v2326, 64
    %v2667 = vpop.permute.xlu0 %2666
    %2668 = vrot.lane.b32.xlu0 %v2327, 64
    %v2669 = vpop.permute.xlu0 %2668
    %v2671 = vsel %vm873, %v2667, 0
    %v2674 = vsel %vm873, %v2669, 0
    %2676 = vmatprep.subr.bf16.mxu0 0
    %2677 = vmatpush1.bf16.xpose.msra.mxu0 %v2674
    %2678 = vmatprep.subr.bf16.mxu0 0
    %2679 = vmatpush1.bf16.xpose.msra.mxu0 0
    %2680 = vmatprep.subr.bf16.mxu0 0
    %2681 = vmatpush1.bf16.xpose.msra.mxu0 0
    %2682 = vmatprep.subr.bf16.mxu0 0
    %2683 = vmatpush1.bf16.xpose.msra.mxu0 0
    %2684 = vmatprep.subr.bf16.mxu0 0
    %2685 = vmatpush1.bf16.xpose.msra.mxu0 0
    %2686 = vmatprep.subr.bf16.mxu0 0
    %2687 = vmatpush1.bf16.xpose.msra.mxu0 0
    %2688 = vmatprep.subr.bf16.mxu0 0
    %2689 = vmatpush1.bf16.xpose.msra.mxu0 0
    %2690 = vmatprep.subr.bf16.mxu0 0
    %2691 = vmatpush1.bf16.xpose.msra.mxu0 0
    %2692 = vmatprep.subr.bf16.mxu0 0
    %2693 = vmatpush1.bf16.xpose.msra.mxu0 0
    %2694 = vmatprep.subr.bf16.mxu0 0
    %2695 = vmatpush1.bf16.xpose.msra.mxu0 0
    %2696 = vmatprep.subr.bf16.mxu0 0
    %2697 = vmatpush1.bf16.xpose.msra.mxu0 0
    %2698 = vmatprep.subr.bf16.mxu0 0
    %2699 = vmatpush1.bf16.xpose.msra.mxu0 0
    %2700 = vmatprep.subr.bf16.mxu0 0
    %2701 = vmatpush1.bf16.xpose.msra.mxu0 0
    %2702 = vmatprep.subr.bf16.mxu0 0
    %2703 = vmatpush1.bf16.xpose.msra.mxu0 0
    %2704 = vmatprep.subr.bf16.mxu0 0
    %2705 = vmatpush1.bf16.xpose.msra.mxu0 0
    %2706 = vmatprep.subr.bf16.mxu0 0
    %2707 = vmatpush1.bf16.xpose.msra.mxu0 0
    %2708 = vmatprep.mubr.bf16.mxu0 0
    %2709 = vmatmul.mubr.bf16.gmra.mrb[0].mxu0 %v2671
    %v2710 = vpop.f32.mrb[0].mxu0
    %v2711 = vadd.f32 %v502, %v2710
    %v2712 = vpop.f32.mrb[0].mxu0
    %v2713 = vpop.f32.mrb[0].mxu0
    %v2714 = vadd.f32 %v503, %v2713
    %v2715 = vpop.f32.mrb[0].mxu0
    %2716 = vdwg.mxu0
    %v2717 = vsel %vm921, %v2711, -inf
    %2718 = vmax.xlane.f32.xlu0 %v2717
    %v2719 = vpop.xlane.xlu0 %2718
    %v2720 = vsel %vm925, %v2714, -inf
    %2721 = vmax.xlane.f32.xlu0 %v2720
    %v2722 = vpop.xlane.xlu0 %2721
    %v2723 = vsub.f32 %v2711, %v2719
    %v2724 = vsub.f32 %v2714, %v2722
    %v2725 = vmul.f32 %v2723, 1.442695
    %v2726 = vpow.pop %v2725
    %v2727 = vmul.f32 %v2724, 1.442695
    %v2728 = vpow.pop %v2727
    %v2729 = vsel %vm921, %v2726, 0.0
    %2730 = vadd.xlane.f32.xlu0 %v2729
    %v2731 = vpop.xlane.xlu0 %2730
    %v2732 = vsel %vm925, %v2728, 0.0
    %2733 = vadd.xlane.f32.xlu0 %v2732
    %v2734 = vpop.xlane.xlu0 %2733
    %v2735 = vrcp.pop %v2731
    %v2736 = vrcp.pop %v2734
    %v2737 = vmul.f32 %v2726, %v2735
    %v2738 = vmul.f32 %v2728, %v2736
    %v2739 = vpack.c.bf16 %v2738, %v2737
    %2740 = vrot.lane.b32.xlu0 %v2398, 64
    %v2741 = vpop.permute.xlu0 %2740
    %v2743 = vsel %vm921, %v2739, 0
    %v2746 = vsel %vm950, %v2741, 0
    %2748 = vmatprep.subr.bf16.mxu0 0
    %2749 = vmatpush1.bf16.msra.mxu0 %v2746
    %2750 = vmatprep.subr.bf16.mxu0 0
    %2751 = vmatpush1.bf16.msra.mxu0 0
    %2752 = vmatprep.subr.bf16.mxu0 0
    %2753 = vmatpush1.bf16.msra.mxu0 0
    %2754 = vmatprep.subr.bf16.mxu0 0
    %2755 = vmatpush1.bf16.msra.mxu0 0
    %2756 = vmatprep.subr.bf16.mxu0 0
    %2757 = vmatpush1.bf16.msra.mxu0 0
    %2758 = vmatprep.subr.bf16.mxu0 0
    %2759 = vmatpush1.bf16.msra.mxu0 0
    %2760 = vmatprep.subr.bf16.mxu0 0
    %2761 = vmatpush1.bf16.msra.mxu0 0
    %2762 = vmatprep.subr.bf16.mxu0 0
    %2763 = vmatpush1.bf16.msra.mxu0 0
    %2764 = vmatprep.subr.bf16.mxu0 0
    %2765 = vmatpush1.bf16.msra.mxu0 0
    %2766 = vmatprep.subr.bf16.mxu0 0
    %2767 = vmatpush1.bf16.msra.mxu0 0
    %2768 = vmatprep.subr.bf16.mxu0 0
    %2769 = vmatpush1.bf16.msra.mxu0 0
    %2770 = vmatprep.subr.bf16.mxu0 0
    %2771 = vmatpush1.bf16.msra.mxu0 0
    %2772 = vmatprep.subr.bf16.mxu0 0
    %2773 = vmatpush1.bf16.msra.mxu0 0
    %2774 = vmatprep.subr.bf16.mxu0 0
    %2775 = vmatpush1.bf16.msra.mxu0 0
    %2776 = vmatprep.subr.bf16.mxu0 0
    %2777 = vmatpush1.bf16.msra.mxu0 0
    %2778 = vmatprep.subr.bf16.mxu0 0
    %2779 = vmatpush1.bf16.msra.mxu0 0
    %2780 = vmatprep.mubr.bf16.mxu0 0
    %2781 = vmatmul.mubr.bf16.gmra.mrb[0].mxu0 %v2743
    %v2782 = vpop.f32.mrb[0].mxu0
    %v2783 = vadd.f32 0.0, %v2782
    %v2784 = vpop.f32.mrb[0].mxu0
    %v2785 = vpop.f32.mrb[0].mxu0
    %v2786 = vadd.f32 0.0, %v2785
    %v2787 = vpop.f32.mrb[0].mxu0
    %2788 = vdwg.mxu0
    %v2789 = vpack.c.bf16 %v2786, %v2783
    %v2790 = vpack.c.bf16 %v2012, %v2011
    %v2791 = vpack.c.bf16 %v2014, %v2013
    %v2793 = vsel %vm873, %v2789, 0
    %2795 = vmatprep.subr.bf16.mxu0 0
    %2796 = vmatpush1.bf16.msra.mxu0 %v2790
    %2797 = vmatprep.subr.bf16.mxu0 0
    %2798 = vmatpush1.bf16.msra.mxu0 %v2791
    %2799 = vmatprep.subr.bf16.mxu0 0
    %2800 = vmatpush1.bf16.msra.mxu0 0
    %2801 = vmatprep.subr.bf16.mxu0 0
    %2802 = vmatpush1.bf16.msra.mxu0 0
    %2803 = vmatprep.subr.bf16.mxu0 0
    %2804 = vmatpush1.bf16.msra.mxu0 0
    %2805 = vmatprep.subr.bf16.mxu0 0
    %2806 = vmatpush1.bf16.msra.mxu0 0
    %2807 = vmatprep.subr.bf16.mxu0 0
    %2808 = vmatpush1.bf16.msra.mxu0 0
    %2809 = vmatprep.subr.bf16.mxu0 0
    %2810 = vmatpush1.bf16.msra.mxu0 0
    %2811 = vmatprep.subr.bf16.mxu0 0
    %2812 = vmatpush1.bf16.msra.mxu0 0
    %2813 = vmatprep.subr.bf16.mxu0 0
    %2814 = vmatpush1.bf16.msra.mxu0 0
    %2815 = vmatprep.subr.bf16.mxu0 0
    %2816 = vmatpush1.bf16.msra.mxu0 0
    %2817 = vmatprep.subr.bf16.mxu0 0
    %2818 = vmatpush1.bf16.msra.mxu0 0
    %2819 = vmatprep.subr.bf16.mxu0 0
    %2820 = vmatpush1.bf16.msra.mxu0 0
    %2821 = vmatprep.subr.bf16.mxu0 0
    %2822 = vmatpush1.bf16.msra.mxu0 0
    %2823 = vmatprep.subr.bf16.mxu0 0
    %2824 = vmatpush1.bf16.msra.mxu0 0
    %2825 = vmatprep.subr.bf16.mxu0 0
    %2826 = vmatpush1.bf16.msra.mxu0 0
    %2827 = vmatprep.mubr.bf16.mxu0 0
    %2828 = vmatmul.mubr.bf16.gmra.mrb[0].mxu0 %v2793
    %v2829 = vpop.f32.mrb[0].mxu0
    %v2830 = vadd.f32 0.0, %v2829
    %v2831 = vpop.f32.mrb[0].mxu0
    %v2832 = vpop.f32.mrb[0].mxu0
    %v2833 = vadd.f32 0.0, %v2832
    %v2834 = vpop.f32.mrb[0].mxu0
    %2835 = vdwg.mxu0
    %v2836 = vadd.f32 %v2660, %v2830
    %v2837 = vadd.f32 %v2663, %v2833
    %2838 = vrot.lane.b32.xlu0 %v2326, 32
    %v2839 = vpop.permute.xlu0 %2838
    %2840 = vrot.lane.b32.xlu0 %v2327, 32
    %v2841 = vpop.permute.xlu0 %2840
    %v2843 = vsel %vm873, %v2839, 0
    %v2846 = vsel %vm873, %v2841, 0
    %2848 = vmatprep.subr.bf16.mxu0 0
    %2849 = vmatpush1.bf16.xpose.msra.mxu0 %v2846
    %2850 = vmatprep.subr.bf16.mxu0 0
    %2851 = vmatpush1.bf16.xpose.msra.mxu0 0
    %2852 = vmatprep.subr.bf16.mxu0 0
    %2853 = vmatpush1.bf16.xpose.msra.mxu0 0
    %2854 = vmatprep.subr.bf16.mxu0 0
    %2855 = vmatpush1.bf16.xpose.msra.mxu0 0
    %2856 = vmatprep.subr.bf16.mxu0 0
    %2857 = vmatpush1.bf16.xpose.msra.mxu0 0
    %2858 = vmatprep.subr.bf16.mxu0 0
    %2859 = vmatpush1.bf16.xpose.msra.mxu0 0
    %2860 = vmatprep.subr.bf16.mxu0 0
    %2861 = vmatpush1.bf16.xpose.msra.mxu0 0
    %2862 = vmatprep.subr.bf16.mxu0 0
    %2863 = vmatpush1.bf16.xpose.msra.mxu0 0
    %2864 = vmatprep.subr.bf16.mxu0 0
    %2865 = vmatpush1.bf16.xpose.msra.mxu0 0
    %2866 = vmatprep.subr.bf16.mxu0 0
    %2867 = vmatpush1.bf16.xpose.msra.mxu0 0
    %2868 = vmatprep.subr.bf16.mxu0 0
    %2869 = vmatpush1.bf16.xpose.msra.mxu0 0
    %2870 = vmatprep.subr.bf16.mxu0 0
    %2871 = vmatpush1.bf16.xpose.msra.mxu0 0
    %2872 = vmatprep.subr.bf16.mxu0 0
    %2873 = vmatpush1.bf16.xpose.msra.mxu0 0
    %2874 = vmatprep.subr.bf16.mxu0 0
    %2875 = vmatpush1.bf16.xpose.msra.mxu0 0
    %2876 = vmatprep.subr.bf16.mxu0 0
    %2877 = vmatpush1.bf16.xpose.msra.mxu0 0
    %2878 = vmatprep.subr.bf16.mxu0 0
    %2879 = vmatpush1.bf16.xpose.msra.mxu0 0
    %2880 = vmatprep.mubr.bf16.mxu0 0
    %2881 = vmatmul.mubr.bf16.gmra.mrb[0].mxu0 %v2843
    %v2882 = vpop.f32.mrb[0].mxu0
    %v2883 = vadd.f32 %v502, %v2882
    %v2884 = vpop.f32.mrb[0].mxu0
    %v2885 = vpop.f32.mrb[0].mxu0
    %v2886 = vadd.f32 %v503, %v2885
    %v2887 = vpop.f32.mrb[0].mxu0
    %2888 = vdwg.mxu0
    %v2889 = vsel %vm921, %v2883, -inf
    %2890 = vmax.xlane.f32.xlu0 %v2889
    %v2891 = vpop.xlane.xlu0 %2890
    %v2892 = vsel %vm925, %v2886, -inf
    %2893 = vmax.xlane.f32.xlu0 %v2892
    %v2894 = vpop.xlane.xlu0 %2893
    %v2895 = vsub.f32 %v2883, %v2891
    %v2896 = vsub.f32 %v2886, %v2894
    %v2897 = vmul.f32 %v2895, 1.442695
    %v2898 = vpow.pop %v2897
    %v2899 = vmul.f32 %v2896, 1.442695
    %v2900 = vpow.pop %v2899
    %v2901 = vsel %vm921, %v2898, 0.0
    %2902 = vadd.xlane.f32.xlu0 %v2901
    %v2903 = vpop.xlane.xlu0 %2902
    %v2904 = vsel %vm925, %v2900, 0.0
    %2905 = vadd.xlane.f32.xlu0 %v2904
    %v2906 = vpop.xlane.xlu0 %2905
    %v2907 = vrcp.pop %v2903
    %v2908 = vrcp.pop %v2906
    %v2909 = vmul.f32 %v2898, %v2907
    %v2910 = vmul.f32 %v2900, %v2908
    %v2911 = vpack.c.bf16 %v2910, %v2909
    %2912 = vrot.lane.b32.xlu0 %v2398, 32
    %v2913 = vpop.permute.xlu0 %2912
    %v2915 = vsel %vm921, %v2911, 0
    %v2918 = vsel %vm950, %v2913, 0
    %2920 = vmatprep.subr.bf16.mxu0 0
    %2921 = vmatpush1.bf16.msra.mxu0 %v2918
    %2922 = vmatprep.subr.bf16.mxu0 0
    %2923 = vmatpush1.bf16.msra.mxu0 0
    %2924 = vmatprep.subr.bf16.mxu0 0
    %2925 = vmatpush1.bf16.msra.mxu0 0
    %2926 = vmatprep.subr.bf16.mxu0 0
    %2927 = vmatpush1.bf16.msra.mxu0 0
    %2928 = vmatprep.subr.bf16.mxu0 0
    %2929 = vmatpush1.bf16.msra.mxu0 0
    %2930 = vmatprep.subr.bf16.mxu0 0
    %2931 = vmatpush1.bf16.msra.mxu0 0
    %2932 = vmatprep.subr.bf16.mxu0 0
    %2933 = vmatpush1.bf16.msra.mxu0 0
    %2934 = vmatprep.subr.bf16.mxu0 0
    %2935 = vmatpush1.bf16.msra.mxu0 0
    %2936 = vmatprep.subr.bf16.mxu0 0
    %2937 = vmatpush1.bf16.msra.mxu0 0
    %2938 = vmatprep.subr.bf16.mxu0 0
    %2939 = vmatpush1.bf16.msra.mxu0 0
    %2940 = vmatprep.subr.bf16.mxu0 0
    %2941 = vmatpush1.bf16.msra.mxu0 0
    %2942 = vmatprep.subr.bf16.mxu0 0
    %2943 = vmatpush1.bf16.msra.mxu0 0
    %2944 = vmatprep.subr.bf16.mxu0 0
    %2945 = vmatpush1.bf16.msra.mxu0 0
    %2946 = vmatprep.subr.bf16.mxu0 0
    %2947 = vmatpush1.bf16.msra.mxu0 0
    %2948 = vmatprep.subr.bf16.mxu0 0
    %2949 = vmatpush1.bf16.msra.mxu0 0
    %2950 = vmatprep.subr.bf16.mxu0 0
    %2951 = vmatpush1.bf16.msra.mxu0 0
    %2952 = vmatprep.mubr.bf16.mxu0 0
    %2953 = vmatmul.mubr.bf16.gmra.mrb[0].mxu0 %v2915
    %v2954 = vpop.f32.mrb[0].mxu0
    %v2955 = vadd.f32 0.0, %v2954
    %v2956 = vpop.f32.mrb[0].mxu0
    %v2957 = vpop.f32.mrb[0].mxu0
    %v2958 = vadd.f32 0.0, %v2957
    %v2959 = vpop.f32.mrb[0].mxu0
    %2960 = vdwg.mxu0
    %v2961 = vpack.c.bf16 %v2958, %v2955
    %v2962 = vpack.c.bf16 %v2016, %v2015
    %v2963 = vpack.c.bf16 %v2018, %v2017
    %v2965 = vsel %vm873, %v2961, 0
    %2967 = vmatprep.subr.bf16.mxu0 0
    %2968 = vmatpush1.bf16.msra.mxu0 %v2962
    %2969 = vmatprep.subr.bf16.mxu0 0
    %2970 = vmatpush1.bf16.msra.mxu0 %v2963
    %2971 = vmatprep.subr.bf16.mxu0 0
    %2972 = vmatpush1.bf16.msra.mxu0 0
    %2973 = vmatprep.subr.bf16.mxu0 0
    %2974 = vmatpush1.bf16.msra.mxu0 0
    %2975 = vmatprep.subr.bf16.mxu0 0
    %2976 = vmatpush1.bf16.msra.mxu0 0
    %2977 = vmatprep.subr.bf16.mxu0 0
    %2978 = vmatpush1.bf16.msra.mxu0 0
    %2979 = vmatprep.subr.bf16.mxu0 0
    %2980 = vmatpush1.bf16.msra.mxu0 0
    %2981 = vmatprep.subr.bf16.mxu0 0
    %2982 = vmatpush1.bf16.msra.mxu0 0
    %2983 = vmatprep.subr.bf16.mxu0 0
    %2984 = vmatpush1.bf16.msra.mxu0 0
    %2985 = vmatprep.subr.bf16.mxu0 0
    %2986 = vmatpush1.bf16.msra.mxu0 0
    %2987 = vmatprep.subr.bf16.mxu0 0
    %2988 = vmatpush1.bf16.msra.mxu0 0
    %2989 = vmatprep.subr.bf16.mxu0 0
    %2990 = vmatpush1.bf16.msra.mxu0 0
    %2991 = vmatprep.subr.bf16.mxu0 0
    %2992 = vmatpush1.bf16.msra.mxu0 0
    %2993 = vmatprep.subr.bf16.mxu0 0
    %2994 = vmatpush1.bf16.msra.mxu0 0
    %2995 = vmatprep.subr.bf16.mxu0 0
    %2996 = vmatpush1.bf16.msra.mxu0 0
    %2997 = vmatprep.subr.bf16.mxu0 0
    %2998 = vmatpush1.bf16.msra.mxu0 0
    %2999 = vmatprep.mubr.bf16.mxu0 0
    %3000 = vmatmul.mubr.bf16.gmra.mrb[0].mxu0 %v2965
    %v3001 = vpop.f32.mrb[0].mxu0
    %v3002 = vadd.f32 0.0, %v3001
    %v3003 = vpop.f32.mrb[0].mxu0
    %v3004 = vpop.f32.mrb[0].mxu0
    %v3005 = vadd.f32 0.0, %v3004
    %v3006 = vpop.f32.mrb[0].mxu0
    %3007 = vdwg.mxu0
    %v3008 = vadd.f32 %v2836, %v3002
    %v3009 = vadd.f32 %v2837, %v3005
    %v3010 = vadd.f32 %v1945, %v3008
    %v3011 = vadd.f32 %v1946, %v3009
    %v3013 = vlaneseq
    %v3014 = vshrl.u32 %v3013, 7
    %v3015 = vsub.s32 0, %v3014
    %v3016 = vrot.slane %v2020, %v3015
    %v3018 = vadd.f32 %v3010, %v3016
    %v3019 = vadd.f32 %v3011, %v3016
    %3020 = vadd.xlane.f32.xlu0 %v3018
    %v3021 = vpop.xlane.xlu0 %3020
    %v3022 = vsel %vm433, %v3019, 0.0
    %3023 = vadd.xlane.f32.xlu0 %v3022
    %v3024 = vpop.xlane.xlu0 %3023
    %v3025 = vmul.f32 %v3021, %v437
    %v3026 = vmul.f32 %v3024, %v437
    %v3027 = vsub.f32 %v3018, %v3025
    %v3028 = vsub.f32 %v3019, %v3026
    %v3029 = vmul.f32 %v3027, %v3027
    %v3030 = vmul.f32 %v3028, %v3028
    %3031 = vadd.xlane.f32.xlu0 %v3029
    %v3032 = vpop.xlane.xlu0 %3031
    %v3033 = vsel %vm433, %v3030, 0.0
    %3034 = vadd.xlane.f32.xlu0 %v3033
    %v3035 = vpop.xlane.xlu0 %3034
    %v3036 = vmul.f32 %v3032, %v437
    %v3037 = vmul.f32 %v3035, %v437
    %v3038 = vadd.f32 %v3036, 1e-05
    %v3039 = vadd.f32 %v3037, 1e-05
    %v3040 = vrsqrt.pop %v3038
    %v3041 = vrsqrt.pop %v3039
    %v3042 = vmul.f32 %v3027, %v3040
    %v3043 = vmul.f32 %v3028, %v3041
    %v3045 = vlaneseq
    %v3046 = vshrl.u32 %v3045, 7
    %v3047 = vsub.s32 0, %v3046
    %v3048 = vrot.slane %v2022, %v3047
    %v3050 = vmul.f32 %v3042, %v3048
    %v3051 = vmul.f32 %v3043, %v3048
    %v3053 = vlaneseq
    %v3054 = vshrl.u32 %v3053, 7
    %v3055 = vsub.s32 0, %v3054
    %v3056 = vrot.slane %v2024, %v3055
    %v3058 = vadd.f32 %v3050, %v3056
    %v3059 = vadd.f32 %v3051, %v3056
    %v3060 = vpack.c.bf16 %v3059, %v3058
    %v3061 = vpack.c.bf16 %v2030, %v2026
    %v3062 = vpack.c.bf16 %v2031, %v2027
    %v3063 = vpack.c.bf16 %v2032, %v2028
    %v3064 = vpack.c.bf16 %v2033, %v2029
    %v3065 = vpack.c.bf16 %v2038, %v2034
    %v3066 = vpack.c.bf16 %v2039, %v2035
    %v3067 = vpack.c.bf16 %v2040, %v2036
    %v3068 = vpack.c.bf16 %v2041, %v2037
    %v3069 = vpack.c.bf16 %v2046, %v2042
    %v3070 = vpack.c.bf16 %v2047, %v2043
    %v3071 = vpack.c.bf16 %v2048, %v2044
    %v3072 = vpack.c.bf16 %v2049, %v2045
    %v3073 = vpack.c.bf16 %v2054, %v2050
    %v3074 = vpack.c.bf16 %v2055, %v2051
    %v3075 = vpack.c.bf16 %v2056, %v2052
    %v3076 = vpack.c.bf16 %v2057, %v2053
    %v3077 = vpack.c.bf16 %v2062, %v2058
    %v3078 = vpack.c.bf16 %v2063, %v2059
    %v3079 = vpack.c.bf16 %v2064, %v2060
    %v3080 = vpack.c.bf16 %v2065, %v2061
    %v3081 = vpack.c.bf16 %v2070, %v2066
    %v3082 = vpack.c.bf16 %v2071, %v2067
    %v3083 = vpack.c.bf16 %v2072, %v2068
    %v3084 = vpack.c.bf16 %v2073, %v2069
    %v3085 = vpack.c.bf16 %v2078, %v2074
    %v3086 = vpack.c.bf16 %v2079, %v2075
    %v3087 = vpack.c.bf16 %v2080, %v2076
    %v3088 = vpack.c.bf16 %v2081, %v2077
    %v3089 = vpack.c.bf16 %v2086, %v2082
    %v3090 = vpack.c.bf16 %v2087, %v2083
    %v3091 = vpack.c.bf16 %v2088, %v2084
    %v3092 = vpack.c.bf16 %v2089, %v2085
    %v3094 = vlaneseq
    %v3095 = vshrl.u32 %v3094, 7
    %v3096 = vsub.s32 0, %v3095
    %v3097 = vrot.slane %v2091, %v3096
    %v3098 = vlaneseq
    %v3099 = vshrl.u32 %v3098, 7
    %v3100 = vsub.s32 1, %v3099
    %v3101 = vrot.slane %v2091, %v3100
    %v3102 = vlaneseq
    %v3103 = vshrl.u32 %v3102, 7
    %v3104 = vsub.s32 2, %v3103
    %v3105 = vrot.slane %v2091, %v3104
    %v3106 = vlaneseq
    %v3107 = vshrl.u32 %v3106, 7
    %v3108 = vsub.s32 3, %v3107
    %v3109 = vrot.slane %v2091, %v3108
    %3114 = vmatprep.subr.bf16.mxu0 %v3062
    %3115 = vmatpush1.bf16.msra.mxu0 %v3061
    %3116 = vmatprep.subr.bf16.mxu0 %v3066
    %3117 = vmatpush1.bf16.msra.mxu0 %v3065
    %3118 = vmatprep.subr.bf16.mxu0 %v3070
    %3119 = vmatpush1.bf16.msra.mxu0 %v3069
    %3120 = vmatprep.subr.bf16.mxu0 %v3074
    %3121 = vmatpush1.bf16.msra.mxu0 %v3073
    %3122 = vmatprep.subr.bf16.mxu0 %v3078
    %3123 = vmatpush1.bf16.msra.mxu0 %v3077
    %3124 = vmatprep.subr.bf16.mxu0 %v3082
    %3125 = vmatpush1.bf16.msra.mxu0 %v3081
    %3126 = vmatprep.subr.bf16.mxu0 %v3086
    %3127 = vmatpush1.bf16.msra.mxu0 %v3085
    %3128 = vmatprep.subr.bf16.mxu0 %v3090
    %3129 = vmatpush1.bf16.msra.mxu0 %v3089
    %3130 = vmatprep.subr.bf16.mxu0 0
    %3131 = vmatpush1.bf16.msra.mxu0 0
    %3132 = vmatprep.subr.bf16.mxu0 0
    %3133 = vmatpush1.bf16.msra.mxu0 0
    %3134 = vmatprep.subr.bf16.mxu0 0
    %3135 = vmatpush1.bf16.msra.mxu0 0
    %3136 = vmatprep.subr.bf16.mxu0 0
    %3137 = vmatpush1.bf16.msra.mxu0 0
    %3138 = vmatprep.subr.bf16.mxu0 0
    %3139 = vmatpush1.bf16.msra.mxu0 0
    %3140 = vmatprep.subr.bf16.mxu0 0
    %3141 = vmatpush1.bf16.msra.mxu0 0
    %3142 = vmatprep.subr.bf16.mxu0 0
    %3143 = vmatpush1.bf16.msra.mxu0 0
    %3144 = vmatprep.subr.bf16.mxu0 0
    %3145 = vmatpush1.bf16.msra.mxu0 0
    %3146 = vmatprep.mubr.bf16.mxu0 0
    %3147 = vmatmul.mubr.bf16.gmra.mrb[0].mxu0 %v3060
    %v3148 = vpop.f32.mrb[0].mxu0
    %v3149 = vadd.f32 %v3097, %v3148
    %v3150 = vpop.f32.mrb[0].mxu0
    %v3151 = vadd.f32 %v3101, %v3150
    %v3152 = vpop.f32.mrb[0].mxu0
    %v3153 = vadd.f32 %v3097, %v3152
    %v3154 = vpop.f32.mrb[0].mxu0
    %v3155 = vadd.f32 %v3101, %v3154
    %3156 = vdwg.mxu0
    %3157 = vmatprep.subr.bf16.mxu0 %v3064
    %3158 = vmatpush1.bf16.msra.mxu0 %v3063
    %3159 = vmatprep.subr.bf16.mxu0 %v3068
    %3160 = vmatpush1.bf16.msra.mxu0 %v3067
    %3161 = vmatprep.subr.bf16.mxu0 %v3072
    %3162 = vmatpush1.bf16.msra.mxu0 %v3071
    %3163 = vmatprep.subr.bf16.mxu0 %v3076
    %3164 = vmatpush1.bf16.msra.mxu0 %v3075
    %3165 = vmatprep.subr.bf16.mxu0 %v3080
    %3166 = vmatpush1.bf16.msra.mxu0 %v3079
    %3167 = vmatprep.subr.bf16.mxu0 %v3084
    %3168 = vmatpush1.bf16.msra.mxu0 %v3083
    %3169 = vmatprep.subr.bf16.mxu0 %v3088
    %3170 = vmatpush1.bf16.msra.mxu0 %v3087
    %3171 = vmatprep.subr.bf16.mxu0 %v3092
    %3172 = vmatpush1.bf16.msra.mxu0 %v3091
    %3173 = vmatprep.subr.bf16.mxu0 0
    %3174 = vmatpush1.bf16.msra.mxu0 0
    %3175 = vmatprep.subr.bf16.mxu0 0
    %3176 = vmatpush1.bf16.msra.mxu0 0
    %3177 = vmatprep.subr.bf16.mxu0 0
    %3178 = vmatpush1.bf16.msra.mxu0 0
    %3179 = vmatprep.subr.bf16.mxu0 0
    %3180 = vmatpush1.bf16.msra.mxu0 0
    %3181 = vmatprep.subr.bf16.mxu0 0
    %3182 = vmatpush1.bf16.msra.mxu0 0
    %3183 = vmatprep.subr.bf16.mxu0 0
    %3184 = vmatpush1.bf16.msra.mxu0 0
    %3185 = vmatprep.subr.bf16.mxu0 0
    %3186 = vmatpush1.bf16.msra.mxu0 0
    %3187 = vmatprep.subr.bf16.mxu0 0
    %3188 = vmatpush1.bf16.msra.mxu0 0
    %3189 = vmatprep.mubr.bf16.mxu0 0
    %3190 = vmatmul.mubr.bf16.gmra.mrb[0].mxu0 %v3060
    %v3191 = vpop.f32.mrb[0].mxu0
    %v3192 = vadd.f32 %v3105, %v3191
    %v3193 = vpop.f32.mrb[0].mxu0
    %v3194 = vadd.f32 %v3109, %v3193
    %v3195 = vpop.f32.mrb[0].mxu0
    %v3196 = vadd.f32 %v3105, %v3195
    %v3197 = vpop.f32.mrb[0].mxu0
    %v3198 = vadd.f32 %v3109, %v3197
    %3199 = vdwg.mxu0
    %v3200 = vmul.f32 %v3149, %v3149
    %v3201 = vmul.f32 %v3151, %v3151
    %v3202 = vmul.f32 %v3192, %v3192
    %v3203 = vmul.f32 %v3194, %v3194
    %v3204 = vmul.f32 %v3153, %v3153
    %v3205 = vmul.f32 %v3155, %v3155
    %v3206 = vmul.f32 %v3196, %v3196
    %v3207 = vmul.f32 %v3198, %v3198
    %v3208 = vmul.f32 %v3149, %v3200
    %v3209 = vmul.f32 %v3151, %v3201
    %v3210 = vmul.f32 %v3192, %v3202
    %v3211 = vmul.f32 %v3194, %v3203
    %v3212 = vmul.f32 %v3153, %v3204
    %v3213 = vmul.f32 %v3155, %v3205
    %v3214 = vmul.f32 %v3196, %v3206
    %v3215 = vmul.f32 %v3198, %v3207
    %v3216 = vmul.f32 %v3208, 0.044715
    %v3217 = vmul.f32 %v3209, 0.044715
    %v3218 = vmul.f32 %v3210, 0.044715
    %v3219 = vmul.f32 %v3211, 0.044715
    %v3220 = vmul.f32 %v3212, 0.044715
    %v3221 = vmul.f32 %v3213, 0.044715
    %v3222 = vmul.f32 %v3214, 0.044715
    %v3223 = vmul.f32 %v3215, 0.044715
    %v3224 = vadd.f32 %v3149, %v3216
    %v3225 = vadd.f32 %v3151, %v3217
    %v3226 = vadd.f32 %v3192, %v3218
    %v3227 = vadd.f32 %v3194, %v3219
    %v3228 = vadd.f32 %v3153, %v3220
    %v3229 = vadd.f32 %v3155, %v3221
    %v3230 = vadd.f32 %v3196, %v3222
    %v3231 = vadd.f32 %v3198, %v3223
    %v3232 = vmul.f32 %v3224, 0.7978846
    %v3233 = vmul.f32 %v3225, 0.7978846
    %v3234 = vmul.f32 %v3226, 0.7978846
    %v3235 = vmul.f32 %v3227, 0.7978846
    %v3236 = vmul.f32 %v3228, 0.7978846
    %v3237 = vmul.f32 %v3229, 0.7978846
    %v3238 = vmul.f32 %v3230, 0.7978846
    %v3239 = vmul.f32 %v3231, 0.7978846
    %v3240 = vtanh.pop %v3232
    %v3241 = vtanh.pop %v3233
    %v3242 = vtanh.pop %v3234
    %v3243 = vtanh.pop %v3235
    %v3244 = vtanh.pop %v3236
    %v3245 = vtanh.pop %v3237
    %v3246 = vtanh.pop %v3238
    %v3247 = vtanh.pop %v3239
    %v3248 = vadd.f32 %v3240, 1.0
    %v3249 = vadd.f32 %v3241, 1.0
    %v3250 = vadd.f32 %v3242, 1.0
    %v3251 = vadd.f32 %v3243, 1.0
    %v3252 = vadd.f32 %v3244, 1.0
    %v3253 = vadd.f32 %v3245, 1.0
    %v3254 = vadd.f32 %v3246, 1.0
    %v3255 = vadd.f32 %v3247, 1.0
    %v3256 = vmul.f32 %v3248, 0.5
    %v3257 = vmul.f32 %v3249, 0.5
    %v3258 = vmul.f32 %v3250, 0.5
    %v3259 = vmul.f32 %v3251, 0.5
    %v3260 = vmul.f32 %v3252, 0.5
    %v3261 = vmul.f32 %v3253, 0.5
    %v3262 = vmul.f32 %v3254, 0.5
    %v3263 = vmul.f32 %v3255, 0.5
    %v3264 = vmul.f32 %v3149, %v3256
    %v3265 = vmul.f32 %v3151, %v3257
    %v3266 = vmul.f32 %v3192, %v3258
    %v3267 = vmul.f32 %v3194, %v3259
    %v3268 = vmul.f32 %v3153, %v3260
    %v3269 = vmul.f32 %v3155, %v3261
    %v3270 = vmul.f32 %v3196, %v3262
    %v3271 = vmul.f32 %v3198, %v3263
    %v3272 = vpack.c.bf16 %v3268, %v3264
    %v3273 = vpack.c.bf16 %v3269, %v3265
    %v3274 = vpack.c.bf16 %v3270, %v3266
    %v3275 = vpack.c.bf16 %v3271, %v3267
    %v3276 = vpack.c.bf16 %v2094, %v2093
    %v3277 = vpack.c.bf16 %v2096, %v2095
    %v3278 = vpack.c.bf16 %v2098, %v2097
    %v3279 = vpack.c.bf16 %v2100, %v2099
    %v3280 = vpack.c.bf16 %v2102, %v2101
    %v3281 = vpack.c.bf16 %v2104, %v2103
    %v3282 = vpack.c.bf16 %v2106, %v2105
    %v3283 = vpack.c.bf16 %v2108, %v2107
    %v3284 = vpack.c.bf16 %v2110, %v2109
    %v3285 = vpack.c.bf16 %v2112, %v2111
    %v3286 = vpack.c.bf16 %v2114, %v2113
    %v3287 = vpack.c.bf16 %v2116, %v2115
    %v3288 = vpack.c.bf16 %v2118, %v2117
    %v3289 = vpack.c.bf16 %v2120, %v2119
    %v3290 = vpack.c.bf16 %v2122, %v2121
    %v3291 = vpack.c.bf16 %v2124, %v2123
    %v3292 = vpack.c.bf16 %v2126, %v2125
    %v3293 = vpack.c.bf16 %v2128, %v2127
    %v3294 = vpack.c.bf16 %v2130, %v2129
    %v3295 = vpack.c.bf16 %v2132, %v2131
    %v3296 = vpack.c.bf16 %v2134, %v2133
    %v3297 = vpack.c.bf16 %v2136, %v2135
    %v3298 = vpack.c.bf16 %v2138, %v2137
    %v3299 = vpack.c.bf16 %v2140, %v2139
    %v3300 = vpack.c.bf16 %v2142, %v2141
    %v3301 = vpack.c.bf16 %v2144, %v2143
    %v3302 = vpack.c.bf16 %v2146, %v2145
    %v3303 = vpack.c.bf16 %v2148, %v2147
    %v3304 = vpack.c.bf16 %v2150, %v2149
    %v3305 = vpack.c.bf16 %v2152, %v2151
    %v3306 = vpack.c.bf16 %v2154, %v2153
    %v3307 = vpack.c.bf16 %v2156, %v2155
    %v3309 = vlaneseq
    %v3310 = vshrl.u32 %v3309, 7
    %v3311 = vsub.s32 0, %v3310
    %v3312 = vrot.slane %v2158, %v3311
    %3314 = vmatprep.subr.bf16.mxu0 0
    %3315 = vmatpush1.bf16.msra.mxu0 %v3276
    %3316 = vmatprep.subr.bf16.mxu0 0
    %3317 = vmatpush1.bf16.msra.mxu0 %v3277
    %3318 = vmatprep.subr.bf16.mxu0 0
    %3319 = vmatpush1.bf16.msra.mxu0 %v3278
    %3320 = vmatprep.subr.bf16.mxu0 0
    %3321 = vmatpush1.bf16.msra.mxu0 %v3279
    %3322 = vmatprep.subr.bf16.mxu0 0
    %3323 = vmatpush1.bf16.msra.mxu0 %v3280
    %3324 = vmatprep.subr.bf16.mxu0 0
    %3325 = vmatpush1.bf16.msra.mxu0 %v3281
    %3326 = vmatprep.subr.bf16.mxu0 0
    %3327 = vmatpush1.bf16.msra.mxu0 %v3282
    %3328 = vmatprep.subr.bf16.mxu0 0
    %3329 = vmatpush1.bf16.msra.mxu0 %v3283
    %3330 = vmatprep.subr.bf16.mxu0 0
    %3331 = vmatpush1.bf16.msra.mxu0 %v3284
    %3332 = vmatprep.subr.bf16.mxu0 0
    %3333 = vmatpush1.bf16.msra.mxu0 %v3285
    %3334 = vmatprep.subr.bf16.mxu0 0
    %3335 = vmatpush1.bf16.msra.mxu0 %v3286
    %3336 = vmatprep.subr.bf16.mxu0 0
    %3337 = vmatpush1.bf16.msra.mxu0 %v3287
    %3338 = vmatprep.subr.bf16.mxu0 0
    %3339 = vmatpush1.bf16.msra.mxu0 %v3288
    %3340 = vmatprep.subr.bf16.mxu0 0
    %3341 = vmatpush1.bf16.msra.mxu0 %v3289
    %3342 = vmatprep.subr.bf16.mxu0 0
    %3343 = vmatpush1.bf16.msra.mxu0 %v3290
    %3344 = vmatprep.subr.bf16.mxu0 0
    %3345 = vmatpush1.bf16.msra.mxu0 %v3291
    %3346 = vmatprep.mubr.bf16.mxu0 %v3273
    %3347 = vmatmul.mubr.bf16.gmra.mrb[0].mxu0 %v3272
    %v3348 = vpop.f32.mrb[0].mxu0
    %v3349 = vadd.f32 %v3312, %v3348
    %v3350 = vpop.f32.mrb[0].mxu0
    %v3351 = vpop.f32.mrb[0].mxu0
    %v3352 = vadd.f32 %v3312, %v3351
    %v3353 = vpop.f32.mrb[0].mxu0
    %3354 = vdwg.mxu0
    %3355 = vmatprep.subr.bf16.mxu0 0
    %3356 = vmatpush1.bf16.msra.mxu0 %v3292
    %3357 = vmatprep.subr.bf16.mxu0 0
    %3358 = vmatpush1.bf16.msra.mxu0 %v3293
    %3359 = vmatprep.subr.bf16.mxu0 0
    %3360 = vmatpush1.bf16.msra.mxu0 %v3294
    %3361 = vmatprep.subr.bf16.mxu0 0
    %3362 = vmatpush1.bf16.msra.mxu0 %v3295
    %3363 = vmatprep.subr.bf16.mxu0 0
    %3364 = vmatpush1.bf16.msra.mxu0 %v3296
    %3365 = vmatprep.subr.bf16.mxu0 0
    %3366 = vmatpush1.bf16.msra.mxu0 %v3297
    %3367 = vmatprep.subr.bf16.mxu0 0
    %3368 = vmatpush1.bf16.msra.mxu0 %v3298
    %3369 = vmatprep.subr.bf16.mxu0 0
    %3370 = vmatpush1.bf16.msra.mxu0 %v3299
    %3371 = vmatprep.subr.bf16.mxu0 0
    %3372 = vmatpush1.bf16.msra.mxu0 %v3300
    %3373 = vmatprep.subr.bf16.mxu0 0
    %3374 = vmatpush1.bf16.msra.mxu0 %v3301
    %3375 = vmatprep.subr.bf16.mxu0 0
    %3376 = vmatpush1.bf16.msra.mxu0 %v3302
    %3377 = vmatprep.subr.bf16.mxu0 0
    %3378 = vmatpush1.bf16.msra.mxu0 %v3303
    %3379 = vmatprep.subr.bf16.mxu0 0
    %3380 = vmatpush1.bf16.msra.mxu0 %v3304
    %3381 = vmatprep.subr.bf16.mxu0 0
    %3382 = vmatpush1.bf16.msra.mxu0 %v3305
    %3383 = vmatprep.subr.bf16.mxu0 0
    %3384 = vmatpush1.bf16.msra.mxu0 %v3306
    %3385 = vmatprep.subr.bf16.mxu0 0
    %3386 = vmatpush1.bf16.msra.mxu0 %v3307
    %3387 = vmatprep.mubr.bf16.mxu0 %v3275
    %3388 = vmatmul.mubr.bf16.gmra.mrb[0].mxu0 %v3274
    %v3389 = vpop.f32.mrb[0].mxu0
    %v3390 = vadd.f32 %v3349, %v3389
    %v3391 = vpop.f32.mrb[0].mxu0
    %v3392 = vpop.f32.mrb[0].mxu0
    %v3393 = vadd.f32 %v3352, %v3392
    %v3394 = vpop.f32.mrb[0].mxu0
    %3395 = vdwg.mxu0
    %v3396 = vadd.f32 %v3018, %v3390
    %v3397 = vadd.f32 %v3019, %v3393
    %v3398 = vld [vmem:[#allocation9] sm:$0x1]
    %v3399 = vld [vmem:[#allocation10] sm:$0x1]
    %3400 = vadd.xlane.f32.xlu0 %v3396
    %v3401 = vpop.xlane.xlu0 %3400
    %v3402 = vsel %vm433, %v3397, 0.0
    %3403 = vadd.xlane.f32.xlu0 %v3402
    %v3404 = vpop.xlane.xlu0 %3403
    %v3405 = vmul.f32 %v3401, %v437
    %v3406 = vmul.f32 %v3404, %v437
    %v3407 = vsub.f32 %v3396, %v3405
    %v3408 = vsub.f32 %v3397, %v3406
    %v3409 = vmul.f32 %v3407, %v3407
    %v3410 = vmul.f32 %v3408, %v3408
    %3411 = vadd.xlane.f32.xlu0 %v3409
    %v3412 = vpop.xlane.xlu0 %3411
    %v3413 = vsel %vm433, %v3410, 0.0
    %3414 = vadd.xlane.f32.xlu0 %v3413
    %v3415 = vpop.xlane.xlu0 %3414
    %v3416 = vmul.f32 %v3412, %v437
    %v3417 = vmul.f32 %v3415, %v437
    %v3418 = vadd.f32 %v3416, 1e-05
    %v3419 = vadd.f32 %v3417, 1e-05
    %v3420 = vrsqrt.pop %v3418
    %v3421 = vrsqrt.pop %v3419
    %v3422 = vmul.f32 %v3407, %v3420
    %v3423 = vmul.f32 %v3408, %v3421
    %v3425 = vlaneseq
    %v3426 = vshrl.u32 %v3425, 7
    %v3427 = vsub.s32 0, %v3426
    %v3428 = vrot.slane %v3398, %v3427
    %v3430 = vmul.f32 %v3422, %v3428
    %v3431 = vmul.f32 %v3423, %v3428
    %v3433 = vlaneseq
    %v3434 = vshrl.u32 %v3433, 7
    %v3435 = vsub.s32 0, %v3434
    %v3436 = vrot.slane %v3399, %v3435
    %v3438 = vadd.f32 %v3430, %v3436
    %v3439 = vadd.f32 %v3431, %v3436
    %v3440 = vmul.u32 %v474, 5
    %vm3441 = vcmp.eq.s32.totalorder %v477, %v3440
    %v3442 = vsel %vm3441, 1.0, 0.0
    %v3444 = vsel %vm921, %v3442, 0
    %v3447 = vsel %vm433, %v3439, 0
    %3449 = vmatprep.subr.mxu0 0.0
    %3450 = vmatpush1.msra.mxu0 %v3438
    %3451 = vmatprep.subr.mxu0 0.0
    %3452 = vmatpush1.msra.mxu0 %v3447
    %3453 = vmatprep.subr.mxu0 0.0
    %3454 = vmatpush1.msra.mxu0 0.0
    %3455 = vmatprep.subr.mxu0 0.0
    %3456 = vmatpush1.msra.mxu0 0.0
    %3457 = vmatprep.subr.mxu0 0.0
    %3458 = vmatpush1.msra.mxu0 0.0
    %3459 = vmatprep.subr.mxu0 0.0
    %3460 = vmatpush1.msra.mxu0 0.0
    %3461 = vmatprep.subr.mxu0 0.0
    %3462 = vmatpush1.msra.mxu0 0.0
    %3463 = vmatprep.subr.mxu0 0.0
    %3464 = vmatpush1.msra.mxu0 0.0
    %3465 = vmatprep.subr.mxu0 0.0
    %3466 = vmatpush1.msra.mxu0 0.0
    %3467 = vmatprep.subr.mxu0 0.0
    %3468 = vmatpush1.msra.mxu0 0.0
    %3469 = vmatprep.subr.mxu0 0.0
    %3470 = vmatpush1.msra.mxu0 0.0
    %3471 = vmatprep.subr.mxu0 0.0
    %3472 = vmatpush1.msra.mxu0 0.0
    %3473 = vmatprep.subr.mxu0 0.0
    %3474 = vmatpush1.msra.mxu0 0.0
    %3475 = vmatprep.subr.mxu0 0.0
    %3476 = vmatpush1.msra.mxu0 0.0
    %3477 = vmatprep.subr.mxu0 0.0
    %3478 = vmatpush1.msra.mxu0 0.0
    %3479 = vmatprep.subr.mxu0 0.0
    %3480 = vmatpush1.msra.mxu0 0.0
    %3481 = vmatprep.subr.mxu0 0.0
    %3482 = vmatpush1.msra.mxu0 0.0
    %3483 = vmatprep.subr.mxu0 0.0
    %3484 = vmatpush1.msra.mxu0 0.0
    %3485 = vmatprep.subr.mxu0 0.0
    %3486 = vmatpush1.msra.mxu0 0.0
    %3487 = vmatprep.subr.mxu0 0.0
    %3488 = vmatpush1.msra.mxu0 0.0
    %3489 = vmatprep.subr.mxu0 0.0
    %3490 = vmatpush1.msra.mxu0 0.0
    %3491 = vmatprep.subr.mxu0 0.0
    %3492 = vmatpush1.msra.mxu0 0.0
    %3493 = vmatprep.subr.mxu0 0.0
    %3494 = vmatpush1.msra.mxu0 0.0
    %3495 = vmatprep.subr.mxu0 0.0
    %3496 = vmatpush1.msra.mxu0 0.0
    %3497 = vmatprep.subr.mxu0 0.0
    %3498 = vmatpush1.msra.mxu0 0.0
    %3499 = vmatprep.subr.mxu0 0.0
    %3500 = vmatpush1.msra.mxu0 0.0
    %3501 = vmatprep.subr.mxu0 0.0
    %3502 = vmatpush1.msra.mxu0 0.0
    %3503 = vmatprep.subr.mxu0 0.0
    %3504 = vmatpush1.msra.mxu0 0.0
    %3505 = vmatprep.subr.mxu0 0.0
    %3506 = vmatpush1.msra.mxu0 0.0
    %3507 = vmatprep.subr.mxu0 0.0
    %3508 = vmatpush1.msra.mxu0 0.0
    %3509 = vmatprep.subr.mxu0 0.0
    %3510 = vmatpush1.msra.mxu0 0.0
    %3511 = vmatprep.subr.mxu0 0.0
    %3512 = vmatpush1.msra.mxu0 0.0
    %3513 = vmatprep.mubr.f32.mxu0 0.0
    %3514 = vmatmul.mubr.f32.gmra.mrb[0].mxu0 %v3444
    %v3515 = vpop.f32.mrb[0].mxu0
    %v3516 = vadd.f32 0.0, %v3515
    %v3517 = vpop.f32.mrb[0].mxu0
    %3518 = vdwg.mxu0
    %v3519 = vld [vmem:[%s19] sm:$0xff]
    %v3520 = vld [vmem:[%s19 + $0x8] sm:$0xff]
    %v3521 = vld [vmem:[%s19 + $0x10] sm:$0xff]
    %v3522 = vld [vmem:[%s19 + $0x18] sm:$0xff]
    %v3523 = vld [vmem:[%s19 + $0x20] sm:$0xff]
    %v3524 = vld [vmem:[%s19 + $0x28] sm:$0xff]
    %v3525 = vld [vmem:[%s19 + $0x30] sm:$0xff]
    %v3526 = vld [vmem:[%s19 + $0x38] sm:$0xff]
    %v3527 = vld [vmem:[%s19 + $0x40] sm:$0xff]
    %v3528 = vld [vmem:[%s19 + $0x48] sm:$0xff]
    %v3529 = vld [vmem:[%s19 + $0x50] sm:$0xff]
    %v3530 = vld [vmem:[%s19 + $0x58] sm:$0xff]
    %v3531 = vld [vmem:[%s19 + $0x60] sm:$0xff]
    %v3532 = vld [vmem:[%s19 + $0x68] sm:$0xff]
    %v3533 = vld [vmem:[%s19 + $0x70] sm:$0xff]
    %v3534 = vld [vmem:[%s19 + $0x78] sm:$0xff]
    %v3535 = vpack.c.bf16 %v3516, %v3516
    %v3536 = vpack.c.bf16 %v3520, %v3519
    %v3537 = vpack.c.bf16 %v3522, %v3521
    %v3538 = vpack.c.bf16 %v3524, %v3523
    %v3539 = vpack.c.bf16 %v3526, %v3525
    %v3540 = vpack.c.bf16 %v3528, %v3527
    %v3541 = vpack.c.bf16 %v3530, %v3529
    %v3542 = vpack.c.bf16 %v3532, %v3531
    %v3543 = vpack.c.bf16 %v3534, %v3533
    %3544 = vmatprep.subr.bf16.mxu0 0
    %3545 = vmatpush1.bf16.msra.mxu0 %v3536
    %3546 = vmatprep.subr.bf16.mxu0 0
    %3547 = vmatpush1.bf16.msra.mxu0 %v3537
    %3548 = vmatprep.subr.bf16.mxu0 0
    %3549 = vmatpush1.bf16.msra.mxu0 %v3538
    %3550 = vmatprep.subr.bf16.mxu0 0
    %3551 = vmatpush1.bf16.msra.mxu0 %v3539
    %3552 = vmatprep.subr.bf16.mxu0 0
    %3553 = vmatpush1.bf16.msra.mxu0 %v3540
    %3554 = vmatprep.subr.bf16.mxu0 0
    %3555 = vmatpush1.bf16.msra.mxu0 %v3541
    %3556 = vmatprep.subr.bf16.mxu0 0
    %3557 = vmatpush1.bf16.msra.mxu0 %v3542
    %3558 = vmatprep.subr.bf16.mxu0 0
    %3559 = vmatpush1.bf16.msra.mxu0 %v3543
    %3560 = vmatprep.subr.bf16.mxu0 0
    %3561 = vmatpush1.bf16.msra.mxu0 0
    %3562 = vmatprep.subr.bf16.mxu0 0
    %3563 = vmatpush1.bf16.msra.mxu0 0
    %3564 = vmatprep.subr.bf16.mxu0 0
    %3565 = vmatpush1.bf16.msra.mxu0 0
    %3566 = vmatprep.subr.bf16.mxu0 0
    %3567 = vmatpush1.bf16.msra.mxu0 0
    %3568 = vmatprep.subr.bf16.mxu0 0
    %3569 = vmatpush1.bf16.msra.mxu0 0
    %3570 = vmatprep.subr.bf16.mxu0 0
    %3571 = vmatpush1.bf16.msra.mxu0 0
    %3572 = vmatprep.subr.bf16.mxu0 0
    %3573 = vmatpush1.bf16.msra.mxu0 0
    %3574 = vmatprep.subr.bf16.mxu0 0
    %3575 = vmatpush1.bf16.msra.mxu0 0
    %3576 = vmatprep.mubr.bf16.mxu0 0
    %3577 = vmatmul.mubr.bf16.gmra.mrb[0].mxu0 %v3535
    %v3578 = vpop.f32.mrb[0].mxu0
    %v3579 = vadd.f32 0.0, %v3578
    %v3580 = vpop.f32.mrb[0].mxu0
    %v3581 = vpop.f32.mrb[0].mxu0
    %v3582 = vpop.f32.mrb[0].mxu0
    %3583 = vdwg.mxu0
    %3584 = vst [vmem:[%s20] sm:$0x3] %v3579
    // Predicated region
    $region106: #{hpsv2_forward.3} parent=1 // pred_check
      _
    $region107: #{hpsv2_forward.3} parent=1 // pred_check_branch
      %3586 = sbr.rel (0) target = $region109
    $region108: #{hpsv2_forward.3} parent=1 // pred_region
      _
    $region109: #{hpsv2_forward.3} parent=1 // pred_fallthru
      _
    // Predicated region
    $region110: #{hpsv2_forward.3} parent=1 // pred_check
      _
    $region111: #{hpsv2_forward.3} parent=1 // pred_check_branch
      %3588 = sbr.rel (0) target = $region113
    $region112: #{hpsv2_forward.3} parent=1 // pred_region
      _
    $region113: #{hpsv2_forward.3} parent=1 // pred_fallthru
      _
    %3589 = vsyncpa [#allocation3], 1
    %3590 = vsyncpa [#allocation5], 1
    %3591 = vsyncpa [#allocation8], 1
    %3592 = vsyncpa [#allocation11], 1

</llo_original>
